<compile_context>
chip_gen: v7x
topology: tpu7x:2x2x1
jax: 0.10.0
libtpu: 0.0.40
codegen_flags: <defaults>
</compile_context>

<pallas_src>
import math
import functools

import jax
import jax.numpy as jnp
from jax import lax
from jax.experimental import pallas as pl
from jax.experimental.pallas import tpu as pltpu

_BF16 = jnp.bfloat16


def _layernorm(v, g, b, eps=1e-5):
    mu = jnp.mean(v, axis=-1, keepdims=True)
    var = jnp.mean((v - mu) ** 2, axis=-1, keepdims=True)
    return (v - mu) * lax.rsqrt(var + eps) * g + b


def encoder_block_kernel(x_ref,
                         ln1_g_ref, ln1_b_ref,
                         wq_ref, bq_ref, wk_ref, bk_ref, wv_ref, bv_ref,
                         wo_ref, bo_ref,
                         ln2_g_ref, ln2_b_ref,
                         w1_ref, b1_ref, w2_ref, b2_ref,
                         o_ref,
                         k_scr, v_scr,
                         *, heads, d_k, seq_len, tq):
    qi = pl.program_id(1)
    f32 = jnp.float32
    D = heads * d_k

    sqrt_dk = math.sqrt(d_k)
    # Multiply only when 1/sqrt(d_k) is an exact power of two (d_k a power of 4);
    # otherwise keep the true divide so the floor quantization is faithful.
    recip_exact = (d_k & (d_k - 1) == 0) and (int(round(math.log2(d_k))) % 2 == 0)

    def scale_scores(s):
        if recip_exact:
            return jnp.floor(s * (1.0 / sqrt_dk))
        return jnp.floor(s / sqrt_dk)

    # ---- K/V projection for the whole sequence, cached once per batch element ----
    # Head-major bf16 scratch persists across the sequential ("arbitrary") qi axis.
    @pl.when(qi == 0)
    def _compute_kv():
        # TODO(synk): source ResidualConnections.forward drops its sublayer arg
        # and calls nn.LayerNorm() with no shape; implemented the intended
        # pre-norm residual x + dropout(sublayer(norm(x))) with dropout = identity.
        n_chunks = seq_len // tq

        def chunk_body(c, carry):
            r0 = pl.multiple_of(c * tq, tq)
            xc = x_ref[0, pl.ds(r0, tq), :].astype(f32)                 # (TQ, D)
            xn = _layernorm(xc, ln1_g_ref[...], ln1_b_ref[...]).astype(_BF16)
            for h in range(heads):                                      # static
                kh = jnp.dot(xn, wk_ref[h],
                             preferred_element_type=f32) + bk_ref[h]    # (TQ, d_k)
                vh = jnp.dot(xn, wv_ref[h],
                             preferred_element_type=f32) + bv_ref[h]
                k_scr[h, pl.ds(r0, tq), :] = kh.astype(_BF16)
                v_scr[h, pl.ds(r0, tq), :] = vh.astype(_BF16)
            return carry

        lax.fori_loop(0, n_chunks, chunk_body, 0)

    # ---------------- per-Q-row-tile work ----------------
    row0 = pl.multiple_of(qi * tq, tq)
    x_tile = x_ref[0, pl.ds(row0, tq), :].astype(f32)                   # (TQ, D)
    xn1 = _layernorm(x_tile, ln1_g_ref[...], ln1_b_ref[...]).astype(_BF16)

    acc = jnp.zeros((tq, D), f32)
    for h in range(heads):                                              # static unroll
        # Q recomputed per tile from the cached LayerNorm'd activations (not cached).
        qh = jnp.dot(xn1, wq_ref[h], preferred_element_type=f32) + bq_ref[h]

        # faithful to source: torch.matmul(q, k.T) // sqrt(d_k)  (floor division).
        # bf16 x bf16 scores matmul with f32 accumulation (MXU-friendly); the
        # subsequent floor can flip on borderline values vs an all-f32 reference.
        s = lax.dot_general(qh.astype(_BF16), k_scr[h],
                            (((1,), (1,)), ((), ())),
                            preferred_element_type=f32)                 # (TQ, S)
        s = scale_scores(s)

        # TODO(synk): source's `attn_score.masked_fill(...)` is never assigned,
        # so src_mask has no effect; reproduced as a no-op.

        m = jnp.max(s, axis=-1, keepdims=True)
        e = jnp.exp(s - m)
        p = e * pl.reciprocal(jnp.sum(e, axis=-1, keepdims=True), approx=True)

        hv = jnp.dot(p.astype(_BF16), v_scr[h],
                     preferred_element_type=f32)                        # (TQ, d_k)
        # Per-head output projection accumulated in place of a head concat.
        acc = acc + jnp.dot(hv.astype(_BF16), wo_ref[h],
                            preferred_element_type=f32)                 # (TQ, D)

    x1 = x_tile + acc + bo_ref[...]

    # ---------------- residual 2: x + FeedForward(LayerNorm(x)) ----------------
    xn2 = _layernorm(x1, ln2_g_ref[...], ln2_b_ref[...])
    h1 = jnp.maximum(
        jnp.dot(xn2.astype(_BF16), w1_ref[...],
                preferred_element_type=f32) + b1_ref[...], 0.0)
    ff = jnp.dot(h1.astype(_BF16), w2_ref[...],
                 preferred_element_type=f32) + b2_ref[...]

    o_ref[0] = (x1 + ff).astype(o_ref.dtype)


def _pick_tq(seq_len, requested=None):
    # Large M tiles keep the MXU full; 256 targets v6e/v7x and is also fine on v5e.
    target = 256 if requested is None else requested
    target = max(8, min(target, seq_len))
    for t in (target, 256, 128, 64, 32, 16, 8):
        if t <= seq_len and seq_len % t == 0:
            return t
    return seq_len


def _vmem_capacity_bytes():
    try:
        cap = getattr(pltpu.get_tpu_info(), "vmem_capacity_bytes", None)
        if cap:
            return int(cap)
    except Exception:
        pass
    return 64 * 1024 * 1024  # conservative fallback that fits every generation


def encoder_block(x, params, *, heads, tq=None):
    B, S, D = x.shape
    assert D % heads == 0, "d_model must be divisible by heads"
    d_k = D // heads
    tq = _pick_tq(S, tq)
    nq = S // tq

    f32 = jnp.float32

    def per_head_in(w):   # (D, D) -> (heads, D, d_k), bf16
        return jnp.transpose(w.reshape(D, heads, d_k), (1, 0, 2)).astype(_BF16)

    def per_head_bias(b):  # (1, D) -> (heads, 1, d_k), f32
        return jnp.transpose(b.reshape(1, heads, d_k), (1, 0, 2)).astype(f32)

    wq = per_head_in(params["wq"]); bq = per_head_bias(params["bq"])
    wk = per_head_in(params["wk"]); bk = per_head_bias(params["bk"])
    wv = per_head_in(params["wv"]); bv = per_head_bias(params["bv"])
    wo = params["wo"].reshape(heads, d_k, D).astype(_BF16)   # rows are head-major
    w1 = params["w1"].astype(_BF16)
    w2 = params["w2"].astype(_BF16)
    d_ff = w1.shape[1]

    weights = [
        params["ln1_g"].astype(f32), params["ln1_b"].astype(f32),
        wq, bq, wk, bk, wv, bv,
        wo, params["bo"].astype(f32),
        params["ln2_g"].astype(f32), params["ln2_b"].astype(f32),
        w1, params["b1"].astype(f32), w2, params["b2"].astype(f32),
    ]

    kernel = functools.partial(encoder_block_kernel,
                               heads=heads, d_k=d_k, seq_len=S, tq=tq)

    # Advisory cost estimate (matmul FLOPs, exp count, HBM bytes).
    flops = int(2 * B * S * D * 3 * D          # Q/K/V projections
                + 4 * B * S * S * D            # scores + P@V
                + 2 * B * S * D * D            # output projection
                + 4 * B * S * D * d_ff)        # FFN
    transcendentals = int(B * heads * S * S)
    bytes_accessed = int(2 * x.size * x.dtype.itemsize
                         + sum(w.size * w.dtype.itemsize for w in weights))

    # VMEM budget: x / out blocks, weights, bf16 K/V scratch (lane-padded) and
    # in-flight f32 temporaries; clamp to ~80% of this generation's capacity.
    scratch_bytes = 2 * heads * S * max(d_k, 128) * 2
    est = (2 * (S * D + tq * D) * 4
           + sum(w.size * w.dtype.itemsize for w in weights)
           + scratch_bytes
           + (tq * S + tq * d_ff + 2 * tq * D) * 4)
    cap = _vmem_capacity_bytes()
    vmem_limit = int(min(max(2 * est, 32 * 1024 * 1024), int(cap * 0.8)))

    def const_spec(a, single_buffered):
        nd = a.ndim
        if single_buffered:
            # Grid-invariant weights: single-buffer to halve their VMEM footprint.
            return pl.BlockSpec(a.shape, lambda b, q, _nd=nd: (0,) * _nd,
                                pipeline_mode=pl.Buffered(1))
        return pl.BlockSpec(a.shape, lambda b, q, _nd=nd: (0,) * _nd)

    def run(single_buffered_weights):
        out = pl.pallas_call(
            kernel,
            out_shape=jax.ShapeDtypeStruct((B, S, D), x.dtype),
            grid=(B, nq),
            in_specs=[pl.BlockSpec((1, S, D), lambda b, q: (b, 0, 0))]
                     + [const_spec(w, single_buffered_weights) for w in weights],
            out_specs=pl.BlockSpec((1, tq, D), lambda b, q: (b, q, 0)),
            scratch_shapes=[pltpu.VMEM((heads, S, d_k), _BF16),   # K (head-major)
                            pltpu.VMEM((heads, S, d_k), _BF16)],  # V (head-major)
            compiler_params=pltpu.CompilerParams(
                dimension_semantics=("parallel", "arbitrary"),
                vmem_limit_bytes=vmem_limit),
            cost_estimate=pl.CostEstimate(flops=flops,
                                          transcendentals=transcendentals,
                                          bytes_accessed=bytes_accessed),
        )(x, *weights)
        return jax.block_until_ready(out)

    # TODO(synk): for B == 1 on v7x, hoist the K/V precompute into its own pass so
    # the qi axis can be marked "parallel" across the two TensorCores.
    try:
        return run(True)
    except Exception:
        # pl.Buffered(1) single-buffering unsupported on this jax/libtpu version;
        # fall back to default double-buffered weight blocks.
        return run(False)


def init_params(key, d_model, d_ff):
    ks = jax.random.split(key, 12)
    n = lambda k, shape, s=0.05: jax.random.normal(k, shape, jnp.float32) * s
    return dict(
        ln1_g=jnp.ones((1, d_model), jnp.float32),
        ln1_b=jnp.zeros((1, d_model), jnp.float32),
        wq=n(ks[0], (d_model, d_model)), bq=n(ks[1], (1, d_model)),
        wk=n(ks[2], (d_model, d_model)), bk=n(ks[3], (1, d_model)),
        wv=n(ks[4], (d_model, d_model)), bv=n(ks[5], (1, d_model)),
        wo=n(ks[6], (d_model, d_model)), bo=n(ks[7], (1, d_model)),
        ln2_g=jnp.ones((1, d_model), jnp.float32),
        ln2_b=jnp.zeros((1, d_model), jnp.float32),
        w1=n(ks[8], (d_model, d_ff)), b1=n(ks[9], (1, d_ff)),
        w2=n(ks[10], (d_ff, d_model)), b2=n(ks[11], (1, d_model)),
    )


if __name__ == "__main__":
    # Small but lane-aligned shapes (D multiple of 128, S multiple of 8) so the
    # tiled grid / lane-dense output path is exercised.
    B, S, d_model, heads, d_ff = 2, 64, 128, 4, 256

    key = jax.random.PRNGKey(0)
    kx, kp = jax.random.split(key)
    x = jax.random.normal(kx, (B, S, d_model), jnp.float32)
    params = init_params(kp, d_model, d_ff)
    # src_mask would be a no-op in the source forward (masked_fill not assigned),
    # so it is intentionally not fed to the kernel.

    out = encoder_block(x, params, heads=heads)
    out = jax.block_until_ready(out)
    assert out.shape == (B, S, d_model)
    assert jnp.all(jnp.isfinite(out))
    print("KERNEL_OK")
</pallas_src>

<mosaic_0001>
module attributes {stable_mosaic.version = 11 : i64} {
  func.func @encoder_block_kernel(%arg0: i32, %arg1: i32, %arg2: memref<1x64x128xf32, #tpu.memory_space<vmem>>, %arg3: memref<1x128xf32, #tpu.memory_space<vmem>>, %arg4: memref<1x128xf32, #tpu.memory_space<vmem>>, %arg5: memref<4x128x32xbf16, #tpu.memory_space<vmem>>, %arg6: memref<4x1x32xf32, #tpu.memory_space<vmem>>, %arg7: memref<4x128x32xbf16, #tpu.memory_space<vmem>>, %arg8: memref<4x1x32xf32, #tpu.memory_space<vmem>>, %arg9: memref<4x128x32xbf16, #tpu.memory_space<vmem>>, %arg10: memref<4x1x32xf32, #tpu.memory_space<vmem>>, %arg11: memref<4x32x128xbf16, #tpu.memory_space<vmem>>, %arg12: memref<1x128xf32, #tpu.memory_space<vmem>>, %arg13: memref<1x128xf32, #tpu.memory_space<vmem>>, %arg14: memref<1x128xf32, #tpu.memory_space<vmem>>, %arg15: memref<128x256xbf16, #tpu.memory_space<vmem>>, %arg16: memref<1x256xf32, #tpu.memory_space<vmem>>, %arg17: memref<256x128xbf16, #tpu.memory_space<vmem>>, %arg18: memref<1x128xf32, #tpu.memory_space<vmem>>, %arg19: memref<1x64x128xf32, #tpu.memory_space<vmem>>, %arg20: memref<4x64x32xbf16, #tpu.memory_space<vmem>>, %arg21: memref<4x64x32xbf16, #tpu.memory_space<vmem>>) attributes {dimension_semantics = [#tpu.dimension_semantics<parallel>, #tpu.dimension_semantics<arbitrary>], iteration_bounds = array<i64: 2, 1>, scalar_prefetch = 0 : i64, scratch_operands = 2 : i64, tpu.core_type = #tpu.core_type<tc>, window_params = [{transform_indices = @transform_0, window_bounds = array<i64: 1, 64, 128>}, {pipeline_mode = #tpu.pipeline_mode<synchronous>, transform_indices = @transform_1, window_bounds = array<i64: 1, 128>}, {pipeline_mode = #tpu.pipeline_mode<synchronous>, transform_indices = @transform_2, window_bounds = array<i64: 1, 128>}, {pipeline_mode = #tpu.pipeline_mode<synchronous>, transform_indices = @transform_3, window_bounds = array<i64: 4, 128, 32>}, {pipeline_mode = #tpu.pipeline_mode<synchronous>, transform_indices = @transform_4, window_bounds = array<i64: 4, 1, 32>}, {pipeline_mode = #tpu.pipeline_mode<synchronous>, transform_indices = @transform_5, window_bounds = array<i64: 4, 128, 32>}, {pipeline_mode = #tpu.pipeline_mode<synchronous>, transform_indices = @transform_6, window_bounds = array<i64: 4, 1, 32>}, {pipeline_mode = #tpu.pipeline_mode<synchronous>, transform_indices = @transform_7, window_bounds = array<i64: 4, 128, 32>}, {pipeline_mode = #tpu.pipeline_mode<synchronous>, transform_indices = @transform_8, window_bounds = array<i64: 4, 1, 32>}, {pipeline_mode = #tpu.pipeline_mode<synchronous>, transform_indices = @transform_9, window_bounds = array<i64: 4, 32, 128>}, {pipeline_mode = #tpu.pipeline_mode<synchronous>, transform_indices = @transform_10, window_bounds = array<i64: 1, 128>}, {pipeline_mode = #tpu.pipeline_mode<synchronous>, transform_indices = @transform_11, window_bounds = array<i64: 1, 128>}, {pipeline_mode = #tpu.pipeline_mode<synchronous>, transform_indices = @transform_12, window_bounds = array<i64: 1, 128>}, {pipeline_mode = #tpu.pipeline_mode<synchronous>, transform_indices = @transform_13, window_bounds = array<i64: 128, 256>}, {pipeline_mode = #tpu.pipeline_mode<synchronous>, transform_indices = @transform_14, window_bounds = array<i64: 1, 256>}, {pipeline_mode = #tpu.pipeline_mode<synchronous>, transform_indices = @transform_15, window_bounds = array<i64: 256, 128>}, {pipeline_mode = #tpu.pipeline_mode<synchronous>, transform_indices = @transform_16, window_bounds = array<i64: 1, 128>}, {transform_indices = @transform_17, window_bounds = array<i64: 1, 64, 128>}]} {
    %c0_i32 = arith.constant 0 : i32
    %0 = arith.cmpi eq, %arg1, %c0_i32 : i32
    %1 = arith.extui %0 : i1 to i32
    %c0_i32_0 = arith.constant 0 : i32
    %2 = arith.cmpi ne, %1, %c0_i32_0 : i32
    scf.if %2 {
      %c0_i32_121 = arith.constant 0 : i32
      %c64_i32_122 = arith.constant 64 : i32
      %212 = arith.muli %c0_i32_121, %c64_i32_122 : i32
      %213 = tpu.assume_multiple %212, 64 : i32
      %c0_123 = arith.constant 0 : index
      %214 = arith.index_cast %213 : i32 to index
      %c0_124 = arith.constant 0 : index
      %215 = vector.load %arg2[%c0_123, %214, %c0_124] : memref<1x64x128xf32, #tpu.memory_space<vmem>>, vector<1x64x128xf32>
      %216 = vector.shape_cast %215 : vector<1x64x128xf32> to vector<64x128xf32>
      %c0_125 = arith.constant 0 : index
      %c0_126 = arith.constant 0 : index
      %217 = vector.load %arg3[%c0_125, %c0_126] : memref<1x128xf32, #tpu.memory_space<vmem>>, vector<1x128xf32>
      %c0_127 = arith.constant 0 : index
      %c0_128 = arith.constant 0 : index
      %218 = vector.load %arg4[%c0_127, %c0_128] : memref<1x128xf32, #tpu.memory_space<vmem>>, vector<1x128xf32>
      %cst_129 = arith.constant dense<0.000000e+00> : vector<64xf32>
      %219 = vector.multi_reduction <add>, %216, %cst_129 [1] : vector<64x128xf32> to vector<64xf32>
      %220 = vector.shape_cast %219 : vector<64xf32> to vector<64x1xf32>
      %cst_130 = arith.constant 1.280000e+02 : f32
      %221 = vector.broadcast %cst_130 : f32 to vector<64x1xf32>
      %222 = arith.divf %220, %221 : vector<64x1xf32>
      %223 = vector.broadcast %222 : vector<64x1xf32> to vector<64x128xf32>
      %224 = arith.subf %216, %223 : vector<64x128xf32>
      %225 = arith.mulf %224, %224 : vector<64x128xf32>
      %cst_131 = arith.constant dense<0.000000e+00> : vector<64xf32>
      %226 = vector.multi_reduction <add>, %225, %cst_131 [1] : vector<64x128xf32> to vector<64xf32>
      %227 = vector.shape_cast %226 : vector<64xf32> to vector<64x1xf32>
      %cst_132 = arith.constant 1.280000e+02 : f32
      %228 = vector.broadcast %cst_132 : f32 to vector<64x1xf32>
      %229 = arith.divf %227, %228 : vector<64x1xf32>
      %230 = vector.broadcast %222 : vector<64x1xf32> to vector<64x128xf32>
      %231 = arith.subf %216, %230 : vector<64x128xf32>
      %cst_133 = arith.constant 9.99999974E-6 : f32
      %232 = vector.broadcast %cst_133 : f32 to vector<64x1xf32>
      %233 = arith.addf %229, %232 : vector<64x1xf32>
      %234 = math.rsqrt %233 : vector<64x1xf32>
      %235 = vector.broadcast %234 : vector<64x1xf32> to vector<64x128xf32>
      %236 = arith.mulf %231, %235 : vector<64x128xf32>
      %237 = vector.broadcast %217 : vector<1x128xf32> to vector<64x128xf32>
      %238 = arith.mulf %236, %237 : vector<64x128xf32>
      %239 = vector.broadcast %218 : vector<1x128xf32> to vector<64x128xf32>
      %240 = arith.addf %238, %239 : vector<64x128xf32>
      %241 = arith.truncf %240 : vector<64x128xf32> to vector<64x128xbf16>
      %c0_134 = arith.constant 0 : index
      %c0_135 = arith.constant 0 : index
      %c0_136 = arith.constant 0 : index
      %242 = vector.load %arg7[%c0_134, %c0_135, %c0_136] : memref<4x128x32xbf16, #tpu.memory_space<vmem>>, vector<1x128x32xbf16>
      %243 = vector.shape_cast %242 : vector<1x128x32xbf16> to vector<128x32xbf16>
      %cst_137 = arith.constant dense<0.000000e+00> : vector<64x32xf32>
      %244 = tpu.matmul %241, %243, %cst_137 {dimension_numbers = #tpu.dot_dimension_numbers<[1], [0], [0], [1], [0, 0, 1, 1], [], []>} : vector<64x128xbf16>, vector<128x32xbf16>, vector<64x32xf32> -> vector<64x32xf32>
      %c0_138 = arith.constant 0 : index
      %c0_139 = arith.constant 0 : index
      %c0_140 = arith.constant 0 : index
      %245 = vector.load %arg8[%c0_138, %c0_139, %c0_140] : memref<4x1x32xf32, #tpu.memory_space<vmem>>, vector<1x1x32xf32>
      %246 = vector.shape_cast %245 : vector<1x1x32xf32> to vector<1x32xf32>
      %247 = vector.broadcast %246 : vector<1x32xf32> to vector<64x32xf32>
      %248 = arith.addf %244, %247 : vector<64x32xf32>
      %c0_141 = arith.constant 0 : index
      %c0_142 = arith.constant 0 : index
      %c0_143 = arith.constant 0 : index
      %249 = vector.load %arg9[%c0_141, %c0_142, %c0_143] : memref<4x128x32xbf16, #tpu.memory_space<vmem>>, vector<1x128x32xbf16>
      %250 = vector.shape_cast %249 : vector<1x128x32xbf16> to vector<128x32xbf16>
      %cst_144 = arith.constant dense<0.000000e+00> : vector<64x32xf32>
      %251 = tpu.matmul %241, %250, %cst_144 {dimension_numbers = #tpu.dot_dimension_numbers<[1], [0], [0], [1], [0, 0, 1, 1], [], []>} : vector<64x128xbf16>, vector<128x32xbf16>, vector<64x32xf32> -> vector<64x32xf32>
      %c0_145 = arith.constant 0 : index
      %c0_146 = arith.constant 0 : index
      %c0_147 = arith.constant 0 : index
      %252 = vector.load %arg10[%c0_145, %c0_146, %c0_147] : memref<4x1x32xf32, #tpu.memory_space<vmem>>, vector<1x1x32xf32>
      %253 = vector.shape_cast %252 : vector<1x1x32xf32> to vector<1x32xf32>
      %254 = vector.broadcast %253 : vector<1x32xf32> to vector<64x32xf32>
      %255 = arith.addf %251, %254 : vector<64x32xf32>
      %256 = arith.truncf %248 : vector<64x32xf32> to vector<64x32xbf16>
      %c0_148 = arith.constant 0 : index
      %257 = arith.index_cast %213 : i32 to index
      %c0_149 = arith.constant 0 : index
      %258 = vector.load %arg20[%c0_148, %257, %c0_149] : memref<4x64x32xbf16, #tpu.memory_space<vmem>>, vector<1x64x32xbf16>
      %259 = vector.shape_cast %258 : vector<1x64x32xbf16> to vector<64x32xbf16>
      %260 = vector.shape_cast %256 : vector<64x32xbf16> to vector<1x64x32xbf16>
      tpu.vector_store %arg20[%c0_148, %257, %c0_149], %260 {strides = array<i32>} : memref<4x64x32xbf16, #tpu.memory_space<vmem>>, vector<1x64x32xbf16>,
      %261 = arith.truncf %255 : vector<64x32xf32> to vector<64x32xbf16>
      %c0_150 = arith.constant 0 : index
      %262 = arith.index_cast %213 : i32 to index
      %c0_151 = arith.constant 0 : index
      %263 = vector.load %arg21[%c0_150, %262, %c0_151] : memref<4x64x32xbf16, #tpu.memory_space<vmem>>, vector<1x64x32xbf16>
      %264 = vector.shape_cast %263 : vector<1x64x32xbf16> to vector<64x32xbf16>
      %265 = vector.shape_cast %261 : vector<64x32xbf16> to vector<1x64x32xbf16>
      tpu.vector_store %arg21[%c0_150, %262, %c0_151], %265 {strides = array<i32>} : memref<4x64x32xbf16, #tpu.memory_space<vmem>>, vector<1x64x32xbf16>,
      %c1_152 = arith.constant 1 : index
      %c0_153 = arith.constant 0 : index
      %c0_154 = arith.constant 0 : index
      %266 = vector.load %arg7[%c1_152, %c0_153, %c0_154] : memref<4x128x32xbf16, #tpu.memory_space<vmem>>, vector<1x128x32xbf16>
      %267 = vector.shape_cast %266 : vector<1x128x32xbf16> to vector<128x32xbf16>
      %cst_155 = arith.constant dense<0.000000e+00> : vector<64x32xf32>
      %268 = tpu.matmul %241, %267, %cst_155 {dimension_numbers = #tpu.dot_dimension_numbers<[1], [0], [0], [1], [0, 0, 1, 1], [], []>} : vector<64x128xbf16>, vector<128x32xbf16>, vector<64x32xf32> -> vector<64x32xf32>
      %c1_156 = arith.constant 1 : index
      %c0_157 = arith.constant 0 : index
      %c0_158 = arith.constant 0 : index
      %269 = vector.load %arg8[%c1_156, %c0_157, %c0_158] : memref<4x1x32xf32, #tpu.memory_space<vmem>>, vector<1x1x32xf32>
      %270 = vector.shape_cast %269 : vector<1x1x32xf32> to vector<1x32xf32>
      %271 = vector.broadcast %270 : vector<1x32xf32> to vector<64x32xf32>
      %272 = arith.addf %268, %271 : vector<64x32xf32>
      %c1_159 = arith.constant 1 : index
      %c0_160 = arith.constant 0 : index
      %c0_161 = arith.constant 0 : index
      %273 = vector.load %arg9[%c1_159, %c0_160, %c0_161] : memref<4x128x32xbf16, #tpu.memory_space<vmem>>, vector<1x128x32xbf16>
      %274 = vector.shape_cast %273 : vector<1x128x32xbf16> to vector<128x32xbf16>
      %cst_162 = arith.constant dense<0.000000e+00> : vector<64x32xf32>
      %275 = tpu.matmul %241, %274, %cst_162 {dimension_numbers = #tpu.dot_dimension_numbers<[1], [0], [0], [1], [0, 0, 1, 1], [], []>} : vector<64x128xbf16>, vector<128x32xbf16>, vector<64x32xf32> -> vector<64x32xf32>
      %c1_163 = arith.constant 1 : index
      %c0_164 = arith.constant 0 : index
      %c0_165 = arith.constant 0 : index
      %276 = vector.load %arg10[%c1_163, %c0_164, %c0_165] : memref<4x1x32xf32, #tpu.memory_space<vmem>>, vector<1x1x32xf32>
      %277 = vector.shape_cast %276 : vector<1x1x32xf32> to vector<1x32xf32>
      %278 = vector.broadcast %277 : vector<1x32xf32> to vector<64x32xf32>
      %279 = arith.addf %275, %278 : vector<64x32xf32>
      %280 = arith.truncf %272 : vector<64x32xf32> to vector<64x32xbf16>
      %c1_166 = arith.constant 1 : index
      %281 = arith.index_cast %213 : i32 to index
      %c0_167 = arith.constant 0 : index
      %282 = vector.load %arg20[%c1_166, %281, %c0_167] : memref<4x64x32xbf16, #tpu.memory_space<vmem>>, vector<1x64x32xbf16>
      %283 = vector.shape_cast %282 : vector<1x64x32xbf16> to vector<64x32xbf16>
      %284 = vector.shape_cast %280 : vector<64x32xbf16> to vector<1x64x32xbf16>
      tpu.vector_store %arg20[%c1_166, %281, %c0_167], %284 {strides = array<i32>} : memref<4x64x32xbf16, #tpu.memory_space<vmem>>, vector<1x64x32xbf16>,
      %285 = arith.truncf %279 : vector<64x32xf32> to vector<64x32xbf16>
      %c1_168 = arith.constant 1 : index
      %286 = arith.index_cast %213 : i32 to index
      %c0_169 = arith.constant 0 : index
      %287 = vector.load %arg21[%c1_168, %286, %c0_169] : memref<4x64x32xbf16, #tpu.memory_space<vmem>>, vector<1x64x32xbf16>
      %288 = vector.shape_cast %287 : vector<1x64x32xbf16> to vector<64x32xbf16>
      %289 = vector.shape_cast %285 : vector<64x32xbf16> to vector<1x64x32xbf16>
      tpu.vector_store %arg21[%c1_168, %286, %c0_169], %289 {strides = array<i32>} : memref<4x64x32xbf16, #tpu.memory_space<vmem>>, vector<1x64x32xbf16>,
      %c2_170 = arith.constant 2 : index
      %c0_171 = arith.constant 0 : index
      %c0_172 = arith.constant 0 : index
      %290 = vector.load %arg7[%c2_170, %c0_171, %c0_172] : memref<4x128x32xbf16, #tpu.memory_space<vmem>>, vector<1x128x32xbf16>
      %291 = vector.shape_cast %290 : vector<1x128x32xbf16> to vector<128x32xbf16>
      %cst_173 = arith.constant dense<0.000000e+00> : vector<64x32xf32>
      %292 = tpu.matmul %241, %291, %cst_173 {dimension_numbers = #tpu.dot_dimension_numbers<[1], [0], [0], [1], [0, 0, 1, 1], [], []>} : vector<64x128xbf16>, vector<128x32xbf16>, vector<64x32xf32> -> vector<64x32xf32>
      %c2_174 = arith.constant 2 : index
      %c0_175 = arith.constant 0 : index
      %c0_176 = arith.constant 0 : index
      %293 = vector.load %arg8[%c2_174, %c0_175, %c0_176] : memref<4x1x32xf32, #tpu.memory_space<vmem>>, vector<1x1x32xf32>
      %294 = vector.shape_cast %293 : vector<1x1x32xf32> to vector<1x32xf32>
      %295 = vector.broadcast %294 : vector<1x32xf32> to vector<64x32xf32>
      %296 = arith.addf %292, %295 : vector<64x32xf32>
      %c2_177 = arith.constant 2 : index
      %c0_178 = arith.constant 0 : index
      %c0_179 = arith.constant 0 : index
      %297 = vector.load %arg9[%c2_177, %c0_178, %c0_179] : memref<4x128x32xbf16, #tpu.memory_space<vmem>>, vector<1x128x32xbf16>
      %298 = vector.shape_cast %297 : vector<1x128x32xbf16> to vector<128x32xbf16>
      %cst_180 = arith.constant dense<0.000000e+00> : vector<64x32xf32>
      %299 = tpu.matmul %241, %298, %cst_180 {dimension_numbers = #tpu.dot_dimension_numbers<[1], [0], [0], [1], [0, 0, 1, 1], [], []>} : vector<64x128xbf16>, vector<128x32xbf16>, vector<64x32xf32> -> vector<64x32xf32>
      %c2_181 = arith.constant 2 : index
      %c0_182 = arith.constant 0 : index
      %c0_183 = arith.constant 0 : index
      %300 = vector.load %arg10[%c2_181, %c0_182, %c0_183] : memref<4x1x32xf32, #tpu.memory_space<vmem>>, vector<1x1x32xf32>
      %301 = vector.shape_cast %300 : vector<1x1x32xf32> to vector<1x32xf32>
      %302 = vector.broadcast %301 : vector<1x32xf32> to vector<64x32xf32>
      %303 = arith.addf %299, %302 : vector<64x32xf32>
      %304 = arith.truncf %296 : vector<64x32xf32> to vector<64x32xbf16>
      %c2_184 = arith.constant 2 : index
      %305 = arith.index_cast %213 : i32 to index
      %c0_185 = arith.constant 0 : index
      %306 = vector.load %arg20[%c2_184, %305, %c0_185] : memref<4x64x32xbf16, #tpu.memory_space<vmem>>, vector<1x64x32xbf16>
      %307 = vector.shape_cast %306 : vector<1x64x32xbf16> to vector<64x32xbf16>
      %308 = vector.shape_cast %304 : vector<64x32xbf16> to vector<1x64x32xbf16>
      tpu.vector_store %arg20[%c2_184, %305, %c0_185], %308 {strides = array<i32>} : memref<4x64x32xbf16, #tpu.memory_space<vmem>>, vector<1x64x32xbf16>,
      %309 = arith.truncf %303 : vector<64x32xf32> to vector<64x32xbf16>
      %c2_186 = arith.constant 2 : index
      %310 = arith.index_cast %213 : i32 to index
      %c0_187 = arith.constant 0 : index
      %311 = vector.load %arg21[%c2_186, %310, %c0_187] : memref<4x64x32xbf16, #tpu.memory_space<vmem>>, vector<1x64x32xbf16>
      %312 = vector.shape_cast %311 : vector<1x64x32xbf16> to vector<64x32xbf16>
      %313 = vector.shape_cast %309 : vector<64x32xbf16> to vector<1x64x32xbf16>
      tpu.vector_store %arg21[%c2_186, %310, %c0_187], %313 {strides = array<i32>} : memref<4x64x32xbf16, #tpu.memory_space<vmem>>, vector<1x64x32xbf16>,
      %c3_188 = arith.constant 3 : index
      %c0_189 = arith.constant 0 : index
      %c0_190 = arith.constant 0 : index
      %314 = vector.load %arg7[%c3_188, %c0_189, %c0_190] : memref<4x128x32xbf16, #tpu.memory_space<vmem>>, vector<1x128x32xbf16>
      %315 = vector.shape_cast %314 : vector<1x128x32xbf16> to vector<128x32xbf16>
      %cst_191 = arith.constant dense<0.000000e+00> : vector<64x32xf32>
      %316 = tpu.matmul %241, %315, %cst_191 {dimension_numbers = #tpu.dot_dimension_numbers<[1], [0], [0], [1], [0, 0, 1, 1], [], []>} : vector<64x128xbf16>, vector<128x32xbf16>, vector<64x32xf32> -> vector<64x32xf32>
      %c3_192 = arith.constant 3 : index
      %c0_193 = arith.constant 0 : index
      %c0_194 = arith.constant 0 : index
      %317 = vector.load %arg8[%c3_192, %c0_193, %c0_194] : memref<4x1x32xf32, #tpu.memory_space<vmem>>, vector<1x1x32xf32>
      %318 = vector.shape_cast %317 : vector<1x1x32xf32> to vector<1x32xf32>
      %319 = vector.broadcast %318 : vector<1x32xf32> to vector<64x32xf32>
      %320 = arith.addf %316, %319 : vector<64x32xf32>
      %c3_195 = arith.constant 3 : index
      %c0_196 = arith.constant 0 : index
      %c0_197 = arith.constant 0 : index
      %321 = vector.load %arg9[%c3_195, %c0_196, %c0_197] : memref<4x128x32xbf16, #tpu.memory_space<vmem>>, vector<1x128x32xbf16>
      %322 = vector.shape_cast %321 : vector<1x128x32xbf16> to vector<128x32xbf16>
      %cst_198 = arith.constant dense<0.000000e+00> : vector<64x32xf32>
      %323 = tpu.matmul %241, %322, %cst_198 {dimension_numbers = #tpu.dot_dimension_numbers<[1], [0], [0], [1], [0, 0, 1, 1], [], []>} : vector<64x128xbf16>, vector<128x32xbf16>, vector<64x32xf32> -> vector<64x32xf32>
      %c3_199 = arith.constant 3 : index
      %c0_200 = arith.constant 0 : index
      %c0_201 = arith.constant 0 : index
      %324 = vector.load %arg10[%c3_199, %c0_200, %c0_201] : memref<4x1x32xf32, #tpu.memory_space<vmem>>, vector<1x1x32xf32>
      %325 = vector.shape_cast %324 : vector<1x1x32xf32> to vector<1x32xf32>
      %326 = vector.broadcast %325 : vector<1x32xf32> to vector<64x32xf32>
      %327 = arith.addf %323, %326 : vector<64x32xf32>
      %328 = arith.truncf %320 : vector<64x32xf32> to vector<64x32xbf16>
      %c3_202 = arith.constant 3 : index
      %329 = arith.index_cast %213 : i32 to index
      %c0_203 = arith.constant 0 : index
      %330 = vector.load %arg20[%c3_202, %329, %c0_203] : memref<4x64x32xbf16, #tpu.memory_space<vmem>>, vector<1x64x32xbf16>
      %331 = vector.shape_cast %330 : vector<1x64x32xbf16> to vector<64x32xbf16>
      %332 = vector.shape_cast %328 : vector<64x32xbf16> to vector<1x64x32xbf16>
      tpu.vector_store %arg20[%c3_202, %329, %c0_203], %332 {strides = array<i32>} : memref<4x64x32xbf16, #tpu.memory_space<vmem>>, vector<1x64x32xbf16>,
      %333 = arith.truncf %327 : vector<64x32xf32> to vector<64x32xbf16>
      %c3_204 = arith.constant 3 : index
      %334 = arith.index_cast %213 : i32 to index
      %c0_205 = arith.constant 0 : index
      %335 = vector.load %arg21[%c3_204, %334, %c0_205] : memref<4x64x32xbf16, #tpu.memory_space<vmem>>, vector<1x64x32xbf16>
      %336 = vector.shape_cast %335 : vector<1x64x32xbf16> to vector<64x32xbf16>
      %337 = vector.shape_cast %333 : vector<64x32xbf16> to vector<1x64x32xbf16>
      tpu.vector_store %arg21[%c3_204, %334, %c0_205], %337 {strides = array<i32>} : memref<4x64x32xbf16, #tpu.memory_space<vmem>>, vector<1x64x32xbf16>,
      %c1_i32 = arith.constant 1 : i32
    } else {
    }
    %c64_i32 = arith.constant 64 : i32
    %3 = arith.muli %arg1, %c64_i32 : i32
    %4 = tpu.assume_multiple %3, 64 : i32
    %c0 = arith.constant 0 : index
    %5 = arith.index_cast %4 : i32 to index
    %c0_1 = arith.constant 0 : index
    %6 = vector.load %arg2[%c0, %5, %c0_1] : memref<1x64x128xf32, #tpu.memory_space<vmem>>, vector<1x64x128xf32>
    %7 = vector.shape_cast %6 : vector<1x64x128xf32> to vector<64x128xf32>
    %c0_2 = arith.constant 0 : index
    %c0_3 = arith.constant 0 : index
    %8 = vector.load %arg3[%c0_2, %c0_3] : memref<1x128xf32, #tpu.memory_space<vmem>>, vector<1x128xf32>
    %c0_4 = arith.constant 0 : index
    %c0_5 = arith.constant 0 : index
    %9 = vector.load %arg4[%c0_4, %c0_5] : memref<1x128xf32, #tpu.memory_space<vmem>>, vector<1x128xf32>
    %cst = arith.constant dense<0.000000e+00> : vector<64xf32>
    %10 = vector.multi_reduction <add>, %7, %cst [1] : vector<64x128xf32> to vector<64xf32>
    %11 = vector.shape_cast %10 : vector<64xf32> to vector<64x1xf32>
    %cst_6 = arith.constant 1.280000e+02 : f32
    %12 = vector.broadcast %cst_6 : f32 to vector<64x1xf32>
    %13 = arith.divf %11, %12 : vector<64x1xf32>
    %14 = vector.broadcast %13 : vector<64x1xf32> to vector<64x128xf32>
    %15 = arith.subf %7, %14 : vector<64x128xf32>
    %16 = arith.mulf %15, %15 : vector<64x128xf32>
    %cst_7 = arith.constant dense<0.000000e+00> : vector<64xf32>
    %17 = vector.multi_reduction <add>, %16, %cst_7 [1] : vector<64x128xf32> to vector<64xf32>
    %18 = vector.shape_cast %17 : vector<64xf32> to vector<64x1xf32>
    %cst_8 = arith.constant 1.280000e+02 : f32
    %19 = vector.broadcast %cst_8 : f32 to vector<64x1xf32>
    %20 = arith.divf %18, %19 : vector<64x1xf32>
    %21 = vector.broadcast %13 : vector<64x1xf32> to vector<64x128xf32>
    %22 = arith.subf %7, %21 : vector<64x128xf32>
    %cst_9 = arith.constant 9.99999974E-6 : f32
    %23 = vector.broadcast %cst_9 : f32 to vector<64x1xf32>
    %24 = arith.addf %20, %23 : vector<64x1xf32>
    %25 = math.rsqrt %24 : vector<64x1xf32>
    %26 = vector.broadcast %25 : vector<64x1xf32> to vector<64x128xf32>
    %27 = arith.mulf %22, %26 : vector<64x128xf32>
    %28 = vector.broadcast %8 : vector<1x128xf32> to vector<64x128xf32>
    %29 = arith.mulf %27, %28 : vector<64x128xf32>
    %30 = vector.broadcast %9 : vector<1x128xf32> to vector<64x128xf32>
    %31 = arith.addf %29, %30 : vector<64x128xf32>
    %32 = arith.truncf %31 : vector<64x128xf32> to vector<64x128xbf16>
    %cst_10 = arith.constant 0.000000e+00 : f32
    %33 = vector.broadcast %cst_10 : f32 to vector<64x128xf32>
    %c0_11 = arith.constant 0 : index
    %c0_12 = arith.constant 0 : index
    %c0_13 = arith.constant 0 : index
    %34 = vector.load %arg5[%c0_11, %c0_12, %c0_13] : memref<4x128x32xbf16, #tpu.memory_space<vmem>>, vector<1x128x32xbf16>
    %35 = vector.shape_cast %34 : vector<1x128x32xbf16> to vector<128x32xbf16>
    %cst_14 = arith.constant dense<0.000000e+00> : vector<64x32xf32>
    %36 = tpu.matmul %32, %35, %cst_14 {dimension_numbers = #tpu.dot_dimension_numbers<[1], [0], [0], [1], [0, 0, 1, 1], [], []>} : vector<64x128xbf16>, vector<128x32xbf16>, vector<64x32xf32> -> vector<64x32xf32>
    %c0_15 = arith.constant 0 : index
    %c0_16 = arith.constant 0 : index
    %c0_17 = arith.constant 0 : index
    %37 = vector.load %arg6[%c0_15, %c0_16, %c0_17] : memref<4x1x32xf32, #tpu.memory_space<vmem>>, vector<1x1x32xf32>
    %38 = vector.shape_cast %37 : vector<1x1x32xf32> to vector<1x32xf32>
    %39 = vector.broadcast %38 : vector<1x32xf32> to vector<64x32xf32>
    %40 = arith.addf %36, %39 : vector<64x32xf32>
    %41 = arith.truncf %40 : vector<64x32xf32> to vector<64x32xbf16>
    %c0_18 = arith.constant 0 : index
    %c0_19 = arith.constant 0 : index
    %c0_20 = arith.constant 0 : index
    %42 = vector.load %arg20[%c0_18, %c0_19, %c0_20] : memref<4x64x32xbf16, #tpu.memory_space<vmem>>, vector<1x64x32xbf16>
    %43 = vector.shape_cast %42 : vector<1x64x32xbf16> to vector<64x32xbf16>
    %cst_21 = arith.constant dense<0.000000e+00> : vector<64x64xf32>
    %44 = tpu.matmul %41, %43, %cst_21 {dimension_numbers = #tpu.dot_dimension_numbers<[1], [1], [0], [0], [0, 0, 1, 0], [], []>} : vector<64x32xbf16>, vector<64x32xbf16>, vector<64x64xf32> -> vector<64x64xf32>
    %cst_22 = arith.constant 5.65685415 : f32
    %45 = vector.broadcast %cst_22 : f32 to vector<64x64xf32>
    %46 = arith.divf %44, %45 : vector<64x64xf32>
    %47 = math.floor %46 : vector<64x64xf32>
    %cst_23 = arith.constant dense<0xFF800000> : vector<64xf32>
    %48 = vector.multi_reduction <maximumf>, %47, %cst_23 [1] : vector<64x64xf32> to vector<64xf32>
    %49 = vector.shape_cast %48 : vector<64xf32> to vector<64x1xf32>
    %50 = vector.broadcast %49 : vector<64x1xf32> to vector<64x64xf32>
    %51 = arith.subf %47, %50 : vector<64x64xf32>
    %52 = math.exp %51 : vector<64x64xf32>
    %cst_24 = arith.constant dense<0.000000e+00> : vector<64xf32>
    %53 = vector.multi_reduction <add>, %52, %cst_24 [1] : vector<64x64xf32> to vector<64xf32>
    %54 = vector.shape_cast %53 : vector<64xf32> to vector<64x1xf32>
    %55 = tpu.reciprocal %54 {approx = true} : vector<64x1xf32> -> vector<64x1xf32>
    %56 = vector.broadcast %55 : vector<64x1xf32> to vector<64x64xf32>
    %57 = arith.mulf %52, %56 : vector<64x64xf32>
    %58 = arith.truncf %57 : vector<64x64xf32> to vector<64x64xbf16>
    %c0_25 = arith.constant 0 : index
    %c0_26 = arith.constant 0 : index
    %c0_27 = arith.constant 0 : index
    %59 = vector.load %arg21[%c0_25, %c0_26, %c0_27] : memref<4x64x32xbf16, #tpu.memory_space<vmem>>, vector<1x64x32xbf16>
    %60 = vector.shape_cast %59 : vector<1x64x32xbf16> to vector<64x32xbf16>
    %cst_28 = arith.constant dense<0.000000e+00> : vector<64x32xf32>
    %61 = tpu.matmul %58, %60, %cst_28 {dimension_numbers = #tpu.dot_dimension_numbers<[1], [0], [0], [1], [0, 0, 1, 1], [], []>} : vector<64x64xbf16>, vector<64x32xbf16>, vector<64x32xf32> -> vector<64x32xf32>
    %62 = arith.truncf %61 : vector<64x32xf32> to vector<64x32xbf16>
    %c0_29 = arith.constant 0 : index
    %c0_30 = arith.constant 0 : index
    %c0_31 = arith.constant 0 : index
    %63 = vector.load %arg11[%c0_29, %c0_30, %c0_31] : memref<4x32x128xbf16, #tpu.memory_space<vmem>>, vector<1x32x128xbf16>
    %64 = vector.shape_cast %63 : vector<1x32x128xbf16> to vector<32x128xbf16>
    %cst_32 = arith.constant dense<0.000000e+00> : vector<64x128xf32>
    %65 = tpu.matmul %62, %64, %cst_32 {dimension_numbers = #tpu.dot_dimension_numbers<[1], [0], [0], [1], [0, 0, 1, 1], [], []>} : vector<64x32xbf16>, vector<32x128xbf16>, vector<64x128xf32> -> vector<64x128xf32>
    %66 = arith.addf %33, %65 : vector<64x128xf32>
    %c1 = arith.constant 1 : index
    %c0_33 = arith.constant 0 : index
    %c0_34 = arith.constant 0 : index
    %67 = vector.load %arg5[%c1, %c0_33, %c0_34] : memref<4x128x32xbf16, #tpu.memory_space<vmem>>, vector<1x128x32xbf16>
    %68 = vector.shape_cast %67 : vector<1x128x32xbf16> to vector<128x32xbf16>
    %cst_35 = arith.constant dense<0.000000e+00> : vector<64x32xf32>
    %69 = tpu.matmul %32, %68, %cst_35 {dimension_numbers = #tpu.dot_dimension_numbers<[1], [0], [0], [1], [0, 0, 1, 1], [], []>} : vector<64x128xbf16>, vector<128x32xbf16>, vector<64x32xf32> -> vector<64x32xf32>
    %c1_36 = arith.constant 1 : index
    %c0_37 = arith.constant 0 : index
    %c0_38 = arith.constant 0 : index
    %70 = vector.load %arg6[%c1_36, %c0_37, %c0_38] : memref<4x1x32xf32, #tpu.memory_space<vmem>>, vector<1x1x32xf32>
    %71 = vector.shape_cast %70 : vector<1x1x32xf32> to vector<1x32xf32>
    %72 = vector.broadcast %71 : vector<1x32xf32> to vector<64x32xf32>
    %73 = arith.addf %69, %72 : vector<64x32xf32>
    %74 = arith.truncf %73 : vector<64x32xf32> to vector<64x32xbf16>
    %c1_39 = arith.constant 1 : index
    %c0_40 = arith.constant 0 : index
    %c0_41 = arith.constant 0 : index
    %75 = vector.load %arg20[%c1_39, %c0_40, %c0_41] : memref<4x64x32xbf16, #tpu.memory_space<vmem>>, vector<1x64x32xbf16>
    %76 = vector.shape_cast %75 : vector<1x64x32xbf16> to vector<64x32xbf16>
    %cst_42 = arith.constant dense<0.000000e+00> : vector<64x64xf32>
    %77 = tpu.matmul %74, %76, %cst_42 {dimension_numbers = #tpu.dot_dimension_numbers<[1], [1], [0], [0], [0, 0, 1, 0], [], []>} : vector<64x32xbf16>, vector<64x32xbf16>, vector<64x64xf32> -> vector<64x64xf32>
    %cst_43 = arith.constant 5.65685415 : f32
    %78 = vector.broadcast %cst_43 : f32 to vector<64x64xf32>
    %79 = arith.divf %77, %78 : vector<64x64xf32>
    %80 = math.floor %79 : vector<64x64xf32>
    %cst_44 = arith.constant dense<0xFF800000> : vector<64xf32>
    %81 = vector.multi_reduction <maximumf>, %80, %cst_44 [1] : vector<64x64xf32> to vector<64xf32>
    %82 = vector.shape_cast %81 : vector<64xf32> to vector<64x1xf32>
    %83 = vector.broadcast %82 : vector<64x1xf32> to vector<64x64xf32>
    %84 = arith.subf %80, %83 : vector<64x64xf32>
    %85 = math.exp %84 : vector<64x64xf32>
    %cst_45 = arith.constant dense<0.000000e+00> : vector<64xf32>
    %86 = vector.multi_reduction <add>, %85, %cst_45 [1] : vector<64x64xf32> to vector<64xf32>
    %87 = vector.shape_cast %86 : vector<64xf32> to vector<64x1xf32>
    %88 = tpu.reciprocal %87 {approx = true} : vector<64x1xf32> -> vector<64x1xf32>
    %89 = vector.broadcast %88 : vector<64x1xf32> to vector<64x64xf32>
    %90 = arith.mulf %85, %89 : vector<64x64xf32>
    %91 = arith.truncf %90 : vector<64x64xf32> to vector<64x64xbf16>
    %c1_46 = arith.constant 1 : index
    %c0_47 = arith.constant 0 : index
    %c0_48 = arith.constant 0 : index
    %92 = vector.load %arg21[%c1_46, %c0_47, %c0_48] : memref<4x64x32xbf16, #tpu.memory_space<vmem>>, vector<1x64x32xbf16>
    %93 = vector.shape_cast %92 : vector<1x64x32xbf16> to vector<64x32xbf16>
    %cst_49 = arith.constant dense<0.000000e+00> : vector<64x32xf32>
    %94 = tpu.matmul %91, %93, %cst_49 {dimension_numbers = #tpu.dot_dimension_numbers<[1], [0], [0], [1], [0, 0, 1, 1], [], []>} : vector<64x64xbf16>, vector<64x32xbf16>, vector<64x32xf32> -> vector<64x32xf32>
    %95 = arith.truncf %94 : vector<64x32xf32> to vector<64x32xbf16>
    %c1_50 = arith.constant 1 : index
    %c0_51 = arith.constant 0 : index
    %c0_52 = arith.constant 0 : index
    %96 = vector.load %arg11[%c1_50, %c0_51, %c0_52] : memref<4x32x128xbf16, #tpu.memory_space<vmem>>, vector<1x32x128xbf16>
    %97 = vector.shape_cast %96 : vector<1x32x128xbf16> to vector<32x128xbf16>
    %cst_53 = arith.constant dense<0.000000e+00> : vector<64x128xf32>
    %98 = tpu.matmul %95, %97, %cst_53 {dimension_numbers = #tpu.dot_dimension_numbers<[1], [0], [0], [1], [0, 0, 1, 1], [], []>} : vector<64x32xbf16>, vector<32x128xbf16>, vector<64x128xf32> -> vector<64x128xf32>
    %99 = arith.addf %66, %98 : vector<64x128xf32>
    %c2 = arith.constant 2 : index
    %c0_54 = arith.constant 0 : index
    %c0_55 = arith.constant 0 : index
    %100 = vector.load %arg5[%c2, %c0_54, %c0_55] : memref<4x128x32xbf16, #tpu.memory_space<vmem>>, vector<1x128x32xbf16>
    %101 = vector.shape_cast %100 : vector<1x128x32xbf16> to vector<128x32xbf16>
    %cst_56 = arith.constant dense<0.000000e+00> : vector<64x32xf32>
    %102 = tpu.matmul %32, %101, %cst_56 {dimension_numbers = #tpu.dot_dimension_numbers<[1], [0], [0], [1], [0, 0, 1, 1], [], []>} : vector<64x128xbf16>, vector<128x32xbf16>, vector<64x32xf32> -> vector<64x32xf32>
    %c2_57 = arith.constant 2 : index
    %c0_58 = arith.constant 0 : index
    %c0_59 = arith.constant 0 : index
    %103 = vector.load %arg6[%c2_57, %c0_58, %c0_59] : memref<4x1x32xf32, #tpu.memory_space<vmem>>, vector<1x1x32xf32>
    %104 = vector.shape_cast %103 : vector<1x1x32xf32> to vector<1x32xf32>
    %105 = vector.broadcast %104 : vector<1x32xf32> to vector<64x32xf32>
    %106 = arith.addf %102, %105 : vector<64x32xf32>
    %107 = arith.truncf %106 : vector<64x32xf32> to vector<64x32xbf16>
    %c2_60 = arith.constant 2 : index
    %c0_61 = arith.constant 0 : index
    %c0_62 = arith.constant 0 : index
    %108 = vector.load %arg20[%c2_60, %c0_61, %c0_62] : memref<4x64x32xbf16, #tpu.memory_space<vmem>>, vector<1x64x32xbf16>
    %109 = vector.shape_cast %108 : vector<1x64x32xbf16> to vector<64x32xbf16>
    %cst_63 = arith.constant dense<0.000000e+00> : vector<64x64xf32>
    %110 = tpu.matmul %107, %109, %cst_63 {dimension_numbers = #tpu.dot_dimension_numbers<[1], [1], [0], [0], [0, 0, 1, 0], [], []>} : vector<64x32xbf16>, vector<64x32xbf16>, vector<64x64xf32> -> vector<64x64xf32>
    %cst_64 = arith.constant 5.65685415 : f32
    %111 = vector.broadcast %cst_64 : f32 to vector<64x64xf32>
    %112 = arith.divf %110, %111 : vector<64x64xf32>
    %113 = math.floor %112 : vector<64x64xf32>
    %cst_65 = arith.constant dense<0xFF800000> : vector<64xf32>
    %114 = vector.multi_reduction <maximumf>, %113, %cst_65 [1] : vector<64x64xf32> to vector<64xf32>
    %115 = vector.shape_cast %114 : vector<64xf32> to vector<64x1xf32>
    %116 = vector.broadcast %115 : vector<64x1xf32> to vector<64x64xf32>
    %117 = arith.subf %113, %116 : vector<64x64xf32>
    %118 = math.exp %117 : vector<64x64xf32>
    %cst_66 = arith.constant dense<0.000000e+00> : vector<64xf32>
    %119 = vector.multi_reduction <add>, %118, %cst_66 [1] : vector<64x64xf32> to vector<64xf32>
    %120 = vector.shape_cast %119 : vector<64xf32> to vector<64x1xf32>
    %121 = tpu.reciprocal %120 {approx = true} : vector<64x1xf32> -> vector<64x1xf32>
    %122 = vector.broadcast %121 : vector<64x1xf32> to vector<64x64xf32>
    %123 = arith.mulf %118, %122 : vector<64x64xf32>
    %124 = arith.truncf %123 : vector<64x64xf32> to vector<64x64xbf16>
    %c2_67 = arith.constant 2 : index
    %c0_68 = arith.constant 0 : index
    %c0_69 = arith.constant 0 : index
    %125 = vector.load %arg21[%c2_67, %c0_68, %c0_69] : memref<4x64x32xbf16, #tpu.memory_space<vmem>>, vector<1x64x32xbf16>
    %126 = vector.shape_cast %125 : vector<1x64x32xbf16> to vector<64x32xbf16>
    %cst_70 = arith.constant dense<0.000000e+00> : vector<64x32xf32>
    %127 = tpu.matmul %124, %126, %cst_70 {dimension_numbers = #tpu.dot_dimension_numbers<[1], [0], [0], [1], [0, 0, 1, 1], [], []>} : vector<64x64xbf16>, vector<64x32xbf16>, vector<64x32xf32> -> vector<64x32xf32>
    %128 = arith.truncf %127 : vector<64x32xf32> to vector<64x32xbf16>
    %c2_71 = arith.constant 2 : index
    %c0_72 = arith.constant 0 : index
    %c0_73 = arith.constant 0 : index
    %129 = vector.load %arg11[%c2_71, %c0_72, %c0_73] : memref<4x32x128xbf16, #tpu.memory_space<vmem>>, vector<1x32x128xbf16>
    %130 = vector.shape_cast %129 : vector<1x32x128xbf16> to vector<32x128xbf16>
    %cst_74 = arith.constant dense<0.000000e+00> : vector<64x128xf32>
    %131 = tpu.matmul %128, %130, %cst_74 {dimension_numbers = #tpu.dot_dimension_numbers<[1], [0], [0], [1], [0, 0, 1, 1], [], []>} : vector<64x32xbf16>, vector<32x128xbf16>, vector<64x128xf32> -> vector<64x128xf32>
    %132 = arith.addf %99, %131 : vector<64x128xf32>
    %c3 = arith.constant 3 : index
    %c0_75 = arith.constant 0 : index
    %c0_76 = arith.constant 0 : index
    %133 = vector.load %arg5[%c3, %c0_75, %c0_76] : memref<4x128x32xbf16, #tpu.memory_space<vmem>>, vector<1x128x32xbf16>
    %134 = vector.shape_cast %133 : vector<1x128x32xbf16> to vector<128x32xbf16>
    %cst_77 = arith.constant dense<0.000000e+00> : vector<64x32xf32>
    %135 = tpu.matmul %32, %134, %cst_77 {dimension_numbers = #tpu.dot_dimension_numbers<[1], [0], [0], [1], [0, 0, 1, 1], [], []>} : vector<64x128xbf16>, vector<128x32xbf16>, vector<64x32xf32> -> vector<64x32xf32>
    %c3_78 = arith.constant 3 : index
    %c0_79 = arith.constant 0 : index
    %c0_80 = arith.constant 0 : index
    %136 = vector.load %arg6[%c3_78, %c0_79, %c0_80] : memref<4x1x32xf32, #tpu.memory_space<vmem>>, vector<1x1x32xf32>
    %137 = vector.shape_cast %136 : vector<1x1x32xf32> to vector<1x32xf32>
    %138 = vector.broadcast %137 : vector<1x32xf32> to vector<64x32xf32>
    %139 = arith.addf %135, %138 : vector<64x32xf32>
    %140 = arith.truncf %139 : vector<64x32xf32> to vector<64x32xbf16>
    %c3_81 = arith.constant 3 : index
    %c0_82 = arith.constant 0 : index
    %c0_83 = arith.constant 0 : index
    %141 = vector.load %arg20[%c3_81, %c0_82, %c0_83] : memref<4x64x32xbf16, #tpu.memory_space<vmem>>, vector<1x64x32xbf16>
    %142 = vector.shape_cast %141 : vector<1x64x32xbf16> to vector<64x32xbf16>
    %cst_84 = arith.constant dense<0.000000e+00> : vector<64x64xf32>
    %143 = tpu.matmul %140, %142, %cst_84 {dimension_numbers = #tpu.dot_dimension_numbers<[1], [1], [0], [0], [0, 0, 1, 0], [], []>} : vector<64x32xbf16>, vector<64x32xbf16>, vector<64x64xf32> -> vector<64x64xf32>
    %cst_85 = arith.constant 5.65685415 : f32
    %144 = vector.broadcast %cst_85 : f32 to vector<64x64xf32>
    %145 = arith.divf %143, %144 : vector<64x64xf32>
    %146 = math.floor %145 : vector<64x64xf32>
    %cst_86 = arith.constant dense<0xFF800000> : vector<64xf32>
    %147 = vector.multi_reduction <maximumf>, %146, %cst_86 [1] : vector<64x64xf32> to vector<64xf32>
    %148 = vector.shape_cast %147 : vector<64xf32> to vector<64x1xf32>
    %149 = vector.broadcast %148 : vector<64x1xf32> to vector<64x64xf32>
    %150 = arith.subf %146, %149 : vector<64x64xf32>
    %151 = math.exp %150 : vector<64x64xf32>
    %cst_87 = arith.constant dense<0.000000e+00> : vector<64xf32>
    %152 = vector.multi_reduction <add>, %151, %cst_87 [1] : vector<64x64xf32> to vector<64xf32>
    %153 = vector.shape_cast %152 : vector<64xf32> to vector<64x1xf32>
    %154 = tpu.reciprocal %153 {approx = true} : vector<64x1xf32> -> vector<64x1xf32>
    %155 = vector.broadcast %154 : vector<64x1xf32> to vector<64x64xf32>
    %156 = arith.mulf %151, %155 : vector<64x64xf32>
    %157 = arith.truncf %156 : vector<64x64xf32> to vector<64x64xbf16>
    %c3_88 = arith.constant 3 : index
    %c0_89 = arith.constant 0 : index
    %c0_90 = arith.constant 0 : index
    %158 = vector.load %arg21[%c3_88, %c0_89, %c0_90] : memref<4x64x32xbf16, #tpu.memory_space<vmem>>, vector<1x64x32xbf16>
    %159 = vector.shape_cast %158 : vector<1x64x32xbf16> to vector<64x32xbf16>
    %cst_91 = arith.constant dense<0.000000e+00> : vector<64x32xf32>
    %160 = tpu.matmul %157, %159, %cst_91 {dimension_numbers = #tpu.dot_dimension_numbers<[1], [0], [0], [1], [0, 0, 1, 1], [], []>} : vector<64x64xbf16>, vector<64x32xbf16>, vector<64x32xf32> -> vector<64x32xf32>
    %161 = arith.truncf %160 : vector<64x32xf32> to vector<64x32xbf16>
    %c3_92 = arith.constant 3 : index
    %c0_93 = arith.constant 0 : index
    %c0_94 = arith.constant 0 : index
    %162 = vector.load %arg11[%c3_92, %c0_93, %c0_94] : memref<4x32x128xbf16, #tpu.memory_space<vmem>>, vector<1x32x128xbf16>
    %163 = vector.shape_cast %162 : vector<1x32x128xbf16> to vector<32x128xbf16>
    %cst_95 = arith.constant dense<0.000000e+00> : vector<64x128xf32>
    %164 = tpu.matmul %161, %163, %cst_95 {dimension_numbers = #tpu.dot_dimension_numbers<[1], [0], [0], [1], [0, 0, 1, 1], [], []>} : vector<64x32xbf16>, vector<32x128xbf16>, vector<64x128xf32> -> vector<64x128xf32>
    %165 = arith.addf %132, %164 : vector<64x128xf32>
    %166 = arith.addf %7, %165 : vector<64x128xf32>
    %c0_96 = arith.constant 0 : index
    %c0_97 = arith.constant 0 : index
    %167 = vector.load %arg12[%c0_96, %c0_97] : memref<1x128xf32, #tpu.memory_space<vmem>>, vector<1x128xf32>
    %168 = vector.broadcast %167 : vector<1x128xf32> to vector<64x128xf32>
    %169 = arith.addf %166, %168 : vector<64x128xf32>
    %c0_98 = arith.constant 0 : index
    %c0_99 = arith.constant 0 : index
    %170 = vector.load %arg13[%c0_98, %c0_99] : memref<1x128xf32, #tpu.memory_space<vmem>>, vector<1x128xf32>
    %c0_100 = arith.constant 0 : index
    %c0_101 = arith.constant 0 : index
    %171 = vector.load %arg14[%c0_100, %c0_101] : memref<1x128xf32, #tpu.memory_space<vmem>>, vector<1x128xf32>
    %cst_102 = arith.constant dense<0.000000e+00> : vector<64xf32>
    %172 = vector.multi_reduction <add>, %169, %cst_102 [1] : vector<64x128xf32> to vector<64xf32>
    %173 = vector.shape_cast %172 : vector<64xf32> to vector<64x1xf32>
    %cst_103 = arith.constant 1.280000e+02 : f32
    %174 = vector.broadcast %cst_103 : f32 to vector<64x1xf32>
    %175 = arith.divf %173, %174 : vector<64x1xf32>
    %176 = vector.broadcast %175 : vector<64x1xf32> to vector<64x128xf32>
    %177 = arith.subf %169, %176 : vector<64x128xf32>
    %178 = arith.mulf %177, %177 : vector<64x128xf32>
    %cst_104 = arith.constant dense<0.000000e+00> : vector<64xf32>
    %179 = vector.multi_reduction <add>, %178, %cst_104 [1] : vector<64x128xf32> to vector<64xf32>
    %180 = vector.shape_cast %179 : vector<64xf32> to vector<64x1xf32>
    %cst_105 = arith.constant 1.280000e+02 : f32
    %181 = vector.broadcast %cst_105 : f32 to vector<64x1xf32>
    %182 = arith.divf %180, %181 : vector<64x1xf32>
    %183 = vector.broadcast %175 : vector<64x1xf32> to vector<64x128xf32>
    %184 = arith.subf %169, %183 : vector<64x128xf32>
    %cst_106 = arith.constant 9.99999974E-6 : f32
    %185 = vector.broadcast %cst_106 : f32 to vector<64x1xf32>
    %186 = arith.addf %182, %185 : vector<64x1xf32>
    %187 = math.rsqrt %186 : vector<64x1xf32>
    %188 = vector.broadcast %187 : vector<64x1xf32> to vector<64x128xf32>
    %189 = arith.mulf %184, %188 : vector<64x128xf32>
    %190 = vector.broadcast %170 : vector<1x128xf32> to vector<64x128xf32>
    %191 = arith.mulf %189, %190 : vector<64x128xf32>
    %192 = vector.broadcast %171 : vector<1x128xf32> to vector<64x128xf32>
    %193 = arith.addf %191, %192 : vector<64x128xf32>
    %194 = arith.truncf %193 : vector<64x128xf32> to vector<64x128xbf16>
    %c0_107 = arith.constant 0 : index
    %c0_108 = arith.constant 0 : index
    %195 = vector.load %arg15[%c0_107, %c0_108] : memref<128x256xbf16, #tpu.memory_space<vmem>>, vector<128x256xbf16>
    %cst_109 = arith.constant dense<0.000000e+00> : vector<64x256xf32>
    %196 = tpu.matmul %194, %195, %cst_109 {dimension_numbers = #tpu.dot_dimension_numbers<[1], [0], [0], [1], [0, 0, 1, 1], [], []>} : vector<64x128xbf16>, vector<128x256xbf16>, vector<64x256xf32> -> vector<64x256xf32>
    %c0_110 = arith.constant 0 : index
    %c0_111 = arith.constant 0 : index
    %197 = vector.load %arg16[%c0_110, %c0_111] : memref<1x256xf32, #tpu.memory_space<vmem>>, vector<1x256xf32>
    %198 = vector.broadcast %197 : vector<1x256xf32> to vector<64x256xf32>
    %199 = arith.addf %196, %198 : vector<64x256xf32>
    %cst_112 = arith.constant 0.000000e+00 : f32
    %200 = vector.broadcast %cst_112 : f32 to vector<64x256xf32>
    %201 = arith.maximumf %199, %200 : vector<64x256xf32>
    %202 = arith.truncf %201 : vector<64x256xf32> to vector<64x256xbf16>
    %c0_113 = arith.constant 0 : index
    %c0_114 = arith.constant 0 : index
    %203 = vector.load %arg17[%c0_113, %c0_114] : memref<256x128xbf16, #tpu.memory_space<vmem>>, vector<256x128xbf16>
    %cst_115 = arith.constant dense<0.000000e+00> : vector<64x128xf32>
    %204 = tpu.matmul %202, %203, %cst_115 {dimension_numbers = #tpu.dot_dimension_numbers<[1], [0], [0], [1], [0, 0, 1, 1], [], []>} : vector<64x256xbf16>, vector<256x128xbf16>, vector<64x128xf32> -> vector<64x128xf32>
    %c0_116 = arith.constant 0 : index
    %c0_117 = arith.constant 0 : index
    %205 = vector.load %arg18[%c0_116, %c0_117] : memref<1x128xf32, #tpu.memory_space<vmem>>, vector<1x128xf32>
    %206 = vector.broadcast %205 : vector<1x128xf32> to vector<64x128xf32>
    %207 = arith.addf %204, %206 : vector<64x128xf32>
    %208 = arith.addf %169, %207 : vector<64x128xf32>
    %c0_118 = arith.constant 0 : index
    %c0_119 = arith.constant 0 : index
    %c0_120 = arith.constant 0 : index
    %209 = vector.load %arg19[%c0_118, %c0_119, %c0_120] : memref<1x64x128xf32, #tpu.memory_space<vmem>>, vector<1x64x128xf32>
    %210 = vector.shape_cast %209 : vector<1x64x128xf32> to vector<64x128xf32>
    %211 = vector.shape_cast %208 : vector<64x128xf32> to vector<1x64x128xf32>
    tpu.vector_store %arg19[%c0_118, %c0_119, %c0_120], %211 {strides = array<i32>} : memref<1x64x128xf32, #tpu.memory_space<vmem>>, vector<1x64x128xf32>,
    return
  }
  func.func @transform_0(%arg0: i32, %arg1: i32) -> (i32, i32, i32) {
    %c0_i32 = arith.constant 0 : i32
    %c0_i32_0 = arith.constant 0 : i32
    %c0_i32_1 = arith.constant 0 : i32
    return %arg0, %c0_i32, %c0_i32_0 : i32, i32, i32
  }
  func.func @transform_1(%arg0: i32, %arg1: i32) -> (i32, i32) {
    %c0_i32 = arith.constant 0 : i32
    %c0_i32_0 = arith.constant 0 : i32
    %c0_i32_1 = arith.constant 0 : i32
    return %c0_i32, %c0_i32_0 : i32, i32
  }
  func.func @transform_2(%arg0: i32, %arg1: i32) -> (i32, i32) {
    %c0_i32 = arith.constant 0 : i32
    %c0_i32_0 = arith.constant 0 : i32
    %c0_i32_1 = arith.constant 0 : i32
    return %c0_i32, %c0_i32_0 : i32, i32
  }
  func.func @transform_3(%arg0: i32, %arg1: i32) -> (i32, i32, i32) {
    %c0_i32 = arith.constant 0 : i32
    %c0_i32_0 = arith.constant 0 : i32
    %c0_i32_1 = arith.constant 0 : i32
    %c0_i32_2 = arith.constant 0 : i32
    return %c0_i32, %c0_i32_0, %c0_i32_1 : i32, i32, i32
  }
  func.func @transform_4(%arg0: i32, %arg1: i32) -> (i32, i32, i32) {
    %c0_i32 = arith.constant 0 : i32
    %c0_i32_0 = arith.constant 0 : i32
    %c0_i32_1 = arith.constant 0 : i32
    %c0_i32_2 = arith.constant 0 : i32
    return %c0_i32, %c0_i32_0, %c0_i32_1 : i32, i32, i32
  }
  func.func @transform_5(%arg0: i32, %arg1: i32) -> (i32, i32, i32) {
    %c0_i32 = arith.constant 0 : i32
    %c0_i32_0 = arith.constant 0 : i32
    %c0_i32_1 = arith.constant 0 : i32
    %c0_i32_2 = arith.constant 0 : i32
    return %c0_i32, %c0_i32_0, %c0_i32_1 : i32, i32, i32
  }
  func.func @transform_6(%arg0: i32, %arg1: i32) -> (i32, i32, i32) {
    %c0_i32 = arith.constant 0 : i32
    %c0_i32_0 = arith.constant 0 : i32
    %c0_i32_1 = arith.constant 0 : i32
    %c0_i32_2 = arith.constant 0 : i32
    return %c0_i32, %c0_i32_0, %c0_i32_1 : i32, i32, i32
  }
  func.func @transform_7(%arg0: i32, %arg1: i32) -> (i32, i32, i32) {
    %c0_i32 = arith.constant 0 : i32
    %c0_i32_0 = arith.constant 0 : i32
    %c0_i32_1 = arith.constant 0 : i32
    %c0_i32_2 = arith.constant 0 : i32
    return %c0_i32, %c0_i32_0, %c0_i32_1 : i32, i32, i32
  }
  func.func @transform_8(%arg0: i32, %arg1: i32) -> (i32, i32, i32) {
    %c0_i32 = arith.constant 0 : i32
    %c0_i32_0 = arith.constant 0 : i32
    %c0_i32_1 = arith.constant 0 : i32
    %c0_i32_2 = arith.constant 0 : i32
    return %c0_i32, %c0_i32_0, %c0_i32_1 : i32, i32, i32
  }
  func.func @transform_9(%arg0: i32, %arg1: i32) -> (i32, i32, i32) {
    %c0_i32 = arith.constant 0 : i32
    %c0_i32_0 = arith.constant 0 : i32
    %c0_i32_1 = arith.constant 0 : i32
    %c0_i32_2 = arith.constant 0 : i32
    return %c0_i32, %c0_i32_0, %c0_i32_1 : i32, i32, i32
  }
  func.func @transform_10(%arg0: i32, %arg1: i32) -> (i32, i32) {
    %c0_i32 = arith.constant 0 : i32
    %c0_i32_0 = arith.constant 0 : i32
    %c0_i32_1 = arith.constant 0 : i32
    return %c0_i32, %c0_i32_0 : i32, i32
  }
  func.func @transform_11(%arg0: i32, %arg1: i32) -> (i32, i32) {
    %c0_i32 = arith.constant 0 : i32
    %c0_i32_0 = arith.constant 0 : i32
    %c0_i32_1 = arith.constant 0 : i32
    return %c0_i32, %c0_i32_0 : i32, i32
  }
  func.func @transform_12(%arg0: i32, %arg1: i32) -> (i32, i32) {
    %c0_i32 = arith.constant 0 : i32
    %c0_i32_0 = arith.constant 0 : i32
    %c0_i32_1 = arith.constant 0 : i32
    return %c0_i32, %c0_i32_0 : i32, i32
  }
  func.func @transform_13(%arg0: i32, %arg1: i32) -> (i32, i32) {
    %c0_i32 = arith.constant 0 : i32
    %c0_i32_0 = arith.constant 0 : i32
    %c0_i32_1 = arith.constant 0 : i32
    return %c0_i32, %c0_i32_0 : i32, i32
  }
  func.func @transform_14(%arg0: i32, %arg1: i32) -> (i32, i32) {
    %c0_i32 = arith.constant 0 : i32
    %c0_i32_0 = arith.constant 0 : i32
    %c0_i32_1 = arith.constant 0 : i32
    return %c0_i32, %c0_i32_0 : i32, i32
  }
  func.func @transform_15(%arg0: i32, %arg1: i32) -> (i32, i32) {
    %c0_i32 = arith.constant 0 : i32
    %c0_i32_0 = arith.constant 0 : i32
    %c0_i32_1 = arith.constant 0 : i32
    return %c0_i32, %c0_i32_0 : i32, i32
  }
  func.func @transform_16(%arg0: i32, %arg1: i32) -> (i32, i32) {
    %c0_i32 = arith.constant 0 : i32
    %c0_i32_0 = arith.constant 0 : i32
    %c0_i32_1 = arith.constant 0 : i32
    return %c0_i32, %c0_i32_0 : i32, i32
  }
  func.func @transform_17(%arg0: i32, %arg1: i32) -> (i32, i32, i32) {
    %c0_i32 = arith.constant 0 : i32
    %c0_i32_0 = arith.constant 0 : i32
    return %arg0, %arg1, %c0_i32 : i32, i32, i32
  }
}

module attributes {stable_mosaic.version = 11 : i64} {
  func.func @encoder_block_kernel(%arg0: i32, %arg1: i32, %arg2: memref<1x64x128xf32, #tpu.memory_space<vmem>>, %arg3: memref<1x128xf32, #tpu.memory_space<vmem>>, %arg4: memref<1x128xf32, #tpu.memory_space<vmem>>, %arg5: memref<4x128x32xbf16, #tpu.memory_space<vmem>>, %arg6: memref<4x1x32xf32, #tpu.memory_space<vmem>>, %arg7: memref<4x128x32xbf16, #tpu.memory_space<vmem>>, %arg8: memref<4x1x32xf32, #tpu.memory_space<vmem>>, %arg9: memref<4x128x32xbf16, #tpu.memory_space<vmem>>, %arg10: memref<4x1x32xf32, #tpu.memory_space<vmem>>, %arg11: memref<4x32x128xbf16, #tpu.memory_space<vmem>>, %arg12: memref<1x128xf32, #tpu.memory_space<vmem>>, %arg13: memref<1x128xf32, #tpu.memory_space<vmem>>, %arg14: memref<1x128xf32, #tpu.memory_space<vmem>>, %arg15: memref<128x256xbf16, #tpu.memory_space<vmem>>, %arg16: memref<1x256xf32, #tpu.memory_space<vmem>>, %arg17: memref<256x128xbf16, #tpu.memory_space<vmem>>, %arg18: memref<1x128xf32, #tpu.memory_space<vmem>>, %arg19: memref<1x64x128xf32, #tpu.memory_space<vmem>>, %arg20: memref<4x64x32xbf16, #tpu.memory_space<vmem>>, %arg21: memref<4x64x32xbf16, #tpu.memory_space<vmem>>) attributes {dimension_semantics = [#tpu.dimension_semantics<parallel>, #tpu.dimension_semantics<arbitrary>], iteration_bounds = array<i64: 2, 1>, scalar_prefetch = 0 : i64, scratch_operands = 2 : i64, tpu.core_type = #tpu.core_type<tc>, window_params = [{transform_indices = @transform_0, window_bounds = array<i64: 1, 64, 128>}, {pipeline_mode = #tpu.pipeline_mode<synchronous>, transform_indices = @transform_1, window_bounds = array<i64: 1, 128>}, {pipeline_mode = #tpu.pipeline_mode<synchronous>, transform_indices = @transform_2, window_bounds = array<i64: 1, 128>}, {pipeline_mode = #tpu.pipeline_mode<synchronous>, transform_indices = @transform_3, window_bounds = array<i64: 4, 128, 32>}, {pipeline_mode = #tpu.pipeline_mode<synchronous>, transform_indices = @transform_4, window_bounds = array<i64: 4, 1, 32>}, {pipeline_mode = #tpu.pipeline_mode<synchronous>, transform_indices = @transform_5, window_bounds = array<i64: 4, 128, 32>}, {pipeline_mode = #tpu.pipeline_mode<synchronous>, transform_indices = @transform_6, window_bounds = array<i64: 4, 1, 32>}, {pipeline_mode = #tpu.pipeline_mode<synchronous>, transform_indices = @transform_7, window_bounds = array<i64: 4, 128, 32>}, {pipeline_mode = #tpu.pipeline_mode<synchronous>, transform_indices = @transform_8, window_bounds = array<i64: 4, 1, 32>}, {pipeline_mode = #tpu.pipeline_mode<synchronous>, transform_indices = @transform_9, window_bounds = array<i64: 4, 32, 128>}, {pipeline_mode = #tpu.pipeline_mode<synchronous>, transform_indices = @transform_10, window_bounds = array<i64: 1, 128>}, {pipeline_mode = #tpu.pipeline_mode<synchronous>, transform_indices = @transform_11, window_bounds = array<i64: 1, 128>}, {pipeline_mode = #tpu.pipeline_mode<synchronous>, transform_indices = @transform_12, window_bounds = array<i64: 1, 128>}, {pipeline_mode = #tpu.pipeline_mode<synchronous>, transform_indices = @transform_13, window_bounds = array<i64: 128, 256>}, {pipeline_mode = #tpu.pipeline_mode<synchronous>, transform_indices = @transform_14, window_bounds = array<i64: 1, 256>}, {pipeline_mode = #tpu.pipeline_mode<synchronous>, transform_indices = @transform_15, window_bounds = array<i64: 256, 128>}, {pipeline_mode = #tpu.pipeline_mode<synchronous>, transform_indices = @transform_16, window_bounds = array<i64: 1, 128>}, {transform_indices = @transform_17, window_bounds = array<i64: 1, 64, 128>}]} {
    %c0_i32 = arith.constant 0 : i32
    %0 = arith.cmpi eq, %arg1, %c0_i32 : i32
    %1 = arith.extui %0 : i1 to i32
    %c0_i32_0 = arith.constant 0 : i32
    %2 = arith.cmpi ne, %1, %c0_i32_0 : i32
    scf.if %2 {
      %c0_i32_121 = arith.constant 0 : i32
      %c64_i32_122 = arith.constant 64 : i32
      %212 = arith.muli %c0_i32_121, %c64_i32_122 : i32
      %213 = tpu.assume_multiple %212, 64 : i32
      %c0_123 = arith.constant 0 : index
      %214 = arith.index_cast %213 : i32 to index
      %c0_124 = arith.constant 0 : index
      %215 = vector.load %arg2[%c0_123, %214, %c0_124] : memref<1x64x128xf32, #tpu.memory_space<vmem>>, vector<1x64x128xf32>
      %216 = vector.shape_cast %215 : vector<1x64x128xf32> to vector<64x128xf32>
      %c0_125 = arith.constant 0 : index
      %c0_126 = arith.constant 0 : index
      %217 = vector.load %arg3[%c0_125, %c0_126] : memref<1x128xf32, #tpu.memory_space<vmem>>, vector<1x128xf32>
      %c0_127 = arith.constant 0 : index
      %c0_128 = arith.constant 0 : index
      %218 = vector.load %arg4[%c0_127, %c0_128] : memref<1x128xf32, #tpu.memory_space<vmem>>, vector<1x128xf32>
      %cst_129 = arith.constant dense<0.000000e+00> : vector<64xf32>
      %219 = vector.multi_reduction <add>, %216, %cst_129 [1] : vector<64x128xf32> to vector<64xf32>
      %220 = vector.shape_cast %219 : vector<64xf32> to vector<64x1xf32>
      %cst_130 = arith.constant 1.280000e+02 : f32
      %221 = vector.broadcast %cst_130 : f32 to vector<64x1xf32>
      %222 = arith.divf %220, %221 : vector<64x1xf32>
      %223 = vector.broadcast %222 : vector<64x1xf32> to vector<64x128xf32>
      %224 = arith.subf %216, %223 : vector<64x128xf32>
      %225 = arith.mulf %224, %224 : vector<64x128xf32>
      %cst_131 = arith.constant dense<0.000000e+00> : vector<64xf32>
      %226 = vector.multi_reduction <add>, %225, %cst_131 [1] : vector<64x128xf32> to vector<64xf32>
      %227 = vector.shape_cast %226 : vector<64xf32> to vector<64x1xf32>
      %cst_132 = arith.constant 1.280000e+02 : f32
      %228 = vector.broadcast %cst_132 : f32 to vector<64x1xf32>
      %229 = arith.divf %227, %228 : vector<64x1xf32>
      %230 = vector.broadcast %222 : vector<64x1xf32> to vector<64x128xf32>
      %231 = arith.subf %216, %230 : vector<64x128xf32>
      %cst_133 = arith.constant 9.99999974E-6 : f32
      %232 = vector.broadcast %cst_133 : f32 to vector<64x1xf32>
      %233 = arith.addf %229, %232 : vector<64x1xf32>
      %234 = math.rsqrt %233 : vector<64x1xf32>
      %235 = vector.broadcast %234 : vector<64x1xf32> to vector<64x128xf32>
      %236 = arith.mulf %231, %235 : vector<64x128xf32>
      %237 = vector.broadcast %217 : vector<1x128xf32> to vector<64x128xf32>
      %238 = arith.mulf %236, %237 : vector<64x128xf32>
      %239 = vector.broadcast %218 : vector<1x128xf32> to vector<64x128xf32>
      %240 = arith.addf %238, %239 : vector<64x128xf32>
      %241 = arith.truncf %240 : vector<64x128xf32> to vector<64x128xbf16>
      %c0_134 = arith.constant 0 : index
      %c0_135 = arith.constant 0 : index
      %c0_136 = arith.constant 0 : index
      %242 = vector.load %arg7[%c0_134, %c0_135, %c0_136] : memref<4x128x32xbf16, #tpu.memory_space<vmem>>, vector<1x128x32xbf16>
      %243 = vector.shape_cast %242 : vector<1x128x32xbf16> to vector<128x32xbf16>
      %cst_137 = arith.constant dense<0.000000e+00> : vector<64x32xf32>
      %244 = tpu.matmul %241, %243, %cst_137 {dimension_numbers = #tpu.dot_dimension_numbers<[1], [0], [0], [1], [0, 0, 1, 1], [], []>} : vector<64x128xbf16>, vector<128x32xbf16>, vector<64x32xf32> -> vector<64x32xf32>
      %c0_138 = arith.constant 0 : index
      %c0_139 = arith.constant 0 : index
      %c0_140 = arith.constant 0 : index
      %245 = vector.load %arg8[%c0_138, %c0_139, %c0_140] : memref<4x1x32xf32, #tpu.memory_space<vmem>>, vector<1x1x32xf32>
      %246 = vector.shape_cast %245 : vector<1x1x32xf32> to vector<1x32xf32>
      %247 = vector.broadcast %246 : vector<1x32xf32> to vector<64x32xf32>
      %248 = arith.addf %244, %247 : vector<64x32xf32>
      %c0_141 = arith.constant 0 : index
      %c0_142 = arith.constant 0 : index
      %c0_143 = arith.constant 0 : index
      %249 = vector.load %arg9[%c0_141, %c0_142, %c0_143] : memref<4x128x32xbf16, #tpu.memory_space<vmem>>, vector<1x128x32xbf16>
      %250 = vector.shape_cast %249 : vector<1x128x32xbf16> to vector<128x32xbf16>
      %cst_144 = arith.constant dense<0.000000e+00> : vector<64x32xf32>
      %251 = tpu.matmul %241, %250, %cst_144 {dimension_numbers = #tpu.dot_dimension_numbers<[1], [0], [0], [1], [0, 0, 1, 1], [], []>} : vector<64x128xbf16>, vector<128x32xbf16>, vector<64x32xf32> -> vector<64x32xf32>
      %c0_145 = arith.constant 0 : index
      %c0_146 = arith.constant 0 : index
      %c0_147 = arith.constant 0 : index
      %252 = vector.load %arg10[%c0_145, %c0_146, %c0_147] : memref<4x1x32xf32, #tpu.memory_space<vmem>>, vector<1x1x32xf32>
      %253 = vector.shape_cast %252 : vector<1x1x32xf32> to vector<1x32xf32>
      %254 = vector.broadcast %253 : vector<1x32xf32> to vector<64x32xf32>
      %255 = arith.addf %251, %254 : vector<64x32xf32>
      %256 = arith.truncf %248 : vector<64x32xf32> to vector<64x32xbf16>
      %c0_148 = arith.constant 0 : index
      %257 = arith.index_cast %213 : i32 to index
      %c0_149 = arith.constant 0 : index
      %258 = vector.load %arg20[%c0_148, %257, %c0_149] : memref<4x64x32xbf16, #tpu.memory_space<vmem>>, vector<1x64x32xbf16>
      %259 = vector.shape_cast %258 : vector<1x64x32xbf16> to vector<64x32xbf16>
      %260 = vector.shape_cast %256 : vector<64x32xbf16> to vector<1x64x32xbf16>
      tpu.vector_store %arg20[%c0_148, %257, %c0_149], %260 {strides = array<i32>} : memref<4x64x32xbf16, #tpu.memory_space<vmem>>, vector<1x64x32xbf16>,
      %261 = arith.truncf %255 : vector<64x32xf32> to vector<64x32xbf16>
      %c0_150 = arith.constant 0 : index
      %262 = arith.index_cast %213 : i32 to index
      %c0_151 = arith.constant 0 : index
      %263 = vector.load %arg21[%c0_150, %262, %c0_151] : memref<4x64x32xbf16, #tpu.memory_space<vmem>>, vector<1x64x32xbf16>
      %264 = vector.shape_cast %263 : vector<1x64x32xbf16> to vector<64x32xbf16>
      %265 = vector.shape_cast %261 : vector<64x32xbf16> to vector<1x64x32xbf16>
      tpu.vector_store %arg21[%c0_150, %262, %c0_151], %265 {strides = array<i32>} : memref<4x64x32xbf16, #tpu.memory_space<vmem>>, vector<1x64x32xbf16>,
      %c1_152 = arith.constant 1 : index
      %c0_153 = arith.constant 0 : index
      %c0_154 = arith.constant 0 : index
      %266 = vector.load %arg7[%c1_152, %c0_153, %c0_154] : memref<4x128x32xbf16, #tpu.memory_space<vmem>>, vector<1x128x32xbf16>
      %267 = vector.shape_cast %266 : vector<1x128x32xbf16> to vector<128x32xbf16>
      %cst_155 = arith.constant dense<0.000000e+00> : vector<64x32xf32>
      %268 = tpu.matmul %241, %267, %cst_155 {dimension_numbers = #tpu.dot_dimension_numbers<[1], [0], [0], [1], [0, 0, 1, 1], [], []>} : vector<64x128xbf16>, vector<128x32xbf16>, vector<64x32xf32> -> vector<64x32xf32>
      %c1_156 = arith.constant 1 : index
      %c0_157 = arith.constant 0 : index
      %c0_158 = arith.constant 0 : index
      %269 = vector.load %arg8[%c1_156, %c0_157, %c0_158] : memref<4x1x32xf32, #tpu.memory_space<vmem>>, vector<1x1x32xf32>
      %270 = vector.shape_cast %269 : vector<1x1x32xf32> to vector<1x32xf32>
      %271 = vector.broadcast %270 : vector<1x32xf32> to vector<64x32xf32>
      %272 = arith.addf %268, %271 : vector<64x32xf32>
      %c1_159 = arith.constant 1 : index
      %c0_160 = arith.constant 0 : index
      %c0_161 = arith.constant 0 : index
      %273 = vector.load %arg9[%c1_159, %c0_160, %c0_161] : memref<4x128x32xbf16, #tpu.memory_space<vmem>>, vector<1x128x32xbf16>
      %274 = vector.shape_cast %273 : vector<1x128x32xbf16> to vector<128x32xbf16>
      %cst_162 = arith.constant dense<0.000000e+00> : vector<64x32xf32>
      %275 = tpu.matmul %241, %274, %cst_162 {dimension_numbers = #tpu.dot_dimension_numbers<[1], [0], [0], [1], [0, 0, 1, 1], [], []>} : vector<64x128xbf16>, vector<128x32xbf16>, vector<64x32xf32> -> vector<64x32xf32>
      %c1_163 = arith.constant 1 : index
      %c0_164 = arith.constant 0 : index
      %c0_165 = arith.constant 0 : index
      %276 = vector.load %arg10[%c1_163, %c0_164, %c0_165] : memref<4x1x32xf32, #tpu.memory_space<vmem>>, vector<1x1x32xf32>
      %277 = vector.shape_cast %276 : vector<1x1x32xf32> to vector<1x32xf32>
      %278 = vector.broadcast %277 : vector<1x32xf32> to vector<64x32xf32>
      %279 = arith.addf %275, %278 : vector<64x32xf32>
      %280 = arith.truncf %272 : vector<64x32xf32> to vector<64x32xbf16>
      %c1_166 = arith.constant 1 : index
      %281 = arith.index_cast %213 : i32 to index
      %c0_167 = arith.constant 0 : index
      %282 = vector.load %arg20[%c1_166, %281, %c0_167] : memref<4x64x32xbf16, #tpu.memory_space<vmem>>, vector<1x64x32xbf16>
      %283 = vector.shape_cast %282 : vector<1x64x32xbf16> to vector<64x32xbf16>
      %284 = vector.shape_cast %280 : vector<64x32xbf16> to vector<1x64x32xbf16>
      tpu.vector_store %arg20[%c1_166, %281, %c0_167], %284 {strides = array<i32>} : memref<4x64x32xbf16, #tpu.memory_space<vmem>>, vector<1x64x32xbf16>,
      %285 = arith.truncf %279 : vector<64x32xf32> to vector<64x32xbf16>
      %c1_168 = arith.constant 1 : index
      %286 = arith.index_cast %213 : i32 to index
      %c0_169 = arith.constant 0 : index
      %287 = vector.load %arg21[%c1_168, %286, %c0_169] : memref<4x64x32xbf16, #tpu.memory_space<vmem>>, vector<1x64x32xbf16>
      %288 = vector.shape_cast %287 : vector<1x64x32xbf16> to vector<64x32xbf16>
      %289 = vector.shape_cast %285 : vector<64x32xbf16> to vector<1x64x32xbf16>
      tpu.vector_store %arg21[%c1_168, %286, %c0_169], %289 {strides = array<i32>} : memref<4x64x32xbf16, #tpu.memory_space<vmem>>, vector<1x64x32xbf16>,
      %c2_170 = arith.constant 2 : index
      %c0_171 = arith.constant 0 : index
      %c0_172 = arith.constant 0 : index
      %290 = vector.load %arg7[%c2_170, %c0_171, %c0_172] : memref<4x128x32xbf16, #tpu.memory_space<vmem>>, vector<1x128x32xbf16>
      %291 = vector.shape_cast %290 : vector<1x128x32xbf16> to vector<128x32xbf16>
      %cst_173 = arith.constant dense<0.000000e+00> : vector<64x32xf32>
      %292 = tpu.matmul %241, %291, %cst_173 {dimension_numbers = #tpu.dot_dimension_numbers<[1], [0], [0], [1], [0, 0, 1, 1], [], []>} : vector<64x128xbf16>, vector<128x32xbf16>, vector<64x32xf32> -> vector<64x32xf32>
      %c2_174 = arith.constant 2 : index
      %c0_175 = arith.constant 0 : index
      %c0_176 = arith.constant 0 : index
      %293 = vector.load %arg8[%c2_174, %c0_175, %c0_176] : memref<4x1x32xf32, #tpu.memory_space<vmem>>, vector<1x1x32xf32>
      %294 = vector.shape_cast %293 : vector<1x1x32xf32> to vector<1x32xf32>
      %295 = vector.broadcast %294 : vector<1x32xf32> to vector<64x32xf32>
      %296 = arith.addf %292, %295 : vector<64x32xf32>
      %c2_177 = arith.constant 2 : index
      %c0_178 = arith.constant 0 : index
      %c0_179 = arith.constant 0 : index
      %297 = vector.load %arg9[%c2_177, %c0_178, %c0_179] : memref<4x128x32xbf16, #tpu.memory_space<vmem>>, vector<1x128x32xbf16>
      %298 = vector.shape_cast %297 : vector<1x128x32xbf16> to vector<128x32xbf16>
      %cst_180 = arith.constant dense<0.000000e+00> : vector<64x32xf32>
      %299 = tpu.matmul %241, %298, %cst_180 {dimension_numbers = #tpu.dot_dimension_numbers<[1], [0], [0], [1], [0, 0, 1, 1], [], []>} : vector<64x128xbf16>, vector<128x32xbf16>, vector<64x32xf32> -> vector<64x32xf32>
      %c2_181 = arith.constant 2 : index
      %c0_182 = arith.constant 0 : index
      %c0_183 = arith.constant 0 : index
      %300 = vector.load %arg10[%c2_181, %c0_182, %c0_183] : memref<4x1x32xf32, #tpu.memory_space<vmem>>, vector<1x1x32xf32>
      %301 = vector.shape_cast %300 : vector<1x1x32xf32> to vector<1x32xf32>
      %302 = vector.broadcast %301 : vector<1x32xf32> to vector<64x32xf32>
      %303 = arith.addf %299, %302 : vector<64x32xf32>
      %304 = arith.truncf %296 : vector<64x32xf32> to vector<64x32xbf16>
      %c2_184 = arith.constant 2 : index
      %305 = arith.index_cast %213 : i32 to index
      %c0_185 = arith.constant 0 : index
      %306 = vector.load %arg20[%c2_184, %305, %c0_185] : memref<4x64x32xbf16, #tpu.memory_space<vmem>>, vector<1x64x32xbf16>
      %307 = vector.shape_cast %306 : vector<1x64x32xbf16> to vector<64x32xbf16>
      %308 = vector.shape_cast %304 : vector<64x32xbf16> to vector<1x64x32xbf16>
      tpu.vector_store %arg20[%c2_184, %305, %c0_185], %308 {strides = array<i32>} : memref<4x64x32xbf16, #tpu.memory_space<vmem>>, vector<1x64x32xbf16>,
      %309 = arith.truncf %303 : vector<64x32xf32> to vector<64x32xbf16>
      %c2_186 = arith.constant 2 : index
      %310 = arith.index_cast %213 : i32 to index
      %c0_187 = arith.constant 0 : index
      %311 = vector.load %arg21[%c2_186, %310, %c0_187] : memref<4x64x32xbf16, #tpu.memory_space<vmem>>, vector<1x64x32xbf16>
      %312 = vector.shape_cast %311 : vector<1x64x32xbf16> to vector<64x32xbf16>
      %313 = vector.shape_cast %309 : vector<64x32xbf16> to vector<1x64x32xbf16>
      tpu.vector_store %arg21[%c2_186, %310, %c0_187], %313 {strides = array<i32>} : memref<4x64x32xbf16, #tpu.memory_space<vmem>>, vector<1x64x32xbf16>,
      %c3_188 = arith.constant 3 : index
      %c0_189 = arith.constant 0 : index
      %c0_190 = arith.constant 0 : index
      %314 = vector.load %arg7[%c3_188, %c0_189, %c0_190] : memref<4x128x32xbf16, #tpu.memory_space<vmem>>, vector<1x128x32xbf16>
      %315 = vector.shape_cast %314 : vector<1x128x32xbf16> to vector<128x32xbf16>
      %cst_191 = arith.constant dense<0.000000e+00> : vector<64x32xf32>
      %316 = tpu.matmul %241, %315, %cst_191 {dimension_numbers = #tpu.dot_dimension_numbers<[1], [0], [0], [1], [0, 0, 1, 1], [], []>} : vector<64x128xbf16>, vector<128x32xbf16>, vector<64x32xf32> -> vector<64x32xf32>
      %c3_192 = arith.constant 3 : index
      %c0_193 = arith.constant 0 : index
      %c0_194 = arith.constant 0 : index
      %317 = vector.load %arg8[%c3_192, %c0_193, %c0_194] : memref<4x1x32xf32, #tpu.memory_space<vmem>>, vector<1x1x32xf32>
      %318 = vector.shape_cast %317 : vector<1x1x32xf32> to vector<1x32xf32>
      %319 = vector.broadcast %318 : vector<1x32xf32> to vector<64x32xf32>
      %320 = arith.addf %316, %319 : vector<64x32xf32>
      %c3_195 = arith.constant 3 : index
      %c0_196 = arith.constant 0 : index
      %c0_197 = arith.constant 0 : index
      %321 = vector.load %arg9[%c3_195, %c0_196, %c0_197] : memref<4x128x32xbf16, #tpu.memory_space<vmem>>, vector<1x128x32xbf16>
      %322 = vector.shape_cast %321 : vector<1x128x32xbf16> to vector<128x32xbf16>
      %cst_198 = arith.constant dense<0.000000e+00> : vector<64x32xf32>
      %323 = tpu.matmul %241, %322, %cst_198 {dimension_numbers = #tpu.dot_dimension_numbers<[1], [0], [0], [1], [0, 0, 1, 1], [], []>} : vector<64x128xbf16>, vector<128x32xbf16>, vector<64x32xf32> -> vector<64x32xf32>
      %c3_199 = arith.constant 3 : index
      %c0_200 = arith.constant 0 : index
      %c0_201 = arith.constant 0 : index
      %324 = vector.load %arg10[%c3_199, %c0_200, %c0_201] : memref<4x1x32xf32, #tpu.memory_space<vmem>>, vector<1x1x32xf32>
      %325 = vector.shape_cast %324 : vector<1x1x32xf32> to vector<1x32xf32>
      %326 = vector.broadcast %325 : vector<1x32xf32> to vector<64x32xf32>
      %327 = arith.addf %323, %326 : vector<64x32xf32>
      %328 = arith.truncf %320 : vector<64x32xf32> to vector<64x32xbf16>
      %c3_202 = arith.constant 3 : index
      %329 = arith.index_cast %213 : i32 to index
      %c0_203 = arith.constant 0 : index
      %330 = vector.load %arg20[%c3_202, %329, %c0_203] : memref<4x64x32xbf16, #tpu.memory_space<vmem>>, vector<1x64x32xbf16>
      %331 = vector.shape_cast %330 : vector<1x64x32xbf16> to vector<64x32xbf16>
      %332 = vector.shape_cast %328 : vector<64x32xbf16> to vector<1x64x32xbf16>
      tpu.vector_store %arg20[%c3_202, %329, %c0_203], %332 {strides = array<i32>} : memref<4x64x32xbf16, #tpu.memory_space<vmem>>, vector<1x64x32xbf16>,
      %333 = arith.truncf %327 : vector<64x32xf32> to vector<64x32xbf16>
      %c3_204 = arith.constant 3 : index
      %334 = arith.index_cast %213 : i32 to index
      %c0_205 = arith.constant 0 : index
      %335 = vector.load %arg21[%c3_204, %334, %c0_205] : memref<4x64x32xbf16, #tpu.memory_space<vmem>>, vector<1x64x32xbf16>
      %336 = vector.shape_cast %335 : vector<1x64x32xbf16> to vector<64x32xbf16>
      %337 = vector.shape_cast %333 : vector<64x32xbf16> to vector<1x64x32xbf16>
      tpu.vector_store %arg21[%c3_204, %334, %c0_205], %337 {strides = array<i32>} : memref<4x64x32xbf16, #tpu.memory_space<vmem>>, vector<1x64x32xbf16>,
      %c1_i32 = arith.constant 1 : i32
    } else {
    }
    %c64_i32 = arith.constant 64 : i32
    %3 = arith.muli %arg1, %c64_i32 : i32
    %4 = tpu.assume_multiple %3, 64 : i32
    %c0 = arith.constant 0 : index
    %5 = arith.index_cast %4 : i32 to index
    %c0_1 = arith.constant 0 : index
    %6 = vector.load %arg2[%c0, %5, %c0_1] : memref<1x64x128xf32, #tpu.memory_space<vmem>>, vector<1x64x128xf32>
    %7 = vector.shape_cast %6 : vector<1x64x128xf32> to vector<64x128xf32>
    %c0_2 = arith.constant 0 : index
    %c0_3 = arith.constant 0 : index
    %8 = vector.load %arg3[%c0_2, %c0_3] : memref<1x128xf32, #tpu.memory_space<vmem>>, vector<1x128xf32>
    %c0_4 = arith.constant 0 : index
    %c0_5 = arith.constant 0 : index
    %9 = vector.load %arg4[%c0_4, %c0_5] : memref<1x128xf32, #tpu.memory_space<vmem>>, vector<1x128xf32>
    %cst = arith.constant dense<0.000000e+00> : vector<64xf32>
    %10 = vector.multi_reduction <add>, %7, %cst [1] : vector<64x128xf32> to vector<64xf32>
    %11 = vector.shape_cast %10 : vector<64xf32> to vector<64x1xf32>
    %cst_6 = arith.constant 1.280000e+02 : f32
    %12 = vector.broadcast %cst_6 : f32 to vector<64x1xf32>
    %13 = arith.divf %11, %12 : vector<64x1xf32>
    %14 = vector.broadcast %13 : vector<64x1xf32> to vector<64x128xf32>
    %15 = arith.subf %7, %14 : vector<64x128xf32>
    %16 = arith.mulf %15, %15 : vector<64x128xf32>
    %cst_7 = arith.constant dense<0.000000e+00> : vector<64xf32>
    %17 = vector.multi_reduction <add>, %16, %cst_7 [1] : vector<64x128xf32> to vector<64xf32>
    %18 = vector.shape_cast %17 : vector<64xf32> to vector<64x1xf32>
    %cst_8 = arith.constant 1.280000e+02 : f32
    %19 = vector.broadcast %cst_8 : f32 to vector<64x1xf32>
    %20 = arith.divf %18, %19 : vector<64x1xf32>
    %21 = vector.broadcast %13 : vector<64x1xf32> to vector<64x128xf32>
    %22 = arith.subf %7, %21 : vector<64x128xf32>
    %cst_9 = arith.constant 9.99999974E-6 : f32
    %23 = vector.broadcast %cst_9 : f32 to vector<64x1xf32>
    %24 = arith.addf %20, %23 : vector<64x1xf32>
    %25 = math.rsqrt %24 : vector<64x1xf32>
    %26 = vector.broadcast %25 : vector<64x1xf32> to vector<64x128xf32>
    %27 = arith.mulf %22, %26 : vector<64x128xf32>
    %28 = vector.broadcast %8 : vector<1x128xf32> to vector<64x128xf32>
    %29 = arith.mulf %27, %28 : vector<64x128xf32>
    %30 = vector.broadcast %9 : vector<1x128xf32> to vector<64x128xf32>
    %31 = arith.addf %29, %30 : vector<64x128xf32>
    %32 = arith.truncf %31 : vector<64x128xf32> to vector<64x128xbf16>
    %cst_10 = arith.constant 0.000000e+00 : f32
    %33 = vector.broadcast %cst_10 : f32 to vector<64x128xf32>
    %c0_11 = arith.constant 0 : index
    %c0_12 = arith.constant 0 : index
    %c0_13 = arith.constant 0 : index
    %34 = vector.load %arg5[%c0_11, %c0_12, %c0_13] : memref<4x128x32xbf16, #tpu.memory_space<vmem>>, vector<1x128x32xbf16>
    %35 = vector.shape_cast %34 : vector<1x128x32xbf16> to vector<128x32xbf16>
    %cst_14 = arith.constant dense<0.000000e+00> : vector<64x32xf32>
    %36 = tpu.matmul %32, %35, %cst_14 {dimension_numbers = #tpu.dot_dimension_numbers<[1], [0], [0], [1], [0, 0, 1, 1], [], []>} : vector<64x128xbf16>, vector<128x32xbf16>, vector<64x32xf32> -> vector<64x32xf32>
    %c0_15 = arith.constant 0 : index
    %c0_16 = arith.constant 0 : index
    %c0_17 = arith.constant 0 : index
    %37 = vector.load %arg6[%c0_15, %c0_16, %c0_17] : memref<4x1x32xf32, #tpu.memory_space<vmem>>, vector<1x1x32xf32>
    %38 = vector.shape_cast %37 : vector<1x1x32xf32> to vector<1x32xf32>
    %39 = vector.broadcast %38 : vector<1x32xf32> to vector<64x32xf32>
    %40 = arith.addf %36, %39 : vector<64x32xf32>
    %41 = arith.truncf %40 : vector<64x32xf32> to vector<64x32xbf16>
    %c0_18 = arith.constant 0 : index
    %c0_19 = arith.constant 0 : index
    %c0_20 = arith.constant 0 : index
    %42 = vector.load %arg20[%c0_18, %c0_19, %c0_20] : memref<4x64x32xbf16, #tpu.memory_space<vmem>>, vector<1x64x32xbf16>
    %43 = vector.shape_cast %42 : vector<1x64x32xbf16> to vector<64x32xbf16>
    %cst_21 = arith.constant dense<0.000000e+00> : vector<64x64xf32>
    %44 = tpu.matmul %41, %43, %cst_21 {dimension_numbers = #tpu.dot_dimension_numbers<[1], [1], [0], [0], [0, 0, 1, 0], [], []>} : vector<64x32xbf16>, vector<64x32xbf16>, vector<64x64xf32> -> vector<64x64xf32>
    %cst_22 = arith.constant 5.65685415 : f32
    %45 = vector.broadcast %cst_22 : f32 to vector<64x64xf32>
    %46 = arith.divf %44, %45 : vector<64x64xf32>
    %47 = math.floor %46 : vector<64x64xf32>
    %cst_23 = arith.constant dense<0xFF800000> : vector<64xf32>
    %48 = vector.multi_reduction <maximumf>, %47, %cst_23 [1] : vector<64x64xf32> to vector<64xf32>
    %49 = vector.shape_cast %48 : vector<64xf32> to vector<64x1xf32>
    %50 = vector.broadcast %49 : vector<64x1xf32> to vector<64x64xf32>
    %51 = arith.subf %47, %50 : vector<64x64xf32>
    %52 = math.exp %51 : vector<64x64xf32>
    %cst_24 = arith.constant dense<0.000000e+00> : vector<64xf32>
    %53 = vector.multi_reduction <add>, %52, %cst_24 [1] : vector<64x64xf32> to vector<64xf32>
    %54 = vector.shape_cast %53 : vector<64xf32> to vector<64x1xf32>
    %55 = tpu.reciprocal %54 {approx = true} : vector<64x1xf32> -> vector<64x1xf32>
    %56 = vector.broadcast %55 : vector<64x1xf32> to vector<64x64xf32>
    %57 = arith.mulf %52, %56 : vector<64x64xf32>
    %58 = arith.truncf %57 : vector<64x64xf32> to vector<64x64xbf16>
    %c0_25 = arith.constant 0 : index
    %c0_26 = arith.constant 0 : index
    %c0_27 = arith.constant 0 : index
    %59 = vector.load %arg21[%c0_25, %c0_26, %c0_27] : memref<4x64x32xbf16, #tpu.memory_space<vmem>>, vector<1x64x32xbf16>
    %60 = vector.shape_cast %59 : vector<1x64x32xbf16> to vector<64x32xbf16>
    %cst_28 = arith.constant dense<0.000000e+00> : vector<64x32xf32>
    %61 = tpu.matmul %58, %60, %cst_28 {dimension_numbers = #tpu.dot_dimension_numbers<[1], [0], [0], [1], [0, 0, 1, 1], [], []>} : vector<64x64xbf16>, vector<64x32xbf16>, vector<64x32xf32> -> vector<64x32xf32>
    %62 = arith.truncf %61 : vector<64x32xf32> to vector<64x32xbf16>
    %c0_29 = arith.constant 0 : index
    %c0_30 = arith.constant 0 : index
    %c0_31 = arith.constant 0 : index
    %63 = vector.load %arg11[%c0_29, %c0_30, %c0_31] : memref<4x32x128xbf16, #tpu.memory_space<vmem>>, vector<1x32x128xbf16>
    %64 = vector.shape_cast %63 : vector<1x32x128xbf16> to vector<32x128xbf16>
    %cst_32 = arith.constant dense<0.000000e+00> : vector<64x128xf32>
    %65 = tpu.matmul %62, %64, %cst_32 {dimension_numbers = #tpu.dot_dimension_numbers<[1], [0], [0], [1], [0, 0, 1, 1], [], []>} : vector<64x32xbf16>, vector<32x128xbf16>, vector<64x128xf32> -> vector<64x128xf32>
    %66 = arith.addf %33, %65 : vector<64x128xf32>
    %c1 = arith.constant 1 : index
    %c0_33 = arith.constant 0 : index
    %c0_34 = arith.constant 0 : index
    %67 = vector.load %arg5[%c1, %c0_33, %c0_34] : memref<4x128x32xbf16, #tpu.memory_space<vmem>>, vector<1x128x32xbf16>
    %68 = vector.shape_cast %67 : vector<1x128x32xbf16> to vector<128x32xbf16>
    %cst_35 = arith.constant dense<0.000000e+00> : vector<64x32xf32>
    %69 = tpu.matmul %32, %68, %cst_35 {dimension_numbers = #tpu.dot_dimension_numbers<[1], [0], [0], [1], [0, 0, 1, 1], [], []>} : vector<64x128xbf16>, vector<128x32xbf16>, vector<64x32xf32> -> vector<64x32xf32>
    %c1_36 = arith.constant 1 : index
    %c0_37 = arith.constant 0 : index
    %c0_38 = arith.constant 0 : index
    %70 = vector.load %arg6[%c1_36, %c0_37, %c0_38] : memref<4x1x32xf32, #tpu.memory_space<vmem>>, vector<1x1x32xf32>
    %71 = vector.shape_cast %70 : vector<1x1x32xf32> to vector<1x32xf32>
    %72 = vector.broadcast %71 : vector<1x32xf32> to vector<64x32xf32>
    %73 = arith.addf %69, %72 : vector<64x32xf32>
    %74 = arith.truncf %73 : vector<64x32xf32> to vector<64x32xbf16>
    %c1_39 = arith.constant 1 : index
    %c0_40 = arith.constant 0 : index
    %c0_41 = arith.constant 0 : index
    %75 = vector.load %arg20[%c1_39, %c0_40, %c0_41] : memref<4x64x32xbf16, #tpu.memory_space<vmem>>, vector<1x64x32xbf16>
    %76 = vector.shape_cast %75 : vector<1x64x32xbf16> to vector<64x32xbf16>
    %cst_42 = arith.constant dense<0.000000e+00> : vector<64x64xf32>
    %77 = tpu.matmul %74, %76, %cst_42 {dimension_numbers = #tpu.dot_dimension_numbers<[1], [1], [0], [0], [0, 0, 1, 0], [], []>} : vector<64x32xbf16>, vector<64x32xbf16>, vector<64x64xf32> -> vector<64x64xf32>
    %cst_43 = arith.constant 5.65685415 : f32
    %78 = vector.broadcast %cst_43 : f32 to vector<64x64xf32>
    %79 = arith.divf %77, %78 : vector<64x64xf32>
    %80 = math.floor %79 : vector<64x64xf32>
    %cst_44 = arith.constant dense<0xFF800000> : vector<64xf32>
    %81 = vector.multi_reduction <maximumf>, %80, %cst_44 [1] : vector<64x64xf32> to vector<64xf32>
    %82 = vector.shape_cast %81 : vector<64xf32> to vector<64x1xf32>
    %83 = vector.broadcast %82 : vector<64x1xf32> to vector<64x64xf32>
    %84 = arith.subf %80, %83 : vector<64x64xf32>
    %85 = math.exp %84 : vector<64x64xf32>
    %cst_45 = arith.constant dense<0.000000e+00> : vector<64xf32>
    %86 = vector.multi_reduction <add>, %85, %cst_45 [1] : vector<64x64xf32> to vector<64xf32>
    %87 = vector.shape_cast %86 : vector<64xf32> to vector<64x1xf32>
    %88 = tpu.reciprocal %87 {approx = true} : vector<64x1xf32> -> vector<64x1xf32>
    %89 = vector.broadcast %88 : vector<64x1xf32> to vector<64x64xf32>
    %90 = arith.mulf %85, %89 : vector<64x64xf32>
    %91 = arith.truncf %90 : vector<64x64xf32> to vector<64x64xbf16>
    %c1_46 = arith.constant 1 : index
    %c0_47 = arith.constant 0 : index
    %c0_48 = arith.constant 0 : index
    %92 = vector.load %arg21[%c1_46, %c0_47, %c0_48] : memref<4x64x32xbf16, #tpu.memory_space<vmem>>, vector<1x64x32xbf16>
    %93 = vector.shape_cast %92 : vector<1x64x32xbf16> to vector<64x32xbf16>
    %cst_49 = arith.constant dense<0.000000e+00> : vector<64x32xf32>
    %94 = tpu.matmul %91, %93, %cst_49 {dimension_numbers = #tpu.dot_dimension_numbers<[1], [0], [0], [1], [0, 0, 1, 1], [], []>} : vector<64x64xbf16>, vector<64x32xbf16>, vector<64x32xf32> -> vector<64x32xf32>
    %95 = arith.truncf %94 : vector<64x32xf32> to vector<64x32xbf16>
    %c1_50 = arith.constant 1 : index
    %c0_51 = arith.constant 0 : index
    %c0_52 = arith.constant 0 : index
    %96 = vector.load %arg11[%c1_50, %c0_51, %c0_52] : memref<4x32x128xbf16, #tpu.memory_space<vmem>>, vector<1x32x128xbf16>
    %97 = vector.shape_cast %96 : vector<1x32x128xbf16> to vector<32x128xbf16>
    %cst_53 = arith.constant dense<0.000000e+00> : vector<64x128xf32>
    %98 = tpu.matmul %95, %97, %cst_53 {dimension_numbers = #tpu.dot_dimension_numbers<[1], [0], [0], [1], [0, 0, 1, 1], [], []>} : vector<64x32xbf16>, vector<32x128xbf16>, vector<64x128xf32> -> vector<64x128xf32>
    %99 = arith.addf %66, %98 : vector<64x128xf32>
    %c2 = arith.constant 2 : index
    %c0_54 = arith.constant 0 : index
    %c0_55 = arith.constant 0 : index
    %100 = vector.load %arg5[%c2, %c0_54, %c0_55] : memref<4x128x32xbf16, #tpu.memory_space<vmem>>, vector<1x128x32xbf16>
    %101 = vector.shape_cast %100 : vector<1x128x32xbf16> to vector<128x32xbf16>
    %cst_56 = arith.constant dense<0.000000e+00> : vector<64x32xf32>
    %102 = tpu.matmul %32, %101, %cst_56 {dimension_numbers = #tpu.dot_dimension_numbers<[1], [0], [0], [1], [0, 0, 1, 1], [], []>} : vector<64x128xbf16>, vector<128x32xbf16>, vector<64x32xf32> -> vector<64x32xf32>
    %c2_57 = arith.constant 2 : index
    %c0_58 = arith.constant 0 : index
    %c0_59 = arith.constant 0 : index
    %103 = vector.load %arg6[%c2_57, %c0_58, %c0_59] : memref<4x1x32xf32, #tpu.memory_space<vmem>>, vector<1x1x32xf32>
    %104 = vector.shape_cast %103 : vector<1x1x32xf32> to vector<1x32xf32>
    %105 = vector.broadcast %104 : vector<1x32xf32> to vector<64x32xf32>
    %106 = arith.addf %102, %105 : vector<64x32xf32>
    %107 = arith.truncf %106 : vector<64x32xf32> to vector<64x32xbf16>
    %c2_60 = arith.constant 2 : index
    %c0_61 = arith.constant 0 : index
    %c0_62 = arith.constant 0 : index
    %108 = vector.load %arg20[%c2_60, %c0_61, %c0_62] : memref<4x64x32xbf16, #tpu.memory_space<vmem>>, vector<1x64x32xbf16>
    %109 = vector.shape_cast %108 : vector<1x64x32xbf16> to vector<64x32xbf16>
    %cst_63 = arith.constant dense<0.000000e+00> : vector<64x64xf32>
    %110 = tpu.matmul %107, %109, %cst_63 {dimension_numbers = #tpu.dot_dimension_numbers<[1], [1], [0], [0], [0, 0, 1, 0], [], []>} : vector<64x32xbf16>, vector<64x32xbf16>, vector<64x64xf32> -> vector<64x64xf32>
    %cst_64 = arith.constant 5.65685415 : f32
    %111 = vector.broadcast %cst_64 : f32 to vector<64x64xf32>
    %112 = arith.divf %110, %111 : vector<64x64xf32>
    %113 = math.floor %112 : vector<64x64xf32>
    %cst_65 = arith.constant dense<0xFF800000> : vector<64xf32>
    %114 = vector.multi_reduction <maximumf>, %113, %cst_65 [1] : vector<64x64xf32> to vector<64xf32>
    %115 = vector.shape_cast %114 : vector<64xf32> to vector<64x1xf32>
    %116 = vector.broadcast %115 : vector<64x1xf32> to vector<64x64xf32>
    %117 = arith.subf %113, %116 : vector<64x64xf32>
    %118 = math.exp %117 : vector<64x64xf32>
    %cst_66 = arith.constant dense<0.000000e+00> : vector<64xf32>
    %119 = vector.multi_reduction <add>, %118, %cst_66 [1] : vector<64x64xf32> to vector<64xf32>
    %120 = vector.shape_cast %119 : vector<64xf32> to vector<64x1xf32>
    %121 = tpu.reciprocal %120 {approx = true} : vector<64x1xf32> -> vector<64x1xf32>
    %122 = vector.broadcast %121 : vector<64x1xf32> to vector<64x64xf32>
    %123 = arith.mulf %118, %122 : vector<64x64xf32>
    %124 = arith.truncf %123 : vector<64x64xf32> to vector<64x64xbf16>
    %c2_67 = arith.constant 2 : index
    %c0_68 = arith.constant 0 : index
    %c0_69 = arith.constant 0 : index
    %125 = vector.load %arg21[%c2_67, %c0_68, %c0_69] : memref<4x64x32xbf16, #tpu.memory_space<vmem>>, vector<1x64x32xbf16>
    %126 = vector.shape_cast %125 : vector<1x64x32xbf16> to vector<64x32xbf16>
    %cst_70 = arith.constant dense<0.000000e+00> : vector<64x32xf32>
    %127 = tpu.matmul %124, %126, %cst_70 {dimension_numbers = #tpu.dot_dimension_numbers<[1], [0], [0], [1], [0, 0, 1, 1], [], []>} : vector<64x64xbf16>, vector<64x32xbf16>, vector<64x32xf32> -> vector<64x32xf32>
    %128 = arith.truncf %127 : vector<64x32xf32> to vector<64x32xbf16>
    %c2_71 = arith.constant 2 : index
    %c0_72 = arith.constant 0 : index
    %c0_73 = arith.constant 0 : index
    %129 = vector.load %arg11[%c2_71, %c0_72, %c0_73] : memref<4x32x128xbf16, #tpu.memory_space<vmem>>, vector<1x32x128xbf16>
    %130 = vector.shape_cast %129 : vector<1x32x128xbf16> to vector<32x128xbf16>
    %cst_74 = arith.constant dense<0.000000e+00> : vector<64x128xf32>
    %131 = tpu.matmul %128, %130, %cst_74 {dimension_numbers = #tpu.dot_dimension_numbers<[1], [0], [0], [1], [0, 0, 1, 1], [], []>} : vector<64x32xbf16>, vector<32x128xbf16>, vector<64x128xf32> -> vector<64x128xf32>
    %132 = arith.addf %99, %131 : vector<64x128xf32>
    %c3 = arith.constant 3 : index
    %c0_75 = arith.constant 0 : index
    %c0_76 = arith.constant 0 : index
    %133 = vector.load %arg5[%c3, %c0_75, %c0_76] : memref<4x128x32xbf16, #tpu.memory_space<vmem>>, vector<1x128x32xbf16>
    %134 = vector.shape_cast %133 : vector<1x128x32xbf16> to vector<128x32xbf16>
    %cst_77 = arith.constant dense<0.000000e+00> : vector<64x32xf32>
    %135 = tpu.matmul %32, %134, %cst_77 {dimension_numbers = #tpu.dot_dimension_numbers<[1], [0], [0], [1], [0, 0, 1, 1], [], []>} : vector<64x128xbf16>, vector<128x32xbf16>, vector<64x32xf32> -> vector<64x32xf32>
    %c3_78 = arith.constant 3 : index
    %c0_79 = arith.constant 0 : index
    %c0_80 = arith.constant 0 : index
    %136 = vector.load %arg6[%c3_78, %c0_79, %c0_80] : memref<4x1x32xf32, #tpu.memory_space<vmem>>, vector<1x1x32xf32>
    %137 = vector.shape_cast %136 : vector<1x1x32xf32> to vector<1x32xf32>
    %138 = vector.broadcast %137 : vector<1x32xf32> to vector<64x32xf32>
    %139 = arith.addf %135, %138 : vector<64x32xf32>
    %140 = arith.truncf %139 : vector<64x32xf32> to vector<64x32xbf16>
    %c3_81 = arith.constant 3 : index
    %c0_82 = arith.constant 0 : index
    %c0_83 = arith.constant 0 : index
    %141 = vector.load %arg20[%c3_81, %c0_82, %c0_83] : memref<4x64x32xbf16, #tpu.memory_space<vmem>>, vector<1x64x32xbf16>
    %142 = vector.shape_cast %141 : vector<1x64x32xbf16> to vector<64x32xbf16>
    %cst_84 = arith.constant dense<0.000000e+00> : vector<64x64xf32>
    %143 = tpu.matmul %140, %142, %cst_84 {dimension_numbers = #tpu.dot_dimension_numbers<[1], [1], [0], [0], [0, 0, 1, 0], [], []>} : vector<64x32xbf16>, vector<64x32xbf16>, vector<64x64xf32> -> vector<64x64xf32>
    %cst_85 = arith.constant 5.65685415 : f32
    %144 = vector.broadcast %cst_85 : f32 to vector<64x64xf32>
    %145 = arith.divf %143, %144 : vector<64x64xf32>
    %146 = math.floor %145 : vector<64x64xf32>
    %cst_86 = arith.constant dense<0xFF800000> : vector<64xf32>
    %147 = vector.multi_reduction <maximumf>, %146, %cst_86 [1] : vector<64x64xf32> to vector<64xf32>
    %148 = vector.shape_cast %147 : vector<64xf32> to vector<64x1xf32>
    %149 = vector.broadcast %148 : vector<64x1xf32> to vector<64x64xf32>
    %150 = arith.subf %146, %149 : vector<64x64xf32>
    %151 = math.exp %150 : vector<64x64xf32>
    %cst_87 = arith.constant dense<0.000000e+00> : vector<64xf32>
    %152 = vector.multi_reduction <add>, %151, %cst_87 [1] : vector<64x64xf32> to vector<64xf32>
    %153 = vector.shape_cast %152 : vector<64xf32> to vector<64x1xf32>
    %154 = tpu.reciprocal %153 {approx = true} : vector<64x1xf32> -> vector<64x1xf32>
    %155 = vector.broadcast %154 : vector<64x1xf32> to vector<64x64xf32>
    %156 = arith.mulf %151, %155 : vector<64x64xf32>
    %157 = arith.truncf %156 : vector<64x64xf32> to vector<64x64xbf16>
    %c3_88 = arith.constant 3 : index
    %c0_89 = arith.constant 0 : index
    %c0_90 = arith.constant 0 : index
    %158 = vector.load %arg21[%c3_88, %c0_89, %c0_90] : memref<4x64x32xbf16, #tpu.memory_space<vmem>>, vector<1x64x32xbf16>
    %159 = vector.shape_cast %158 : vector<1x64x32xbf16> to vector<64x32xbf16>
    %cst_91 = arith.constant dense<0.000000e+00> : vector<64x32xf32>
    %160 = tpu.matmul %157, %159, %cst_91 {dimension_numbers = #tpu.dot_dimension_numbers<[1], [0], [0], [1], [0, 0, 1, 1], [], []>} : vector<64x64xbf16>, vector<64x32xbf16>, vector<64x32xf32> -> vector<64x32xf32>
    %161 = arith.truncf %160 : vector<64x32xf32> to vector<64x32xbf16>
    %c3_92 = arith.constant 3 : index
    %c0_93 = arith.constant 0 : index
    %c0_94 = arith.constant 0 : index
    %162 = vector.load %arg11[%c3_92, %c0_93, %c0_94] : memref<4x32x128xbf16, #tpu.memory_space<vmem>>, vector<1x32x128xbf16>
    %163 = vector.shape_cast %162 : vector<1x32x128xbf16> to vector<32x128xbf16>
    %cst_95 = arith.constant dense<0.000000e+00> : vector<64x128xf32>
    %164 = tpu.matmul %161, %163, %cst_95 {dimension_numbers = #tpu.dot_dimension_numbers<[1], [0], [0], [1], [0, 0, 1, 1], [], []>} : vector<64x32xbf16>, vector<32x128xbf16>, vector<64x128xf32> -> vector<64x128xf32>
    %165 = arith.addf %132, %164 : vector<64x128xf32>
    %166 = arith.addf %7, %165 : vector<64x128xf32>
    %c0_96 = arith.constant 0 : index
    %c0_97 = arith.constant 0 : index
    %167 = vector.load %arg12[%c0_96, %c0_97] : memref<1x128xf32, #tpu.memory_space<vmem>>, vector<1x128xf32>
    %168 = vector.broadcast %167 : vector<1x128xf32> to vector<64x128xf32>
    %169 = arith.addf %166, %168 : vector<64x128xf32>
    %c0_98 = arith.constant 0 : index
    %c0_99 = arith.constant 0 : index
    %170 = vector.load %arg13[%c0_98, %c0_99] : memref<1x128xf32, #tpu.memory_space<vmem>>, vector<1x128xf32>
    %c0_100 = arith.constant 0 : index
    %c0_101 = arith.constant 0 : index
    %171 = vector.load %arg14[%c0_100, %c0_101] : memref<1x128xf32, #tpu.memory_space<vmem>>, vector<1x128xf32>
    %cst_102 = arith.constant dense<0.000000e+00> : vector<64xf32>
    %172 = vector.multi_reduction <add>, %169, %cst_102 [1] : vector<64x128xf32> to vector<64xf32>
    %173 = vector.shape_cast %172 : vector<64xf32> to vector<64x1xf32>
    %cst_103 = arith.constant 1.280000e+02 : f32
    %174 = vector.broadcast %cst_103 : f32 to vector<64x1xf32>
    %175 = arith.divf %173, %174 : vector<64x1xf32>
    %176 = vector.broadcast %175 : vector<64x1xf32> to vector<64x128xf32>
    %177 = arith.subf %169, %176 : vector<64x128xf32>
    %178 = arith.mulf %177, %177 : vector<64x128xf32>
    %cst_104 = arith.constant dense<0.000000e+00> : vector<64xf32>
    %179 = vector.multi_reduction <add>, %178, %cst_104 [1] : vector<64x128xf32> to vector<64xf32>
    %180 = vector.shape_cast %179 : vector<64xf32> to vector<64x1xf32>
    %cst_105 = arith.constant 1.280000e+02 : f32
    %181 = vector.broadcast %cst_105 : f32 to vector<64x1xf32>
    %182 = arith.divf %180, %181 : vector<64x1xf32>
    %183 = vector.broadcast %175 : vector<64x1xf32> to vector<64x128xf32>
    %184 = arith.subf %169, %183 : vector<64x128xf32>
    %cst_106 = arith.constant 9.99999974E-6 : f32
    %185 = vector.broadcast %cst_106 : f32 to vector<64x1xf32>
    %186 = arith.addf %182, %185 : vector<64x1xf32>
    %187 = math.rsqrt %186 : vector<64x1xf32>
    %188 = vector.broadcast %187 : vector<64x1xf32> to vector<64x128xf32>
    %189 = arith.mulf %184, %188 : vector<64x128xf32>
    %190 = vector.broadcast %170 : vector<1x128xf32> to vector<64x128xf32>
    %191 = arith.mulf %189, %190 : vector<64x128xf32>
    %192 = vector.broadcast %171 : vector<1x128xf32> to vector<64x128xf32>
    %193 = arith.addf %191, %192 : vector<64x128xf32>
    %194 = arith.truncf %193 : vector<64x128xf32> to vector<64x128xbf16>
    %c0_107 = arith.constant 0 : index
    %c0_108 = arith.constant 0 : index
    %195 = vector.load %arg15[%c0_107, %c0_108] : memref<128x256xbf16, #tpu.memory_space<vmem>>, vector<128x256xbf16>
    %cst_109 = arith.constant dense<0.000000e+00> : vector<64x256xf32>
    %196 = tpu.matmul %194, %195, %cst_109 {dimension_numbers = #tpu.dot_dimension_numbers<[1], [0], [0], [1], [0, 0, 1, 1], [], []>} : vector<64x128xbf16>, vector<128x256xbf16>, vector<64x256xf32> -> vector<64x256xf32>
    %c0_110 = arith.constant 0 : index
    %c0_111 = arith.constant 0 : index
    %197 = vector.load %arg16[%c0_110, %c0_111] : memref<1x256xf32, #tpu.memory_space<vmem>>, vector<1x256xf32>
    %198 = vector.broadcast %197 : vector<1x256xf32> to vector<64x256xf32>
    %199 = arith.addf %196, %198 : vector<64x256xf32>
    %cst_112 = arith.constant 0.000000e+00 : f32
    %200 = vector.broadcast %cst_112 : f32 to vector<64x256xf32>
    %201 = arith.maximumf %199, %200 : vector<64x256xf32>
    %202 = arith.truncf %201 : vector<64x256xf32> to vector<64x256xbf16>
    %c0_113 = arith.constant 0 : index
    %c0_114 = arith.constant 0 : index
    %203 = vector.load %arg17[%c0_113, %c0_114] : memref<256x128xbf16, #tpu.memory_space<vmem>>, vector<256x128xbf16>
    %cst_115 = arith.constant dense<0.000000e+00> : vector<64x128xf32>
    %204 = tpu.matmul %202, %203, %cst_115 {dimension_numbers = #tpu.dot_dimension_numbers<[1], [0], [0], [1], [0, 0, 1, 1], [], []>} : vector<64x256xbf16>, vector<256x128xbf16>, vector<64x128xf32> -> vector<64x128xf32>
    %c0_116 = arith.constant 0 : index
    %c0_117 = arith.constant 0 : index
    %205 = vector.load %arg18[%c0_116, %c0_117] : memref<1x128xf32, #tpu.memory_space<vmem>>, vector<1x128xf32>
    %206 = vector.broadcast %205 : vector<1x128xf32> to vector<64x128xf32>
    %207 = arith.addf %204, %206 : vector<64x128xf32>
    %208 = arith.addf %169, %207 : vector<64x128xf32>
    %c0_118 = arith.constant 0 : index
    %c0_119 = arith.constant 0 : index
    %c0_120 = arith.constant 0 : index
    %209 = vector.load %arg19[%c0_118, %c0_119, %c0_120] : memref<1x64x128xf32, #tpu.memory_space<vmem>>, vector<1x64x128xf32>
    %210 = vector.shape_cast %209 : vector<1x64x128xf32> to vector<64x128xf32>
    %211 = vector.shape_cast %208 : vector<64x128xf32> to vector<1x64x128xf32>
    tpu.vector_store %arg19[%c0_118, %c0_119, %c0_120], %211 {strides = array<i32>} : memref<1x64x128xf32, #tpu.memory_space<vmem>>, vector<1x64x128xf32>,
    return
  }
  func.func @transform_0(%arg0: i32, %arg1: i32) -> (i32, i32, i32) {
    %c0_i32 = arith.constant 0 : i32
    %c0_i32_0 = arith.constant 0 : i32
    %c0_i32_1 = arith.constant 0 : i32
    return %arg0, %c0_i32, %c0_i32_0 : i32, i32, i32
  }
  func.func @transform_1(%arg0: i32, %arg1: i32) -> (i32, i32) {
    %c0_i32 = arith.constant 0 : i32
    %c0_i32_0 = arith.constant 0 : i32
    %c0_i32_1 = arith.constant 0 : i32
    return %c0_i32, %c0_i32_0 : i32, i32
  }
  func.func @transform_2(%arg0: i32, %arg1: i32) -> (i32, i32) {
    %c0_i32 = arith.constant 0 : i32
    %c0_i32_0 = arith.constant 0 : i32
    %c0_i32_1 = arith.constant 0 : i32
    return %c0_i32, %c0_i32_0 : i32, i32
  }
  func.func @transform_3(%arg0: i32, %arg1: i32) -> (i32, i32, i32) {
    %c0_i32 = arith.constant 0 : i32
    %c0_i32_0 = arith.constant 0 : i32
    %c0_i32_1 = arith.constant 0 : i32
    %c0_i32_2 = arith.constant 0 : i32
    return %c0_i32, %c0_i32_0, %c0_i32_1 : i32, i32, i32
  }
  func.func @transform_4(%arg0: i32, %arg1: i32) -> (i32, i32, i32) {
    %c0_i32 = arith.constant 0 : i32
    %c0_i32_0 = arith.constant 0 : i32
    %c0_i32_1 = arith.constant 0 : i32
    %c0_i32_2 = arith.constant 0 : i32
    return %c0_i32, %c0_i32_0, %c0_i32_1 : i32, i32, i32
  }
  func.func @transform_5(%arg0: i32, %arg1: i32) -> (i32, i32, i32) {
    %c0_i32 = arith.constant 0 : i32
    %c0_i32_0 = arith.constant 0 : i32
    %c0_i32_1 = arith.constant 0 : i32
    %c0_i32_2 = arith.constant 0 : i32
    return %c0_i32, %c0_i32_0, %c0_i32_1 : i32, i32, i32
  }
  func.func @transform_6(%arg0: i32, %arg1: i32) -> (i32, i32, i32) {
    %c0_i32 = arith.constant 0 : i32
    %c0_i32_0 = arith.constant 0 : i32
    %c0_i32_1 = arith.constant 0 : i32
    %c0_i32_2 = arith.constant 0 : i32
    return %c0_i32, %c0_i32_0, %c0_i32_1 : i32, i32, i32
  }
  func.func @transform_7(%arg0: i32, %arg1: i32) -> (i32, i32, i32) {
    %c0_i32 = arith.constant 0 : i32
    %c0_i32_0 = arith.constant 0 : i32
    %c0_i32_1 = arith.constant 0 : i32
    %c0_i32_2 = arith.constant 0 : i32
    return %c0_i32, %c0_i32_0, %c0_i32_1 : i32, i32, i32
  }
  func.func @transform_8(%arg0: i32, %arg1: i32) -> (i32, i32, i32) {
    %c0_i32 = arith.constant 0 : i32
    %c0_i32_0 = arith.constant 0 : i32
    %c0_i32_1 = arith.constant 0 : i32
    %c0_i32_2 = arith.constant 0 : i32
    return %c0_i32, %c0_i32_0, %c0_i32_1 : i32, i32, i32
  }
  func.func @transform_9(%arg0: i32, %arg1: i32) -> (i32, i32, i32) {
    %c0_i32 = arith.constant 0 : i32
    %c0_i32_0 = arith.constant 0 : i32
    %c0_i32_1 = arith.constant 0 : i32
    %c0_i32_2 = arith.constant 0 : i32
    return %c0_i32, %c0_i32_0, %c0_i32_1 : i32, i32, i32
  }
  func.func @transform_10(%arg0: i32, %arg1: i32) -> (i32, i32) {
    %c0_i32 = arith.constant 0 : i32
    %c0_i32_0 = arith.constant 0 : i32
    %c0_i32_1 = arith.constant 0 : i32
    return %c0_i32, %c0_i32_0 : i32, i32
  }
  func.func @transform_11(%arg0: i32, %arg1: i32) -> (i32, i32) {
    %c0_i32 = arith.constant 0 : i32
    %c0_i32_0 = arith.constant 0 : i32
    %c0_i32_1 = arith.constant 0 : i32
    return %c0_i32, %c0_i32_0 : i32, i32
  }
  func.func @transform_12(%arg0: i32, %arg1: i32) -> (i32, i32) {
    %c0_i32 = arith.constant 0 : i32
    %c0_i32_0 = arith.constant 0 : i32
    %c0_i32_1 = arith.constant 0 : i32
    return %c0_i32, %c0_i32_0 : i32, i32
  }
  func.func @transform_13(%arg0: i32, %arg1: i32) -> (i32, i32) {
    %c0_i32 = arith.constant 0 : i32
    %c0_i32_0 = arith.constant 0 : i32
    %c0_i32_1 = arith.constant 0 : i32
    return %c0_i32, %c0_i32_0 : i32, i32
  }
  func.func @transform_14(%arg0: i32, %arg1: i32) -> (i32, i32) {
    %c0_i32 = arith.constant 0 : i32
    %c0_i32_0 = arith.constant 0 : i32
    %c0_i32_1 = arith.constant 0 : i32
    return %c0_i32, %c0_i32_0 : i32, i32
  }
  func.func @transform_15(%arg0: i32, %arg1: i32) -> (i32, i32) {
    %c0_i32 = arith.constant 0 : i32
    %c0_i32_0 = arith.constant 0 : i32
    %c0_i32_1 = arith.constant 0 : i32
    return %c0_i32, %c0_i32_0 : i32, i32
  }
  func.func @transform_16(%arg0: i32, %arg1: i32) -> (i32, i32) {
    %c0_i32 = arith.constant 0 : i32
    %c0_i32_0 = arith.constant 0 : i32
    %c0_i32_1 = arith.constant 0 : i32
    return %c0_i32, %c0_i32_0 : i32, i32
  }
  func.func @transform_17(%arg0: i32, %arg1: i32) -> (i32, i32, i32) {
    %c0_i32 = arith.constant 0 : i32
    %c0_i32_0 = arith.constant 0 : i32
    return %arg0, %arg1, %c0_i32 : i32, i32, i32
  }
}

</mosaic_0001>

<llo_original>
// kernel: tpu_custom_call.1
$region0: #{tpu_custom_call.1}
  #allocation0 [shape = 'u32[]', space=smem, size = 0x4, offset = 0x4, fixed_abs, tag = 'smem constant byte address 0x4 - core index']
  #allocation1 [shape = 'u32[144,128]{1,0:T(1,128)}', space=vmem, size = 0x12000, scoped, tag = 'internal scratch']
  #allocation2 [shape = 'bf16[4,64,32]{2,1,0:T(16,128)(2,1)}', space=vmem, size = 0x10000, scoped, tag = 'scratch operand']
  #allocation3 [shape = 'bf16[4,64,32]{2,1,0:T(16,128)(2,1)}', space=vmem, size = 0x10000, scoped, tag = 'scratch operand']
  %s0 = inlined_call_operand.vmem [shape: f32[2,64,128], index: 0, kind: input, shape index: {}]
  %s1 = inlined_call_operand.vmem [shape: f32[1,128], index: 1, kind: input, shape index: {}]
  %s2 = inlined_call_operand.vmem [shape: f32[1,128], index: 2, kind: input, shape index: {}]
  %s3 = inlined_call_operand.vmem [shape: bf16[4,128,32], index: 3, kind: input, shape index: {}]
  %s4 = inlined_call_operand.vmem [shape: f32[4,1,32], index: 4, kind: input, shape index: {}]
  %s5 = inlined_call_operand.vmem [shape: bf16[4,128,32], index: 5, kind: input, shape index: {}]
  %s6 = inlined_call_operand.vmem [shape: f32[4,1,32], index: 6, kind: input, shape index: {}]
  %s7 = inlined_call_operand.vmem [shape: bf16[4,128,32], index: 7, kind: input, shape index: {}]
  %s8 = inlined_call_operand.vmem [shape: f32[4,1,32], index: 8, kind: input, shape index: {}]
  %s9 = inlined_call_operand.vmem [shape: bf16[4,32,128], index: 9, kind: input, shape index: {}]
  %s10 = inlined_call_operand.vmem [shape: f32[1,128], index: 10, kind: input, shape index: {}]
  %s11 = inlined_call_operand.vmem [shape: f32[1,128], index: 11, kind: input, shape index: {}]
  %s12 = inlined_call_operand.vmem [shape: f32[1,128], index: 12, kind: input, shape index: {}]
  %s13 = inlined_call_operand.vmem [shape: bf16[128,256], index: 13, kind: input, shape index: {}]
  %s14 = inlined_call_operand.vmem [shape: f32[1,256], index: 14, kind: input, shape index: {}]
  %s15 = inlined_call_operand.vmem [shape: bf16[256,128], index: 15, kind: input, shape index: {}]
  %s16 = inlined_call_operand.vmem [shape: f32[1,128], index: 16, kind: input, shape index: {}]
  %s17 = inlined_call_operand.hbm [shape: f32[2,64,128], index: 17, kind: output, shape index: {}]
  %s18 = sld [smem:[#allocation0]]
  $region105: #{tpu_custom_call.1} parent=0
    _
  %s20 = ssub.s32 1, %s18
  %s21 = scalar_select 0, %s20, %s18
  $region1: #{tpu_custom_call.1} parent=0
    #allocation4 [shape = 'u8[65536]{0}', space=vmem, size = 0x10000, scoped, tag = 'output window, operand 0']
    #allocation5 [shape = 's32[2]{0}', space=sflag, size = 0x8, scoped, tag = 'scoped memory for tpu_custom_call.1']
    %22 = vsyncpa [#allocation5], 0
    %s23 = scalar_lea.sflag [#allocation5], 1
    %24 = vsyncpa %s23, 0
    loop: start=0, step=1, limit=4
    $region2: #{tpu_custom_call.1} parent=1 // loop_pre_header
      _
    $region3: #{tpu_custom_call.1} parent=1 // loop_header
      %s26 = sphi 0, %s30
      %p27 = scmp.ge.s32.totalorder %s26, 4
      %s33 = sphi 0, %s45
      %s34 = sphi 0, %s41
      %s35 = sphi 0, %s33
      %s36 = sphi 0, %s34
      %s37 = sphi 0, %s35
      %s38 = sphi 0, %s36
      %s48 = sphi 0, %s50
      %s51 = sphi 0, %s48
      %s52 = sphi 0, %s51
      %s68 = sphi 0, %s52
      %s72 = sphi 0, %s72
      %s74 = sphi 0, %s72
      %s75 = sphi 0, %s74
      %s89 = sphi 0, %s75
      %s93 = sphi 0, %s93
      %s95 = sphi 0, %s93
      %s96 = sphi 0, %s95
      %s110 = sphi 0, %s96
      %s114 = sphi 0, %s114
      %s116 = sphi 0, %s114
      %s117 = sphi 0, %s116
      %s131 = sphi 0, %s117
      %s135 = sphi 0, %s135
      %s137 = sphi 0, %s135
      %s138 = sphi 0, %s137
      %s152 = sphi 0, %s138
      %s156 = sphi 0, %s156
      %s158 = sphi 0, %s156
      %s159 = sphi 0, %s158
      %s173 = sphi 0, %s159
      %s177 = sphi 0, %s177
      %s179 = sphi 0, %s177
      %s180 = sphi 0, %s179
      %s194 = sphi 0, %s180
      %s198 = sphi 0, %s198
      %s200 = sphi 0, %s198
      %s201 = sphi 0, %s200
      %s215 = sphi 0, %s201
      %s219 = sphi 0, %s219
      %s221 = sphi 0, %s219
      %s222 = sphi 0, %s221
      %s236 = sphi 0, %s222
      %s240 = sphi 0, %s240
      %s242 = sphi 0, %s240
      %s243 = sphi 0, %s242
      %s257 = sphi 0, %s243
      %s261 = sphi 0, %s261
      %s263 = sphi 0, %s261
      %s264 = sphi 0, %s263
      %s278 = sphi 0, %s264
      %s282 = sphi 0, %s282
      %s284 = sphi 0, %s282
      %s285 = sphi 0, %s284
      %s299 = sphi 0, %s285
      %s303 = sphi 0, %s303
      %s305 = sphi 0, %s303
      %s306 = sphi 0, %s305
      %s320 = sphi 0, %s306
      %s324 = sphi 0, %s324
      %s326 = sphi 0, %s324
      %s327 = sphi 0, %s326
      %s341 = sphi 0, %s327
      %s345 = sphi 0, %s345
      %s347 = sphi 0, %s345
      %s348 = sphi 0, %s347
      %s362 = sphi 0, %s348
      %s366 = sphi 0, %s366
      %s368 = sphi 0, %s366
      %s369 = sphi 0, %s368
      %s383 = sphi 0, %s369
      %s387 = sphi 0, %s387
      %s389 = sphi 0, %s387
      %s390 = sphi 0, %s389
      %s404 = sphi 0, %s390
      %s412 = sphi 0, %s414
      %s415 = sphi 0, %s412
      %s416 = sphi 0, %s415
      %s432 = sphi 0, %s416
    $region4: #{tpu_custom_call.1} parent=1 // loop_header_branch
      %29 = sbr.rel (%p27) target = $region8
    $region5: #{tpu_custom_call.1} parent=1 // loop_body
      %s31 = ssub.s32 %s26, 1
      %s32 = ssub.s32 %s26, 2
      %s39 = sadd.s32 1, %s34
      %p40 = scmp.ge.s32.totalorder %s39, 1
      %s41 = scalar_select %p40, 0, %s39
      %s42 = sadd.s32 1, %s33
      %s43 = scalar_select %p40, %s42, %s33
      %p44 = scmp.ge.s32.totalorder %s43, 2
      %s45 = scalar_select %p44, 0, %s43
      %s46 = ssub.s32 %s33, %s45
      %p47 = scmp.eq.s32.totalorder %s46, 0
      %s49 = sadd.s32 %s48, 1
      %s50 = scalar_select %p47, %s48, %s49
      %p53 = pneg %p47
      %p54 = scmp.eq.s32.totalorder %s26, 1
      %p55 = por %p53, %p54
      %p56 = scmp.ne.s32.totalorder %s48, %s51
      %p57 = scmp.eq.s32.totalorder %s26, 0
      %p58 = por %p56, %p57
      %p59 = scmp.ne.s32.totalorder %s48, %s51
      %p60 = scmp.eq.s32.totalorder %s31, 1
      %p61 = por %p59, %p60
      %p62 = scmp.ne.s32.totalorder %s51, %s52
      %p63 = scmp.eq.s32.totalorder %s31, 0
      %p64 = por %p62, %p63
      %p65 = scmp.ne.s32.totalorder %s51, %s52
      %p66 = scmp.eq.s32.totalorder %s32, 1
      %p67 = por %p65, %p66
      %p69 = scmp.ne.s32.totalorder %s52, %s68
      %p70 = scmp.eq.s32.totalorder %s32, 0
      %p71 = por %p69, %p70
      %s73 = sadd.s32 %s72, 1
      %p76 = scmp.eq.s32.totalorder %s26, 1
      %p77 = scmp.ne.s32.totalorder %s72, %s74
      %p78 = scmp.eq.s32.totalorder %s26, 0
      %p79 = por %p77, %p78
      %p80 = scmp.ne.s32.totalorder %s72, %s74
      %p81 = scmp.eq.s32.totalorder %s31, 1
      %p82 = por %p80, %p81
      %p83 = scmp.ne.s32.totalorder %s74, %s75
      %p84 = scmp.eq.s32.totalorder %s31, 0
      %p85 = por %p83, %p84
      %p86 = scmp.ne.s32.totalorder %s74, %s75
      %p87 = scmp.eq.s32.totalorder %s32, 1
      %p88 = por %p86, %p87
      %p90 = scmp.ne.s32.totalorder %s75, %s89
      %p91 = scmp.eq.s32.totalorder %s32, 0
      %p92 = por %p90, %p91
      %s94 = sadd.s32 %s93, 1
      %p97 = scmp.eq.s32.totalorder %s26, 1
      %p98 = scmp.ne.s32.totalorder %s93, %s95
      %p99 = scmp.eq.s32.totalorder %s26, 0
      %p100 = por %p98, %p99
      %p101 = scmp.ne.s32.totalorder %s93, %s95
      %p102 = scmp.eq.s32.totalorder %s31, 1
      %p103 = por %p101, %p102
      %p104 = scmp.ne.s32.totalorder %s95, %s96
      %p105 = scmp.eq.s32.totalorder %s31, 0
      %p106 = por %p104, %p105
      %p107 = scmp.ne.s32.totalorder %s95, %s96
      %p108 = scmp.eq.s32.totalorder %s32, 1
      %p109 = por %p107, %p108
      %p111 = scmp.ne.s32.totalorder %s96, %s110
      %p112 = scmp.eq.s32.totalorder %s32, 0
      %p113 = por %p111, %p112
      %s115 = sadd.s32 %s114, 1
      %p118 = scmp.eq.s32.totalorder %s26, 1
      %p119 = scmp.ne.s32.totalorder %s114, %s116
      %p120 = scmp.eq.s32.totalorder %s26, 0
      %p121 = por %p119, %p120
      %p122 = scmp.ne.s32.totalorder %s114, %s116
      %p123 = scmp.eq.s32.totalorder %s31, 1
      %p124 = por %p122, %p123
      %p125 = scmp.ne.s32.totalorder %s116, %s117
      %p126 = scmp.eq.s32.totalorder %s31, 0
      %p127 = por %p125, %p126
      %p128 = scmp.ne.s32.totalorder %s116, %s117
      %p129 = scmp.eq.s32.totalorder %s32, 1
      %p130 = por %p128, %p129
      %p132 = scmp.ne.s32.totalorder %s117, %s131
      %p133 = scmp.eq.s32.totalorder %s32, 0
      %p134 = por %p132, %p133
      %s136 = sadd.s32 %s135, 1
      %p139 = scmp.eq.s32.totalorder %s26, 1
      %p140 = scmp.ne.s32.totalorder %s135, %s137
      %p141 = scmp.eq.s32.totalorder %s26, 0
      %p142 = por %p140, %p141
      %p143 = scmp.ne.s32.totalorder %s135, %s137
      %p144 = scmp.eq.s32.totalorder %s31, 1
      %p145 = por %p143, %p144
      %p146 = scmp.ne.s32.totalorder %s137, %s138
      %p147 = scmp.eq.s32.totalorder %s31, 0
      %p148 = por %p146, %p147
      %p149 = scmp.ne.s32.totalorder %s137, %s138
      %p150 = scmp.eq.s32.totalorder %s32, 1
      %p151 = por %p149, %p150
      %p153 = scmp.ne.s32.totalorder %s138, %s152
      %p154 = scmp.eq.s32.totalorder %s32, 0
      %p155 = por %p153, %p154
      %s157 = sadd.s32 %s156, 1
      %p160 = scmp.eq.s32.totalorder %s26, 1
      %p161 = scmp.ne.s32.totalorder %s156, %s158
      %p162 = scmp.eq.s32.totalorder %s26, 0
      %p163 = por %p161, %p162
      %p164 = scmp.ne.s32.totalorder %s156, %s158
      %p165 = scmp.eq.s32.totalorder %s31, 1
      %p166 = por %p164, %p165
      %p167 = scmp.ne.s32.totalorder %s158, %s159
      %p168 = scmp.eq.s32.totalorder %s31, 0
      %p169 = por %p167, %p168
      %p170 = scmp.ne.s32.totalorder %s158, %s159
      %p171 = scmp.eq.s32.totalorder %s32, 1
      %p172 = por %p170, %p171
      %p174 = scmp.ne.s32.totalorder %s159, %s173
      %p175 = scmp.eq.s32.totalorder %s32, 0
      %p176 = por %p174, %p175
      %s178 = sadd.s32 %s177, 1
      %p181 = scmp.eq.s32.totalorder %s26, 1
      %p182 = scmp.ne.s32.totalorder %s177, %s179
      %p183 = scmp.eq.s32.totalorder %s26, 0
      %p184 = por %p182, %p183
      %p185 = scmp.ne.s32.totalorder %s177, %s179
      %p186 = scmp.eq.s32.totalorder %s31, 1
      %p187 = por %p185, %p186
      %p188 = scmp.ne.s32.totalorder %s179, %s180
      %p189 = scmp.eq.s32.totalorder %s31, 0
      %p190 = por %p188, %p189
      %p191 = scmp.ne.s32.totalorder %s179, %s180
      %p192 = scmp.eq.s32.totalorder %s32, 1
      %p193 = por %p191, %p192
      %p195 = scmp.ne.s32.totalorder %s180, %s194
      %p196 = scmp.eq.s32.totalorder %s32, 0
      %p197 = por %p195, %p196
      %s199 = sadd.s32 %s198, 1
      %p202 = scmp.eq.s32.totalorder %s26, 1
      %p203 = scmp.ne.s32.totalorder %s198, %s200
      %p204 = scmp.eq.s32.totalorder %s26, 0
      %p205 = por %p203, %p204
      %p206 = scmp.ne.s32.totalorder %s198, %s200
      %p207 = scmp.eq.s32.totalorder %s31, 1
      %p208 = por %p206, %p207
      %p209 = scmp.ne.s32.totalorder %s200, %s201
      %p210 = scmp.eq.s32.totalorder %s31, 0
      %p211 = por %p209, %p210
      %p212 = scmp.ne.s32.totalorder %s200, %s201
      %p213 = scmp.eq.s32.totalorder %s32, 1
      %p214 = por %p212, %p213
      %p216 = scmp.ne.s32.totalorder %s201, %s215
      %p217 = scmp.eq.s32.totalorder %s32, 0
      %p218 = por %p216, %p217
      %s220 = sadd.s32 %s219, 1
      %p223 = scmp.eq.s32.totalorder %s26, 1
      %p224 = scmp.ne.s32.totalorder %s219, %s221
      %p225 = scmp.eq.s32.totalorder %s26, 0
      %p226 = por %p224, %p225
      %p227 = scmp.ne.s32.totalorder %s219, %s221
      %p228 = scmp.eq.s32.totalorder %s31, 1
      %p229 = por %p227, %p228
      %p230 = scmp.ne.s32.totalorder %s221, %s222
      %p231 = scmp.eq.s32.totalorder %s31, 0
      %p232 = por %p230, %p231
      %p233 = scmp.ne.s32.totalorder %s221, %s222
      %p234 = scmp.eq.s32.totalorder %s32, 1
      %p235 = por %p233, %p234
      %p237 = scmp.ne.s32.totalorder %s222, %s236
      %p238 = scmp.eq.s32.totalorder %s32, 0
      %p239 = por %p237, %p238
      %s241 = sadd.s32 %s240, 1
      %p244 = scmp.eq.s32.totalorder %s26, 1
      %p245 = scmp.ne.s32.totalorder %s240, %s242
      %p246 = scmp.eq.s32.totalorder %s26, 0
      %p247 = por %p245, %p246
      %p248 = scmp.ne.s32.totalorder %s240, %s242
      %p249 = scmp.eq.s32.totalorder %s31, 1
      %p250 = por %p248, %p249
      %p251 = scmp.ne.s32.totalorder %s242, %s243
      %p252 = scmp.eq.s32.totalorder %s31, 0
      %p253 = por %p251, %p252
      %p254 = scmp.ne.s32.totalorder %s242, %s243
      %p255 = scmp.eq.s32.totalorder %s32, 1
      %p256 = por %p254, %p255
      %p258 = scmp.ne.s32.totalorder %s243, %s257
      %p259 = scmp.eq.s32.totalorder %s32, 0
      %p260 = por %p258, %p259
      %s262 = sadd.s32 %s261, 1
      %p265 = scmp.eq.s32.totalorder %s26, 1
      %p266 = scmp.ne.s32.totalorder %s261, %s263
      %p267 = scmp.eq.s32.totalorder %s26, 0
      %p268 = por %p266, %p267
      %p269 = scmp.ne.s32.totalorder %s261, %s263
      %p270 = scmp.eq.s32.totalorder %s31, 1
      %p271 = por %p269, %p270
      %p272 = scmp.ne.s32.totalorder %s263, %s264
      %p273 = scmp.eq.s32.totalorder %s31, 0
      %p274 = por %p272, %p273
      %p275 = scmp.ne.s32.totalorder %s263, %s264
      %p276 = scmp.eq.s32.totalorder %s32, 1
      %p277 = por %p275, %p276
      %p279 = scmp.ne.s32.totalorder %s264, %s278
      %p280 = scmp.eq.s32.totalorder %s32, 0
      %p281 = por %p279, %p280
      %s283 = sadd.s32 %s282, 1
      %p286 = scmp.eq.s32.totalorder %s26, 1
      %p287 = scmp.ne.s32.totalorder %s282, %s284
      %p288 = scmp.eq.s32.totalorder %s26, 0
      %p289 = por %p287, %p288
      %p290 = scmp.ne.s32.totalorder %s282, %s284
      %p291 = scmp.eq.s32.totalorder %s31, 1
      %p292 = por %p290, %p291
      %p293 = scmp.ne.s32.totalorder %s284, %s285
      %p294 = scmp.eq.s32.totalorder %s31, 0
      %p295 = por %p293, %p294
      %p296 = scmp.ne.s32.totalorder %s284, %s285
      %p297 = scmp.eq.s32.totalorder %s32, 1
      %p298 = por %p296, %p297
      %p300 = scmp.ne.s32.totalorder %s285, %s299
      %p301 = scmp.eq.s32.totalorder %s32, 0
      %p302 = por %p300, %p301
      %s304 = sadd.s32 %s303, 1
      %p307 = scmp.eq.s32.totalorder %s26, 1
      %p308 = scmp.ne.s32.totalorder %s303, %s305
      %p309 = scmp.eq.s32.totalorder %s26, 0
      %p310 = por %p308, %p309
      %p311 = scmp.ne.s32.totalorder %s303, %s305
      %p312 = scmp.eq.s32.totalorder %s31, 1
      %p313 = por %p311, %p312
      %p314 = scmp.ne.s32.totalorder %s305, %s306
      %p315 = scmp.eq.s32.totalorder %s31, 0
      %p316 = por %p314, %p315
      %p317 = scmp.ne.s32.totalorder %s305, %s306
      %p318 = scmp.eq.s32.totalorder %s32, 1
      %p319 = por %p317, %p318
      %p321 = scmp.ne.s32.totalorder %s306, %s320
      %p322 = scmp.eq.s32.totalorder %s32, 0
      %p323 = por %p321, %p322
      %s325 = sadd.s32 %s324, 1
      %p328 = scmp.eq.s32.totalorder %s26, 1
      %p329 = scmp.ne.s32.totalorder %s324, %s326
      %p330 = scmp.eq.s32.totalorder %s26, 0
      %p331 = por %p329, %p330
      %p332 = scmp.ne.s32.totalorder %s324, %s326
      %p333 = scmp.eq.s32.totalorder %s31, 1
      %p334 = por %p332, %p333
      %p335 = scmp.ne.s32.totalorder %s326, %s327
      %p336 = scmp.eq.s32.totalorder %s31, 0
      %p337 = por %p335, %p336
      %p338 = scmp.ne.s32.totalorder %s326, %s327
      %p339 = scmp.eq.s32.totalorder %s32, 1
      %p340 = por %p338, %p339
      %p342 = scmp.ne.s32.totalorder %s327, %s341
      %p343 = scmp.eq.s32.totalorder %s32, 0
      %p344 = por %p342, %p343
      %s346 = sadd.s32 %s345, 1
      %p349 = scmp.eq.s32.totalorder %s26, 1
      %p350 = scmp.ne.s32.totalorder %s345, %s347
      %p351 = scmp.eq.s32.totalorder %s26, 0
      %p352 = por %p350, %p351
      %p353 = scmp.ne.s32.totalorder %s345, %s347
      %p354 = scmp.eq.s32.totalorder %s31, 1
      %p355 = por %p353, %p354
      %p356 = scmp.ne.s32.totalorder %s347, %s348
      %p357 = scmp.eq.s32.totalorder %s31, 0
      %p358 = por %p356, %p357
      %p359 = scmp.ne.s32.totalorder %s347, %s348
      %p360 = scmp.eq.s32.totalorder %s32, 1
      %p361 = por %p359, %p360
      %p363 = scmp.ne.s32.totalorder %s348, %s362
      %p364 = scmp.eq.s32.totalorder %s32, 0
      %p365 = por %p363, %p364
      %s367 = sadd.s32 %s366, 1
      %p370 = scmp.eq.s32.totalorder %s26, 1
      %p371 = scmp.ne.s32.totalorder %s366, %s368
      %p372 = scmp.eq.s32.totalorder %s26, 0
      %p373 = por %p371, %p372
      %p374 = scmp.ne.s32.totalorder %s366, %s368
      %p375 = scmp.eq.s32.totalorder %s31, 1
      %p376 = por %p374, %p375
      %p377 = scmp.ne.s32.totalorder %s368, %s369
      %p378 = scmp.eq.s32.totalorder %s31, 0
      %p379 = por %p377, %p378
      %p380 = scmp.ne.s32.totalorder %s368, %s369
      %p381 = scmp.eq.s32.totalorder %s32, 1
      %p382 = por %p380, %p381
      %p384 = scmp.ne.s32.totalorder %s369, %s383
      %p385 = scmp.eq.s32.totalorder %s32, 0
      %p386 = por %p384, %p385
      %s388 = sadd.s32 %s387, 1
      %p391 = scmp.eq.s32.totalorder %s26, 1
      %p392 = scmp.ne.s32.totalorder %s387, %s389
      %p393 = scmp.eq.s32.totalorder %s26, 0
      %p394 = por %p392, %p393
      %p395 = scmp.ne.s32.totalorder %s387, %s389
      %p396 = scmp.eq.s32.totalorder %s31, 1
      %p397 = por %p395, %p396
      %p398 = scmp.ne.s32.totalorder %s389, %s390
      %p399 = scmp.eq.s32.totalorder %s31, 0
      %p400 = por %p398, %p399
      %p401 = scmp.ne.s32.totalorder %s389, %s390
      %p402 = scmp.eq.s32.totalorder %s32, 1
      %p403 = por %p401, %p402
      %p405 = scmp.ne.s32.totalorder %s390, %s404
      %p406 = scmp.eq.s32.totalorder %s32, 0
      %p407 = por %p405, %p406
      %s408 = ssub.s32 %s33, %s45
      %s409 = ssub.s32 %s34, %s41
      %s410 = sor.u32 %s408, %s409
      %p411 = scmp.eq.s32.totalorder %s410, 0
      %s413 = sadd.s32 %s412, 1
      %s414 = scalar_select %p411, %s412, %s413
      %p417 = pneg %p411
      %p418 = scmp.eq.s32.totalorder %s26, 1
      %p419 = por %p417, %p418
      %p420 = scmp.ne.s32.totalorder %s412, %s415
      %p421 = scmp.eq.s32.totalorder %s26, 0
      %p422 = por %p420, %p421
      %p423 = scmp.ne.s32.totalorder %s412, %s415
      %p424 = scmp.eq.s32.totalorder %s31, 1
      %p425 = por %p423, %p424
      %p426 = scmp.ne.s32.totalorder %s415, %s416
      %p427 = scmp.eq.s32.totalorder %s31, 0
      %p428 = por %p426, %p427
      %p429 = scmp.ne.s32.totalorder %s415, %s416
      %p430 = scmp.eq.s32.totalorder %s32, 1
      %p431 = por %p429, %p430
      %p433 = scmp.ne.s32.totalorder %s416, %s432
      %p434 = scmp.eq.s32.totalorder %s32, 0
      %p435 = por %p433, %p434
      %p436 = scmp.le.s32.totalorder 1, %s26
      %p437 = scmp.lt.s32.totalorder %s26, 3
      %p438 = pnand %p436, %p437
      %p439 = pneg %p438
      // Predicated region
      $region9: #{tpu_custom_call.1} parent=5 // pred_check
        _
      $region10: #{tpu_custom_call.1} parent=5 // pred_check_branch
        %441 = sbr.rel (%p438) target = $region12
      $region11: #{tpu_custom_call.1} parent=5 // pred_region
        %s442 = ssub.s32 %s26, 1
        // Predicated region
        $region13: #{tpu_custom_call.1} parent=11 // pred_check
          %p443 = pneg %p85
        $region14: #{tpu_custom_call.1} parent=11 // pred_check_branch
          %445 = sbr.rel (%p443) target = $region16
        $region15: #{tpu_custom_call.1} parent=11 // pred_region
          _
        $region16: #{tpu_custom_call.1} parent=11 // pred_fallthru
          _
        // Predicated region
        $region17: #{tpu_custom_call.1} parent=11 // pred_check
          %p446 = pneg %p106
        $region18: #{tpu_custom_call.1} parent=11 // pred_check_branch
          %448 = sbr.rel (%p446) target = $region20
        $region19: #{tpu_custom_call.1} parent=11 // pred_region
          _
        $region20: #{tpu_custom_call.1} parent=11 // pred_fallthru
          _
        // Predicated region
        $region21: #{tpu_custom_call.1} parent=11 // pred_check
          %p449 = pneg %p127
        $region22: #{tpu_custom_call.1} parent=11 // pred_check_branch
          %451 = sbr.rel (%p449) target = $region24
        $region23: #{tpu_custom_call.1} parent=11 // pred_region
          _
        $region24: #{tpu_custom_call.1} parent=11 // pred_fallthru
          _
        // Predicated region
        $region25: #{tpu_custom_call.1} parent=11 // pred_check
          %p452 = pneg %p148
        $region26: #{tpu_custom_call.1} parent=11 // pred_check_branch
          %454 = sbr.rel (%p452) target = $region28
        $region27: #{tpu_custom_call.1} parent=11 // pred_region
          _
        $region28: #{tpu_custom_call.1} parent=11 // pred_fallthru
          _
        // Predicated region
        $region29: #{tpu_custom_call.1} parent=11 // pred_check
          %p455 = pneg %p169
        $region30: #{tpu_custom_call.1} parent=11 // pred_check_branch
          %457 = sbr.rel (%p455) target = $region32
        $region31: #{tpu_custom_call.1} parent=11 // pred_region
          _
        $region32: #{tpu_custom_call.1} parent=11 // pred_fallthru
          _
        // Predicated region
        $region33: #{tpu_custom_call.1} parent=11 // pred_check
          %p458 = pneg %p190
        $region34: #{tpu_custom_call.1} parent=11 // pred_check_branch
          %460 = sbr.rel (%p458) target = $region36
        $region35: #{tpu_custom_call.1} parent=11 // pred_region
          _
        $region36: #{tpu_custom_call.1} parent=11 // pred_fallthru
          _
        // Predicated region
        $region37: #{tpu_custom_call.1} parent=11 // pred_check
          %p461 = pneg %p211
        $region38: #{tpu_custom_call.1} parent=11 // pred_check_branch
          %463 = sbr.rel (%p461) target = $region40
        $region39: #{tpu_custom_call.1} parent=11 // pred_region
          _
        $region40: #{tpu_custom_call.1} parent=11 // pred_fallthru
          _
        // Predicated region
        $region41: #{tpu_custom_call.1} parent=11 // pred_check
          %p464 = pneg %p232
        $region42: #{tpu_custom_call.1} parent=11 // pred_check_branch
          %466 = sbr.rel (%p464) target = $region44
        $region43: #{tpu_custom_call.1} parent=11 // pred_region
          _
        $region44: #{tpu_custom_call.1} parent=11 // pred_fallthru
          _
        // Predicated region
        $region45: #{tpu_custom_call.1} parent=11 // pred_check
          %p467 = pneg %p253
        $region46: #{tpu_custom_call.1} parent=11 // pred_check_branch
          %469 = sbr.rel (%p467) target = $region48
        $region47: #{tpu_custom_call.1} parent=11 // pred_region
          _
        $region48: #{tpu_custom_call.1} parent=11 // pred_fallthru
          _
        // Predicated region
        $region49: #{tpu_custom_call.1} parent=11 // pred_check
          %p470 = pneg %p274
        $region50: #{tpu_custom_call.1} parent=11 // pred_check_branch
          %472 = sbr.rel (%p470) target = $region52
        $region51: #{tpu_custom_call.1} parent=11 // pred_region
          _
        $region52: #{tpu_custom_call.1} parent=11 // pred_fallthru
          _
        // Predicated region
        $region53: #{tpu_custom_call.1} parent=11 // pred_check
          %p473 = pneg %p295
        $region54: #{tpu_custom_call.1} parent=11 // pred_check_branch
          %475 = sbr.rel (%p473) target = $region56
        $region55: #{tpu_custom_call.1} parent=11 // pred_region
          _
        $region56: #{tpu_custom_call.1} parent=11 // pred_fallthru
          _
        // Predicated region
        $region57: #{tpu_custom_call.1} parent=11 // pred_check
          %p476 = pneg %p316
        $region58: #{tpu_custom_call.1} parent=11 // pred_check_branch
          %478 = sbr.rel (%p476) target = $region60
        $region59: #{tpu_custom_call.1} parent=11 // pred_region
          _
        $region60: #{tpu_custom_call.1} parent=11 // pred_fallthru
          _
        // Predicated region
        $region61: #{tpu_custom_call.1} parent=11 // pred_check
          %p479 = pneg %p337
        $region62: #{tpu_custom_call.1} parent=11 // pred_check_branch
          %481 = sbr.rel (%p479) target = $region64
        $region63: #{tpu_custom_call.1} parent=11 // pred_region
          _
        $region64: #{tpu_custom_call.1} parent=11 // pred_fallthru
          _
        // Predicated region
        $region65: #{tpu_custom_call.1} parent=11 // pred_check
          %p482 = pneg %p358
        $region66: #{tpu_custom_call.1} parent=11 // pred_check_branch
          %484 = sbr.rel (%p482) target = $region68
        $region67: #{tpu_custom_call.1} parent=11 // pred_region
          _
        $region68: #{tpu_custom_call.1} parent=11 // pred_fallthru
          _
        // Predicated region
        $region69: #{tpu_custom_call.1} parent=11 // pred_check
          %p485 = pneg %p379
        $region70: #{tpu_custom_call.1} parent=11 // pred_check_branch
          %487 = sbr.rel (%p485) target = $region72
        $region71: #{tpu_custom_call.1} parent=11 // pred_region
          _
        $region72: #{tpu_custom_call.1} parent=11 // pred_fallthru
          _
        // Predicated region
        $region73: #{tpu_custom_call.1} parent=11 // pred_check
          %p488 = pneg %p400
        $region74: #{tpu_custom_call.1} parent=11 // pred_check_branch
          %490 = sbr.rel (%p488) target = $region76
        $region75: #{tpu_custom_call.1} parent=11 // pred_region
          _
        $region76: #{tpu_custom_call.1} parent=11 // pred_fallthru
          _
      $region12: #{tpu_custom_call.1} parent=5 // pred_fallthru
        _
      %p491 = scmp.lt.s32.totalorder %s26, 2
      // Predicated region
      $region77: #{tpu_custom_call.1} parent=5 // pred_check
        %p492 = pneg %p491
      $region78: #{tpu_custom_call.1} parent=5 // pred_check_branch
        %494 = sbr.rel (%p492) target = $region80
      $region79: #{tpu_custom_call.1} parent=5 // pred_region
        // Predicated region
        $region81: #{tpu_custom_call.1} parent=79 // pred_check
          %p495 = pneg %p58
        $region82: #{tpu_custom_call.1} parent=79 // pred_check_branch
          %497 = sbr.rel (%p495) target = $region84
        $region83: #{tpu_custom_call.1} parent=79 // pred_region
          %p498 = scmp.lt.s32.totalorder %s33, 1
          %s499 = scalar_select %p498, %s33, 1
          %s500 = smul.addr %s499, 8
          %s501 = smul.addr %s500, 8
          %s502 = scalar_lea.vmem %s0, %s501
        $region84: #{tpu_custom_call.1} parent=79 // pred_fallthru
          _
      $region80: #{tpu_custom_call.1} parent=5 // pred_fallthru
        _
      %p503 = scmp.le.s32.totalorder 1, %s26
      %p504 = scmp.lt.s32.totalorder %s26, 3
      %p505 = pnand %p503, %p504
      %p506 = pneg %p505
      // Predicated region
      $region85: #{tpu_custom_call.1} parent=5 // pred_check
        _
      $region86: #{tpu_custom_call.1} parent=5 // pred_check_branch
        %508 = sbr.rel (%p505) target = $region88
      $region87: #{tpu_custom_call.1} parent=5 // pred_region
        %s509 = ssub.s32 %s26, 1
        %p510 = scmp.lt.s32.totalorder %s35, 1
        %s511 = scalar_select %p510, %s35, 1
        %s512 = smul.addr %s511, 8
        %s513 = smul.addr %s512, 8
        %s514 = scalar_lea.vmem %s0, %s513
        %p515 = pneg %p64
        %p516 = pneg %p61
        %p517 = pneg %p85
        %p518 = pneg %p82
        %p519 = pneg %p106
        %p520 = pneg %p103
        %p521 = pneg %p127
        %p522 = pneg %p124
        %p523 = pneg %p148
        %p524 = pneg %p145
        %p525 = pneg %p169
        %p526 = pneg %p166
        %p527 = pneg %p190
        %p528 = pneg %p187
        %p529 = pneg %p211
        %p530 = pneg %p208
        %p531 = pneg %p232
        %p532 = pneg %p229
        %p533 = pneg %p253
        %p534 = pneg %p250
        %p535 = pneg %p274
        %p536 = pneg %p271
        %p537 = pneg %p295
        %p538 = pneg %p292
        %p539 = pneg %p316
        %p540 = pneg %p313
        %p541 = pneg %p337
        %p542 = pneg %p334
        %p543 = pneg %p358
        %p544 = pneg %p355
        %p545 = pneg %p379
        %p546 = pneg %p376
        %p547 = pneg %p400
        %p548 = pneg %p397
        %p549 = pneg %p428
        %p550 = pneg %p425
        %s551 = sand.u32 %s415, 1
        %s552 = scalar_lea.sflag [#allocation5], %s551
        %s553 = sand.u32 %s415, 1
        %s554 = smul.addr %s553, 64
        %s555 = scalar_lea.vmem [#allocation4], %s554
        %p556 = scmp.lt.s32.totalorder %s35, 1
        %s557 = scalar_select %p556, %s35, 1
        %s558 = smul.addr %s557, 8
        %s559 = smul.addr %s558, 8
        %s560 = scalar_lea.vmem %s0, %s559
        %s561 = smul.u32 8, %s36
        %p563 = scmp.eq.s32.totalorder %s36, 0
        // Predicated region
        $region89: #{tpu_custom_call.1} parent=87 // pred_check
          %p564 = pneg %p563
        $region90: #{tpu_custom_call.1} parent=87 // pred_check_branch
          %566 = sbr.rel (%p564) target = $region92
        $region91: #{tpu_custom_call.1} parent=87 // pred_region
          %v567 = vld [vmem:[%s560] sm:$0xff]
          %v568 = vld [vmem:[%s560 + $0x8] sm:$0xff]
          %v569 = vld [vmem:[%s560 + $0x10] sm:$0xff]
          %v570 = vld [vmem:[%s560 + $0x18] sm:$0xff]
          %v571 = vld [vmem:[%s560 + $0x20] sm:$0xff]
          %v572 = vld [vmem:[%s560 + $0x28] sm:$0xff]
          %v573 = vld [vmem:[%s560 + $0x30] sm:$0xff]
          %v574 = vld [vmem:[%s560 + $0x38] sm:$0xff]
          %v575 = vld [vmem:[%s1] sm:$0x1]
          %v576 = vld [vmem:[%s2] sm:$0x1]
          %577 = vadd.xlane.f32.xlu0 %v567
          %v578 = vpop.xlane.xlu0 %577
          %579 = vadd.xlane.f32.xlu0 %v568
          %v580 = vpop.xlane.xlu0 %579
          %581 = vadd.xlane.f32.xlu0 %v569
          %v582 = vpop.xlane.xlu0 %581
          %583 = vadd.xlane.f32.xlu0 %v570
          %v584 = vpop.xlane.xlu0 %583
          %585 = vadd.xlane.f32.xlu0 %v571
          %v586 = vpop.xlane.xlu0 %585
          %587 = vadd.xlane.f32.xlu0 %v572
          %v588 = vpop.xlane.xlu0 %587
          %589 = vadd.xlane.f32.xlu0 %v573
          %v590 = vpop.xlane.xlu0 %589
          %591 = vadd.xlane.f32.xlu0 %v574
          %v592 = vpop.xlane.xlu0 %591
          %v593 = vrcp.pop 128.0
          %v594 = vmul.f32 %v578, %v593
          %v595 = vmul.f32 %v580, %v593
          %v596 = vmul.f32 %v582, %v593
          %v597 = vmul.f32 %v584, %v593
          %v598 = vmul.f32 %v586, %v593
          %v599 = vmul.f32 %v588, %v593
          %v600 = vmul.f32 %v590, %v593
          %v601 = vmul.f32 %v592, %v593
          %v602 = vsub.f32 %v567, %v594
          %v603 = vsub.f32 %v568, %v595
          %v604 = vsub.f32 %v569, %v596
          %v605 = vsub.f32 %v570, %v597
          %v606 = vsub.f32 %v571, %v598
          %v607 = vsub.f32 %v572, %v599
          %v608 = vsub.f32 %v573, %v600
          %v609 = vsub.f32 %v574, %v601
          %v610 = vmul.f32 %v602, %v602
          %v611 = vmul.f32 %v603, %v603
          %v612 = vmul.f32 %v604, %v604
          %v613 = vmul.f32 %v605, %v605
          %v614 = vmul.f32 %v606, %v606
          %v615 = vmul.f32 %v607, %v607
          %v616 = vmul.f32 %v608, %v608
          %v617 = vmul.f32 %v609, %v609
          %618 = vadd.xlane.f32.xlu0 %v610
          %v619 = vpop.xlane.xlu0 %618
          %620 = vadd.xlane.f32.xlu0 %v611
          %v621 = vpop.xlane.xlu0 %620
          %622 = vadd.xlane.f32.xlu0 %v612
          %v623 = vpop.xlane.xlu0 %622
          %624 = vadd.xlane.f32.xlu0 %v613
          %v625 = vpop.xlane.xlu0 %624
          %626 = vadd.xlane.f32.xlu0 %v614
          %v627 = vpop.xlane.xlu0 %626
          %628 = vadd.xlane.f32.xlu0 %v615
          %v629 = vpop.xlane.xlu0 %628
          %630 = vadd.xlane.f32.xlu0 %v616
          %v631 = vpop.xlane.xlu0 %630
          %632 = vadd.xlane.f32.xlu0 %v617
          %v633 = vpop.xlane.xlu0 %632
          %v634 = vmul.f32 %v619, %v593
          %v635 = vmul.f32 %v621, %v593
          %v636 = vmul.f32 %v623, %v593
          %v637 = vmul.f32 %v625, %v593
          %v638 = vmul.f32 %v627, %v593
          %v639 = vmul.f32 %v629, %v593
          %v640 = vmul.f32 %v631, %v593
          %v641 = vmul.f32 %v633, %v593
          %v642 = vadd.f32 %v634, 1e-05
          %v643 = vadd.f32 %v635, 1e-05
          %v644 = vadd.f32 %v636, 1e-05
          %v645 = vadd.f32 %v637, 1e-05
          %v646 = vadd.f32 %v638, 1e-05
          %v647 = vadd.f32 %v639, 1e-05
          %v648 = vadd.f32 %v640, 1e-05
          %v649 = vadd.f32 %v641, 1e-05
          %v650 = vrsqrt.pop %v642
          %v651 = vrsqrt.pop %v643
          %v652 = vrsqrt.pop %v644
          %v653 = vrsqrt.pop %v645
          %v654 = vrsqrt.pop %v646
          %v655 = vrsqrt.pop %v647
          %v656 = vrsqrt.pop %v648
          %v657 = vrsqrt.pop %v649
          %v658 = vmul.f32 %v602, %v650
          %v659 = vmul.f32 %v603, %v651
          %v660 = vmul.f32 %v604, %v652
          %v661 = vmul.f32 %v605, %v653
          %v662 = vmul.f32 %v606, %v654
          %v663 = vmul.f32 %v607, %v655
          %v664 = vmul.f32 %v608, %v656
          %v665 = vmul.f32 %v609, %v657
          %v667 = vlaneseq
          %v668 = vshrl.u32 %v667, 7
          %v669 = vsub.s32 0, %v668
          %v670 = vrot.slane %v575, %v669
          %v672 = vmul.f32 %v658, %v670
          %v673 = vmul.f32 %v659, %v670
          %v674 = vmul.f32 %v660, %v670
          %v675 = vmul.f32 %v661, %v670
          %v676 = vmul.f32 %v662, %v670
          %v677 = vmul.f32 %v663, %v670
          %v678 = vmul.f32 %v664, %v670
          %v679 = vmul.f32 %v665, %v670
          %v681 = vlaneseq
          %v682 = vshrl.u32 %v681, 7
          %v683 = vsub.s32 0, %v682
          %v684 = vrot.slane %v576, %v683
          %v686 = vadd.f32 %v672, %v684
          %v687 = vadd.f32 %v673, %v684
          %v688 = vadd.f32 %v674, %v684
          %v689 = vadd.f32 %v675, %v684
          %v690 = vadd.f32 %v676, %v684
          %v691 = vadd.f32 %v677, %v684
          %v692 = vadd.f32 %v678, %v684
          %v693 = vadd.f32 %v679, %v684
          %v694 = vpack.c.bf16 %v687, %v686
          %v695 = vpack.c.bf16 %v689, %v688
          %v696 = vpack.c.bf16 %v691, %v690
          %v697 = vpack.c.bf16 %v693, %v692
          %v698 = vld [vmem:[%s5] sm:$0xf]
          %v699 = vld [vmem:[%s5 + $0x4] sm:$0xf]
          %v700 = vld [vmem:[%s5 + $0x8] sm:$0xf]
          %v701 = vld [vmem:[%s5 + $0xc] sm:$0xf]
          %v702 = vld [vmem:[%s5 + $0x10] sm:$0xf]
          %v703 = vld [vmem:[%s5 + $0x14] sm:$0xf]
          %v704 = vld [vmem:[%s5 + $0x18] sm:$0xf]
          %v705 = vld [vmem:[%s5 + $0x1c] sm:$0xf]
          %v706 = vld [vmem:[%s5 + $0x20] sm:$0xf]
          %v707 = vld [vmem:[%s5 + $0x24] sm:$0xf]
          %v708 = vld [vmem:[%s5 + $0x28] sm:$0xf]
          %v709 = vld [vmem:[%s5 + $0x2c] sm:$0xf]
          %v710 = vld [vmem:[%s5 + $0x30] sm:$0xf]
          %v711 = vld [vmem:[%s5 + $0x34] sm:$0xf]
          %v712 = vld [vmem:[%s5 + $0x38] sm:$0xf]
          %v713 = vld [vmem:[%s5 + $0x3c] sm:$0xf]
          %v714 = vld [vmem:[%s6] sm:$0x1]
          %v716 = vlaneseq
          %v717 = vshrl.u32 %v716, 7
          %v718 = vsub.s32 0, %v717
          %v719 = vrot.slane %v714, %v718
          %v737 = vunpack.c.l.b16 %v698
          %v738 = vunpack.c.l.b16 %v699
          %v739 = vunpack.c.l.b16 %v700
          %v740 = vunpack.c.l.b16 %v701
          %v741 = vunpack.c.l.b16 %v702
          %v742 = vunpack.c.l.b16 %v703
          %v743 = vunpack.c.l.b16 %v704
          %v744 = vunpack.c.l.b16 %v705
          %v745 = vunpack.c.l.b16 %v706
          %v746 = vunpack.c.l.b16 %v707
          %v747 = vunpack.c.l.b16 %v708
          %v748 = vunpack.c.l.b16 %v709
          %v749 = vunpack.c.l.b16 %v710
          %v750 = vunpack.c.l.b16 %v711
          %v751 = vunpack.c.l.b16 %v712
          %v752 = vunpack.c.l.b16 %v713
          %v753 = vpack.c.b16 %v738, %v737
          %v754 = vpack.c.b16 %v740, %v739
          %v755 = vpack.c.b16 %v742, %v741
          %v756 = vpack.c.b16 %v744, %v743
          %v757 = vpack.c.b16 %v746, %v745
          %v758 = vpack.c.b16 %v748, %v747
          %v759 = vpack.c.b16 %v750, %v749
          %v760 = vpack.c.b16 %v752, %v751
          %769 = vmatprep.subr.bf16.mxu0 0
          %770 = vmatpush1.bf16.msra.mxu0 %v753
          %771 = vmatprep.subr.bf16.mxu0 0
          %772 = vmatpush1.bf16.msra.mxu0 %v754
          %773 = vmatprep.subr.bf16.mxu0 0
          %774 = vmatpush1.bf16.msra.mxu0 %v755
          %775 = vmatprep.subr.bf16.mxu0 0
          %776 = vmatpush1.bf16.msra.mxu0 %v756
          %777 = vmatprep.subr.bf16.mxu0 0
          %778 = vmatpush1.bf16.msra.mxu0 %v757
          %779 = vmatprep.subr.bf16.mxu0 0
          %780 = vmatpush1.bf16.msra.mxu0 %v758
          %781 = vmatprep.subr.bf16.mxu0 0
          %782 = vmatpush1.bf16.msra.mxu0 %v759
          %783 = vmatprep.subr.bf16.mxu0 0
          %784 = vmatpush1.bf16.msra.mxu0 %v760
          %785 = vmatprep.subr.bf16.mxu0 0
          %786 = vmatpush1.bf16.msra.mxu0 0
          %787 = vmatprep.subr.bf16.mxu0 0
          %788 = vmatpush1.bf16.msra.mxu0 0
          %789 = vmatprep.subr.bf16.mxu0 0
          %790 = vmatpush1.bf16.msra.mxu0 0
          %791 = vmatprep.subr.bf16.mxu0 0
          %792 = vmatpush1.bf16.msra.mxu0 0
          %793 = vmatprep.subr.bf16.mxu0 0
          %794 = vmatpush1.bf16.msra.mxu0 0
          %795 = vmatprep.subr.bf16.mxu0 0
          %796 = vmatpush1.bf16.msra.mxu0 0
          %797 = vmatprep.subr.bf16.mxu0 0
          %798 = vmatpush1.bf16.msra.mxu0 0
          %799 = vmatprep.subr.bf16.mxu0 0
          %800 = vmatpush1.bf16.msra.mxu0 0
          %801 = vmatprep.mubr.bf16.mxu0 0
          %802 = vmatmul.mubr.bf16.gmra.mrb[0].mxu0 %v694
          %v803 = vpop.f32.mrb[0].mxu0
          %v804 = vadd.f32 %v719, %v803
          %v805 = vpop.f32.mrb[0].mxu0
          %v806 = vpop.f32.mrb[0].mxu0
          %v807 = vadd.f32 %v719, %v806
          %v808 = vpop.f32.mrb[0].mxu0
          %809 = vmatprep.mubr.bf16.mxu0 0
          %810 = vmatmul.mubr.bf16.gmra.mrb[0].mxu0 %v695
          %v811 = vpop.f32.mrb[0].mxu0
          %v812 = vadd.f32 %v719, %v811
          %v813 = vpop.f32.mrb[0].mxu0
          %v814 = vpop.f32.mrb[0].mxu0
          %v815 = vadd.f32 %v719, %v814
          %v816 = vpop.f32.mrb[0].mxu0
          %817 = vmatprep.mubr.bf16.mxu0 0
          %818 = vmatmul.mubr.bf16.gmra.mrb[0].mxu0 %v696
          %v819 = vpop.f32.mrb[0].mxu0
          %v820 = vadd.f32 %v719, %v819
          %v821 = vpop.f32.mrb[0].mxu0
          %v822 = vpop.f32.mrb[0].mxu0
          %v823 = vadd.f32 %v719, %v822
          %v824 = vpop.f32.mrb[0].mxu0
          %825 = vmatprep.mubr.bf16.mxu0 0
          %826 = vmatmul.mubr.bf16.gmra.mrb[0].mxu0 %v697
          %v827 = vpop.f32.mrb[0].mxu0
          %v828 = vadd.f32 %v719, %v827
          %v829 = vpop.f32.mrb[0].mxu0
          %v830 = vpop.f32.mrb[0].mxu0
          %v831 = vadd.f32 %v719, %v830
          %v832 = vpop.f32.mrb[0].mxu0
          %833 = vdwg.mxu0
          %v834 = vld [vmem:[%s7] sm:$0xf]
          %v835 = vld [vmem:[%s7 + $0x4] sm:$0xf]
          %v836 = vld [vmem:[%s7 + $0x8] sm:$0xf]
          %v837 = vld [vmem:[%s7 + $0xc] sm:$0xf]
          %v838 = vld [vmem:[%s7 + $0x10] sm:$0xf]
          %v839 = vld [vmem:[%s7 + $0x14] sm:$0xf]
          %v840 = vld [vmem:[%s7 + $0x18] sm:$0xf]
          %v841 = vld [vmem:[%s7 + $0x1c] sm:$0xf]
          %v842 = vld [vmem:[%s7 + $0x20] sm:$0xf]
          %v843 = vld [vmem:[%s7 + $0x24] sm:$0xf]
          %v844 = vld [vmem:[%s7 + $0x28] sm:$0xf]
          %v845 = vld [vmem:[%s7 + $0x2c] sm:$0xf]
          %v846 = vld [vmem:[%s7 + $0x30] sm:$0xf]
          %v847 = vld [vmem:[%s7 + $0x34] sm:$0xf]
          %v848 = vld [vmem:[%s7 + $0x38] sm:$0xf]
          %v849 = vld [vmem:[%s7 + $0x3c] sm:$0xf]
          %v850 = vld [vmem:[%s8] sm:$0x1]
          %v852 = vlaneseq
          %v853 = vshrl.u32 %v852, 7
          %v854 = vsub.s32 0, %v853
          %v855 = vrot.slane %v850, %v854
          %v873 = vunpack.c.l.b16 %v834
          %v874 = vunpack.c.l.b16 %v835
          %v875 = vunpack.c.l.b16 %v836
          %v876 = vunpack.c.l.b16 %v837
          %v877 = vunpack.c.l.b16 %v838
          %v878 = vunpack.c.l.b16 %v839
          %v879 = vunpack.c.l.b16 %v840
          %v880 = vunpack.c.l.b16 %v841
          %v881 = vunpack.c.l.b16 %v842
          %v882 = vunpack.c.l.b16 %v843
          %v883 = vunpack.c.l.b16 %v844
          %v884 = vunpack.c.l.b16 %v845
          %v885 = vunpack.c.l.b16 %v846
          %v886 = vunpack.c.l.b16 %v847
          %v887 = vunpack.c.l.b16 %v848
          %v888 = vunpack.c.l.b16 %v849
          %v889 = vpack.c.b16 %v874, %v873
          %v890 = vpack.c.b16 %v876, %v875
          %v891 = vpack.c.b16 %v878, %v877
          %v892 = vpack.c.b16 %v880, %v879
          %v893 = vpack.c.b16 %v882, %v881
          %v894 = vpack.c.b16 %v884, %v883
          %v895 = vpack.c.b16 %v886, %v885
          %v896 = vpack.c.b16 %v888, %v887
          %905 = vmatprep.subr.bf16.mxu0 0
          %906 = vmatpush1.bf16.msra.mxu0 %v889
          %907 = vmatprep.subr.bf16.mxu0 0
          %908 = vmatpush1.bf16.msra.mxu0 %v890
          %909 = vmatprep.subr.bf16.mxu0 0
          %910 = vmatpush1.bf16.msra.mxu0 %v891
          %911 = vmatprep.subr.bf16.mxu0 0
          %912 = vmatpush1.bf16.msra.mxu0 %v892
          %913 = vmatprep.subr.bf16.mxu0 0
          %914 = vmatpush1.bf16.msra.mxu0 %v893
          %915 = vmatprep.subr.bf16.mxu0 0
          %916 = vmatpush1.bf16.msra.mxu0 %v894
          %917 = vmatprep.subr.bf16.mxu0 0
          %918 = vmatpush1.bf16.msra.mxu0 %v895
          %919 = vmatprep.subr.bf16.mxu0 0
          %920 = vmatpush1.bf16.msra.mxu0 %v896
          %921 = vmatprep.subr.bf16.mxu0 0
          %922 = vmatpush1.bf16.msra.mxu0 0
          %923 = vmatprep.subr.bf16.mxu0 0
          %924 = vmatpush1.bf16.msra.mxu0 0
          %925 = vmatprep.subr.bf16.mxu0 0
          %926 = vmatpush1.bf16.msra.mxu0 0
          %927 = vmatprep.subr.bf16.mxu0 0
          %928 = vmatpush1.bf16.msra.mxu0 0
          %929 = vmatprep.subr.bf16.mxu0 0
          %930 = vmatpush1.bf16.msra.mxu0 0
          %931 = vmatprep.subr.bf16.mxu0 0
          %932 = vmatpush1.bf16.msra.mxu0 0
          %933 = vmatprep.subr.bf16.mxu0 0
          %934 = vmatpush1.bf16.msra.mxu0 0
          %935 = vmatprep.subr.bf16.mxu0 0
          %936 = vmatpush1.bf16.msra.mxu0 0
          %937 = vmatprep.mubr.bf16.mxu0 0
          %938 = vmatmul.mubr.bf16.gmra.mrb[0].mxu0 %v694
          %v939 = vpop.f32.mrb[0].mxu0
          %v940 = vadd.f32 %v855, %v939
          %v941 = vpop.f32.mrb[0].mxu0
          %v942 = vpop.f32.mrb[0].mxu0
          %v943 = vadd.f32 %v855, %v942
          %v944 = vpop.f32.mrb[0].mxu0
          %945 = vmatprep.mubr.bf16.mxu0 0
          %946 = vmatmul.mubr.bf16.gmra.mrb[0].mxu0 %v695
          %v947 = vpop.f32.mrb[0].mxu0
          %v948 = vadd.f32 %v855, %v947
          %v949 = vpop.f32.mrb[0].mxu0
          %v950 = vpop.f32.mrb[0].mxu0
          %v951 = vadd.f32 %v855, %v950
          %v952 = vpop.f32.mrb[0].mxu0
          %953 = vmatprep.mubr.bf16.mxu0 0
          %954 = vmatmul.mubr.bf16.gmra.mrb[0].mxu0 %v696
          %v955 = vpop.f32.mrb[0].mxu0
          %v956 = vadd.f32 %v855, %v955
          %v957 = vpop.f32.mrb[0].mxu0
          %v958 = vpop.f32.mrb[0].mxu0
          %v959 = vadd.f32 %v855, %v958
          %v960 = vpop.f32.mrb[0].mxu0
          %961 = vmatprep.mubr.bf16.mxu0 0
          %962 = vmatmul.mubr.bf16.gmra.mrb[0].mxu0 %v697
          %v963 = vpop.f32.mrb[0].mxu0
          %v964 = vadd.f32 %v855, %v963
          %v965 = vpop.f32.mrb[0].mxu0
          %v966 = vpop.f32.mrb[0].mxu0
          %v967 = vadd.f32 %v855, %v966
          %v968 = vpop.f32.mrb[0].mxu0
          %969 = vdwg.mxu0
          %v970 = vpack.c.bf16 %v807, %v804
          %v971 = vpack.c.bf16 %v815, %v812
          %v972 = vpack.c.bf16 %v823, %v820
          %v973 = vpack.c.bf16 %v831, %v828
          %vm974 = vcmask 261120
          %975 = vst.msk [vmem:[#allocation2] sm:$0xff] %vm974, %v970
          %976 = vst.msk [vmem:[#allocation2 + $0x8] sm:$0xff] %vm974, %v971
          %977 = vst.msk [vmem:[#allocation2 + $0x10] sm:$0xff] %vm974, %v972
          %978 = vst.msk [vmem:[#allocation2 + $0x18] sm:$0xff] %vm974, %v973
          %v979 = vpack.c.bf16 %v943, %v940
          %v980 = vpack.c.bf16 %v951, %v948
          %v981 = vpack.c.bf16 %v959, %v956
          %v982 = vpack.c.bf16 %v967, %v964
          %983 = vst.msk [vmem:[#allocation3] sm:$0xff] %vm974, %v979
          %984 = vst.msk [vmem:[#allocation3 + $0x8] sm:$0xff] %vm974, %v980
          %985 = vst.msk [vmem:[#allocation3 + $0x10] sm:$0xff] %vm974, %v981
          %986 = vst.msk [vmem:[#allocation3 + $0x18] sm:$0xff] %vm974, %v982
          %s987 = scalar_lea.vmem %s5, 64
          %v988 = vld [vmem:[%s987] sm:$0xf]
          %v989 = vld [vmem:[%s987 + $0x4] sm:$0xf]
          %v990 = vld [vmem:[%s987 + $0x8] sm:$0xf]
          %v991 = vld [vmem:[%s987 + $0xc] sm:$0xf]
          %v992 = vld [vmem:[%s987 + $0x10] sm:$0xf]
          %v993 = vld [vmem:[%s987 + $0x14] sm:$0xf]
          %v994 = vld [vmem:[%s987 + $0x18] sm:$0xf]
          %v995 = vld [vmem:[%s987 + $0x1c] sm:$0xf]
          %v996 = vld [vmem:[%s987 + $0x20] sm:$0xf]
          %v997 = vld [vmem:[%s987 + $0x24] sm:$0xf]
          %v998 = vld [vmem:[%s987 + $0x28] sm:$0xf]
          %v999 = vld [vmem:[%s987 + $0x2c] sm:$0xf]
          %v1000 = vld [vmem:[%s987 + $0x30] sm:$0xf]
          %v1001 = vld [vmem:[%s987 + $0x34] sm:$0xf]
          %v1002 = vld [vmem:[%s987 + $0x38] sm:$0xf]
          %v1003 = vld [vmem:[%s987 + $0x3c] sm:$0xf]
          %s1004 = scalar_lea.vmem %s6, 1
          %v1005 = vld [vmem:[%s1004] sm:$0x1]
          %v1007 = vlaneseq
          %v1008 = vshrl.u32 %v1007, 7
          %v1009 = vsub.s32 0, %v1008
          %v1010 = vrot.slane %v1005, %v1009
          %v1028 = vunpack.c.l.b16 %v988
          %v1029 = vunpack.c.l.b16 %v989
          %v1030 = vunpack.c.l.b16 %v990
          %v1031 = vunpack.c.l.b16 %v991
          %v1032 = vunpack.c.l.b16 %v992
          %v1033 = vunpack.c.l.b16 %v993
          %v1034 = vunpack.c.l.b16 %v994
          %v1035 = vunpack.c.l.b16 %v995
          %v1036 = vunpack.c.l.b16 %v996
          %v1037 = vunpack.c.l.b16 %v997
          %v1038 = vunpack.c.l.b16 %v998
          %v1039 = vunpack.c.l.b16 %v999
          %v1040 = vunpack.c.l.b16 %v1000
          %v1041 = vunpack.c.l.b16 %v1001
          %v1042 = vunpack.c.l.b16 %v1002
          %v1043 = vunpack.c.l.b16 %v1003
          %v1044 = vpack.c.b16 %v1029, %v1028
          %v1045 = vpack.c.b16 %v1031, %v1030
          %v1046 = vpack.c.b16 %v1033, %v1032
          %v1047 = vpack.c.b16 %v1035, %v1034
          %v1048 = vpack.c.b16 %v1037, %v1036
          %v1049 = vpack.c.b16 %v1039, %v1038
          %v1050 = vpack.c.b16 %v1041, %v1040
          %v1051 = vpack.c.b16 %v1043, %v1042
          %1060 = vmatprep.subr.bf16.mxu0 0
          %1061 = vmatpush1.bf16.msra.mxu0 %v1044
          %1062 = vmatprep.subr.bf16.mxu0 0
          %1063 = vmatpush1.bf16.msra.mxu0 %v1045
          %1064 = vmatprep.subr.bf16.mxu0 0
          %1065 = vmatpush1.bf16.msra.mxu0 %v1046
          %1066 = vmatprep.subr.bf16.mxu0 0
          %1067 = vmatpush1.bf16.msra.mxu0 %v1047
          %1068 = vmatprep.subr.bf16.mxu0 0
          %1069 = vmatpush1.bf16.msra.mxu0 %v1048
          %1070 = vmatprep.subr.bf16.mxu0 0
          %1071 = vmatpush1.bf16.msra.mxu0 %v1049
          %1072 = vmatprep.subr.bf16.mxu0 0
          %1073 = vmatpush1.bf16.msra.mxu0 %v1050
          %1074 = vmatprep.subr.bf16.mxu0 0
          %1075 = vmatpush1.bf16.msra.mxu0 %v1051
          %1076 = vmatprep.subr.bf16.mxu0 0
          %1077 = vmatpush1.bf16.msra.mxu0 0
          %1078 = vmatprep.subr.bf16.mxu0 0
          %1079 = vmatpush1.bf16.msra.mxu0 0
          %1080 = vmatprep.subr.bf16.mxu0 0
          %1081 = vmatpush1.bf16.msra.mxu0 0
          %1082 = vmatprep.subr.bf16.mxu0 0
          %1083 = vmatpush1.bf16.msra.mxu0 0
          %1084 = vmatprep.subr.bf16.mxu0 0
          %1085 = vmatpush1.bf16.msra.mxu0 0
          %1086 = vmatprep.subr.bf16.mxu0 0
          %1087 = vmatpush1.bf16.msra.mxu0 0
          %1088 = vmatprep.subr.bf16.mxu0 0
          %1089 = vmatpush1.bf16.msra.mxu0 0
          %1090 = vmatprep.subr.bf16.mxu0 0
          %1091 = vmatpush1.bf16.msra.mxu0 0
          %1092 = vmatprep.mubr.bf16.mxu0 0
          %1093 = vmatmul.mubr.bf16.gmra.mrb[0].mxu0 %v694
          %v1094 = vpop.f32.mrb[0].mxu0
          %v1095 = vadd.f32 %v1010, %v1094
          %v1096 = vpop.f32.mrb[0].mxu0
          %v1097 = vpop.f32.mrb[0].mxu0
          %v1098 = vadd.f32 %v1010, %v1097
          %v1099 = vpop.f32.mrb[0].mxu0
          %1100 = vmatprep.mubr.bf16.mxu0 0
          %1101 = vmatmul.mubr.bf16.gmra.mrb[0].mxu0 %v695
          %v1102 = vpop.f32.mrb[0].mxu0
          %v1103 = vadd.f32 %v1010, %v1102
          %v1104 = vpop.f32.mrb[0].mxu0
          %v1105 = vpop.f32.mrb[0].mxu0
          %v1106 = vadd.f32 %v1010, %v1105
          %v1107 = vpop.f32.mrb[0].mxu0
          %1108 = vmatprep.mubr.bf16.mxu0 0
          %1109 = vmatmul.mubr.bf16.gmra.mrb[0].mxu0 %v696
          %v1110 = vpop.f32.mrb[0].mxu0
          %v1111 = vadd.f32 %v1010, %v1110
          %v1112 = vpop.f32.mrb[0].mxu0
          %v1113 = vpop.f32.mrb[0].mxu0
          %v1114 = vadd.f32 %v1010, %v1113
          %v1115 = vpop.f32.mrb[0].mxu0
          %1116 = vmatprep.mubr.bf16.mxu0 0
          %1117 = vmatmul.mubr.bf16.gmra.mrb[0].mxu0 %v697
          %v1118 = vpop.f32.mrb[0].mxu0
          %v1119 = vadd.f32 %v1010, %v1118
          %v1120 = vpop.f32.mrb[0].mxu0
          %v1121 = vpop.f32.mrb[0].mxu0
          %v1122 = vadd.f32 %v1010, %v1121
          %v1123 = vpop.f32.mrb[0].mxu0
          %1124 = vdwg.mxu0
          %s1125 = scalar_lea.vmem %s7, 64
          %v1126 = vld [vmem:[%s1125] sm:$0xf]
          %v1127 = vld [vmem:[%s1125 + $0x4] sm:$0xf]
          %v1128 = vld [vmem:[%s1125 + $0x8] sm:$0xf]
          %v1129 = vld [vmem:[%s1125 + $0xc] sm:$0xf]
          %v1130 = vld [vmem:[%s1125 + $0x10] sm:$0xf]
          %v1131 = vld [vmem:[%s1125 + $0x14] sm:$0xf]
          %v1132 = vld [vmem:[%s1125 + $0x18] sm:$0xf]
          %v1133 = vld [vmem:[%s1125 + $0x1c] sm:$0xf]
          %v1134 = vld [vmem:[%s1125 + $0x20] sm:$0xf]
          %v1135 = vld [vmem:[%s1125 + $0x24] sm:$0xf]
          %v1136 = vld [vmem:[%s1125 + $0x28] sm:$0xf]
          %v1137 = vld [vmem:[%s1125 + $0x2c] sm:$0xf]
          %v1138 = vld [vmem:[%s1125 + $0x30] sm:$0xf]
          %v1139 = vld [vmem:[%s1125 + $0x34] sm:$0xf]
          %v1140 = vld [vmem:[%s1125 + $0x38] sm:$0xf]
          %v1141 = vld [vmem:[%s1125 + $0x3c] sm:$0xf]
          %s1142 = scalar_lea.vmem %s8, 1
          %v1143 = vld [vmem:[%s1142] sm:$0x1]
          %v1145 = vlaneseq
          %v1146 = vshrl.u32 %v1145, 7
          %v1147 = vsub.s32 0, %v1146
          %v1148 = vrot.slane %v1143, %v1147
          %v1166 = vunpack.c.l.b16 %v1126
          %v1167 = vunpack.c.l.b16 %v1127
          %v1168 = vunpack.c.l.b16 %v1128
          %v1169 = vunpack.c.l.b16 %v1129
          %v1170 = vunpack.c.l.b16 %v1130
          %v1171 = vunpack.c.l.b16 %v1131
          %v1172 = vunpack.c.l.b16 %v1132
          %v1173 = vunpack.c.l.b16 %v1133
          %v1174 = vunpack.c.l.b16 %v1134
          %v1175 = vunpack.c.l.b16 %v1135
          %v1176 = vunpack.c.l.b16 %v1136
          %v1177 = vunpack.c.l.b16 %v1137
          %v1178 = vunpack.c.l.b16 %v1138
          %v1179 = vunpack.c.l.b16 %v1139
          %v1180 = vunpack.c.l.b16 %v1140
          %v1181 = vunpack.c.l.b16 %v1141
          %v1182 = vpack.c.b16 %v1167, %v1166
          %v1183 = vpack.c.b16 %v1169, %v1168
          %v1184 = vpack.c.b16 %v1171, %v1170
          %v1185 = vpack.c.b16 %v1173, %v1172
          %v1186 = vpack.c.b16 %v1175, %v1174
          %v1187 = vpack.c.b16 %v1177, %v1176
          %v1188 = vpack.c.b16 %v1179, %v1178
          %v1189 = vpack.c.b16 %v1181, %v1180
          %1198 = vmatprep.subr.bf16.mxu0 0
          %1199 = vmatpush1.bf16.msra.mxu0 %v1182
          %1200 = vmatprep.subr.bf16.mxu0 0
          %1201 = vmatpush1.bf16.msra.mxu0 %v1183
          %1202 = vmatprep.subr.bf16.mxu0 0
          %1203 = vmatpush1.bf16.msra.mxu0 %v1184
          %1204 = vmatprep.subr.bf16.mxu0 0
          %1205 = vmatpush1.bf16.msra.mxu0 %v1185
          %1206 = vmatprep.subr.bf16.mxu0 0
          %1207 = vmatpush1.bf16.msra.mxu0 %v1186
          %1208 = vmatprep.subr.bf16.mxu0 0
          %1209 = vmatpush1.bf16.msra.mxu0 %v1187
          %1210 = vmatprep.subr.bf16.mxu0 0
          %1211 = vmatpush1.bf16.msra.mxu0 %v1188
          %1212 = vmatprep.subr.bf16.mxu0 0
          %1213 = vmatpush1.bf16.msra.mxu0 %v1189
          %1214 = vmatprep.subr.bf16.mxu0 0
          %1215 = vmatpush1.bf16.msra.mxu0 0
          %1216 = vmatprep.subr.bf16.mxu0 0
          %1217 = vmatpush1.bf16.msra.mxu0 0
          %1218 = vmatprep.subr.bf16.mxu0 0
          %1219 = vmatpush1.bf16.msra.mxu0 0
          %1220 = vmatprep.subr.bf16.mxu0 0
          %1221 = vmatpush1.bf16.msra.mxu0 0
          %1222 = vmatprep.subr.bf16.mxu0 0
          %1223 = vmatpush1.bf16.msra.mxu0 0
          %1224 = vmatprep.subr.bf16.mxu0 0
          %1225 = vmatpush1.bf16.msra.mxu0 0
          %1226 = vmatprep.subr.bf16.mxu0 0
          %1227 = vmatpush1.bf16.msra.mxu0 0
          %1228 = vmatprep.subr.bf16.mxu0 0
          %1229 = vmatpush1.bf16.msra.mxu0 0
          %1230 = vmatprep.mubr.bf16.mxu0 0
          %1231 = vmatmul.mubr.bf16.gmra.mrb[0].mxu0 %v694
          %v1232 = vpop.f32.mrb[0].mxu0
          %v1233 = vadd.f32 %v1148, %v1232
          %v1234 = vpop.f32.mrb[0].mxu0
          %v1235 = vpop.f32.mrb[0].mxu0
          %v1236 = vadd.f32 %v1148, %v1235
          %v1237 = vpop.f32.mrb[0].mxu0
          %1238 = vmatprep.mubr.bf16.mxu0 0
          %1239 = vmatmul.mubr.bf16.gmra.mrb[0].mxu0 %v695
          %v1240 = vpop.f32.mrb[0].mxu0
          %v1241 = vadd.f32 %v1148, %v1240
          %v1242 = vpop.f32.mrb[0].mxu0
          %v1243 = vpop.f32.mrb[0].mxu0
          %v1244 = vadd.f32 %v1148, %v1243
          %v1245 = vpop.f32.mrb[0].mxu0
          %1246 = vmatprep.mubr.bf16.mxu0 0
          %1247 = vmatmul.mubr.bf16.gmra.mrb[0].mxu0 %v696
          %v1248 = vpop.f32.mrb[0].mxu0
          %v1249 = vadd.f32 %v1148, %v1248
          %v1250 = vpop.f32.mrb[0].mxu0
          %v1251 = vpop.f32.mrb[0].mxu0
          %v1252 = vadd.f32 %v1148, %v1251
          %v1253 = vpop.f32.mrb[0].mxu0
          %1254 = vmatprep.mubr.bf16.mxu0 0
          %1255 = vmatmul.mubr.bf16.gmra.mrb[0].mxu0 %v697
          %v1256 = vpop.f32.mrb[0].mxu0
          %v1257 = vadd.f32 %v1148, %v1256
          %v1258 = vpop.f32.mrb[0].mxu0
          %v1259 = vpop.f32.mrb[0].mxu0
          %v1260 = vadd.f32 %v1148, %v1259
          %v1261 = vpop.f32.mrb[0].mxu0
          %1262 = vdwg.mxu0
          %v1263 = vpack.c.bf16 %v1098, %v1095
          %v1264 = vpack.c.bf16 %v1106, %v1103
          %v1265 = vpack.c.bf16 %v1114, %v1111
          %v1266 = vpack.c.bf16 %v1122, %v1119
          %s1267 = sadd.s32 0, 4
          %s1268 = smul.addr %s1267, 8
          %s1269 = scalar_lea.vmem [#allocation2], %s1268
          %1270 = vst.msk [vmem:[%s1269] sm:$0xff] %vm974, %v1263
          %1271 = vst.msk [vmem:[%s1269 + $0x8] sm:$0xff] %vm974, %v1264
          %1272 = vst.msk [vmem:[%s1269 + $0x10] sm:$0xff] %vm974, %v1265
          %1273 = vst.msk [vmem:[%s1269 + $0x18] sm:$0xff] %vm974, %v1266
          %v1274 = vpack.c.bf16 %v1236, %v1233
          %v1275 = vpack.c.bf16 %v1244, %v1241
          %v1276 = vpack.c.bf16 %v1252, %v1249
          %v1277 = vpack.c.bf16 %v1260, %v1257
          %s1278 = smul.addr %s1267, 8
          %s1279 = scalar_lea.vmem [#allocation3], %s1278
          %1280 = vst.msk [vmem:[%s1279] sm:$0xff] %vm974, %v1274
          %1281 = vst.msk [vmem:[%s1279 + $0x8] sm:$0xff] %vm974, %v1275
          %1282 = vst.msk [vmem:[%s1279 + $0x10] sm:$0xff] %vm974, %v1276
          %1283 = vst.msk [vmem:[%s1279 + $0x18] sm:$0xff] %vm974, %v1277
          %s1284 = scalar_lea.vmem %s5, 128
          %v1285 = vld [vmem:[%s1284] sm:$0xf]
          %v1286 = vld [vmem:[%s1284 + $0x4] sm:$0xf]
          %v1287 = vld [vmem:[%s1284 + $0x8] sm:$0xf]
          %v1288 = vld [vmem:[%s1284 + $0xc] sm:$0xf]
          %v1289 = vld [vmem:[%s1284 + $0x10] sm:$0xf]
          %v1290 = vld [vmem:[%s1284 + $0x14] sm:$0xf]
          %v1291 = vld [vmem:[%s1284 + $0x18] sm:$0xf]
          %v1292 = vld [vmem:[%s1284 + $0x1c] sm:$0xf]
          %v1293 = vld [vmem:[%s1284 + $0x20] sm:$0xf]
          %v1294 = vld [vmem:[%s1284 + $0x24] sm:$0xf]
          %v1295 = vld [vmem:[%s1284 + $0x28] sm:$0xf]
          %v1296 = vld [vmem:[%s1284 + $0x2c] sm:$0xf]
          %v1297 = vld [vmem:[%s1284 + $0x30] sm:$0xf]
          %v1298 = vld [vmem:[%s1284 + $0x34] sm:$0xf]
          %v1299 = vld [vmem:[%s1284 + $0x38] sm:$0xf]
          %v1300 = vld [vmem:[%s1284 + $0x3c] sm:$0xf]
          %s1301 = scalar_lea.vmem %s6, 2
          %v1302 = vld [vmem:[%s1301] sm:$0x1]
          %v1304 = vlaneseq
          %v1305 = vshrl.u32 %v1304, 7
          %v1306 = vsub.s32 0, %v1305
          %v1307 = vrot.slane %v1302, %v1306
          %v1325 = vunpack.c.l.b16 %v1285
          %v1326 = vunpack.c.l.b16 %v1286
          %v1327 = vunpack.c.l.b16 %v1287
          %v1328 = vunpack.c.l.b16 %v1288
          %v1329 = vunpack.c.l.b16 %v1289
          %v1330 = vunpack.c.l.b16 %v1290
          %v1331 = vunpack.c.l.b16 %v1291
          %v1332 = vunpack.c.l.b16 %v1292
          %v1333 = vunpack.c.l.b16 %v1293
          %v1334 = vunpack.c.l.b16 %v1294
          %v1335 = vunpack.c.l.b16 %v1295
          %v1336 = vunpack.c.l.b16 %v1296
          %v1337 = vunpack.c.l.b16 %v1297
          %v1338 = vunpack.c.l.b16 %v1298
          %v1339 = vunpack.c.l.b16 %v1299
          %v1340 = vunpack.c.l.b16 %v1300
          %v1341 = vpack.c.b16 %v1326, %v1325
          %v1342 = vpack.c.b16 %v1328, %v1327
          %v1343 = vpack.c.b16 %v1330, %v1329
          %v1344 = vpack.c.b16 %v1332, %v1331
          %v1345 = vpack.c.b16 %v1334, %v1333
          %v1346 = vpack.c.b16 %v1336, %v1335
          %v1347 = vpack.c.b16 %v1338, %v1337
          %v1348 = vpack.c.b16 %v1340, %v1339
          %1357 = vmatprep.subr.bf16.mxu0 0
          %1358 = vmatpush1.bf16.msra.mxu0 %v1341
          %1359 = vmatprep.subr.bf16.mxu0 0
          %1360 = vmatpush1.bf16.msra.mxu0 %v1342
          %1361 = vmatprep.subr.bf16.mxu0 0
          %1362 = vmatpush1.bf16.msra.mxu0 %v1343
          %1363 = vmatprep.subr.bf16.mxu0 0
          %1364 = vmatpush1.bf16.msra.mxu0 %v1344
          %1365 = vmatprep.subr.bf16.mxu0 0
          %1366 = vmatpush1.bf16.msra.mxu0 %v1345
          %1367 = vmatprep.subr.bf16.mxu0 0
          %1368 = vmatpush1.bf16.msra.mxu0 %v1346
          %1369 = vmatprep.subr.bf16.mxu0 0
          %1370 = vmatpush1.bf16.msra.mxu0 %v1347
          %1371 = vmatprep.subr.bf16.mxu0 0
          %1372 = vmatpush1.bf16.msra.mxu0 %v1348
          %1373 = vmatprep.subr.bf16.mxu0 0
          %1374 = vmatpush1.bf16.msra.mxu0 0
          %1375 = vmatprep.subr.bf16.mxu0 0
          %1376 = vmatpush1.bf16.msra.mxu0 0
          %1377 = vmatprep.subr.bf16.mxu0 0
          %1378 = vmatpush1.bf16.msra.mxu0 0
          %1379 = vmatprep.subr.bf16.mxu0 0
          %1380 = vmatpush1.bf16.msra.mxu0 0
          %1381 = vmatprep.subr.bf16.mxu0 0
          %1382 = vmatpush1.bf16.msra.mxu0 0
          %1383 = vmatprep.subr.bf16.mxu0 0
          %1384 = vmatpush1.bf16.msra.mxu0 0
          %1385 = vmatprep.subr.bf16.mxu0 0
          %1386 = vmatpush1.bf16.msra.mxu0 0
          %1387 = vmatprep.subr.bf16.mxu0 0
          %1388 = vmatpush1.bf16.msra.mxu0 0
          %1389 = vmatprep.mubr.bf16.mxu0 0
          %1390 = vmatmul.mubr.bf16.gmra.mrb[0].mxu0 %v694
          %v1391 = vpop.f32.mrb[0].mxu0
          %v1392 = vadd.f32 %v1307, %v1391
          %v1393 = vpop.f32.mrb[0].mxu0
          %v1394 = vpop.f32.mrb[0].mxu0
          %v1395 = vadd.f32 %v1307, %v1394
          %v1396 = vpop.f32.mrb[0].mxu0
          %1397 = vmatprep.mubr.bf16.mxu0 0
          %1398 = vmatmul.mubr.bf16.gmra.mrb[0].mxu0 %v695
          %v1399 = vpop.f32.mrb[0].mxu0
          %v1400 = vadd.f32 %v1307, %v1399
          %v1401 = vpop.f32.mrb[0].mxu0
          %v1402 = vpop.f32.mrb[0].mxu0
          %v1403 = vadd.f32 %v1307, %v1402
          %v1404 = vpop.f32.mrb[0].mxu0
          %1405 = vmatprep.mubr.bf16.mxu0 0
          %1406 = vmatmul.mubr.bf16.gmra.mrb[0].mxu0 %v696
          %v1407 = vpop.f32.mrb[0].mxu0
          %v1408 = vadd.f32 %v1307, %v1407
          %v1409 = vpop.f32.mrb[0].mxu0
          %v1410 = vpop.f32.mrb[0].mxu0
          %v1411 = vadd.f32 %v1307, %v1410
          %v1412 = vpop.f32.mrb[0].mxu0
          %1413 = vmatprep.mubr.bf16.mxu0 0
          %1414 = vmatmul.mubr.bf16.gmra.mrb[0].mxu0 %v697
          %v1415 = vpop.f32.mrb[0].mxu0
          %v1416 = vadd.f32 %v1307, %v1415
          %v1417 = vpop.f32.mrb[0].mxu0
          %v1418 = vpop.f32.mrb[0].mxu0
          %v1419 = vadd.f32 %v1307, %v1418
          %v1420 = vpop.f32.mrb[0].mxu0
          %1421 = vdwg.mxu0
          %s1422 = scalar_lea.vmem %s7, 128
          %v1423 = vld [vmem:[%s1422] sm:$0xf]
          %v1424 = vld [vmem:[%s1422 + $0x4] sm:$0xf]
          %v1425 = vld [vmem:[%s1422 + $0x8] sm:$0xf]
          %v1426 = vld [vmem:[%s1422 + $0xc] sm:$0xf]
          %v1427 = vld [vmem:[%s1422 + $0x10] sm:$0xf]
          %v1428 = vld [vmem:[%s1422 + $0x14] sm:$0xf]
          %v1429 = vld [vmem:[%s1422 + $0x18] sm:$0xf]
          %v1430 = vld [vmem:[%s1422 + $0x1c] sm:$0xf]
          %v1431 = vld [vmem:[%s1422 + $0x20] sm:$0xf]
          %v1432 = vld [vmem:[%s1422 + $0x24] sm:$0xf]
          %v1433 = vld [vmem:[%s1422 + $0x28] sm:$0xf]
          %v1434 = vld [vmem:[%s1422 + $0x2c] sm:$0xf]
          %v1435 = vld [vmem:[%s1422 + $0x30] sm:$0xf]
          %v1436 = vld [vmem:[%s1422 + $0x34] sm:$0xf]
          %v1437 = vld [vmem:[%s1422 + $0x38] sm:$0xf]
          %v1438 = vld [vmem:[%s1422 + $0x3c] sm:$0xf]
          %s1439 = scalar_lea.vmem %s8, 2
          %v1440 = vld [vmem:[%s1439] sm:$0x1]
          %v1442 = vlaneseq
          %v1443 = vshrl.u32 %v1442, 7
          %v1444 = vsub.s32 0, %v1443
          %v1445 = vrot.slane %v1440, %v1444
          %v1463 = vunpack.c.l.b16 %v1423
          %v1464 = vunpack.c.l.b16 %v1424
          %v1465 = vunpack.c.l.b16 %v1425
          %v1466 = vunpack.c.l.b16 %v1426
          %v1467 = vunpack.c.l.b16 %v1427
          %v1468 = vunpack.c.l.b16 %v1428
          %v1469 = vunpack.c.l.b16 %v1429
          %v1470 = vunpack.c.l.b16 %v1430
          %v1471 = vunpack.c.l.b16 %v1431
          %v1472 = vunpack.c.l.b16 %v1432
          %v1473 = vunpack.c.l.b16 %v1433
          %v1474 = vunpack.c.l.b16 %v1434
          %v1475 = vunpack.c.l.b16 %v1435
          %v1476 = vunpack.c.l.b16 %v1436
          %v1477 = vunpack.c.l.b16 %v1437
          %v1478 = vunpack.c.l.b16 %v1438
          %v1479 = vpack.c.b16 %v1464, %v1463
          %v1480 = vpack.c.b16 %v1466, %v1465
          %v1481 = vpack.c.b16 %v1468, %v1467
          %v1482 = vpack.c.b16 %v1470, %v1469
          %v1483 = vpack.c.b16 %v1472, %v1471
          %v1484 = vpack.c.b16 %v1474, %v1473
          %v1485 = vpack.c.b16 %v1476, %v1475
          %v1486 = vpack.c.b16 %v1478, %v1477
          %1495 = vmatprep.subr.bf16.mxu0 0
          %1496 = vmatpush1.bf16.msra.mxu0 %v1479
          %1497 = vmatprep.subr.bf16.mxu0 0
          %1498 = vmatpush1.bf16.msra.mxu0 %v1480
          %1499 = vmatprep.subr.bf16.mxu0 0
          %1500 = vmatpush1.bf16.msra.mxu0 %v1481
          %1501 = vmatprep.subr.bf16.mxu0 0
          %1502 = vmatpush1.bf16.msra.mxu0 %v1482
          %1503 = vmatprep.subr.bf16.mxu0 0
          %1504 = vmatpush1.bf16.msra.mxu0 %v1483
          %1505 = vmatprep.subr.bf16.mxu0 0
          %1506 = vmatpush1.bf16.msra.mxu0 %v1484
          %1507 = vmatprep.subr.bf16.mxu0 0
          %1508 = vmatpush1.bf16.msra.mxu0 %v1485
          %1509 = vmatprep.subr.bf16.mxu0 0
          %1510 = vmatpush1.bf16.msra.mxu0 %v1486
          %1511 = vmatprep.subr.bf16.mxu0 0
          %1512 = vmatpush1.bf16.msra.mxu0 0
          %1513 = vmatprep.subr.bf16.mxu0 0
          %1514 = vmatpush1.bf16.msra.mxu0 0
          %1515 = vmatprep.subr.bf16.mxu0 0
          %1516 = vmatpush1.bf16.msra.mxu0 0
          %1517 = vmatprep.subr.bf16.mxu0 0
          %1518 = vmatpush1.bf16.msra.mxu0 0
          %1519 = vmatprep.subr.bf16.mxu0 0
          %1520 = vmatpush1.bf16.msra.mxu0 0
          %1521 = vmatprep.subr.bf16.mxu0 0
          %1522 = vmatpush1.bf16.msra.mxu0 0
          %1523 = vmatprep.subr.bf16.mxu0 0
          %1524 = vmatpush1.bf16.msra.mxu0 0
          %1525 = vmatprep.subr.bf16.mxu0 0
          %1526 = vmatpush1.bf16.msra.mxu0 0
          %1527 = vmatprep.mubr.bf16.mxu0 0
          %1528 = vmatmul.mubr.bf16.gmra.mrb[0].mxu0 %v694
          %v1529 = vpop.f32.mrb[0].mxu0
          %v1530 = vadd.f32 %v1445, %v1529
          %v1531 = vpop.f32.mrb[0].mxu0
          %v1532 = vpop.f32.mrb[0].mxu0
          %v1533 = vadd.f32 %v1445, %v1532
          %v1534 = vpop.f32.mrb[0].mxu0
          %1535 = vmatprep.mubr.bf16.mxu0 0
          %1536 = vmatmul.mubr.bf16.gmra.mrb[0].mxu0 %v695
          %v1537 = vpop.f32.mrb[0].mxu0
          %v1538 = vadd.f32 %v1445, %v1537
          %v1539 = vpop.f32.mrb[0].mxu0
          %v1540 = vpop.f32.mrb[0].mxu0
          %v1541 = vadd.f32 %v1445, %v1540
          %v1542 = vpop.f32.mrb[0].mxu0
          %1543 = vmatprep.mubr.bf16.mxu0 0
          %1544 = vmatmul.mubr.bf16.gmra.mrb[0].mxu0 %v696
          %v1545 = vpop.f32.mrb[0].mxu0
          %v1546 = vadd.f32 %v1445, %v1545
          %v1547 = vpop.f32.mrb[0].mxu0
          %v1548 = vpop.f32.mrb[0].mxu0
          %v1549 = vadd.f32 %v1445, %v1548
          %v1550 = vpop.f32.mrb[0].mxu0
          %1551 = vmatprep.mubr.bf16.mxu0 0
          %1552 = vmatmul.mubr.bf16.gmra.mrb[0].mxu0 %v697
          %v1553 = vpop.f32.mrb[0].mxu0
          %v1554 = vadd.f32 %v1445, %v1553
          %v1555 = vpop.f32.mrb[0].mxu0
          %v1556 = vpop.f32.mrb[0].mxu0
          %v1557 = vadd.f32 %v1445, %v1556
          %v1558 = vpop.f32.mrb[0].mxu0
          %1559 = vdwg.mxu0
          %v1560 = vpack.c.bf16 %v1395, %v1392
          %v1561 = vpack.c.bf16 %v1403, %v1400
          %v1562 = vpack.c.bf16 %v1411, %v1408
          %v1563 = vpack.c.bf16 %v1419, %v1416
          %s1564 = sadd.s32 0, 8
          %s1565 = smul.addr %s1564, 8
          %s1566 = scalar_lea.vmem [#allocation2], %s1565
          %1567 = vst.msk [vmem:[%s1566] sm:$0xff] %vm974, %v1560
          %1568 = vst.msk [vmem:[%s1566 + $0x8] sm:$0xff] %vm974, %v1561
          %1569 = vst.msk [vmem:[%s1566 + $0x10] sm:$0xff] %vm974, %v1562
          %1570 = vst.msk [vmem:[%s1566 + $0x18] sm:$0xff] %vm974, %v1563
          %v1571 = vpack.c.bf16 %v1533, %v1530
          %v1572 = vpack.c.bf16 %v1541, %v1538
          %v1573 = vpack.c.bf16 %v1549, %v1546
          %v1574 = vpack.c.bf16 %v1557, %v1554
          %s1575 = smul.addr %s1564, 8
          %s1576 = scalar_lea.vmem [#allocation3], %s1575
          %1577 = vst.msk [vmem:[%s1576] sm:$0xff] %vm974, %v1571
          %1578 = vst.msk [vmem:[%s1576 + $0x8] sm:$0xff] %vm974, %v1572
          %1579 = vst.msk [vmem:[%s1576 + $0x10] sm:$0xff] %vm974, %v1573
          %1580 = vst.msk [vmem:[%s1576 + $0x18] sm:$0xff] %vm974, %v1574
          %s1581 = scalar_lea.vmem %s5, 192
          %v1582 = vld [vmem:[%s1581] sm:$0xf]
          %v1583 = vld [vmem:[%s1581 + $0x4] sm:$0xf]
          %v1584 = vld [vmem:[%s1581 + $0x8] sm:$0xf]
          %v1585 = vld [vmem:[%s1581 + $0xc] sm:$0xf]
          %v1586 = vld [vmem:[%s1581 + $0x10] sm:$0xf]
          %v1587 = vld [vmem:[%s1581 + $0x14] sm:$0xf]
          %v1588 = vld [vmem:[%s1581 + $0x18] sm:$0xf]
          %v1589 = vld [vmem:[%s1581 + $0x1c] sm:$0xf]
          %v1590 = vld [vmem:[%s1581 + $0x20] sm:$0xf]
          %v1591 = vld [vmem:[%s1581 + $0x24] sm:$0xf]
          %v1592 = vld [vmem:[%s1581 + $0x28] sm:$0xf]
          %v1593 = vld [vmem:[%s1581 + $0x2c] sm:$0xf]
          %v1594 = vld [vmem:[%s1581 + $0x30] sm:$0xf]
          %v1595 = vld [vmem:[%s1581 + $0x34] sm:$0xf]
          %v1596 = vld [vmem:[%s1581 + $0x38] sm:$0xf]
          %v1597 = vld [vmem:[%s1581 + $0x3c] sm:$0xf]
          %s1598 = scalar_lea.vmem %s6, 3
          %v1599 = vld [vmem:[%s1598] sm:$0x1]
          %v1601 = vlaneseq
          %v1602 = vshrl.u32 %v1601, 7
          %v1603 = vsub.s32 0, %v1602
          %v1604 = vrot.slane %v1599, %v1603
          %v1622 = vunpack.c.l.b16 %v1582
          %v1623 = vunpack.c.l.b16 %v1583
          %v1624 = vunpack.c.l.b16 %v1584
          %v1625 = vunpack.c.l.b16 %v1585
          %v1626 = vunpack.c.l.b16 %v1586
          %v1627 = vunpack.c.l.b16 %v1587
          %v1628 = vunpack.c.l.b16 %v1588
          %v1629 = vunpack.c.l.b16 %v1589
          %v1630 = vunpack.c.l.b16 %v1590
          %v1631 = vunpack.c.l.b16 %v1591
          %v1632 = vunpack.c.l.b16 %v1592
          %v1633 = vunpack.c.l.b16 %v1593
          %v1634 = vunpack.c.l.b16 %v1594
          %v1635 = vunpack.c.l.b16 %v1595
          %v1636 = vunpack.c.l.b16 %v1596
          %v1637 = vunpack.c.l.b16 %v1597
          %v1638 = vpack.c.b16 %v1623, %v1622
          %v1639 = vpack.c.b16 %v1625, %v1624
          %v1640 = vpack.c.b16 %v1627, %v1626
          %v1641 = vpack.c.b16 %v1629, %v1628
          %v1642 = vpack.c.b16 %v1631, %v1630
          %v1643 = vpack.c.b16 %v1633, %v1632
          %v1644 = vpack.c.b16 %v1635, %v1634
          %v1645 = vpack.c.b16 %v1637, %v1636
          %1654 = vmatprep.subr.bf16.mxu0 0
          %1655 = vmatpush1.bf16.msra.mxu0 %v1638
          %1656 = vmatprep.subr.bf16.mxu0 0
          %1657 = vmatpush1.bf16.msra.mxu0 %v1639
          %1658 = vmatprep.subr.bf16.mxu0 0
          %1659 = vmatpush1.bf16.msra.mxu0 %v1640
          %1660 = vmatprep.subr.bf16.mxu0 0
          %1661 = vmatpush1.bf16.msra.mxu0 %v1641
          %1662 = vmatprep.subr.bf16.mxu0 0
          %1663 = vmatpush1.bf16.msra.mxu0 %v1642
          %1664 = vmatprep.subr.bf16.mxu0 0
          %1665 = vmatpush1.bf16.msra.mxu0 %v1643
          %1666 = vmatprep.subr.bf16.mxu0 0
          %1667 = vmatpush1.bf16.msra.mxu0 %v1644
          %1668 = vmatprep.subr.bf16.mxu0 0
          %1669 = vmatpush1.bf16.msra.mxu0 %v1645
          %1670 = vmatprep.subr.bf16.mxu0 0
          %1671 = vmatpush1.bf16.msra.mxu0 0
          %1672 = vmatprep.subr.bf16.mxu0 0
          %1673 = vmatpush1.bf16.msra.mxu0 0
          %1674 = vmatprep.subr.bf16.mxu0 0
          %1675 = vmatpush1.bf16.msra.mxu0 0
          %1676 = vmatprep.subr.bf16.mxu0 0
          %1677 = vmatpush1.bf16.msra.mxu0 0
          %1678 = vmatprep.subr.bf16.mxu0 0
          %1679 = vmatpush1.bf16.msra.mxu0 0
          %1680 = vmatprep.subr.bf16.mxu0 0
          %1681 = vmatpush1.bf16.msra.mxu0 0
          %1682 = vmatprep.subr.bf16.mxu0 0
          %1683 = vmatpush1.bf16.msra.mxu0 0
          %1684 = vmatprep.subr.bf16.mxu0 0
          %1685 = vmatpush1.bf16.msra.mxu0 0
          %1686 = vmatprep.mubr.bf16.mxu0 0
          %1687 = vmatmul.mubr.bf16.gmra.mrb[0].mxu0 %v694
          %v1688 = vpop.f32.mrb[0].mxu0
          %v1689 = vadd.f32 %v1604, %v1688
          %v1690 = vpop.f32.mrb[0].mxu0
          %v1691 = vpop.f32.mrb[0].mxu0
          %v1692 = vadd.f32 %v1604, %v1691
          %v1693 = vpop.f32.mrb[0].mxu0
          %1694 = vmatprep.mubr.bf16.mxu0 0
          %1695 = vmatmul.mubr.bf16.gmra.mrb[0].mxu0 %v695
          %v1696 = vpop.f32.mrb[0].mxu0
          %v1697 = vadd.f32 %v1604, %v1696
          %v1698 = vpop.f32.mrb[0].mxu0
          %v1699 = vpop.f32.mrb[0].mxu0
          %v1700 = vadd.f32 %v1604, %v1699
          %v1701 = vpop.f32.mrb[0].mxu0
          %1702 = vmatprep.mubr.bf16.mxu0 0
          %1703 = vmatmul.mubr.bf16.gmra.mrb[0].mxu0 %v696
          %v1704 = vpop.f32.mrb[0].mxu0
          %v1705 = vadd.f32 %v1604, %v1704
          %v1706 = vpop.f32.mrb[0].mxu0
          %v1707 = vpop.f32.mrb[0].mxu0
          %v1708 = vadd.f32 %v1604, %v1707
          %v1709 = vpop.f32.mrb[0].mxu0
          %1710 = vmatprep.mubr.bf16.mxu0 0
          %1711 = vmatmul.mubr.bf16.gmra.mrb[0].mxu0 %v697
          %v1712 = vpop.f32.mrb[0].mxu0
          %v1713 = vadd.f32 %v1604, %v1712
          %v1714 = vpop.f32.mrb[0].mxu0
          %v1715 = vpop.f32.mrb[0].mxu0
          %v1716 = vadd.f32 %v1604, %v1715
          %v1717 = vpop.f32.mrb[0].mxu0
          %1718 = vdwg.mxu0
          %s1719 = scalar_lea.vmem %s7, 192
          %v1720 = vld [vmem:[%s1719] sm:$0xf]
          %v1721 = vld [vmem:[%s1719 + $0x4] sm:$0xf]
          %v1722 = vld [vmem:[%s1719 + $0x8] sm:$0xf]
          %v1723 = vld [vmem:[%s1719 + $0xc] sm:$0xf]
          %v1724 = vld [vmem:[%s1719 + $0x10] sm:$0xf]
          %v1725 = vld [vmem:[%s1719 + $0x14] sm:$0xf]
          %v1726 = vld [vmem:[%s1719 + $0x18] sm:$0xf]
          %v1727 = vld [vmem:[%s1719 + $0x1c] sm:$0xf]
          %v1728 = vld [vmem:[%s1719 + $0x20] sm:$0xf]
          %v1729 = vld [vmem:[%s1719 + $0x24] sm:$0xf]
          %v1730 = vld [vmem:[%s1719 + $0x28] sm:$0xf]
          %v1731 = vld [vmem:[%s1719 + $0x2c] sm:$0xf]
          %v1732 = vld [vmem:[%s1719 + $0x30] sm:$0xf]
          %v1733 = vld [vmem:[%s1719 + $0x34] sm:$0xf]
          %v1734 = vld [vmem:[%s1719 + $0x38] sm:$0xf]
          %v1735 = vld [vmem:[%s1719 + $0x3c] sm:$0xf]
          %s1736 = scalar_lea.vmem %s8, 3
          %v1737 = vld [vmem:[%s1736] sm:$0x1]
          %v1739 = vlaneseq
          %v1740 = vshrl.u32 %v1739, 7
          %v1741 = vsub.s32 0, %v1740
          %v1742 = vrot.slane %v1737, %v1741
          %v1760 = vunpack.c.l.b16 %v1720
          %v1761 = vunpack.c.l.b16 %v1721
          %v1762 = vunpack.c.l.b16 %v1722
          %v1763 = vunpack.c.l.b16 %v1723
          %v1764 = vunpack.c.l.b16 %v1724
          %v1765 = vunpack.c.l.b16 %v1725
          %v1766 = vunpack.c.l.b16 %v1726
          %v1767 = vunpack.c.l.b16 %v1727
          %v1768 = vunpack.c.l.b16 %v1728
          %v1769 = vunpack.c.l.b16 %v1729
          %v1770 = vunpack.c.l.b16 %v1730
          %v1771 = vunpack.c.l.b16 %v1731
          %v1772 = vunpack.c.l.b16 %v1732
          %v1773 = vunpack.c.l.b16 %v1733
          %v1774 = vunpack.c.l.b16 %v1734
          %v1775 = vunpack.c.l.b16 %v1735
          %v1776 = vpack.c.b16 %v1761, %v1760
          %v1777 = vpack.c.b16 %v1763, %v1762
          %v1778 = vpack.c.b16 %v1765, %v1764
          %v1779 = vpack.c.b16 %v1767, %v1766
          %v1780 = vpack.c.b16 %v1769, %v1768
          %v1781 = vpack.c.b16 %v1771, %v1770
          %v1782 = vpack.c.b16 %v1773, %v1772
          %v1783 = vpack.c.b16 %v1775, %v1774
          %1792 = vmatprep.subr.bf16.mxu0 0
          %1793 = vmatpush1.bf16.msra.mxu0 %v1776
          %1794 = vmatprep.subr.bf16.mxu0 0
          %1795 = vmatpush1.bf16.msra.mxu0 %v1777
          %1796 = vmatprep.subr.bf16.mxu0 0
          %1797 = vmatpush1.bf16.msra.mxu0 %v1778
          %1798 = vmatprep.subr.bf16.mxu0 0
          %1799 = vmatpush1.bf16.msra.mxu0 %v1779
          %1800 = vmatprep.subr.bf16.mxu0 0
          %1801 = vmatpush1.bf16.msra.mxu0 %v1780
          %1802 = vmatprep.subr.bf16.mxu0 0
          %1803 = vmatpush1.bf16.msra.mxu0 %v1781
          %1804 = vmatprep.subr.bf16.mxu0 0
          %1805 = vmatpush1.bf16.msra.mxu0 %v1782
          %1806 = vmatprep.subr.bf16.mxu0 0
          %1807 = vmatpush1.bf16.msra.mxu0 %v1783
          %1808 = vmatprep.subr.bf16.mxu0 0
          %1809 = vmatpush1.bf16.msra.mxu0 0
          %1810 = vmatprep.subr.bf16.mxu0 0
          %1811 = vmatpush1.bf16.msra.mxu0 0
          %1812 = vmatprep.subr.bf16.mxu0 0
          %1813 = vmatpush1.bf16.msra.mxu0 0
          %1814 = vmatprep.subr.bf16.mxu0 0
          %1815 = vmatpush1.bf16.msra.mxu0 0
          %1816 = vmatprep.subr.bf16.mxu0 0
          %1817 = vmatpush1.bf16.msra.mxu0 0
          %1818 = vmatprep.subr.bf16.mxu0 0
          %1819 = vmatpush1.bf16.msra.mxu0 0
          %1820 = vmatprep.subr.bf16.mxu0 0
          %1821 = vmatpush1.bf16.msra.mxu0 0
          %1822 = vmatprep.subr.bf16.mxu0 0
          %1823 = vmatpush1.bf16.msra.mxu0 0
          %1824 = vmatprep.mubr.bf16.mxu0 0
          %1825 = vmatmul.mubr.bf16.gmra.mrb[0].mxu0 %v694
          %v1826 = vpop.f32.mrb[0].mxu0
          %v1827 = vadd.f32 %v1742, %v1826
          %v1828 = vpop.f32.mrb[0].mxu0
          %v1829 = vpop.f32.mrb[0].mxu0
          %v1830 = vadd.f32 %v1742, %v1829
          %v1831 = vpop.f32.mrb[0].mxu0
          %1832 = vmatprep.mubr.bf16.mxu0 0
          %1833 = vmatmul.mubr.bf16.gmra.mrb[0].mxu0 %v695
          %v1834 = vpop.f32.mrb[0].mxu0
          %v1835 = vadd.f32 %v1742, %v1834
          %v1836 = vpop.f32.mrb[0].mxu0
          %v1837 = vpop.f32.mrb[0].mxu0
          %v1838 = vadd.f32 %v1742, %v1837
          %v1839 = vpop.f32.mrb[0].mxu0
          %1840 = vmatprep.mubr.bf16.mxu0 0
          %1841 = vmatmul.mubr.bf16.gmra.mrb[0].mxu0 %v696
          %v1842 = vpop.f32.mrb[0].mxu0
          %v1843 = vadd.f32 %v1742, %v1842
          %v1844 = vpop.f32.mrb[0].mxu0
          %v1845 = vpop.f32.mrb[0].mxu0
          %v1846 = vadd.f32 %v1742, %v1845
          %v1847 = vpop.f32.mrb[0].mxu0
          %1848 = vmatprep.mubr.bf16.mxu0 0
          %1849 = vmatmul.mubr.bf16.gmra.mrb[0].mxu0 %v697
          %v1850 = vpop.f32.mrb[0].mxu0
          %v1851 = vadd.f32 %v1742, %v1850
          %v1852 = vpop.f32.mrb[0].mxu0
          %v1853 = vpop.f32.mrb[0].mxu0
          %v1854 = vadd.f32 %v1742, %v1853
          %v1855 = vpop.f32.mrb[0].mxu0
          %1856 = vdwg.mxu0
          %v1857 = vpack.c.bf16 %v1692, %v1689
          %v1858 = vpack.c.bf16 %v1700, %v1697
          %v1859 = vpack.c.bf16 %v1708, %v1705
          %v1860 = vpack.c.bf16 %v1716, %v1713
          %s1861 = sadd.s32 0, 12
          %s1862 = smul.addr %s1861, 8
          %s1863 = scalar_lea.vmem [#allocation2], %s1862
          %1864 = vst.msk [vmem:[%s1863] sm:$0xff] %vm974, %v1857
          %1865 = vst.msk [vmem:[%s1863 + $0x8] sm:$0xff] %vm974, %v1858
          %1866 = vst.msk [vmem:[%s1863 + $0x10] sm:$0xff] %vm974, %v1859
          %1867 = vst.msk [vmem:[%s1863 + $0x18] sm:$0xff] %vm974, %v1860
          %v1868 = vpack.c.bf16 %v1830, %v1827
          %v1869 = vpack.c.bf16 %v1838, %v1835
          %v1870 = vpack.c.bf16 %v1846, %v1843
          %v1871 = vpack.c.bf16 %v1854, %v1851
          %s1872 = smul.addr %s1861, 8
          %s1873 = scalar_lea.vmem [#allocation3], %s1872
          %1874 = vst.msk [vmem:[%s1873] sm:$0xff] %vm974, %v1868
          %1875 = vst.msk [vmem:[%s1873 + $0x8] sm:$0xff] %vm974, %v1869
          %1876 = vst.msk [vmem:[%s1873 + $0x10] sm:$0xff] %vm974, %v1870
          %1877 = vst.msk [vmem:[%s1873 + $0x18] sm:$0xff] %vm974, %v1871
        $region92: #{tpu_custom_call.1} parent=87 // pred_fallthru
          _
        %s1878 = smul.u32 %s36, 64
        %s1879 = scalar_lea.vmem %s560, %s1878
        %v1880 = vld [vmem:[%s1879] sm:$0xff]
        %v1881 = vld [vmem:[%s1879 + $0x8] sm:$0xff]
        %v1882 = vld [vmem:[%s1879 + $0x10] sm:$0xff]
        %v1883 = vld [vmem:[%s1879 + $0x18] sm:$0xff]
        %v1884 = vld [vmem:[%s1879 + $0x20] sm:$0xff]
        %v1885 = vld [vmem:[%s1879 + $0x28] sm:$0xff]
        %v1886 = vld [vmem:[%s1879 + $0x30] sm:$0xff]
        %v1887 = vld [vmem:[%s1879 + $0x38] sm:$0xff]
        %v1888 = vld [vmem:[%s1] sm:$0x1]
        %v1889 = vld [vmem:[%s2] sm:$0x1]
        %1890 = vadd.xlane.f32.xlu0 %v1880
        %v1891 = vpop.xlane.xlu0 %1890
        %1892 = vadd.xlane.f32.xlu0 %v1881
        %v1893 = vpop.xlane.xlu0 %1892
        %1894 = vadd.xlane.f32.xlu0 %v1882
        %v1895 = vpop.xlane.xlu0 %1894
        %1896 = vadd.xlane.f32.xlu0 %v1883
        %v1897 = vpop.xlane.xlu0 %1896
        %1898 = vadd.xlane.f32.xlu0 %v1884
        %v1899 = vpop.xlane.xlu0 %1898
        %1900 = vadd.xlane.f32.xlu0 %v1885
        %v1901 = vpop.xlane.xlu0 %1900
        %1902 = vadd.xlane.f32.xlu0 %v1886
        %v1903 = vpop.xlane.xlu0 %1902
        %1904 = vadd.xlane.f32.xlu0 %v1887
        %v1905 = vpop.xlane.xlu0 %1904
        %v1906 = vrcp.pop 128.0
        %v1907 = vmul.f32 %v1891, %v1906
        %v1908 = vmul.f32 %v1893, %v1906
        %v1909 = vmul.f32 %v1895, %v1906
        %v1910 = vmul.f32 %v1897, %v1906
        %v1911 = vmul.f32 %v1899, %v1906
        %v1912 = vmul.f32 %v1901, %v1906
        %v1913 = vmul.f32 %v1903, %v1906
        %v1914 = vmul.f32 %v1905, %v1906
        %v1915 = vsub.f32 %v1880, %v1907
        %v1916 = vsub.f32 %v1881, %v1908
        %v1917 = vsub.f32 %v1882, %v1909
        %v1918 = vsub.f32 %v1883, %v1910
        %v1919 = vsub.f32 %v1884, %v1911
        %v1920 = vsub.f32 %v1885, %v1912
        %v1921 = vsub.f32 %v1886, %v1913
        %v1922 = vsub.f32 %v1887, %v1914
        %v1923 = vmul.f32 %v1915, %v1915
        %v1924 = vmul.f32 %v1916, %v1916
        %v1925 = vmul.f32 %v1917, %v1917
        %v1926 = vmul.f32 %v1918, %v1918
        %v1927 = vmul.f32 %v1919, %v1919
        %v1928 = vmul.f32 %v1920, %v1920
        %v1929 = vmul.f32 %v1921, %v1921
        %v1930 = vmul.f32 %v1922, %v1922
        %1931 = vadd.xlane.f32.xlu0 %v1923
        %v1932 = vpop.xlane.xlu0 %1931
        %1933 = vadd.xlane.f32.xlu0 %v1924
        %v1934 = vpop.xlane.xlu0 %1933
        %1935 = vadd.xlane.f32.xlu0 %v1925
        %v1936 = vpop.xlane.xlu0 %1935
        %1937 = vadd.xlane.f32.xlu0 %v1926
        %v1938 = vpop.xlane.xlu0 %1937
        %1939 = vadd.xlane.f32.xlu0 %v1927
        %v1940 = vpop.xlane.xlu0 %1939
        %1941 = vadd.xlane.f32.xlu0 %v1928
        %v1942 = vpop.xlane.xlu0 %1941
        %1943 = vadd.xlane.f32.xlu0 %v1929
        %v1944 = vpop.xlane.xlu0 %1943
        %1945 = vadd.xlane.f32.xlu0 %v1930
        %v1946 = vpop.xlane.xlu0 %1945
        %v1947 = vmul.f32 %v1932, %v1906
        %v1948 = vmul.f32 %v1934, %v1906
        %v1949 = vmul.f32 %v1936, %v1906
        %v1950 = vmul.f32 %v1938, %v1906
        %v1951 = vmul.f32 %v1940, %v1906
        %v1952 = vmul.f32 %v1942, %v1906
        %v1953 = vmul.f32 %v1944, %v1906
        %v1954 = vmul.f32 %v1946, %v1906
        %v1955 = vadd.f32 %v1947, 1e-05
        %v1956 = vadd.f32 %v1948, 1e-05
        %v1957 = vadd.f32 %v1949, 1e-05
        %v1958 = vadd.f32 %v1950, 1e-05
        %v1959 = vadd.f32 %v1951, 1e-05
        %v1960 = vadd.f32 %v1952, 1e-05
        %v1961 = vadd.f32 %v1953, 1e-05
        %v1962 = vadd.f32 %v1954, 1e-05
        %v1963 = vrsqrt.pop %v1955
        %v1964 = vrsqrt.pop %v1956
        %v1965 = vrsqrt.pop %v1957
        %v1966 = vrsqrt.pop %v1958
        %v1967 = vrsqrt.pop %v1959
        %v1968 = vrsqrt.pop %v1960
        %v1969 = vrsqrt.pop %v1961
        %v1970 = vrsqrt.pop %v1962
        %v1971 = vmul.f32 %v1915, %v1963
        %v1972 = vmul.f32 %v1916, %v1964
        %v1973 = vmul.f32 %v1917, %v1965
        %v1974 = vmul.f32 %v1918, %v1966
        %v1975 = vmul.f32 %v1919, %v1967
        %v1976 = vmul.f32 %v1920, %v1968
        %v1977 = vmul.f32 %v1921, %v1969
        %v1978 = vmul.f32 %v1922, %v1970
        %v1980 = vlaneseq
        %v1981 = vshrl.u32 %v1980, 7
        %v1982 = vsub.s32 0, %v1981
        %v1983 = vrot.slane %v1888, %v1982
        %v1985 = vmul.f32 %v1971, %v1983
        %v1986 = vmul.f32 %v1972, %v1983
        %v1987 = vmul.f32 %v1973, %v1983
        %v1988 = vmul.f32 %v1974, %v1983
        %v1989 = vmul.f32 %v1975, %v1983
        %v1990 = vmul.f32 %v1976, %v1983
        %v1991 = vmul.f32 %v1977, %v1983
        %v1992 = vmul.f32 %v1978, %v1983
        %v1994 = vlaneseq
        %v1995 = vshrl.u32 %v1994, 7
        %v1996 = vsub.s32 0, %v1995
        %v1997 = vrot.slane %v1889, %v1996
        %v1999 = vadd.f32 %v1985, %v1997
        %v2000 = vadd.f32 %v1986, %v1997
        %v2001 = vadd.f32 %v1987, %v1997
        %v2002 = vadd.f32 %v1988, %v1997
        %v2003 = vadd.f32 %v1989, %v1997
        %v2004 = vadd.f32 %v1990, %v1997
        %v2005 = vadd.f32 %v1991, %v1997
        %v2006 = vadd.f32 %v1992, %v1997
        %v2007 = vpack.c.bf16 %v2000, %v1999
        %v2008 = vpack.c.bf16 %v2002, %v2001
        %v2009 = vpack.c.bf16 %v2004, %v2003
        %v2010 = vpack.c.bf16 %v2006, %v2005
        %v2011 = vld [vmem:[%s3] sm:$0xf]
        %v2012 = vld [vmem:[%s3 + $0x4] sm:$0xf]
        %v2013 = vld [vmem:[%s3 + $0x8] sm:$0xf]
        %v2014 = vld [vmem:[%s3 + $0xc] sm:$0xf]
        %v2015 = vld [vmem:[%s3 + $0x10] sm:$0xf]
        %v2016 = vld [vmem:[%s3 + $0x14] sm:$0xf]
        %v2017 = vld [vmem:[%s3 + $0x18] sm:$0xf]
        %v2018 = vld [vmem:[%s3 + $0x1c] sm:$0xf]
        %v2019 = vld [vmem:[%s3 + $0x20] sm:$0xf]
        %v2020 = vld [vmem:[%s3 + $0x24] sm:$0xf]
        %v2021 = vld [vmem:[%s3 + $0x28] sm:$0xf]
        %v2022 = vld [vmem:[%s3 + $0x2c] sm:$0xf]
        %v2023 = vld [vmem:[%s3 + $0x30] sm:$0xf]
        %v2024 = vld [vmem:[%s3 + $0x34] sm:$0xf]
        %v2025 = vld [vmem:[%s3 + $0x38] sm:$0xf]
        %v2026 = vld [vmem:[%s3 + $0x3c] sm:$0xf]
        %v2027 = vld [vmem:[%s4] sm:$0x1]
        %v2029 = vlaneseq
        %v2030 = vshrl.u32 %v2029, 7
        %v2031 = vsub.s32 0, %v2030
        %v2032 = vrot.slane %v2027, %v2031
        %v2050 = vunpack.c.l.b16 %v2011
        %v2051 = vunpack.c.l.b16 %v2012
        %v2052 = vunpack.c.l.b16 %v2013
        %v2053 = vunpack.c.l.b16 %v2014
        %v2054 = vunpack.c.l.b16 %v2015
        %v2055 = vunpack.c.l.b16 %v2016
        %v2056 = vunpack.c.l.b16 %v2017
        %v2057 = vunpack.c.l.b16 %v2018
        %v2058 = vunpack.c.l.b16 %v2019
        %v2059 = vunpack.c.l.b16 %v2020
        %v2060 = vunpack.c.l.b16 %v2021
        %v2061 = vunpack.c.l.b16 %v2022
        %v2062 = vunpack.c.l.b16 %v2023
        %v2063 = vunpack.c.l.b16 %v2024
        %v2064 = vunpack.c.l.b16 %v2025
        %v2065 = vunpack.c.l.b16 %v2026
        %v2066 = vpack.c.b16 %v2051, %v2050
        %v2067 = vpack.c.b16 %v2053, %v2052
        %v2068 = vpack.c.b16 %v2055, %v2054
        %v2069 = vpack.c.b16 %v2057, %v2056
        %v2070 = vpack.c.b16 %v2059, %v2058
        %v2071 = vpack.c.b16 %v2061, %v2060
        %v2072 = vpack.c.b16 %v2063, %v2062
        %v2073 = vpack.c.b16 %v2065, %v2064
        %2082 = vmatprep.subr.bf16.mxu0 0
        %2083 = vmatpush1.bf16.msra.mxu0 %v2066
        %2084 = vmatprep.subr.bf16.mxu0 0
        %2085 = vmatpush1.bf16.msra.mxu0 %v2067
        %2086 = vmatprep.subr.bf16.mxu0 0
        %2087 = vmatpush1.bf16.msra.mxu0 %v2068
        %2088 = vmatprep.subr.bf16.mxu0 0
        %2089 = vmatpush1.bf16.msra.mxu0 %v2069
        %2090 = vmatprep.subr.bf16.mxu0 0
        %2091 = vmatpush1.bf16.msra.mxu0 %v2070
        %2092 = vmatprep.subr.bf16.mxu0 0
        %2093 = vmatpush1.bf16.msra.mxu0 %v2071
        %2094 = vmatprep.subr.bf16.mxu0 0
        %2095 = vmatpush1.bf16.msra.mxu0 %v2072
        %2096 = vmatprep.subr.bf16.mxu0 0
        %2097 = vmatpush1.bf16.msra.mxu0 %v2073
        %2098 = vmatprep.subr.bf16.mxu0 0
        %2099 = vmatpush1.bf16.msra.mxu0 0
        %2100 = vmatprep.subr.bf16.mxu0 0
        %2101 = vmatpush1.bf16.msra.mxu0 0
        %2102 = vmatprep.subr.bf16.mxu0 0
        %2103 = vmatpush1.bf16.msra.mxu0 0
        %2104 = vmatprep.subr.bf16.mxu0 0
        %2105 = vmatpush1.bf16.msra.mxu0 0
        %2106 = vmatprep.subr.bf16.mxu0 0
        %2107 = vmatpush1.bf16.msra.mxu0 0
        %2108 = vmatprep.subr.bf16.mxu0 0
        %2109 = vmatpush1.bf16.msra.mxu0 0
        %2110 = vmatprep.subr.bf16.mxu0 0
        %2111 = vmatpush1.bf16.msra.mxu0 0
        %2112 = vmatprep.subr.bf16.mxu0 0
        %2113 = vmatpush1.bf16.msra.mxu0 0
        %2114 = vmatprep.mubr.bf16.mxu0 0
        %2115 = vmatmul.mubr.bf16.gmra.mrb[0].mxu0 %v2007
        %v2116 = vpop.f32.mrb[0].mxu0
        %v2117 = vadd.f32 %v2032, %v2116
        %v2118 = vpop.f32.mrb[0].mxu0
        %v2119 = vpop.f32.mrb[0].mxu0
        %v2120 = vadd.f32 %v2032, %v2119
        %v2121 = vpop.f32.mrb[0].mxu0
        %2122 = vmatprep.mubr.bf16.mxu0 0
        %2123 = vmatmul.mubr.bf16.gmra.mrb[0].mxu0 %v2008
        %v2124 = vpop.f32.mrb[0].mxu0
        %v2125 = vadd.f32 %v2032, %v2124
        %v2126 = vpop.f32.mrb[0].mxu0
        %v2127 = vpop.f32.mrb[0].mxu0
        %v2128 = vadd.f32 %v2032, %v2127
        %v2129 = vpop.f32.mrb[0].mxu0
        %2130 = vmatprep.mubr.bf16.mxu0 0
        %2131 = vmatmul.mubr.bf16.gmra.mrb[0].mxu0 %v2009
        %v2132 = vpop.f32.mrb[0].mxu0
        %v2133 = vadd.f32 %v2032, %v2132
        %v2134 = vpop.f32.mrb[0].mxu0
        %v2135 = vpop.f32.mrb[0].mxu0
        %v2136 = vadd.f32 %v2032, %v2135
        %v2137 = vpop.f32.mrb[0].mxu0
        %2138 = vmatprep.mubr.bf16.mxu0 0
        %2139 = vmatmul.mubr.bf16.gmra.mrb[0].mxu0 %v2010
        %v2140 = vpop.f32.mrb[0].mxu0
        %v2141 = vadd.f32 %v2032, %v2140
        %v2142 = vpop.f32.mrb[0].mxu0
        %v2143 = vpop.f32.mrb[0].mxu0
        %v2144 = vadd.f32 %v2032, %v2143
        %v2145 = vpop.f32.mrb[0].mxu0
        %2146 = vdwg.mxu0
        %v2147 = vpack.c.bf16 %v2120, %v2117
        %v2148 = vpack.c.bf16 %v2128, %v2125
        %v2149 = vpack.c.bf16 %v2136, %v2133
        %v2150 = vpack.c.bf16 %v2144, %v2141
        %v2151 = vld [vmem:[#allocation2] sm:$0xff]
        %v2152 = vld [vmem:[#allocation2 + $0x8] sm:$0xff]
        %v2153 = vld [vmem:[#allocation2 + $0x10] sm:$0xff]
        %v2154 = vld [vmem:[#allocation2 + $0x18] sm:$0xff]
        %vm2155 = vcmask 261120
        %v2157 = vsel %vm2155, %v2147, 0
        %v2160 = vsel %vm2155, %v2148, 0
        %v2163 = vsel %vm2155, %v2149, 0
        %v2166 = vsel %vm2155, %v2150, 0
        %v2169 = vsel %vm2155, %v2151, 0
        %v2172 = vsel %vm2155, %v2152, 0
        %v2175 = vsel %vm2155, %v2153, 0
        %v2178 = vsel %vm2155, %v2154, 0
        %2180 = vmatprep.subr.bf16.mxu0 0
        %2181 = vmatpush1.bf16.xpose.msra.mxu0 %v2169
        %2182 = vmatprep.subr.bf16.mxu0 0
        %2183 = vmatpush1.bf16.xpose.msra.mxu0 %v2172
        %2184 = vmatprep.subr.bf16.mxu0 0
        %2185 = vmatpush1.bf16.xpose.msra.mxu0 %v2175
        %2186 = vmatprep.subr.bf16.mxu0 0
        %2187 = vmatpush1.bf16.xpose.msra.mxu0 %v2178
        %2188 = vmatprep.subr.bf16.mxu0 0
        %2189 = vmatpush1.bf16.xpose.msra.mxu0 0
        %2190 = vmatprep.subr.bf16.mxu0 0
        %2191 = vmatpush1.bf16.xpose.msra.mxu0 0
        %2192 = vmatprep.subr.bf16.mxu0 0
        %2193 = vmatpush1.bf16.xpose.msra.mxu0 0
        %2194 = vmatprep.subr.bf16.mxu0 0
        %2195 = vmatpush1.bf16.xpose.msra.mxu0 0
        %2196 = vmatprep.subr.bf16.mxu0 0
        %2197 = vmatpush1.bf16.xpose.msra.mxu0 0
        %2198 = vmatprep.subr.bf16.mxu0 0
        %2199 = vmatpush1.bf16.xpose.msra.mxu0 0
        %2200 = vmatprep.subr.bf16.mxu0 0
        %2201 = vmatpush1.bf16.xpose.msra.mxu0 0
        %2202 = vmatprep.subr.bf16.mxu0 0
        %2203 = vmatpush1.bf16.xpose.msra.mxu0 0
        %2204 = vmatprep.subr.bf16.mxu0 0
        %2205 = vmatpush1.bf16.xpose.msra.mxu0 0
        %2206 = vmatprep.subr.bf16.mxu0 0
        %2207 = vmatpush1.bf16.xpose.msra.mxu0 0
        %2208 = vmatprep.subr.bf16.mxu0 0
        %2209 = vmatpush1.bf16.xpose.msra.mxu0 0
        %2210 = vmatprep.subr.bf16.mxu0 0
        %2211 = vmatpush1.bf16.xpose.msra.mxu0 0
        %2212 = vmatprep.mubr.bf16.mxu0 0
        %2213 = vmatmul.mubr.bf16.gmra.mrb[0].mxu0 %v2157
        %v2214 = vpop.f32.mrb[0].mxu0
        %v2215 = vadd.f32 0.0, %v2214
        %v2216 = vpop.f32.mrb[0].mxu0
        %v2217 = vpop.f32.mrb[0].mxu0
        %v2218 = vadd.f32 0.0, %v2217
        %v2219 = vpop.f32.mrb[0].mxu0
        %2220 = vmatprep.mubr.bf16.mxu0 0
        %2221 = vmatmul.mubr.bf16.gmra.mrb[0].mxu0 %v2160
        %v2222 = vpop.f32.mrb[0].mxu0
        %v2223 = vadd.f32 0.0, %v2222
        %v2224 = vpop.f32.mrb[0].mxu0
        %v2225 = vpop.f32.mrb[0].mxu0
        %v2226 = vadd.f32 0.0, %v2225
        %v2227 = vpop.f32.mrb[0].mxu0
        %2228 = vmatprep.mubr.bf16.mxu0 0
        %2229 = vmatmul.mubr.bf16.gmra.mrb[0].mxu0 %v2163
        %v2230 = vpop.f32.mrb[0].mxu0
        %v2231 = vadd.f32 0.0, %v2230
        %v2232 = vpop.f32.mrb[0].mxu0
        %v2233 = vpop.f32.mrb[0].mxu0
        %v2234 = vadd.f32 0.0, %v2233
        %v2235 = vpop.f32.mrb[0].mxu0
        %2236 = vmatprep.mubr.bf16.mxu0 0
        %2237 = vmatmul.mubr.bf16.gmra.mrb[0].mxu0 %v2166
        %v2238 = vpop.f32.mrb[0].mxu0
        %v2239 = vadd.f32 0.0, %v2238
        %v2240 = vpop.f32.mrb[0].mxu0
        %v2241 = vpop.f32.mrb[0].mxu0
        %v2242 = vadd.f32 0.0, %v2241
        %v2243 = vpop.f32.mrb[0].mxu0
        %2244 = vdwg.mxu0
        %v2245 = vrcp.pop 5.656854
        %v2246 = vmul.f32 %v2215, %v2245
        %v2247 = vmul.f32 %v2218, %v2245
        %v2248 = vmul.f32 %v2223, %v2245
        %v2249 = vmul.f32 %v2226, %v2245
        %v2250 = vmul.f32 %v2231, %v2245
        %v2251 = vmul.f32 %v2234, %v2245
        %v2252 = vmul.f32 %v2239, %v2245
        %v2253 = vmul.f32 %v2242, %v2245
        %v2254 = vfloor.f32 %v2246
        %v2255 = vfloor.f32 %v2247
        %v2256 = vfloor.f32 %v2248
        %v2257 = vfloor.f32 %v2249
        %v2258 = vfloor.f32 %v2250
        %v2259 = vfloor.f32 %v2251
        %v2260 = vfloor.f32 %v2252
        %v2261 = vfloor.f32 %v2253
        %vm2262 = vcmask 523264
        %v2263 = vsel %vm2262, %v2254, -inf
        %2264 = vmax.xlane.f32.xlu0 %v2263
        %v2265 = vpop.xlane.xlu0 %2264
        %v2266 = vsel %vm2262, %v2255, -inf
        %2267 = vmax.xlane.f32.xlu0 %v2266
        %v2268 = vpop.xlane.xlu0 %2267
        %v2269 = vsel %vm2262, %v2256, -inf
        %2270 = vmax.xlane.f32.xlu0 %v2269
        %v2271 = vpop.xlane.xlu0 %2270
        %v2272 = vsel %vm2262, %v2257, -inf
        %2273 = vmax.xlane.f32.xlu0 %v2272
        %v2274 = vpop.xlane.xlu0 %2273
        %v2275 = vsel %vm2262, %v2258, -inf
        %2276 = vmax.xlane.f32.xlu0 %v2275
        %v2277 = vpop.xlane.xlu0 %2276
        %v2278 = vsel %vm2262, %v2259, -inf
        %2279 = vmax.xlane.f32.xlu0 %v2278
        %v2280 = vpop.xlane.xlu0 %2279
        %v2281 = vsel %vm2262, %v2260, -inf
        %2282 = vmax.xlane.f32.xlu0 %v2281
        %v2283 = vpop.xlane.xlu0 %2282
        %v2284 = vsel %vm2262, %v2261, -inf
        %2285 = vmax.xlane.f32.xlu0 %v2284
        %v2286 = vpop.xlane.xlu0 %2285
        %v2287 = vsub.f32 %v2254, %v2265
        %v2288 = vsub.f32 %v2255, %v2268
        %v2289 = vsub.f32 %v2256, %v2271
        %v2290 = vsub.f32 %v2257, %v2274
        %v2291 = vsub.f32 %v2258, %v2277
        %v2292 = vsub.f32 %v2259, %v2280
        %v2293 = vsub.f32 %v2260, %v2283
        %v2294 = vsub.f32 %v2261, %v2286
        %v2295 = vmul.f32 %v2287, 1.442695
        %v2296 = vpow.pop %v2295
        %v2297 = vmul.f32 %v2288, 1.442695
        %v2298 = vpow.pop %v2297
        %v2299 = vmul.f32 %v2289, 1.442695
        %v2300 = vpow.pop %v2299
        %v2301 = vmul.f32 %v2290, 1.442695
        %v2302 = vpow.pop %v2301
        %v2303 = vmul.f32 %v2291, 1.442695
        %v2304 = vpow.pop %v2303
        %v2305 = vmul.f32 %v2292, 1.442695
        %v2306 = vpow.pop %v2305
        %v2307 = vmul.f32 %v2293, 1.442695
        %v2308 = vpow.pop %v2307
        %v2309 = vmul.f32 %v2294, 1.442695
        %v2310 = vpow.pop %v2309
        %v2311 = vsel %vm2262, %v2296, 0.0
        %2312 = vadd.xlane.f32.xlu0 %v2311
        %v2313 = vpop.xlane.xlu0 %2312
        %v2314 = vsel %vm2262, %v2298, 0.0
        %2315 = vadd.xlane.f32.xlu0 %v2314
        %v2316 = vpop.xlane.xlu0 %2315
        %v2317 = vsel %vm2262, %v2300, 0.0
        %2318 = vadd.xlane.f32.xlu0 %v2317
        %v2319 = vpop.xlane.xlu0 %2318
        %v2320 = vsel %vm2262, %v2302, 0.0
        %2321 = vadd.xlane.f32.xlu0 %v2320
        %v2322 = vpop.xlane.xlu0 %2321
        %v2323 = vsel %vm2262, %v2304, 0.0
        %2324 = vadd.xlane.f32.xlu0 %v2323
        %v2325 = vpop.xlane.xlu0 %2324
        %v2326 = vsel %vm2262, %v2306, 0.0
        %2327 = vadd.xlane.f32.xlu0 %v2326
        %v2328 = vpop.xlane.xlu0 %2327
        %v2329 = vsel %vm2262, %v2308, 0.0
        %2330 = vadd.xlane.f32.xlu0 %v2329
        %v2331 = vpop.xlane.xlu0 %2330
        %v2332 = vsel %vm2262, %v2310, 0.0
        %2333 = vadd.xlane.f32.xlu0 %v2332
        %v2334 = vpop.xlane.xlu0 %2333
        %v2335 = vrcp.pop %v2313
        %v2336 = vrcp.pop %v2316
        %v2337 = vrcp.pop %v2319
        %v2338 = vrcp.pop %v2322
        %v2339 = vrcp.pop %v2325
        %v2340 = vrcp.pop %v2328
        %v2341 = vrcp.pop %v2331
        %v2342 = vrcp.pop %v2334
        %v2343 = vmul.f32 %v2296, %v2335
        %v2344 = vmul.f32 %v2298, %v2336
        %v2345 = vmul.f32 %v2300, %v2337
        %v2346 = vmul.f32 %v2302, %v2338
        %v2347 = vmul.f32 %v2304, %v2339
        %v2348 = vmul.f32 %v2306, %v2340
        %v2349 = vmul.f32 %v2308, %v2341
        %v2350 = vmul.f32 %v2310, %v2342
        %v2351 = vpack.c.bf16 %v2344, %v2343
        %v2352 = vpack.c.bf16 %v2346, %v2345
        %v2353 = vpack.c.bf16 %v2348, %v2347
        %v2354 = vpack.c.bf16 %v2350, %v2349
        %v2355 = vld [vmem:[#allocation3] sm:$0xff]
        %v2356 = vld [vmem:[#allocation3 + $0x8] sm:$0xff]
        %v2357 = vld [vmem:[#allocation3 + $0x10] sm:$0xff]
        %v2358 = vld [vmem:[#allocation3 + $0x18] sm:$0xff]
        %v2360 = vsel %vm2262, %v2351, 0
        %v2363 = vsel %vm2262, %v2352, 0
        %v2366 = vsel %vm2262, %v2353, 0
        %v2369 = vsel %vm2262, %v2354, 0
        %2371 = vmatprep.subr.bf16.mxu0 0
        %2372 = vmatpush1.bf16.msra.mxu0 %v2355
        %2373 = vmatprep.subr.bf16.mxu0 0
        %2374 = vmatpush1.bf16.msra.mxu0 %v2356
        %2375 = vmatprep.subr.bf16.mxu0 0
        %2376 = vmatpush1.bf16.msra.mxu0 %v2357
        %2377 = vmatprep.subr.bf16.mxu0 0
        %2378 = vmatpush1.bf16.msra.mxu0 %v2358
        %2379 = vmatprep.subr.bf16.mxu0 0
        %2380 = vmatpush1.bf16.msra.mxu0 0
        %2381 = vmatprep.subr.bf16.mxu0 0
        %2382 = vmatpush1.bf16.msra.mxu0 0
        %2383 = vmatprep.subr.bf16.mxu0 0
        %2384 = vmatpush1.bf16.msra.mxu0 0
        %2385 = vmatprep.subr.bf16.mxu0 0
        %2386 = vmatpush1.bf16.msra.mxu0 0
        %2387 = vmatprep.subr.bf16.mxu0 0
        %2388 = vmatpush1.bf16.msra.mxu0 0
        %2389 = vmatprep.subr.bf16.mxu0 0
        %2390 = vmatpush1.bf16.msra.mxu0 0
        %2391 = vmatprep.subr.bf16.mxu0 0
        %2392 = vmatpush1.bf16.msra.mxu0 0
        %2393 = vmatprep.subr.bf16.mxu0 0
        %2394 = vmatpush1.bf16.msra.mxu0 0
        %2395 = vmatprep.subr.bf16.mxu0 0
        %2396 = vmatpush1.bf16.msra.mxu0 0
        %2397 = vmatprep.subr.bf16.mxu0 0
        %2398 = vmatpush1.bf16.msra.mxu0 0
        %2399 = vmatprep.subr.bf16.mxu0 0
        %2400 = vmatpush1.bf16.msra.mxu0 0
        %2401 = vmatprep.subr.bf16.mxu0 0
        %2402 = vmatpush1.bf16.msra.mxu0 0
        %2403 = vmatprep.mubr.bf16.mxu0 0
        %2404 = vmatmul.mubr.bf16.gmra.mrb[0].mxu0 %v2360
        %v2405 = vpop.f32.mrb[0].mxu0
        %v2406 = vadd.f32 0.0, %v2405
        %v2407 = vpop.f32.mrb[0].mxu0
        %v2408 = vpop.f32.mrb[0].mxu0
        %v2409 = vadd.f32 0.0, %v2408
        %v2410 = vpop.f32.mrb[0].mxu0
        %2411 = vmatprep.mubr.bf16.mxu0 0
        %2412 = vmatmul.mubr.bf16.gmra.mrb[0].mxu0 %v2363
        %v2413 = vpop.f32.mrb[0].mxu0
        %v2414 = vadd.f32 0.0, %v2413
        %v2415 = vpop.f32.mrb[0].mxu0
        %v2416 = vpop.f32.mrb[0].mxu0
        %v2417 = vadd.f32 0.0, %v2416
        %v2418 = vpop.f32.mrb[0].mxu0
        %2419 = vmatprep.mubr.bf16.mxu0 0
        %2420 = vmatmul.mubr.bf16.gmra.mrb[0].mxu0 %v2366
        %v2421 = vpop.f32.mrb[0].mxu0
        %v2422 = vadd.f32 0.0, %v2421
        %v2423 = vpop.f32.mrb[0].mxu0
        %v2424 = vpop.f32.mrb[0].mxu0
        %v2425 = vadd.f32 0.0, %v2424
        %v2426 = vpop.f32.mrb[0].mxu0
        %2427 = vmatprep.mubr.bf16.mxu0 0
        %2428 = vmatmul.mubr.bf16.gmra.mrb[0].mxu0 %v2369
        %v2429 = vpop.f32.mrb[0].mxu0
        %v2430 = vadd.f32 0.0, %v2429
        %v2431 = vpop.f32.mrb[0].mxu0
        %v2432 = vpop.f32.mrb[0].mxu0
        %v2433 = vadd.f32 0.0, %v2432
        %v2434 = vpop.f32.mrb[0].mxu0
        %2435 = vdwg.mxu0
        %v2436 = vpack.c.bf16 %v2409, %v2406
        %v2437 = vpack.c.bf16 %v2417, %v2414
        %v2438 = vpack.c.bf16 %v2425, %v2422
        %v2439 = vpack.c.bf16 %v2433, %v2430
        %v2440 = vld [vmem:[%s9] sm:$0xf]
        %v2441 = vld [vmem:[%s9 + $0x4] sm:$0xf]
        %v2442 = vld [vmem:[%s9 + $0x8] sm:$0xf]
        %v2443 = vld [vmem:[%s9 + $0xc] sm:$0xf]
        %s2444 = scalar_lea.vmem %s3, 64
        %v2445 = vld [vmem:[%s2444] sm:$0xf]
        %v2446 = vld [vmem:[%s2444 + $0x4] sm:$0xf]
        %v2447 = vld [vmem:[%s2444 + $0x8] sm:$0xf]
        %v2448 = vld [vmem:[%s2444 + $0xc] sm:$0xf]
        %v2449 = vld [vmem:[%s2444 + $0x10] sm:$0xf]
        %v2450 = vld [vmem:[%s2444 + $0x14] sm:$0xf]
        %v2451 = vld [vmem:[%s2444 + $0x18] sm:$0xf]
        %v2452 = vld [vmem:[%s2444 + $0x1c] sm:$0xf]
        %v2453 = vld [vmem:[%s2444 + $0x20] sm:$0xf]
        %v2454 = vld [vmem:[%s2444 + $0x24] sm:$0xf]
        %v2455 = vld [vmem:[%s2444 + $0x28] sm:$0xf]
        %v2456 = vld [vmem:[%s2444 + $0x2c] sm:$0xf]
        %v2457 = vld [vmem:[%s2444 + $0x30] sm:$0xf]
        %v2458 = vld [vmem:[%s2444 + $0x34] sm:$0xf]
        %v2459 = vld [vmem:[%s2444 + $0x38] sm:$0xf]
        %v2460 = vld [vmem:[%s2444 + $0x3c] sm:$0xf]
        %s2461 = scalar_lea.vmem %s4, 1
        %v2462 = vld [vmem:[%s2461] sm:$0x1]
        %v2464 = vlaneseq
        %v2465 = vshrl.u32 %v2464, 7
        %v2466 = vsub.s32 0, %v2465
        %v2467 = vrot.slane %v2462, %v2466
        %v2485 = vunpack.c.l.b16 %v2445
        %v2486 = vunpack.c.l.b16 %v2446
        %v2487 = vunpack.c.l.b16 %v2447
        %v2488 = vunpack.c.l.b16 %v2448
        %v2489 = vunpack.c.l.b16 %v2449
        %v2490 = vunpack.c.l.b16 %v2450
        %v2491 = vunpack.c.l.b16 %v2451
        %v2492 = vunpack.c.l.b16 %v2452
        %v2493 = vunpack.c.l.b16 %v2453
        %v2494 = vunpack.c.l.b16 %v2454
        %v2495 = vunpack.c.l.b16 %v2455
        %v2496 = vunpack.c.l.b16 %v2456
        %v2497 = vunpack.c.l.b16 %v2457
        %v2498 = vunpack.c.l.b16 %v2458
        %v2499 = vunpack.c.l.b16 %v2459
        %v2500 = vunpack.c.l.b16 %v2460
        %v2501 = vpack.c.b16 %v2486, %v2485
        %v2502 = vpack.c.b16 %v2488, %v2487
        %v2503 = vpack.c.b16 %v2490, %v2489
        %v2504 = vpack.c.b16 %v2492, %v2491
        %v2505 = vpack.c.b16 %v2494, %v2493
        %v2506 = vpack.c.b16 %v2496, %v2495
        %v2507 = vpack.c.b16 %v2498, %v2497
        %v2508 = vpack.c.b16 %v2500, %v2499
        %2517 = vmatprep.subr.bf16.mxu0 0
        %2518 = vmatpush1.bf16.msra.mxu0 %v2501
        %2519 = vmatprep.subr.bf16.mxu0 0
        %2520 = vmatpush1.bf16.msra.mxu0 %v2502
        %2521 = vmatprep.subr.bf16.mxu0 0
        %2522 = vmatpush1.bf16.msra.mxu0 %v2503
        %2523 = vmatprep.subr.bf16.mxu0 0
        %2524 = vmatpush1.bf16.msra.mxu0 %v2504
        %2525 = vmatprep.subr.bf16.mxu0 0
        %2526 = vmatpush1.bf16.msra.mxu0 %v2505
        %2527 = vmatprep.subr.bf16.mxu0 0
        %2528 = vmatpush1.bf16.msra.mxu0 %v2506
        %2529 = vmatprep.subr.bf16.mxu0 0
        %2530 = vmatpush1.bf16.msra.mxu0 %v2507
        %2531 = vmatprep.subr.bf16.mxu0 0
        %2532 = vmatpush1.bf16.msra.mxu0 %v2508
        %2533 = vmatprep.subr.bf16.mxu0 0
        %2534 = vmatpush1.bf16.msra.mxu0 0
        %2535 = vmatprep.subr.bf16.mxu0 0
        %2536 = vmatpush1.bf16.msra.mxu0 0
        %2537 = vmatprep.subr.bf16.mxu0 0
        %2538 = vmatpush1.bf16.msra.mxu0 0
        %2539 = vmatprep.subr.bf16.mxu0 0
        %2540 = vmatpush1.bf16.msra.mxu0 0
        %2541 = vmatprep.subr.bf16.mxu0 0
        %2542 = vmatpush1.bf16.msra.mxu0 0
        %2543 = vmatprep.subr.bf16.mxu0 0
        %2544 = vmatpush1.bf16.msra.mxu0 0
        %2545 = vmatprep.subr.bf16.mxu0 0
        %2546 = vmatpush1.bf16.msra.mxu0 0
        %2547 = vmatprep.subr.bf16.mxu0 0
        %2548 = vmatpush1.bf16.msra.mxu0 0
        %2549 = vmatprep.mubr.bf16.mxu0 0
        %2550 = vmatmul.mubr.bf16.gmra.mrb[0].mxu0 %v2007
        %v2551 = vpop.f32.mrb[0].mxu0
        %v2552 = vadd.f32 %v2467, %v2551
        %v2553 = vpop.f32.mrb[0].mxu0
        %v2554 = vpop.f32.mrb[0].mxu0
        %v2555 = vadd.f32 %v2467, %v2554
        %v2556 = vpop.f32.mrb[0].mxu0
        %2557 = vmatprep.mubr.bf16.mxu0 0
        %2558 = vmatmul.mubr.bf16.gmra.mrb[0].mxu0 %v2008
        %v2559 = vpop.f32.mrb[0].mxu0
        %v2560 = vadd.f32 %v2467, %v2559
        %v2561 = vpop.f32.mrb[0].mxu0
        %v2562 = vpop.f32.mrb[0].mxu0
        %v2563 = vadd.f32 %v2467, %v2562
        %v2564 = vpop.f32.mrb[0].mxu0
        %2565 = vmatprep.mubr.bf16.mxu0 0
        %2566 = vmatmul.mubr.bf16.gmra.mrb[0].mxu0 %v2009
        %v2567 = vpop.f32.mrb[0].mxu0
        %v2568 = vadd.f32 %v2467, %v2567
        %v2569 = vpop.f32.mrb[0].mxu0
        %v2570 = vpop.f32.mrb[0].mxu0
        %v2571 = vadd.f32 %v2467, %v2570
        %v2572 = vpop.f32.mrb[0].mxu0
        %2573 = vmatprep.mubr.bf16.mxu0 0
        %2574 = vmatmul.mubr.bf16.gmra.mrb[0].mxu0 %v2010
        %v2575 = vpop.f32.mrb[0].mxu0
        %v2576 = vadd.f32 %v2467, %v2575
        %v2577 = vpop.f32.mrb[0].mxu0
        %v2578 = vpop.f32.mrb[0].mxu0
        %v2579 = vadd.f32 %v2467, %v2578
        %v2580 = vpop.f32.mrb[0].mxu0
        %2581 = vdwg.mxu0
        %v2582 = vpack.c.bf16 %v2555, %v2552
        %v2583 = vpack.c.bf16 %v2563, %v2560
        %v2584 = vpack.c.bf16 %v2571, %v2568
        %v2585 = vpack.c.bf16 %v2579, %v2576
        %s2586 = scalar_lea.vmem [#allocation2], 32
        %v2587 = vld [vmem:[%s2586] sm:$0xff]
        %v2588 = vld [vmem:[%s2586 + $0x8] sm:$0xff]
        %v2589 = vld [vmem:[%s2586 + $0x10] sm:$0xff]
        %v2590 = vld [vmem:[%s2586 + $0x18] sm:$0xff]
        %v2592 = vsel %vm2155, %v2582, 0
        %v2595 = vsel %vm2155, %v2583, 0
        %v2598 = vsel %vm2155, %v2584, 0
        %v2601 = vsel %vm2155, %v2585, 0
        %v2604 = vsel %vm2155, %v2587, 0
        %v2607 = vsel %vm2155, %v2588, 0
        %v2610 = vsel %vm2155, %v2589, 0
        %v2613 = vsel %vm2155, %v2590, 0
        %2615 = vmatprep.subr.bf16.mxu0 0
        %2616 = vmatpush1.bf16.xpose.msra.mxu0 %v2604
        %2617 = vmatprep.subr.bf16.mxu0 0
        %2618 = vmatpush1.bf16.xpose.msra.mxu0 %v2607
        %2619 = vmatprep.subr.bf16.mxu0 0
        %2620 = vmatpush1.bf16.xpose.msra.mxu0 %v2610
        %2621 = vmatprep.subr.bf16.mxu0 0
        %2622 = vmatpush1.bf16.xpose.msra.mxu0 %v2613
        %2623 = vmatprep.subr.bf16.mxu0 0
        %2624 = vmatpush1.bf16.xpose.msra.mxu0 0
        %2625 = vmatprep.subr.bf16.mxu0 0
        %2626 = vmatpush1.bf16.xpose.msra.mxu0 0
        %2627 = vmatprep.subr.bf16.mxu0 0
        %2628 = vmatpush1.bf16.xpose.msra.mxu0 0
        %2629 = vmatprep.subr.bf16.mxu0 0
        %2630 = vmatpush1.bf16.xpose.msra.mxu0 0
        %2631 = vmatprep.subr.bf16.mxu0 0
        %2632 = vmatpush1.bf16.xpose.msra.mxu0 0
        %2633 = vmatprep.subr.bf16.mxu0 0
        %2634 = vmatpush1.bf16.xpose.msra.mxu0 0
        %2635 = vmatprep.subr.bf16.mxu0 0
        %2636 = vmatpush1.bf16.xpose.msra.mxu0 0
        %2637 = vmatprep.subr.bf16.mxu0 0
        %2638 = vmatpush1.bf16.xpose.msra.mxu0 0
        %2639 = vmatprep.subr.bf16.mxu0 0
        %2640 = vmatpush1.bf16.xpose.msra.mxu0 0
        %2641 = vmatprep.subr.bf16.mxu0 0
        %2642 = vmatpush1.bf16.xpose.msra.mxu0 0
        %2643 = vmatprep.subr.bf16.mxu0 0
        %2644 = vmatpush1.bf16.xpose.msra.mxu0 0
        %2645 = vmatprep.subr.bf16.mxu0 0
        %2646 = vmatpush1.bf16.xpose.msra.mxu0 0
        %2647 = vmatprep.mubr.bf16.mxu0 0
        %2648 = vmatmul.mubr.bf16.gmra.mrb[0].mxu0 %v2592
        %v2649 = vpop.f32.mrb[0].mxu0
        %v2650 = vadd.f32 0.0, %v2649
        %v2651 = vpop.f32.mrb[0].mxu0
        %v2652 = vpop.f32.mrb[0].mxu0
        %v2653 = vadd.f32 0.0, %v2652
        %v2654 = vpop.f32.mrb[0].mxu0
        %2655 = vmatprep.mubr.bf16.mxu0 0
        %2656 = vmatmul.mubr.bf16.gmra.mrb[0].mxu0 %v2595
        %v2657 = vpop.f32.mrb[0].mxu0
        %v2658 = vadd.f32 0.0, %v2657
        %v2659 = vpop.f32.mrb[0].mxu0
        %v2660 = vpop.f32.mrb[0].mxu0
        %v2661 = vadd.f32 0.0, %v2660
        %v2662 = vpop.f32.mrb[0].mxu0
        %2663 = vmatprep.mubr.bf16.mxu0 0
        %2664 = vmatmul.mubr.bf16.gmra.mrb[0].mxu0 %v2598
        %v2665 = vpop.f32.mrb[0].mxu0
        %v2666 = vadd.f32 0.0, %v2665
        %v2667 = vpop.f32.mrb[0].mxu0
        %v2668 = vpop.f32.mrb[0].mxu0
        %v2669 = vadd.f32 0.0, %v2668
        %v2670 = vpop.f32.mrb[0].mxu0
        %2671 = vmatprep.mubr.bf16.mxu0 0
        %2672 = vmatmul.mubr.bf16.gmra.mrb[0].mxu0 %v2601
        %v2673 = vpop.f32.mrb[0].mxu0
        %v2674 = vadd.f32 0.0, %v2673
        %v2675 = vpop.f32.mrb[0].mxu0
        %v2676 = vpop.f32.mrb[0].mxu0
        %v2677 = vadd.f32 0.0, %v2676
        %v2678 = vpop.f32.mrb[0].mxu0
        %2679 = vdwg.mxu0
        %v2680 = vmul.f32 %v2650, %v2245
        %v2681 = vmul.f32 %v2653, %v2245
        %v2682 = vmul.f32 %v2658, %v2245
        %v2683 = vmul.f32 %v2661, %v2245
        %v2684 = vmul.f32 %v2666, %v2245
        %v2685 = vmul.f32 %v2669, %v2245
        %v2686 = vmul.f32 %v2674, %v2245
        %v2687 = vmul.f32 %v2677, %v2245
        %v2688 = vfloor.f32 %v2680
        %v2689 = vfloor.f32 %v2681
        %v2690 = vfloor.f32 %v2682
        %v2691 = vfloor.f32 %v2683
        %v2692 = vfloor.f32 %v2684
        %v2693 = vfloor.f32 %v2685
        %v2694 = vfloor.f32 %v2686
        %v2695 = vfloor.f32 %v2687
        %v2696 = vsel %vm2262, %v2688, -inf
        %2697 = vmax.xlane.f32.xlu0 %v2696
        %v2698 = vpop.xlane.xlu0 %2697
        %v2699 = vsel %vm2262, %v2689, -inf
        %2700 = vmax.xlane.f32.xlu0 %v2699
        %v2701 = vpop.xlane.xlu0 %2700
        %v2702 = vsel %vm2262, %v2690, -inf
        %2703 = vmax.xlane.f32.xlu0 %v2702
        %v2704 = vpop.xlane.xlu0 %2703
        %v2705 = vsel %vm2262, %v2691, -inf
        %2706 = vmax.xlane.f32.xlu0 %v2705
        %v2707 = vpop.xlane.xlu0 %2706
        %v2708 = vsel %vm2262, %v2692, -inf
        %2709 = vmax.xlane.f32.xlu0 %v2708
        %v2710 = vpop.xlane.xlu0 %2709
        %v2711 = vsel %vm2262, %v2693, -inf
        %2712 = vmax.xlane.f32.xlu0 %v2711
        %v2713 = vpop.xlane.xlu0 %2712
        %v2714 = vsel %vm2262, %v2694, -inf
        %2715 = vmax.xlane.f32.xlu0 %v2714
        %v2716 = vpop.xlane.xlu0 %2715
        %v2717 = vsel %vm2262, %v2695, -inf
        %2718 = vmax.xlane.f32.xlu0 %v2717
        %v2719 = vpop.xlane.xlu0 %2718
        %v2720 = vsub.f32 %v2688, %v2698
        %v2721 = vsub.f32 %v2689, %v2701
        %v2722 = vsub.f32 %v2690, %v2704
        %v2723 = vsub.f32 %v2691, %v2707
        %v2724 = vsub.f32 %v2692, %v2710
        %v2725 = vsub.f32 %v2693, %v2713
        %v2726 = vsub.f32 %v2694, %v2716
        %v2727 = vsub.f32 %v2695, %v2719
        %v2728 = vmul.f32 %v2720, 1.442695
        %v2729 = vpow.pop %v2728
        %v2730 = vmul.f32 %v2721, 1.442695
        %v2731 = vpow.pop %v2730
        %v2732 = vmul.f32 %v2722, 1.442695
        %v2733 = vpow.pop %v2732
        %v2734 = vmul.f32 %v2723, 1.442695
        %v2735 = vpow.pop %v2734
        %v2736 = vmul.f32 %v2724, 1.442695
        %v2737 = vpow.pop %v2736
        %v2738 = vmul.f32 %v2725, 1.442695
        %v2739 = vpow.pop %v2738
        %v2740 = vmul.f32 %v2726, 1.442695
        %v2741 = vpow.pop %v2740
        %v2742 = vmul.f32 %v2727, 1.442695
        %v2743 = vpow.pop %v2742
        %v2744 = vsel %vm2262, %v2729, 0.0
        %2745 = vadd.xlane.f32.xlu0 %v2744
        %v2746 = vpop.xlane.xlu0 %2745
        %v2747 = vsel %vm2262, %v2731, 0.0
        %2748 = vadd.xlane.f32.xlu0 %v2747
        %v2749 = vpop.xlane.xlu0 %2748
        %v2750 = vsel %vm2262, %v2733, 0.0
        %2751 = vadd.xlane.f32.xlu0 %v2750
        %v2752 = vpop.xlane.xlu0 %2751
        %v2753 = vsel %vm2262, %v2735, 0.0
        %2754 = vadd.xlane.f32.xlu0 %v2753
        %v2755 = vpop.xlane.xlu0 %2754
        %v2756 = vsel %vm2262, %v2737, 0.0
        %2757 = vadd.xlane.f32.xlu0 %v2756
        %v2758 = vpop.xlane.xlu0 %2757
        %v2759 = vsel %vm2262, %v2739, 0.0
        %2760 = vadd.xlane.f32.xlu0 %v2759
        %v2761 = vpop.xlane.xlu0 %2760
        %v2762 = vsel %vm2262, %v2741, 0.0
        %2763 = vadd.xlane.f32.xlu0 %v2762
        %v2764 = vpop.xlane.xlu0 %2763
        %v2765 = vsel %vm2262, %v2743, 0.0
        %2766 = vadd.xlane.f32.xlu0 %v2765
        %v2767 = vpop.xlane.xlu0 %2766
        %v2768 = vrcp.pop %v2746
        %v2769 = vrcp.pop %v2749
        %v2770 = vrcp.pop %v2752
        %v2771 = vrcp.pop %v2755
        %v2772 = vrcp.pop %v2758
        %v2773 = vrcp.pop %v2761
        %v2774 = vrcp.pop %v2764
        %v2775 = vrcp.pop %v2767
        %v2776 = vmul.f32 %v2729, %v2768
        %v2777 = vmul.f32 %v2731, %v2769
        %v2778 = vmul.f32 %v2733, %v2770
        %v2779 = vmul.f32 %v2735, %v2771
        %v2780 = vmul.f32 %v2737, %v2772
        %v2781 = vmul.f32 %v2739, %v2773
        %v2782 = vmul.f32 %v2741, %v2774
        %v2783 = vmul.f32 %v2743, %v2775
        %v2784 = vpack.c.bf16 %v2777, %v2776
        %v2785 = vpack.c.bf16 %v2779, %v2778
        %v2786 = vpack.c.bf16 %v2781, %v2780
        %v2787 = vpack.c.bf16 %v2783, %v2782
        %s2788 = scalar_lea.vmem [#allocation3], 32
        %v2789 = vld [vmem:[%s2788] sm:$0xff]
        %v2790 = vld [vmem:[%s2788 + $0x8] sm:$0xff]
        %v2791 = vld [vmem:[%s2788 + $0x10] sm:$0xff]
        %v2792 = vld [vmem:[%s2788 + $0x18] sm:$0xff]
        %v2794 = vsel %vm2262, %v2784, 0
        %v2797 = vsel %vm2262, %v2785, 0
        %v2800 = vsel %vm2262, %v2786, 0
        %v2803 = vsel %vm2262, %v2787, 0
        %2805 = vmatprep.subr.bf16.mxu0 0
        %2806 = vmatpush1.bf16.msra.mxu0 %v2789
        %2807 = vmatprep.subr.bf16.mxu0 0
        %2808 = vmatpush1.bf16.msra.mxu0 %v2790
        %2809 = vmatprep.subr.bf16.mxu0 0
        %2810 = vmatpush1.bf16.msra.mxu0 %v2791
        %2811 = vmatprep.subr.bf16.mxu0 0
        %2812 = vmatpush1.bf16.msra.mxu0 %v2792
        %2813 = vmatprep.subr.bf16.mxu0 0
        %2814 = vmatpush1.bf16.msra.mxu0 0
        %2815 = vmatprep.subr.bf16.mxu0 0
        %2816 = vmatpush1.bf16.msra.mxu0 0
        %2817 = vmatprep.subr.bf16.mxu0 0
        %2818 = vmatpush1.bf16.msra.mxu0 0
        %2819 = vmatprep.subr.bf16.mxu0 0
        %2820 = vmatpush1.bf16.msra.mxu0 0
        %2821 = vmatprep.subr.bf16.mxu0 0
        %2822 = vmatpush1.bf16.msra.mxu0 0
        %2823 = vmatprep.subr.bf16.mxu0 0
        %2824 = vmatpush1.bf16.msra.mxu0 0
        %2825 = vmatprep.subr.bf16.mxu0 0
        %2826 = vmatpush1.bf16.msra.mxu0 0
        %2827 = vmatprep.subr.bf16.mxu0 0
        %2828 = vmatpush1.bf16.msra.mxu0 0
        %2829 = vmatprep.subr.bf16.mxu0 0
        %2830 = vmatpush1.bf16.msra.mxu0 0
        %2831 = vmatprep.subr.bf16.mxu0 0
        %2832 = vmatpush1.bf16.msra.mxu0 0
        %2833 = vmatprep.subr.bf16.mxu0 0
        %2834 = vmatpush1.bf16.msra.mxu0 0
        %2835 = vmatprep.subr.bf16.mxu0 0
        %2836 = vmatpush1.bf16.msra.mxu0 0
        %2837 = vmatprep.mubr.bf16.mxu0 0
        %2838 = vmatmul.mubr.bf16.gmra.mrb[0].mxu0 %v2794
        %v2839 = vpop.f32.mrb[0].mxu0
        %v2840 = vadd.f32 0.0, %v2839
        %v2841 = vpop.f32.mrb[0].mxu0
        %v2842 = vpop.f32.mrb[0].mxu0
        %v2843 = vadd.f32 0.0, %v2842
        %v2844 = vpop.f32.mrb[0].mxu0
        %2845 = vmatprep.mubr.bf16.mxu0 0
        %2846 = vmatmul.mubr.bf16.gmra.mrb[0].mxu0 %v2797
        %v2847 = vpop.f32.mrb[0].mxu0
        %v2848 = vadd.f32 0.0, %v2847
        %v2849 = vpop.f32.mrb[0].mxu0
        %v2850 = vpop.f32.mrb[0].mxu0
        %v2851 = vadd.f32 0.0, %v2850
        %v2852 = vpop.f32.mrb[0].mxu0
        %2853 = vmatprep.mubr.bf16.mxu0 0
        %2854 = vmatmul.mubr.bf16.gmra.mrb[0].mxu0 %v2800
        %v2855 = vpop.f32.mrb[0].mxu0
        %v2856 = vadd.f32 0.0, %v2855
        %v2857 = vpop.f32.mrb[0].mxu0
        %v2858 = vpop.f32.mrb[0].mxu0
        %v2859 = vadd.f32 0.0, %v2858
        %v2860 = vpop.f32.mrb[0].mxu0
        %2861 = vmatprep.mubr.bf16.mxu0 0
        %2862 = vmatmul.mubr.bf16.gmra.mrb[0].mxu0 %v2803
        %v2863 = vpop.f32.mrb[0].mxu0
        %v2864 = vadd.f32 0.0, %v2863
        %v2865 = vpop.f32.mrb[0].mxu0
        %v2866 = vpop.f32.mrb[0].mxu0
        %v2867 = vadd.f32 0.0, %v2866
        %v2868 = vpop.f32.mrb[0].mxu0
        %2869 = vdwg.mxu0
        %v2870 = vpack.c.bf16 %v2843, %v2840
        %v2871 = vpack.c.bf16 %v2851, %v2848
        %v2872 = vpack.c.bf16 %v2859, %v2856
        %v2873 = vpack.c.bf16 %v2867, %v2864
        %s2874 = scalar_lea.vmem %s9, 16
        %v2875 = vld [vmem:[%s2874] sm:$0xf]
        %v2876 = vld [vmem:[%s2874 + $0x4] sm:$0xf]
        %v2877 = vld [vmem:[%s2874 + $0x8] sm:$0xf]
        %v2878 = vld [vmem:[%s2874 + $0xc] sm:$0xf]
        %v2883 = vunpack.c.l.b16 %v2875
        %v2884 = vunpack.c.l.b16 %v2876
        %v2885 = vunpack.c.l.b16 %v2877
        %v2886 = vunpack.c.l.b16 %v2878
        %v2887 = vpack.c.b16 %v2884, %v2883
        %v2888 = vpack.c.b16 %v2886, %v2885
        %v2892 = vsel %vm2155, %v2870, 0
        %v2895 = vsel %vm2155, %v2871, 0
        %v2898 = vsel %vm2155, %v2872, 0
        %v2901 = vsel %vm2155, %v2873, 0
        %2903 = vmatprep.subr.bf16.mxu0 0
        %2904 = vmatpush1.bf16.msra.mxu0 %v2887
        %2905 = vmatprep.subr.bf16.mxu0 0
        %2906 = vmatpush1.bf16.msra.mxu0 %v2888
        %2907 = vmatprep.subr.bf16.mxu0 0
        %2908 = vmatpush1.bf16.msra.mxu0 0
        %2909 = vmatprep.subr.bf16.mxu0 0
        %2910 = vmatpush1.bf16.msra.mxu0 0
        %2911 = vmatprep.subr.bf16.mxu0 0
        %2912 = vmatpush1.bf16.msra.mxu0 0
        %2913 = vmatprep.subr.bf16.mxu0 0
        %2914 = vmatpush1.bf16.msra.mxu0 0
        %2915 = vmatprep.subr.bf16.mxu0 0
        %2916 = vmatpush1.bf16.msra.mxu0 0
        %2917 = vmatprep.subr.bf16.mxu0 0
        %2918 = vmatpush1.bf16.msra.mxu0 0
        %2919 = vmatprep.subr.bf16.mxu0 0
        %2920 = vmatpush1.bf16.msra.mxu0 0
        %2921 = vmatprep.subr.bf16.mxu0 0
        %2922 = vmatpush1.bf16.msra.mxu0 0
        %2923 = vmatprep.subr.bf16.mxu0 0
        %2924 = vmatpush1.bf16.msra.mxu0 0
        %2925 = vmatprep.subr.bf16.mxu0 0
        %2926 = vmatpush1.bf16.msra.mxu0 0
        %2927 = vmatprep.subr.bf16.mxu0 0
        %2928 = vmatpush1.bf16.msra.mxu0 0
        %2929 = vmatprep.subr.bf16.mxu0 0
        %2930 = vmatpush1.bf16.msra.mxu0 0
        %2931 = vmatprep.subr.bf16.mxu0 0
        %2932 = vmatpush1.bf16.msra.mxu0 0
        %2933 = vmatprep.subr.bf16.mxu0 0
        %2934 = vmatpush1.bf16.msra.mxu0 0
        %2935 = vmatprep.mubr.bf16.mxu0 0
        %2936 = vmatmul.mubr.bf16.gmra.mrb[0].mxu0 %v2892
        %v2937 = vpop.f32.mrb[0].mxu0
        %v2938 = vadd.f32 0.0, %v2937
        %v2939 = vpop.f32.mrb[0].mxu0
        %v2940 = vpop.f32.mrb[0].mxu0
        %v2941 = vadd.f32 0.0, %v2940
        %v2942 = vpop.f32.mrb[0].mxu0
        %2943 = vmatprep.mubr.bf16.mxu0 0
        %2944 = vmatmul.mubr.bf16.gmra.mrb[0].mxu0 %v2895
        %v2945 = vpop.f32.mrb[0].mxu0
        %v2946 = vadd.f32 0.0, %v2945
        %v2947 = vpop.f32.mrb[0].mxu0
        %v2948 = vpop.f32.mrb[0].mxu0
        %v2949 = vadd.f32 0.0, %v2948
        %v2950 = vpop.f32.mrb[0].mxu0
        %2951 = vmatprep.mubr.bf16.mxu0 0
        %2952 = vmatmul.mubr.bf16.gmra.mrb[0].mxu0 %v2898
        %v2953 = vpop.f32.mrb[0].mxu0
        %v2954 = vadd.f32 0.0, %v2953
        %v2955 = vpop.f32.mrb[0].mxu0
        %v2956 = vpop.f32.mrb[0].mxu0
        %v2957 = vadd.f32 0.0, %v2956
        %v2958 = vpop.f32.mrb[0].mxu0
        %2959 = vmatprep.mubr.bf16.mxu0 0
        %2960 = vmatmul.mubr.bf16.gmra.mrb[0].mxu0 %v2901
        %v2961 = vpop.f32.mrb[0].mxu0
        %v2962 = vadd.f32 0.0, %v2961
        %v2963 = vpop.f32.mrb[0].mxu0
        %v2964 = vpop.f32.mrb[0].mxu0
        %v2965 = vadd.f32 0.0, %v2964
        %v2966 = vpop.f32.mrb[0].mxu0
        %2967 = vdwg.mxu0
        %v2972 = vunpack.c.l.b16 %v2440
        %v2973 = vunpack.c.l.b16 %v2441
        %v2974 = vunpack.c.l.b16 %v2442
        %v2975 = vunpack.c.l.b16 %v2443
        %v2976 = vpack.c.b16 %v2973, %v2972
        %v2977 = vpack.c.b16 %v2975, %v2974
        %v2981 = vsel %vm2155, %v2436, 0
        %v2984 = vsel %vm2155, %v2437, 0
        %v2987 = vsel %vm2155, %v2438, 0
        %v2990 = vsel %vm2155, %v2439, 0
        %2992 = vmatprep.subr.bf16.mxu0 0
        %2993 = vmatpush1.bf16.msra.mxu0 %v2976
        %2994 = vmatprep.subr.bf16.mxu0 0
        %2995 = vmatpush1.bf16.msra.mxu0 %v2977
        %2996 = vmatprep.subr.bf16.mxu0 0
        %2997 = vmatpush1.bf16.msra.mxu0 0
        %2998 = vmatprep.subr.bf16.mxu0 0
        %2999 = vmatpush1.bf16.msra.mxu0 0
        %3000 = vmatprep.subr.bf16.mxu0 0
        %3001 = vmatpush1.bf16.msra.mxu0 0
        %3002 = vmatprep.subr.bf16.mxu0 0
        %3003 = vmatpush1.bf16.msra.mxu0 0
        %3004 = vmatprep.subr.bf16.mxu0 0
        %3005 = vmatpush1.bf16.msra.mxu0 0
        %3006 = vmatprep.subr.bf16.mxu0 0
        %3007 = vmatpush1.bf16.msra.mxu0 0
        %3008 = vmatprep.subr.bf16.mxu0 0
        %3009 = vmatpush1.bf16.msra.mxu0 0
        %3010 = vmatprep.subr.bf16.mxu0 0
        %3011 = vmatpush1.bf16.msra.mxu0 0
        %3012 = vmatprep.subr.bf16.mxu0 0
        %3013 = vmatpush1.bf16.msra.mxu0 0
        %3014 = vmatprep.subr.bf16.mxu0 0
        %3015 = vmatpush1.bf16.msra.mxu0 0
        %3016 = vmatprep.subr.bf16.mxu0 0
        %3017 = vmatpush1.bf16.msra.mxu0 0
        %3018 = vmatprep.subr.bf16.mxu0 0
        %3019 = vmatpush1.bf16.msra.mxu0 0
        %3020 = vmatprep.subr.bf16.mxu0 0
        %3021 = vmatpush1.bf16.msra.mxu0 0
        %3022 = vmatprep.subr.bf16.mxu0 0
        %3023 = vmatpush1.bf16.msra.mxu0 0
        %3024 = vmatprep.mubr.bf16.mxu0 0
        %3025 = vmatmul.mubr.bf16.gmra.mrb[0].mxu0 %v2981
        %v3026 = vpop.f32.mrb[0].mxu0
        %v3027 = vadd.f32 %v2938, %v3026
        %v3028 = vpop.f32.mrb[0].mxu0
        %v3029 = vpop.f32.mrb[0].mxu0
        %v3030 = vadd.f32 %v2941, %v3029
        %v3031 = vpop.f32.mrb[0].mxu0
        %3032 = vmatprep.mubr.bf16.mxu0 0
        %3033 = vmatmul.mubr.bf16.gmra.mrb[0].mxu0 %v2984
        %v3034 = vpop.f32.mrb[0].mxu0
        %v3035 = vadd.f32 %v2946, %v3034
        %v3036 = vpop.f32.mrb[0].mxu0
        %v3037 = vpop.f32.mrb[0].mxu0
        %v3038 = vadd.f32 %v2949, %v3037
        %v3039 = vpop.f32.mrb[0].mxu0
        %3040 = vmatprep.mubr.bf16.mxu0 0
        %3041 = vmatmul.mubr.bf16.gmra.mrb[0].mxu0 %v2987
        %v3042 = vpop.f32.mrb[0].mxu0
        %v3043 = vadd.f32 %v2954, %v3042
        %v3044 = vpop.f32.mrb[0].mxu0
        %v3045 = vpop.f32.mrb[0].mxu0
        %v3046 = vadd.f32 %v2957, %v3045
        %v3047 = vpop.f32.mrb[0].mxu0
        %3048 = vmatprep.mubr.bf16.mxu0 0
        %3049 = vmatmul.mubr.bf16.gmra.mrb[0].mxu0 %v2990
        %v3050 = vpop.f32.mrb[0].mxu0
        %v3051 = vadd.f32 %v2962, %v3050
        %v3052 = vpop.f32.mrb[0].mxu0
        %v3053 = vpop.f32.mrb[0].mxu0
        %v3054 = vadd.f32 %v2965, %v3053
        %v3055 = vpop.f32.mrb[0].mxu0
        %3056 = vdwg.mxu0
        %s3057 = scalar_lea.vmem %s3, 128
        %v3058 = vld [vmem:[%s3057] sm:$0xf]
        %v3059 = vld [vmem:[%s3057 + $0x4] sm:$0xf]
        %v3060 = vld [vmem:[%s3057 + $0x8] sm:$0xf]
        %v3061 = vld [vmem:[%s3057 + $0xc] sm:$0xf]
        %v3062 = vld [vmem:[%s3057 + $0x10] sm:$0xf]
        %v3063 = vld [vmem:[%s3057 + $0x14] sm:$0xf]
        %v3064 = vld [vmem:[%s3057 + $0x18] sm:$0xf]
        %v3065 = vld [vmem:[%s3057 + $0x1c] sm:$0xf]
        %v3066 = vld [vmem:[%s3057 + $0x20] sm:$0xf]
        %v3067 = vld [vmem:[%s3057 + $0x24] sm:$0xf]
        %v3068 = vld [vmem:[%s3057 + $0x28] sm:$0xf]
        %v3069 = vld [vmem:[%s3057 + $0x2c] sm:$0xf]
        %v3070 = vld [vmem:[%s3057 + $0x30] sm:$0xf]
        %v3071 = vld [vmem:[%s3057 + $0x34] sm:$0xf]
        %v3072 = vld [vmem:[%s3057 + $0x38] sm:$0xf]
        %v3073 = vld [vmem:[%s3057 + $0x3c] sm:$0xf]
        %s3074 = scalar_lea.vmem %s4, 2
        %v3075 = vld [vmem:[%s3074] sm:$0x1]
        %v3077 = vlaneseq
        %v3078 = vshrl.u32 %v3077, 7
        %v3079 = vsub.s32 0, %v3078
        %v3080 = vrot.slane %v3075, %v3079
        %v3098 = vunpack.c.l.b16 %v3058
        %v3099 = vunpack.c.l.b16 %v3059
        %v3100 = vunpack.c.l.b16 %v3060
        %v3101 = vunpack.c.l.b16 %v3061
        %v3102 = vunpack.c.l.b16 %v3062
        %v3103 = vunpack.c.l.b16 %v3063
        %v3104 = vunpack.c.l.b16 %v3064
        %v3105 = vunpack.c.l.b16 %v3065
        %v3106 = vunpack.c.l.b16 %v3066
        %v3107 = vunpack.c.l.b16 %v3067
        %v3108 = vunpack.c.l.b16 %v3068
        %v3109 = vunpack.c.l.b16 %v3069
        %v3110 = vunpack.c.l.b16 %v3070
        %v3111 = vunpack.c.l.b16 %v3071
        %v3112 = vunpack.c.l.b16 %v3072
        %v3113 = vunpack.c.l.b16 %v3073
        %v3114 = vpack.c.b16 %v3099, %v3098
        %v3115 = vpack.c.b16 %v3101, %v3100
        %v3116 = vpack.c.b16 %v3103, %v3102
        %v3117 = vpack.c.b16 %v3105, %v3104
        %v3118 = vpack.c.b16 %v3107, %v3106
        %v3119 = vpack.c.b16 %v3109, %v3108
        %v3120 = vpack.c.b16 %v3111, %v3110
        %v3121 = vpack.c.b16 %v3113, %v3112
        %3130 = vmatprep.subr.bf16.mxu0 0
        %3131 = vmatpush1.bf16.msra.mxu0 %v3114
        %3132 = vmatprep.subr.bf16.mxu0 0
        %3133 = vmatpush1.bf16.msra.mxu0 %v3115
        %3134 = vmatprep.subr.bf16.mxu0 0
        %3135 = vmatpush1.bf16.msra.mxu0 %v3116
        %3136 = vmatprep.subr.bf16.mxu0 0
        %3137 = vmatpush1.bf16.msra.mxu0 %v3117
        %3138 = vmatprep.subr.bf16.mxu0 0
        %3139 = vmatpush1.bf16.msra.mxu0 %v3118
        %3140 = vmatprep.subr.bf16.mxu0 0
        %3141 = vmatpush1.bf16.msra.mxu0 %v3119
        %3142 = vmatprep.subr.bf16.mxu0 0
        %3143 = vmatpush1.bf16.msra.mxu0 %v3120
        %3144 = vmatprep.subr.bf16.mxu0 0
        %3145 = vmatpush1.bf16.msra.mxu0 %v3121
        %3146 = vmatprep.subr.bf16.mxu0 0
        %3147 = vmatpush1.bf16.msra.mxu0 0
        %3148 = vmatprep.subr.bf16.mxu0 0
        %3149 = vmatpush1.bf16.msra.mxu0 0
        %3150 = vmatprep.subr.bf16.mxu0 0
        %3151 = vmatpush1.bf16.msra.mxu0 0
        %3152 = vmatprep.subr.bf16.mxu0 0
        %3153 = vmatpush1.bf16.msra.mxu0 0
        %3154 = vmatprep.subr.bf16.mxu0 0
        %3155 = vmatpush1.bf16.msra.mxu0 0
        %3156 = vmatprep.subr.bf16.mxu0 0
        %3157 = vmatpush1.bf16.msra.mxu0 0
        %3158 = vmatprep.subr.bf16.mxu0 0
        %3159 = vmatpush1.bf16.msra.mxu0 0
        %3160 = vmatprep.subr.bf16.mxu0 0
        %3161 = vmatpush1.bf16.msra.mxu0 0
        %3162 = vmatprep.mubr.bf16.mxu0 0
        %3163 = vmatmul.mubr.bf16.gmra.mrb[0].mxu0 %v2007
        %v3164 = vpop.f32.mrb[0].mxu0
        %v3165 = vadd.f32 %v3080, %v3164
        %v3166 = vpop.f32.mrb[0].mxu0
        %v3167 = vpop.f32.mrb[0].mxu0
        %v3168 = vadd.f32 %v3080, %v3167
        %v3169 = vpop.f32.mrb[0].mxu0
        %3170 = vmatprep.mubr.bf16.mxu0 0
        %3171 = vmatmul.mubr.bf16.gmra.mrb[0].mxu0 %v2008
        %v3172 = vpop.f32.mrb[0].mxu0
        %v3173 = vadd.f32 %v3080, %v3172
        %v3174 = vpop.f32.mrb[0].mxu0
        %v3175 = vpop.f32.mrb[0].mxu0
        %v3176 = vadd.f32 %v3080, %v3175
        %v3177 = vpop.f32.mrb[0].mxu0
        %3178 = vmatprep.mubr.bf16.mxu0 0
        %3179 = vmatmul.mubr.bf16.gmra.mrb[0].mxu0 %v2009
        %v3180 = vpop.f32.mrb[0].mxu0
        %v3181 = vadd.f32 %v3080, %v3180
        %v3182 = vpop.f32.mrb[0].mxu0
        %v3183 = vpop.f32.mrb[0].mxu0
        %v3184 = vadd.f32 %v3080, %v3183
        %v3185 = vpop.f32.mrb[0].mxu0
        %3186 = vmatprep.mubr.bf16.mxu0 0
        %3187 = vmatmul.mubr.bf16.gmra.mrb[0].mxu0 %v2010
        %v3188 = vpop.f32.mrb[0].mxu0
        %v3189 = vadd.f32 %v3080, %v3188
        %v3190 = vpop.f32.mrb[0].mxu0
        %v3191 = vpop.f32.mrb[0].mxu0
        %v3192 = vadd.f32 %v3080, %v3191
        %v3193 = vpop.f32.mrb[0].mxu0
        %3194 = vdwg.mxu0
        %v3195 = vpack.c.bf16 %v3168, %v3165
        %v3196 = vpack.c.bf16 %v3176, %v3173
        %v3197 = vpack.c.bf16 %v3184, %v3181
        %v3198 = vpack.c.bf16 %v3192, %v3189
        %s3199 = scalar_lea.vmem [#allocation2], 64
        %v3200 = vld [vmem:[%s3199] sm:$0xff]
        %v3201 = vld [vmem:[%s3199 + $0x8] sm:$0xff]
        %v3202 = vld [vmem:[%s3199 + $0x10] sm:$0xff]
        %v3203 = vld [vmem:[%s3199 + $0x18] sm:$0xff]
        %v3205 = vsel %vm2155, %v3195, 0
        %v3208 = vsel %vm2155, %v3196, 0
        %v3211 = vsel %vm2155, %v3197, 0
        %v3214 = vsel %vm2155, %v3198, 0
        %v3217 = vsel %vm2155, %v3200, 0
        %v3220 = vsel %vm2155, %v3201, 0
        %v3223 = vsel %vm2155, %v3202, 0
        %v3226 = vsel %vm2155, %v3203, 0
        %3228 = vmatprep.subr.bf16.mxu0 0
        %3229 = vmatpush1.bf16.xpose.msra.mxu0 %v3217
        %3230 = vmatprep.subr.bf16.mxu0 0
        %3231 = vmatpush1.bf16.xpose.msra.mxu0 %v3220
        %3232 = vmatprep.subr.bf16.mxu0 0
        %3233 = vmatpush1.bf16.xpose.msra.mxu0 %v3223
        %3234 = vmatprep.subr.bf16.mxu0 0
        %3235 = vmatpush1.bf16.xpose.msra.mxu0 %v3226
        %3236 = vmatprep.subr.bf16.mxu0 0
        %3237 = vmatpush1.bf16.xpose.msra.mxu0 0
        %3238 = vmatprep.subr.bf16.mxu0 0
        %3239 = vmatpush1.bf16.xpose.msra.mxu0 0
        %3240 = vmatprep.subr.bf16.mxu0 0
        %3241 = vmatpush1.bf16.xpose.msra.mxu0 0
        %3242 = vmatprep.subr.bf16.mxu0 0
        %3243 = vmatpush1.bf16.xpose.msra.mxu0 0
        %3244 = vmatprep.subr.bf16.mxu0 0
        %3245 = vmatpush1.bf16.xpose.msra.mxu0 0
        %3246 = vmatprep.subr.bf16.mxu0 0
        %3247 = vmatpush1.bf16.xpose.msra.mxu0 0
        %3248 = vmatprep.subr.bf16.mxu0 0
        %3249 = vmatpush1.bf16.xpose.msra.mxu0 0
        %3250 = vmatprep.subr.bf16.mxu0 0
        %3251 = vmatpush1.bf16.xpose.msra.mxu0 0
        %3252 = vmatprep.subr.bf16.mxu0 0
        %3253 = vmatpush1.bf16.xpose.msra.mxu0 0
        %3254 = vmatprep.subr.bf16.mxu0 0
        %3255 = vmatpush1.bf16.xpose.msra.mxu0 0
        %3256 = vmatprep.subr.bf16.mxu0 0
        %3257 = vmatpush1.bf16.xpose.msra.mxu0 0
        %3258 = vmatprep.subr.bf16.mxu0 0
        %3259 = vmatpush1.bf16.xpose.msra.mxu0 0
        %3260 = vmatprep.mubr.bf16.mxu0 0
        %3261 = vmatmul.mubr.bf16.gmra.mrb[0].mxu0 %v3205
        %v3262 = vpop.f32.mrb[0].mxu0
        %v3263 = vadd.f32 0.0, %v3262
        %v3264 = vpop.f32.mrb[0].mxu0
        %v3265 = vpop.f32.mrb[0].mxu0
        %v3266 = vadd.f32 0.0, %v3265
        %v3267 = vpop.f32.mrb[0].mxu0
        %3268 = vmatprep.mubr.bf16.mxu0 0
        %3269 = vmatmul.mubr.bf16.gmra.mrb[0].mxu0 %v3208
        %v3270 = vpop.f32.mrb[0].mxu0
        %v3271 = vadd.f32 0.0, %v3270
        %v3272 = vpop.f32.mrb[0].mxu0
        %v3273 = vpop.f32.mrb[0].mxu0
        %v3274 = vadd.f32 0.0, %v3273
        %v3275 = vpop.f32.mrb[0].mxu0
        %3276 = vmatprep.mubr.bf16.mxu0 0
        %3277 = vmatmul.mubr.bf16.gmra.mrb[0].mxu0 %v3211
        %v3278 = vpop.f32.mrb[0].mxu0
        %v3279 = vadd.f32 0.0, %v3278
        %v3280 = vpop.f32.mrb[0].mxu0
        %v3281 = vpop.f32.mrb[0].mxu0
        %v3282 = vadd.f32 0.0, %v3281
        %v3283 = vpop.f32.mrb[0].mxu0
        %3284 = vmatprep.mubr.bf16.mxu0 0
        %3285 = vmatmul.mubr.bf16.gmra.mrb[0].mxu0 %v3214
        %v3286 = vpop.f32.mrb[0].mxu0
        %v3287 = vadd.f32 0.0, %v3286
        %v3288 = vpop.f32.mrb[0].mxu0
        %v3289 = vpop.f32.mrb[0].mxu0
        %v3290 = vadd.f32 0.0, %v3289
        %v3291 = vpop.f32.mrb[0].mxu0
        %3292 = vdwg.mxu0
        %v3293 = vmul.f32 %v3263, %v2245
        %v3294 = vmul.f32 %v3266, %v2245
        %v3295 = vmul.f32 %v3271, %v2245
        %v3296 = vmul.f32 %v3274, %v2245
        %v3297 = vmul.f32 %v3279, %v2245
        %v3298 = vmul.f32 %v3282, %v2245
        %v3299 = vmul.f32 %v3287, %v2245
        %v3300 = vmul.f32 %v3290, %v2245
        %v3301 = vfloor.f32 %v3293
        %v3302 = vfloor.f32 %v3294
        %v3303 = vfloor.f32 %v3295
        %v3304 = vfloor.f32 %v3296
        %v3305 = vfloor.f32 %v3297
        %v3306 = vfloor.f32 %v3298
        %v3307 = vfloor.f32 %v3299
        %v3308 = vfloor.f32 %v3300
        %v3309 = vsel %vm2262, %v3301, -inf
        %3310 = vmax.xlane.f32.xlu0 %v3309
        %v3311 = vpop.xlane.xlu0 %3310
        %v3312 = vsel %vm2262, %v3302, -inf
        %3313 = vmax.xlane.f32.xlu0 %v3312
        %v3314 = vpop.xlane.xlu0 %3313
        %v3315 = vsel %vm2262, %v3303, -inf
        %3316 = vmax.xlane.f32.xlu0 %v3315
        %v3317 = vpop.xlane.xlu0 %3316
        %v3318 = vsel %vm2262, %v3304, -inf
        %3319 = vmax.xlane.f32.xlu0 %v3318
        %v3320 = vpop.xlane.xlu0 %3319
        %v3321 = vsel %vm2262, %v3305, -inf
        %3322 = vmax.xlane.f32.xlu0 %v3321
        %v3323 = vpop.xlane.xlu0 %3322
        %v3324 = vsel %vm2262, %v3306, -inf
        %3325 = vmax.xlane.f32.xlu0 %v3324
        %v3326 = vpop.xlane.xlu0 %3325
        %v3327 = vsel %vm2262, %v3307, -inf
        %3328 = vmax.xlane.f32.xlu0 %v3327
        %v3329 = vpop.xlane.xlu0 %3328
        %v3330 = vsel %vm2262, %v3308, -inf
        %3331 = vmax.xlane.f32.xlu0 %v3330
        %v3332 = vpop.xlane.xlu0 %3331
        %v3333 = vsub.f32 %v3301, %v3311
        %v3334 = vsub.f32 %v3302, %v3314
        %v3335 = vsub.f32 %v3303, %v3317
        %v3336 = vsub.f32 %v3304, %v3320
        %v3337 = vsub.f32 %v3305, %v3323
        %v3338 = vsub.f32 %v3306, %v3326
        %v3339 = vsub.f32 %v3307, %v3329
        %v3340 = vsub.f32 %v3308, %v3332
        %v3341 = vmul.f32 %v3333, 1.442695
        %v3342 = vpow.pop %v3341
        %v3343 = vmul.f32 %v3334, 1.442695
        %v3344 = vpow.pop %v3343
        %v3345 = vmul.f32 %v3335, 1.442695
        %v3346 = vpow.pop %v3345
        %v3347 = vmul.f32 %v3336, 1.442695
        %v3348 = vpow.pop %v3347
        %v3349 = vmul.f32 %v3337, 1.442695
        %v3350 = vpow.pop %v3349
        %v3351 = vmul.f32 %v3338, 1.442695
        %v3352 = vpow.pop %v3351
        %v3353 = vmul.f32 %v3339, 1.442695
        %v3354 = vpow.pop %v3353
        %v3355 = vmul.f32 %v3340, 1.442695
        %v3356 = vpow.pop %v3355
        %v3357 = vsel %vm2262, %v3342, 0.0
        %3358 = vadd.xlane.f32.xlu0 %v3357
        %v3359 = vpop.xlane.xlu0 %3358
        %v3360 = vsel %vm2262, %v3344, 0.0
        %3361 = vadd.xlane.f32.xlu0 %v3360
        %v3362 = vpop.xlane.xlu0 %3361
        %v3363 = vsel %vm2262, %v3346, 0.0
        %3364 = vadd.xlane.f32.xlu0 %v3363
        %v3365 = vpop.xlane.xlu0 %3364
        %v3366 = vsel %vm2262, %v3348, 0.0
        %3367 = vadd.xlane.f32.xlu0 %v3366
        %v3368 = vpop.xlane.xlu0 %3367
        %v3369 = vsel %vm2262, %v3350, 0.0
        %3370 = vadd.xlane.f32.xlu0 %v3369
        %v3371 = vpop.xlane.xlu0 %3370
        %v3372 = vsel %vm2262, %v3352, 0.0
        %3373 = vadd.xlane.f32.xlu0 %v3372
        %v3374 = vpop.xlane.xlu0 %3373
        %v3375 = vsel %vm2262, %v3354, 0.0
        %3376 = vadd.xlane.f32.xlu0 %v3375
        %v3377 = vpop.xlane.xlu0 %3376
        %v3378 = vsel %vm2262, %v3356, 0.0
        %3379 = vadd.xlane.f32.xlu0 %v3378
        %v3380 = vpop.xlane.xlu0 %3379
        %v3381 = vrcp.pop %v3359
        %v3382 = vrcp.pop %v3362
        %v3383 = vrcp.pop %v3365
        %v3384 = vrcp.pop %v3368
        %v3385 = vrcp.pop %v3371
        %v3386 = vrcp.pop %v3374
        %v3387 = vrcp.pop %v3377
        %v3388 = vrcp.pop %v3380
        %v3389 = vmul.f32 %v3342, %v3381
        %v3390 = vmul.f32 %v3344, %v3382
        %v3391 = vmul.f32 %v3346, %v3383
        %v3392 = vmul.f32 %v3348, %v3384
        %v3393 = vmul.f32 %v3350, %v3385
        %v3394 = vmul.f32 %v3352, %v3386
        %v3395 = vmul.f32 %v3354, %v3387
        %v3396 = vmul.f32 %v3356, %v3388
        %v3397 = vpack.c.bf16 %v3390, %v3389
        %v3398 = vpack.c.bf16 %v3392, %v3391
        %v3399 = vpack.c.bf16 %v3394, %v3393
        %v3400 = vpack.c.bf16 %v3396, %v3395
        %s3401 = scalar_lea.vmem [#allocation3], 64
        %v3402 = vld [vmem:[%s3401] sm:$0xff]
        %v3403 = vld [vmem:[%s3401 + $0x8] sm:$0xff]
        %v3404 = vld [vmem:[%s3401 + $0x10] sm:$0xff]
        %v3405 = vld [vmem:[%s3401 + $0x18] sm:$0xff]
        %v3407 = vsel %vm2262, %v3397, 0
        %v3410 = vsel %vm2262, %v3398, 0
        %v3413 = vsel %vm2262, %v3399, 0
        %v3416 = vsel %vm2262, %v3400, 0
        %3418 = vmatprep.subr.bf16.mxu0 0
        %3419 = vmatpush1.bf16.msra.mxu0 %v3402
        %3420 = vmatprep.subr.bf16.mxu0 0
        %3421 = vmatpush1.bf16.msra.mxu0 %v3403
        %3422 = vmatprep.subr.bf16.mxu0 0
        %3423 = vmatpush1.bf16.msra.mxu0 %v3404
        %3424 = vmatprep.subr.bf16.mxu0 0
        %3425 = vmatpush1.bf16.msra.mxu0 %v3405
        %3426 = vmatprep.subr.bf16.mxu0 0
        %3427 = vmatpush1.bf16.msra.mxu0 0
        %3428 = vmatprep.subr.bf16.mxu0 0
        %3429 = vmatpush1.bf16.msra.mxu0 0
        %3430 = vmatprep.subr.bf16.mxu0 0
        %3431 = vmatpush1.bf16.msra.mxu0 0
        %3432 = vmatprep.subr.bf16.mxu0 0
        %3433 = vmatpush1.bf16.msra.mxu0 0
        %3434 = vmatprep.subr.bf16.mxu0 0
        %3435 = vmatpush1.bf16.msra.mxu0 0
        %3436 = vmatprep.subr.bf16.mxu0 0
        %3437 = vmatpush1.bf16.msra.mxu0 0
        %3438 = vmatprep.subr.bf16.mxu0 0
        %3439 = vmatpush1.bf16.msra.mxu0 0
        %3440 = vmatprep.subr.bf16.mxu0 0
        %3441 = vmatpush1.bf16.msra.mxu0 0
        %3442 = vmatprep.subr.bf16.mxu0 0
        %3443 = vmatpush1.bf16.msra.mxu0 0
        %3444 = vmatprep.subr.bf16.mxu0 0
        %3445 = vmatpush1.bf16.msra.mxu0 0
        %3446 = vmatprep.subr.bf16.mxu0 0
        %3447 = vmatpush1.bf16.msra.mxu0 0
        %3448 = vmatprep.subr.bf16.mxu0 0
        %3449 = vmatpush1.bf16.msra.mxu0 0
        %3450 = vmatprep.mubr.bf16.mxu0 0
        %3451 = vmatmul.mubr.bf16.gmra.mrb[0].mxu0 %v3407
        %v3452 = vpop.f32.mrb[0].mxu0
        %v3453 = vadd.f32 0.0, %v3452
        %v3454 = vpop.f32.mrb[0].mxu0
        %v3455 = vpop.f32.mrb[0].mxu0
        %v3456 = vadd.f32 0.0, %v3455
        %v3457 = vpop.f32.mrb[0].mxu0
        %3458 = vmatprep.mubr.bf16.mxu0 0
        %3459 = vmatmul.mubr.bf16.gmra.mrb[0].mxu0 %v3410
        %v3460 = vpop.f32.mrb[0].mxu0
        %v3461 = vadd.f32 0.0, %v3460
        %v3462 = vpop.f32.mrb[0].mxu0
        %v3463 = vpop.f32.mrb[0].mxu0
        %v3464 = vadd.f32 0.0, %v3463
        %v3465 = vpop.f32.mrb[0].mxu0
        %3466 = vmatprep.mubr.bf16.mxu0 0
        %3467 = vmatmul.mubr.bf16.gmra.mrb[0].mxu0 %v3413
        %v3468 = vpop.f32.mrb[0].mxu0
        %v3469 = vadd.f32 0.0, %v3468
        %v3470 = vpop.f32.mrb[0].mxu0
        %v3471 = vpop.f32.mrb[0].mxu0
        %v3472 = vadd.f32 0.0, %v3471
        %v3473 = vpop.f32.mrb[0].mxu0
        %3474 = vmatprep.mubr.bf16.mxu0 0
        %3475 = vmatmul.mubr.bf16.gmra.mrb[0].mxu0 %v3416
        %v3476 = vpop.f32.mrb[0].mxu0
        %v3477 = vadd.f32 0.0, %v3476
        %v3478 = vpop.f32.mrb[0].mxu0
        %v3479 = vpop.f32.mrb[0].mxu0
        %v3480 = vadd.f32 0.0, %v3479
        %v3481 = vpop.f32.mrb[0].mxu0
        %3482 = vdwg.mxu0
        %v3483 = vpack.c.bf16 %v3456, %v3453
        %v3484 = vpack.c.bf16 %v3464, %v3461
        %v3485 = vpack.c.bf16 %v3472, %v3469
        %v3486 = vpack.c.bf16 %v3480, %v3477
        %s3487 = scalar_lea.vmem %s9, 32
        %v3488 = vld [vmem:[%s3487] sm:$0xf]
        %v3489 = vld [vmem:[%s3487 + $0x4] sm:$0xf]
        %v3490 = vld [vmem:[%s3487 + $0x8] sm:$0xf]
        %v3491 = vld [vmem:[%s3487 + $0xc] sm:$0xf]
        %v3496 = vunpack.c.l.b16 %v3488
        %v3497 = vunpack.c.l.b16 %v3489
        %v3498 = vunpack.c.l.b16 %v3490
        %v3499 = vunpack.c.l.b16 %v3491
        %v3500 = vpack.c.b16 %v3497, %v3496
        %v3501 = vpack.c.b16 %v3499, %v3498
        %v3505 = vsel %vm2155, %v3483, 0
        %v3508 = vsel %vm2155, %v3484, 0
        %v3511 = vsel %vm2155, %v3485, 0
        %v3514 = vsel %vm2155, %v3486, 0
        %3516 = vmatprep.subr.bf16.mxu0 0
        %3517 = vmatpush1.bf16.msra.mxu0 %v3500
        %3518 = vmatprep.subr.bf16.mxu0 0
        %3519 = vmatpush1.bf16.msra.mxu0 %v3501
        %3520 = vmatprep.subr.bf16.mxu0 0
        %3521 = vmatpush1.bf16.msra.mxu0 0
        %3522 = vmatprep.subr.bf16.mxu0 0
        %3523 = vmatpush1.bf16.msra.mxu0 0
        %3524 = vmatprep.subr.bf16.mxu0 0
        %3525 = vmatpush1.bf16.msra.mxu0 0
        %3526 = vmatprep.subr.bf16.mxu0 0
        %3527 = vmatpush1.bf16.msra.mxu0 0
        %3528 = vmatprep.subr.bf16.mxu0 0
        %3529 = vmatpush1.bf16.msra.mxu0 0
        %3530 = vmatprep.subr.bf16.mxu0 0
        %3531 = vmatpush1.bf16.msra.mxu0 0
        %3532 = vmatprep.subr.bf16.mxu0 0
        %3533 = vmatpush1.bf16.msra.mxu0 0
        %3534 = vmatprep.subr.bf16.mxu0 0
        %3535 = vmatpush1.bf16.msra.mxu0 0
        %3536 = vmatprep.subr.bf16.mxu0 0
        %3537 = vmatpush1.bf16.msra.mxu0 0
        %3538 = vmatprep.subr.bf16.mxu0 0
        %3539 = vmatpush1.bf16.msra.mxu0 0
        %3540 = vmatprep.subr.bf16.mxu0 0
        %3541 = vmatpush1.bf16.msra.mxu0 0
        %3542 = vmatprep.subr.bf16.mxu0 0
        %3543 = vmatpush1.bf16.msra.mxu0 0
        %3544 = vmatprep.subr.bf16.mxu0 0
        %3545 = vmatpush1.bf16.msra.mxu0 0
        %3546 = vmatprep.subr.bf16.mxu0 0
        %3547 = vmatpush1.bf16.msra.mxu0 0
        %3548 = vmatprep.mubr.bf16.mxu0 0
        %3549 = vmatmul.mubr.bf16.gmra.mrb[0].mxu0 %v3505
        %v3550 = vpop.f32.mrb[0].mxu0
        %v3551 = vadd.f32 0.0, %v3550
        %v3552 = vpop.f32.mrb[0].mxu0
        %v3553 = vpop.f32.mrb[0].mxu0
        %v3554 = vadd.f32 0.0, %v3553
        %v3555 = vpop.f32.mrb[0].mxu0
        %3556 = vmatprep.mubr.bf16.mxu0 0
        %3557 = vmatmul.mubr.bf16.gmra.mrb[0].mxu0 %v3508
        %v3558 = vpop.f32.mrb[0].mxu0
        %v3559 = vadd.f32 0.0, %v3558
        %v3560 = vpop.f32.mrb[0].mxu0
        %v3561 = vpop.f32.mrb[0].mxu0
        %v3562 = vadd.f32 0.0, %v3561
        %v3563 = vpop.f32.mrb[0].mxu0
        %3564 = vmatprep.mubr.bf16.mxu0 0
        %3565 = vmatmul.mubr.bf16.gmra.mrb[0].mxu0 %v3511
        %v3566 = vpop.f32.mrb[0].mxu0
        %v3567 = vadd.f32 0.0, %v3566
        %v3568 = vpop.f32.mrb[0].mxu0
        %v3569 = vpop.f32.mrb[0].mxu0
        %v3570 = vadd.f32 0.0, %v3569
        %v3571 = vpop.f32.mrb[0].mxu0
        %3572 = vmatprep.mubr.bf16.mxu0 0
        %3573 = vmatmul.mubr.bf16.gmra.mrb[0].mxu0 %v3514
        %v3574 = vpop.f32.mrb[0].mxu0
        %v3575 = vadd.f32 0.0, %v3574
        %v3576 = vpop.f32.mrb[0].mxu0
        %v3577 = vpop.f32.mrb[0].mxu0
        %v3578 = vadd.f32 0.0, %v3577
        %v3579 = vpop.f32.mrb[0].mxu0
        %3580 = vdwg.mxu0
        %v3581 = vadd.f32 %v3027, %v3551
        %v3582 = vadd.f32 %v3030, %v3554
        %v3583 = vadd.f32 %v3035, %v3559
        %v3584 = vadd.f32 %v3038, %v3562
        %v3585 = vadd.f32 %v3043, %v3567
        %v3586 = vadd.f32 %v3046, %v3570
        %v3587 = vadd.f32 %v3051, %v3575
        %v3588 = vadd.f32 %v3054, %v3578
        %s3589 = scalar_lea.vmem %s3, 192
        %v3590 = vld [vmem:[%s3589] sm:$0xf]
        %v3591 = vld [vmem:[%s3589 + $0x4] sm:$0xf]
        %v3592 = vld [vmem:[%s3589 + $0x8] sm:$0xf]
        %v3593 = vld [vmem:[%s3589 + $0xc] sm:$0xf]
        %v3594 = vld [vmem:[%s3589 + $0x10] sm:$0xf]
        %v3595 = vld [vmem:[%s3589 + $0x14] sm:$0xf]
        %v3596 = vld [vmem:[%s3589 + $0x18] sm:$0xf]
        %v3597 = vld [vmem:[%s3589 + $0x1c] sm:$0xf]
        %v3598 = vld [vmem:[%s3589 + $0x20] sm:$0xf]
        %v3599 = vld [vmem:[%s3589 + $0x24] sm:$0xf]
        %v3600 = vld [vmem:[%s3589 + $0x28] sm:$0xf]
        %v3601 = vld [vmem:[%s3589 + $0x2c] sm:$0xf]
        %v3602 = vld [vmem:[%s3589 + $0x30] sm:$0xf]
        %v3603 = vld [vmem:[%s3589 + $0x34] sm:$0xf]
        %v3604 = vld [vmem:[%s3589 + $0x38] sm:$0xf]
        %v3605 = vld [vmem:[%s3589 + $0x3c] sm:$0xf]
        %s3606 = scalar_lea.vmem %s4, 3
        %v3607 = vld [vmem:[%s3606] sm:$0x1]
        %v3609 = vlaneseq
        %v3610 = vshrl.u32 %v3609, 7
        %v3611 = vsub.s32 0, %v3610
        %v3612 = vrot.slane %v3607, %v3611
        %v3630 = vunpack.c.l.b16 %v3590
        %v3631 = vunpack.c.l.b16 %v3591
        %v3632 = vunpack.c.l.b16 %v3592
        %v3633 = vunpack.c.l.b16 %v3593
        %v3634 = vunpack.c.l.b16 %v3594
        %v3635 = vunpack.c.l.b16 %v3595
        %v3636 = vunpack.c.l.b16 %v3596
        %v3637 = vunpack.c.l.b16 %v3597
        %v3638 = vunpack.c.l.b16 %v3598
        %v3639 = vunpack.c.l.b16 %v3599
        %v3640 = vunpack.c.l.b16 %v3600
        %v3641 = vunpack.c.l.b16 %v3601
        %v3642 = vunpack.c.l.b16 %v3602
        %v3643 = vunpack.c.l.b16 %v3603
        %v3644 = vunpack.c.l.b16 %v3604
        %v3645 = vunpack.c.l.b16 %v3605
        %v3646 = vpack.c.b16 %v3631, %v3630
        %v3647 = vpack.c.b16 %v3633, %v3632
        %v3648 = vpack.c.b16 %v3635, %v3634
        %v3649 = vpack.c.b16 %v3637, %v3636
        %v3650 = vpack.c.b16 %v3639, %v3638
        %v3651 = vpack.c.b16 %v3641, %v3640
        %v3652 = vpack.c.b16 %v3643, %v3642
        %v3653 = vpack.c.b16 %v3645, %v3644
        %3662 = vmatprep.subr.bf16.mxu0 0
        %3663 = vmatpush1.bf16.msra.mxu0 %v3646
        %3664 = vmatprep.subr.bf16.mxu0 0
        %3665 = vmatpush1.bf16.msra.mxu0 %v3647
        %3666 = vmatprep.subr.bf16.mxu0 0
        %3667 = vmatpush1.bf16.msra.mxu0 %v3648
        %3668 = vmatprep.subr.bf16.mxu0 0
        %3669 = vmatpush1.bf16.msra.mxu0 %v3649
        %3670 = vmatprep.subr.bf16.mxu0 0
        %3671 = vmatpush1.bf16.msra.mxu0 %v3650
        %3672 = vmatprep.subr.bf16.mxu0 0
        %3673 = vmatpush1.bf16.msra.mxu0 %v3651
        %3674 = vmatprep.subr.bf16.mxu0 0
        %3675 = vmatpush1.bf16.msra.mxu0 %v3652
        %3676 = vmatprep.subr.bf16.mxu0 0
        %3677 = vmatpush1.bf16.msra.mxu0 %v3653
        %3678 = vmatprep.subr.bf16.mxu0 0
        %3679 = vmatpush1.bf16.msra.mxu0 0
        %3680 = vmatprep.subr.bf16.mxu0 0
        %3681 = vmatpush1.bf16.msra.mxu0 0
        %3682 = vmatprep.subr.bf16.mxu0 0
        %3683 = vmatpush1.bf16.msra.mxu0 0
        %3684 = vmatprep.subr.bf16.mxu0 0
        %3685 = vmatpush1.bf16.msra.mxu0 0
        %3686 = vmatprep.subr.bf16.mxu0 0
        %3687 = vmatpush1.bf16.msra.mxu0 0
        %3688 = vmatprep.subr.bf16.mxu0 0
        %3689 = vmatpush1.bf16.msra.mxu0 0
        %3690 = vmatprep.subr.bf16.mxu0 0
        %3691 = vmatpush1.bf16.msra.mxu0 0
        %3692 = vmatprep.subr.bf16.mxu0 0
        %3693 = vmatpush1.bf16.msra.mxu0 0
        %3694 = vmatprep.mubr.bf16.mxu0 0
        %3695 = vmatmul.mubr.bf16.gmra.mrb[0].mxu0 %v2007
        %v3696 = vpop.f32.mrb[0].mxu0
        %v3697 = vadd.f32 %v3612, %v3696
        %v3698 = vpop.f32.mrb[0].mxu0
        %v3699 = vpop.f32.mrb[0].mxu0
        %v3700 = vadd.f32 %v3612, %v3699
        %v3701 = vpop.f32.mrb[0].mxu0
        %3702 = vmatprep.mubr.bf16.mxu0 0
        %3703 = vmatmul.mubr.bf16.gmra.mrb[0].mxu0 %v2008
        %v3704 = vpop.f32.mrb[0].mxu0
        %v3705 = vadd.f32 %v3612, %v3704
        %v3706 = vpop.f32.mrb[0].mxu0
        %v3707 = vpop.f32.mrb[0].mxu0
        %v3708 = vadd.f32 %v3612, %v3707
        %v3709 = vpop.f32.mrb[0].mxu0
        %3710 = vmatprep.mubr.bf16.mxu0 0
        %3711 = vmatmul.mubr.bf16.gmra.mrb[0].mxu0 %v2009
        %v3712 = vpop.f32.mrb[0].mxu0
        %v3713 = vadd.f32 %v3612, %v3712
        %v3714 = vpop.f32.mrb[0].mxu0
        %v3715 = vpop.f32.mrb[0].mxu0
        %v3716 = vadd.f32 %v3612, %v3715
        %v3717 = vpop.f32.mrb[0].mxu0
        %3718 = vmatprep.mubr.bf16.mxu0 0
        %3719 = vmatmul.mubr.bf16.gmra.mrb[0].mxu0 %v2010
        %v3720 = vpop.f32.mrb[0].mxu0
        %v3721 = vadd.f32 %v3612, %v3720
        %v3722 = vpop.f32.mrb[0].mxu0
        %v3723 = vpop.f32.mrb[0].mxu0
        %v3724 = vadd.f32 %v3612, %v3723
        %v3725 = vpop.f32.mrb[0].mxu0
        %3726 = vdwg.mxu0
        %v3727 = vpack.c.bf16 %v3700, %v3697
        %v3728 = vpack.c.bf16 %v3708, %v3705
        %v3729 = vpack.c.bf16 %v3716, %v3713
        %v3730 = vpack.c.bf16 %v3724, %v3721
        %s3731 = scalar_lea.vmem [#allocation2], 96
        %v3732 = vld [vmem:[%s3731] sm:$0xff]
        %v3733 = vld [vmem:[%s3731 + $0x8] sm:$0xff]
        %v3734 = vld [vmem:[%s3731 + $0x10] sm:$0xff]
        %v3735 = vld [vmem:[%s3731 + $0x18] sm:$0xff]
        %v3737 = vsel %vm2155, %v3727, 0
        %v3740 = vsel %vm2155, %v3728, 0
        %v3743 = vsel %vm2155, %v3729, 0
        %v3746 = vsel %vm2155, %v3730, 0
        %v3749 = vsel %vm2155, %v3732, 0
        %v3752 = vsel %vm2155, %v3733, 0
        %v3755 = vsel %vm2155, %v3734, 0
        %v3758 = vsel %vm2155, %v3735, 0
        %3760 = vmatprep.subr.bf16.mxu0 0
        %3761 = vmatpush1.bf16.xpose.msra.mxu0 %v3749
        %3762 = vmatprep.subr.bf16.mxu0 0
        %3763 = vmatpush1.bf16.xpose.msra.mxu0 %v3752
        %3764 = vmatprep.subr.bf16.mxu0 0
        %3765 = vmatpush1.bf16.xpose.msra.mxu0 %v3755
        %3766 = vmatprep.subr.bf16.mxu0 0
        %3767 = vmatpush1.bf16.xpose.msra.mxu0 %v3758
        %3768 = vmatprep.subr.bf16.mxu0 0
        %3769 = vmatpush1.bf16.xpose.msra.mxu0 0
        %3770 = vmatprep.subr.bf16.mxu0 0
        %3771 = vmatpush1.bf16.xpose.msra.mxu0 0
        %3772 = vmatprep.subr.bf16.mxu0 0
        %3773 = vmatpush1.bf16.xpose.msra.mxu0 0
        %3774 = vmatprep.subr.bf16.mxu0 0
        %3775 = vmatpush1.bf16.xpose.msra.mxu0 0
        %3776 = vmatprep.subr.bf16.mxu0 0
        %3777 = vmatpush1.bf16.xpose.msra.mxu0 0
        %3778 = vmatprep.subr.bf16.mxu0 0
        %3779 = vmatpush1.bf16.xpose.msra.mxu0 0
        %3780 = vmatprep.subr.bf16.mxu0 0
        %3781 = vmatpush1.bf16.xpose.msra.mxu0 0
        %3782 = vmatprep.subr.bf16.mxu0 0
        %3783 = vmatpush1.bf16.xpose.msra.mxu0 0
        %3784 = vmatprep.subr.bf16.mxu0 0
        %3785 = vmatpush1.bf16.xpose.msra.mxu0 0
        %3786 = vmatprep.subr.bf16.mxu0 0
        %3787 = vmatpush1.bf16.xpose.msra.mxu0 0
        %3788 = vmatprep.subr.bf16.mxu0 0
        %3789 = vmatpush1.bf16.xpose.msra.mxu0 0
        %3790 = vmatprep.subr.bf16.mxu0 0
        %3791 = vmatpush1.bf16.xpose.msra.mxu0 0
        %3792 = vmatprep.mubr.bf16.mxu0 0
        %3793 = vmatmul.mubr.bf16.gmra.mrb[0].mxu0 %v3737
        %v3794 = vpop.f32.mrb[0].mxu0
        %v3795 = vadd.f32 0.0, %v3794
        %v3796 = vpop.f32.mrb[0].mxu0
        %v3797 = vpop.f32.mrb[0].mxu0
        %v3798 = vadd.f32 0.0, %v3797
        %v3799 = vpop.f32.mrb[0].mxu0
        %3800 = vmatprep.mubr.bf16.mxu0 0
        %3801 = vmatmul.mubr.bf16.gmra.mrb[0].mxu0 %v3740
        %v3802 = vpop.f32.mrb[0].mxu0
        %v3803 = vadd.f32 0.0, %v3802
        %v3804 = vpop.f32.mrb[0].mxu0
        %v3805 = vpop.f32.mrb[0].mxu0
        %v3806 = vadd.f32 0.0, %v3805
        %v3807 = vpop.f32.mrb[0].mxu0
        %3808 = vmatprep.mubr.bf16.mxu0 0
        %3809 = vmatmul.mubr.bf16.gmra.mrb[0].mxu0 %v3743
        %v3810 = vpop.f32.mrb[0].mxu0
        %v3811 = vadd.f32 0.0, %v3810
        %v3812 = vpop.f32.mrb[0].mxu0
        %v3813 = vpop.f32.mrb[0].mxu0
        %v3814 = vadd.f32 0.0, %v3813
        %v3815 = vpop.f32.mrb[0].mxu0
        %3816 = vmatprep.mubr.bf16.mxu0 0
        %3817 = vmatmul.mubr.bf16.gmra.mrb[0].mxu0 %v3746
        %v3818 = vpop.f32.mrb[0].mxu0
        %v3819 = vadd.f32 0.0, %v3818
        %v3820 = vpop.f32.mrb[0].mxu0
        %v3821 = vpop.f32.mrb[0].mxu0
        %v3822 = vadd.f32 0.0, %v3821
        %v3823 = vpop.f32.mrb[0].mxu0
        %3824 = vdwg.mxu0
        %v3825 = vmul.f32 %v3795, %v2245
        %v3826 = vmul.f32 %v3798, %v2245
        %v3827 = vmul.f32 %v3803, %v2245
        %v3828 = vmul.f32 %v3806, %v2245
        %v3829 = vmul.f32 %v3811, %v2245
        %v3830 = vmul.f32 %v3814, %v2245
        %v3831 = vmul.f32 %v3819, %v2245
        %v3832 = vmul.f32 %v3822, %v2245
        %v3833 = vfloor.f32 %v3825
        %v3834 = vfloor.f32 %v3826
        %v3835 = vfloor.f32 %v3827
        %v3836 = vfloor.f32 %v3828
        %v3837 = vfloor.f32 %v3829
        %v3838 = vfloor.f32 %v3830
        %v3839 = vfloor.f32 %v3831
        %v3840 = vfloor.f32 %v3832
        %v3841 = vsel %vm2262, %v3833, -inf
        %3842 = vmax.xlane.f32.xlu0 %v3841
        %v3843 = vpop.xlane.xlu0 %3842
        %v3844 = vsel %vm2262, %v3834, -inf
        %3845 = vmax.xlane.f32.xlu0 %v3844
        %v3846 = vpop.xlane.xlu0 %3845
        %v3847 = vsel %vm2262, %v3835, -inf
        %3848 = vmax.xlane.f32.xlu0 %v3847
        %v3849 = vpop.xlane.xlu0 %3848
        %v3850 = vsel %vm2262, %v3836, -inf
        %3851 = vmax.xlane.f32.xlu0 %v3850
        %v3852 = vpop.xlane.xlu0 %3851
        %v3853 = vsel %vm2262, %v3837, -inf
        %3854 = vmax.xlane.f32.xlu0 %v3853
        %v3855 = vpop.xlane.xlu0 %3854
        %v3856 = vsel %vm2262, %v3838, -inf
        %3857 = vmax.xlane.f32.xlu0 %v3856
        %v3858 = vpop.xlane.xlu0 %3857
        %v3859 = vsel %vm2262, %v3839, -inf
        %3860 = vmax.xlane.f32.xlu0 %v3859
        %v3861 = vpop.xlane.xlu0 %3860
        %v3862 = vsel %vm2262, %v3840, -inf
        %3863 = vmax.xlane.f32.xlu0 %v3862
        %v3864 = vpop.xlane.xlu0 %3863
        %v3865 = vsub.f32 %v3833, %v3843
        %v3866 = vsub.f32 %v3834, %v3846
        %v3867 = vsub.f32 %v3835, %v3849
        %v3868 = vsub.f32 %v3836, %v3852
        %v3869 = vsub.f32 %v3837, %v3855
        %v3870 = vsub.f32 %v3838, %v3858
        %v3871 = vsub.f32 %v3839, %v3861
        %v3872 = vsub.f32 %v3840, %v3864
        %v3873 = vmul.f32 %v3865, 1.442695
        %v3874 = vpow.pop %v3873
        %v3875 = vmul.f32 %v3866, 1.442695
        %v3876 = vpow.pop %v3875
        %v3877 = vmul.f32 %v3867, 1.442695
        %v3878 = vpow.pop %v3877
        %v3879 = vmul.f32 %v3868, 1.442695
        %v3880 = vpow.pop %v3879
        %v3881 = vmul.f32 %v3869, 1.442695
        %v3882 = vpow.pop %v3881
        %v3883 = vmul.f32 %v3870, 1.442695
        %v3884 = vpow.pop %v3883
        %v3885 = vmul.f32 %v3871, 1.442695
        %v3886 = vpow.pop %v3885
        %v3887 = vmul.f32 %v3872, 1.442695
        %v3888 = vpow.pop %v3887
        %v3889 = vsel %vm2262, %v3874, 0.0
        %3890 = vadd.xlane.f32.xlu0 %v3889
        %v3891 = vpop.xlane.xlu0 %3890
        %v3892 = vsel %vm2262, %v3876, 0.0
        %3893 = vadd.xlane.f32.xlu0 %v3892
        %v3894 = vpop.xlane.xlu0 %3893
        %v3895 = vsel %vm2262, %v3878, 0.0
        %3896 = vadd.xlane.f32.xlu0 %v3895
        %v3897 = vpop.xlane.xlu0 %3896
        %v3898 = vsel %vm2262, %v3880, 0.0
        %3899 = vadd.xlane.f32.xlu0 %v3898
        %v3900 = vpop.xlane.xlu0 %3899
        %v3901 = vsel %vm2262, %v3882, 0.0
        %3902 = vadd.xlane.f32.xlu0 %v3901
        %v3903 = vpop.xlane.xlu0 %3902
        %v3904 = vsel %vm2262, %v3884, 0.0
        %3905 = vadd.xlane.f32.xlu0 %v3904
        %v3906 = vpop.xlane.xlu0 %3905
        %v3907 = vsel %vm2262, %v3886, 0.0
        %3908 = vadd.xlane.f32.xlu0 %v3907
        %v3909 = vpop.xlane.xlu0 %3908
        %v3910 = vsel %vm2262, %v3888, 0.0
        %3911 = vadd.xlane.f32.xlu0 %v3910
        %v3912 = vpop.xlane.xlu0 %3911
        %v3913 = vrcp.pop %v3891
        %v3914 = vrcp.pop %v3894
        %v3915 = vrcp.pop %v3897
        %v3916 = vrcp.pop %v3900
        %v3917 = vrcp.pop %v3903
        %v3918 = vrcp.pop %v3906
        %v3919 = vrcp.pop %v3909
        %v3920 = vrcp.pop %v3912
        %v3921 = vmul.f32 %v3874, %v3913
        %v3922 = vmul.f32 %v3876, %v3914
        %v3923 = vmul.f32 %v3878, %v3915
        %v3924 = vmul.f32 %v3880, %v3916
        %v3925 = vmul.f32 %v3882, %v3917
        %v3926 = vmul.f32 %v3884, %v3918
        %v3927 = vmul.f32 %v3886, %v3919
        %v3928 = vmul.f32 %v3888, %v3920
        %v3929 = vpack.c.bf16 %v3922, %v3921
        %v3930 = vpack.c.bf16 %v3924, %v3923
        %v3931 = vpack.c.bf16 %v3926, %v3925
        %v3932 = vpack.c.bf16 %v3928, %v3927
        %s3933 = scalar_lea.vmem [#allocation3], 96
        %v3934 = vld [vmem:[%s3933] sm:$0xff]
        %v3935 = vld [vmem:[%s3933 + $0x8] sm:$0xff]
        %v3936 = vld [vmem:[%s3933 + $0x10] sm:$0xff]
        %v3937 = vld [vmem:[%s3933 + $0x18] sm:$0xff]
        %v3939 = vsel %vm2262, %v3929, 0
        %v3942 = vsel %vm2262, %v3930, 0
        %v3945 = vsel %vm2262, %v3931, 0
        %v3948 = vsel %vm2262, %v3932, 0
        %3950 = vmatprep.subr.bf16.mxu0 0
        %3951 = vmatpush1.bf16.msra.mxu0 %v3934
        %3952 = vmatprep.subr.bf16.mxu0 0
        %3953 = vmatpush1.bf16.msra.mxu0 %v3935
        %3954 = vmatprep.subr.bf16.mxu0 0
        %3955 = vmatpush1.bf16.msra.mxu0 %v3936
        %3956 = vmatprep.subr.bf16.mxu0 0
        %3957 = vmatpush1.bf16.msra.mxu0 %v3937
        %3958 = vmatprep.subr.bf16.mxu0 0
        %3959 = vmatpush1.bf16.msra.mxu0 0
        %3960 = vmatprep.subr.bf16.mxu0 0
        %3961 = vmatpush1.bf16.msra.mxu0 0
        %3962 = vmatprep.subr.bf16.mxu0 0
        %3963 = vmatpush1.bf16.msra.mxu0 0
        %3964 = vmatprep.subr.bf16.mxu0 0
        %3965 = vmatpush1.bf16.msra.mxu0 0
        %3966 = vmatprep.subr.bf16.mxu0 0
        %3967 = vmatpush1.bf16.msra.mxu0 0
        %3968 = vmatprep.subr.bf16.mxu0 0
        %3969 = vmatpush1.bf16.msra.mxu0 0
        %3970 = vmatprep.subr.bf16.mxu0 0
        %3971 = vmatpush1.bf16.msra.mxu0 0
        %3972 = vmatprep.subr.bf16.mxu0 0
        %3973 = vmatpush1.bf16.msra.mxu0 0
        %3974 = vmatprep.subr.bf16.mxu0 0
        %3975 = vmatpush1.bf16.msra.mxu0 0
        %3976 = vmatprep.subr.bf16.mxu0 0
        %3977 = vmatpush1.bf16.msra.mxu0 0
        %3978 = vmatprep.subr.bf16.mxu0 0
        %3979 = vmatpush1.bf16.msra.mxu0 0
        %3980 = vmatprep.subr.bf16.mxu0 0
        %3981 = vmatpush1.bf16.msra.mxu0 0
        %3982 = vmatprep.mubr.bf16.mxu0 0
        %3983 = vmatmul.mubr.bf16.gmra.mrb[0].mxu0 %v3939
        %v3984 = vpop.f32.mrb[0].mxu0
        %v3985 = vadd.f32 0.0, %v3984
        %v3986 = vpop.f32.mrb[0].mxu0
        %v3987 = vpop.f32.mrb[0].mxu0
        %v3988 = vadd.f32 0.0, %v3987
        %v3989 = vpop.f32.mrb[0].mxu0
        %3990 = vmatprep.mubr.bf16.mxu0 0
        %3991 = vmatmul.mubr.bf16.gmra.mrb[0].mxu0 %v3942
        %v3992 = vpop.f32.mrb[0].mxu0
        %v3993 = vadd.f32 0.0, %v3992
        %v3994 = vpop.f32.mrb[0].mxu0
        %v3995 = vpop.f32.mrb[0].mxu0
        %v3996 = vadd.f32 0.0, %v3995
        %v3997 = vpop.f32.mrb[0].mxu0
        %3998 = vmatprep.mubr.bf16.mxu0 0
        %3999 = vmatmul.mubr.bf16.gmra.mrb[0].mxu0 %v3945
        %v4000 = vpop.f32.mrb[0].mxu0
        %v4001 = vadd.f32 0.0, %v4000
        %v4002 = vpop.f32.mrb[0].mxu0
        %v4003 = vpop.f32.mrb[0].mxu0
        %v4004 = vadd.f32 0.0, %v4003
        %v4005 = vpop.f32.mrb[0].mxu0
        %4006 = vmatprep.mubr.bf16.mxu0 0
        %4007 = vmatmul.mubr.bf16.gmra.mrb[0].mxu0 %v3948
        %v4008 = vpop.f32.mrb[0].mxu0
        %v4009 = vadd.f32 0.0, %v4008
        %v4010 = vpop.f32.mrb[0].mxu0
        %v4011 = vpop.f32.mrb[0].mxu0
        %v4012 = vadd.f32 0.0, %v4011
        %v4013 = vpop.f32.mrb[0].mxu0
        %4014 = vdwg.mxu0
        %v4015 = vpack.c.bf16 %v3988, %v3985
        %v4016 = vpack.c.bf16 %v3996, %v3993
        %v4017 = vpack.c.bf16 %v4004, %v4001
        %v4018 = vpack.c.bf16 %v4012, %v4009
        %s4019 = scalar_lea.vmem %s9, 48
        %v4020 = vld [vmem:[%s4019] sm:$0xf]
        %v4021 = vld [vmem:[%s4019 + $0x4] sm:$0xf]
        %v4022 = vld [vmem:[%s4019 + $0x8] sm:$0xf]
        %v4023 = vld [vmem:[%s4019 + $0xc] sm:$0xf]
        %v4028 = vunpack.c.l.b16 %v4020
        %v4029 = vunpack.c.l.b16 %v4021
        %v4030 = vunpack.c.l.b16 %v4022
        %v4031 = vunpack.c.l.b16 %v4023
        %v4032 = vpack.c.b16 %v4029, %v4028
        %v4033 = vpack.c.b16 %v4031, %v4030
        %v4037 = vsel %vm2155, %v4015, 0
        %v4040 = vsel %vm2155, %v4016, 0
        %v4043 = vsel %vm2155, %v4017, 0
        %v4046 = vsel %vm2155, %v4018, 0
        %4048 = vmatprep.subr.bf16.mxu0 0
        %4049 = vmatpush1.bf16.msra.mxu0 %v4032
        %4050 = vmatprep.subr.bf16.mxu0 0
        %4051 = vmatpush1.bf16.msra.mxu0 %v4033
        %4052 = vmatprep.subr.bf16.mxu0 0
        %4053 = vmatpush1.bf16.msra.mxu0 0
        %4054 = vmatprep.subr.bf16.mxu0 0
        %4055 = vmatpush1.bf16.msra.mxu0 0
        %4056 = vmatprep.subr.bf16.mxu0 0
        %4057 = vmatpush1.bf16.msra.mxu0 0
        %4058 = vmatprep.subr.bf16.mxu0 0
        %4059 = vmatpush1.bf16.msra.mxu0 0
        %4060 = vmatprep.subr.bf16.mxu0 0
        %4061 = vmatpush1.bf16.msra.mxu0 0
        %4062 = vmatprep.subr.bf16.mxu0 0
        %4063 = vmatpush1.bf16.msra.mxu0 0
        %4064 = vmatprep.subr.bf16.mxu0 0
        %4065 = vmatpush1.bf16.msra.mxu0 0
        %4066 = vmatprep.subr.bf16.mxu0 0
        %4067 = vmatpush1.bf16.msra.mxu0 0
        %4068 = vmatprep.subr.bf16.mxu0 0
        %4069 = vmatpush1.bf16.msra.mxu0 0
        %4070 = vmatprep.subr.bf16.mxu0 0
        %4071 = vmatpush1.bf16.msra.mxu0 0
        %4072 = vmatprep.subr.bf16.mxu0 0
        %4073 = vmatpush1.bf16.msra.mxu0 0
        %4074 = vmatprep.subr.bf16.mxu0 0
        %4075 = vmatpush1.bf16.msra.mxu0 0
        %4076 = vmatprep.subr.bf16.mxu0 0
        %4077 = vmatpush1.bf16.msra.mxu0 0
        %4078 = vmatprep.subr.bf16.mxu0 0
        %4079 = vmatpush1.bf16.msra.mxu0 0
        %4080 = vmatprep.mubr.bf16.mxu0 0
        %4081 = vmatmul.mubr.bf16.gmra.mrb[0].mxu0 %v4037
        %v4082 = vpop.f32.mrb[0].mxu0
        %v4083 = vadd.f32 0.0, %v4082
        %v4084 = vpop.f32.mrb[0].mxu0
        %v4085 = vpop.f32.mrb[0].mxu0
        %v4086 = vadd.f32 0.0, %v4085
        %v4087 = vpop.f32.mrb[0].mxu0
        %4088 = vmatprep.mubr.bf16.mxu0 0
        %4089 = vmatmul.mubr.bf16.gmra.mrb[0].mxu0 %v4040
        %v4090 = vpop.f32.mrb[0].mxu0
        %v4091 = vadd.f32 0.0, %v4090
        %v4092 = vpop.f32.mrb[0].mxu0
        %v4093 = vpop.f32.mrb[0].mxu0
        %v4094 = vadd.f32 0.0, %v4093
        %v4095 = vpop.f32.mrb[0].mxu0
        %4096 = vmatprep.mubr.bf16.mxu0 0
        %4097 = vmatmul.mubr.bf16.gmra.mrb[0].mxu0 %v4043
        %v4098 = vpop.f32.mrb[0].mxu0
        %v4099 = vadd.f32 0.0, %v4098
        %v4100 = vpop.f32.mrb[0].mxu0
        %v4101 = vpop.f32.mrb[0].mxu0
        %v4102 = vadd.f32 0.0, %v4101
        %v4103 = vpop.f32.mrb[0].mxu0
        %4104 = vmatprep.mubr.bf16.mxu0 0
        %4105 = vmatmul.mubr.bf16.gmra.mrb[0].mxu0 %v4046
        %v4106 = vpop.f32.mrb[0].mxu0
        %v4107 = vadd.f32 0.0, %v4106
        %v4108 = vpop.f32.mrb[0].mxu0
        %v4109 = vpop.f32.mrb[0].mxu0
        %v4110 = vadd.f32 0.0, %v4109
        %v4111 = vpop.f32.mrb[0].mxu0
        %4112 = vdwg.mxu0
        %v4113 = vadd.f32 %v3581, %v4083
        %v4114 = vadd.f32 %v3582, %v4086
        %v4115 = vadd.f32 %v3583, %v4091
        %v4116 = vadd.f32 %v3584, %v4094
        %v4117 = vadd.f32 %v3585, %v4099
        %v4118 = vadd.f32 %v3586, %v4102
        %v4119 = vadd.f32 %v3587, %v4107
        %v4120 = vadd.f32 %v3588, %v4110
        %v4121 = vadd.f32 %v1880, %v4113
        %v4122 = vadd.f32 %v1881, %v4114
        %v4123 = vadd.f32 %v1882, %v4115
        %v4124 = vadd.f32 %v1883, %v4116
        %v4125 = vadd.f32 %v1884, %v4117
        %v4126 = vadd.f32 %v1885, %v4118
        %v4127 = vadd.f32 %v1886, %v4119
        %v4128 = vadd.f32 %v1887, %v4120
        %v4129 = vld [vmem:[%s10] sm:$0x1]
        %v4131 = vlaneseq
        %v4132 = vshrl.u32 %v4131, 7
        %v4133 = vsub.s32 0, %v4132
        %v4134 = vrot.slane %v4129, %v4133
        %v4136 = vadd.f32 %v4121, %v4134
        %v4137 = vadd.f32 %v4122, %v4134
        %v4138 = vadd.f32 %v4123, %v4134
        %v4139 = vadd.f32 %v4124, %v4134
        %v4140 = vadd.f32 %v4125, %v4134
        %v4141 = vadd.f32 %v4126, %v4134
        %v4142 = vadd.f32 %v4127, %v4134
        %v4143 = vadd.f32 %v4128, %v4134
        %v4144 = vld [vmem:[%s11] sm:$0x1]
        %v4145 = vld [vmem:[%s12] sm:$0x1]
        %4146 = vadd.xlane.f32.xlu0 %v4136
        %v4147 = vpop.xlane.xlu0 %4146
        %4148 = vadd.xlane.f32.xlu0 %v4137
        %v4149 = vpop.xlane.xlu0 %4148
        %4150 = vadd.xlane.f32.xlu0 %v4138
        %v4151 = vpop.xlane.xlu0 %4150
        %4152 = vadd.xlane.f32.xlu0 %v4139
        %v4153 = vpop.xlane.xlu0 %4152
        %4154 = vadd.xlane.f32.xlu0 %v4140
        %v4155 = vpop.xlane.xlu0 %4154
        %4156 = vadd.xlane.f32.xlu0 %v4141
        %v4157 = vpop.xlane.xlu0 %4156
        %4158 = vadd.xlane.f32.xlu0 %v4142
        %v4159 = vpop.xlane.xlu0 %4158
        %4160 = vadd.xlane.f32.xlu0 %v4143
        %v4161 = vpop.xlane.xlu0 %4160
        %v4162 = vmul.f32 %v4147, %v1906
        %v4163 = vmul.f32 %v4149, %v1906
        %v4164 = vmul.f32 %v4151, %v1906
        %v4165 = vmul.f32 %v4153, %v1906
        %v4166 = vmul.f32 %v4155, %v1906
        %v4167 = vmul.f32 %v4157, %v1906
        %v4168 = vmul.f32 %v4159, %v1906
        %v4169 = vmul.f32 %v4161, %v1906
        %v4170 = vsub.f32 %v4136, %v4162
        %v4171 = vsub.f32 %v4137, %v4163
        %v4172 = vsub.f32 %v4138, %v4164
        %v4173 = vsub.f32 %v4139, %v4165
        %v4174 = vsub.f32 %v4140, %v4166
        %v4175 = vsub.f32 %v4141, %v4167
        %v4176 = vsub.f32 %v4142, %v4168
        %v4177 = vsub.f32 %v4143, %v4169
        %v4178 = vmul.f32 %v4170, %v4170
        %v4179 = vmul.f32 %v4171, %v4171
        %v4180 = vmul.f32 %v4172, %v4172
        %v4181 = vmul.f32 %v4173, %v4173
        %v4182 = vmul.f32 %v4174, %v4174
        %v4183 = vmul.f32 %v4175, %v4175
        %v4184 = vmul.f32 %v4176, %v4176
        %v4185 = vmul.f32 %v4177, %v4177
        %4186 = vadd.xlane.f32.xlu0 %v4178
        %v4187 = vpop.xlane.xlu0 %4186
        %4188 = vadd.xlane.f32.xlu0 %v4179
        %v4189 = vpop.xlane.xlu0 %4188
        %4190 = vadd.xlane.f32.xlu0 %v4180
        %v4191 = vpop.xlane.xlu0 %4190
        %4192 = vadd.xlane.f32.xlu0 %v4181
        %v4193 = vpop.xlane.xlu0 %4192
        %4194 = vadd.xlane.f32.xlu0 %v4182
        %v4195 = vpop.xlane.xlu0 %4194
        %4196 = vadd.xlane.f32.xlu0 %v4183
        %v4197 = vpop.xlane.xlu0 %4196
        %4198 = vadd.xlane.f32.xlu0 %v4184
        %v4199 = vpop.xlane.xlu0 %4198
        %4200 = vadd.xlane.f32.xlu0 %v4185
        %v4201 = vpop.xlane.xlu0 %4200
        %v4202 = vmul.f32 %v4187, %v1906
        %v4203 = vmul.f32 %v4189, %v1906
        %v4204 = vmul.f32 %v4191, %v1906
        %v4205 = vmul.f32 %v4193, %v1906
        %v4206 = vmul.f32 %v4195, %v1906
        %v4207 = vmul.f32 %v4197, %v1906
        %v4208 = vmul.f32 %v4199, %v1906
        %v4209 = vmul.f32 %v4201, %v1906
        %v4210 = vadd.f32 %v4202, 1e-05
        %v4211 = vadd.f32 %v4203, 1e-05
        %v4212 = vadd.f32 %v4204, 1e-05
        %v4213 = vadd.f32 %v4205, 1e-05
        %v4214 = vadd.f32 %v4206, 1e-05
        %v4215 = vadd.f32 %v4207, 1e-05
        %v4216 = vadd.f32 %v4208, 1e-05
        %v4217 = vadd.f32 %v4209, 1e-05
        %v4218 = vrsqrt.pop %v4210
        %v4219 = vrsqrt.pop %v4211
        %v4220 = vrsqrt.pop %v4212
        %v4221 = vrsqrt.pop %v4213
        %v4222 = vrsqrt.pop %v4214
        %v4223 = vrsqrt.pop %v4215
        %v4224 = vrsqrt.pop %v4216
        %v4225 = vrsqrt.pop %v4217
        %v4226 = vmul.f32 %v4170, %v4218
        %v4227 = vmul.f32 %v4171, %v4219
        %v4228 = vmul.f32 %v4172, %v4220
        %v4229 = vmul.f32 %v4173, %v4221
        %v4230 = vmul.f32 %v4174, %v4222
        %v4231 = vmul.f32 %v4175, %v4223
        %v4232 = vmul.f32 %v4176, %v4224
        %v4233 = vmul.f32 %v4177, %v4225
        %v4235 = vlaneseq
        %v4236 = vshrl.u32 %v4235, 7
        %v4237 = vsub.s32 0, %v4236
        %v4238 = vrot.slane %v4144, %v4237
        %v4240 = vmul.f32 %v4226, %v4238
        %v4241 = vmul.f32 %v4227, %v4238
        %v4242 = vmul.f32 %v4228, %v4238
        %v4243 = vmul.f32 %v4229, %v4238
        %v4244 = vmul.f32 %v4230, %v4238
        %v4245 = vmul.f32 %v4231, %v4238
        %v4246 = vmul.f32 %v4232, %v4238
        %v4247 = vmul.f32 %v4233, %v4238
        %v4249 = vlaneseq
        %v4250 = vshrl.u32 %v4249, 7
        %v4251 = vsub.s32 0, %v4250
        %v4252 = vrot.slane %v4145, %v4251
        %v4254 = vadd.f32 %v4240, %v4252
        %v4255 = vadd.f32 %v4241, %v4252
        %v4256 = vadd.f32 %v4242, %v4252
        %v4257 = vadd.f32 %v4243, %v4252
        %v4258 = vadd.f32 %v4244, %v4252
        %v4259 = vadd.f32 %v4245, %v4252
        %v4260 = vadd.f32 %v4246, %v4252
        %v4261 = vadd.f32 %v4247, %v4252
        %v4262 = vpack.c.bf16 %v4255, %v4254
        %v4263 = vpack.c.bf16 %v4257, %v4256
        %v4264 = vpack.c.bf16 %v4259, %v4258
        %v4265 = vpack.c.bf16 %v4261, %v4260
        %v4266 = vld [vmem:[%s13] sm:$0xff]
        %v4267 = vld [vmem:[%s13 + $0x8] sm:$0xff]
        %v4268 = vld [vmem:[%s13 + $0x10] sm:$0xff]
        %v4269 = vld [vmem:[%s13 + $0x18] sm:$0xff]
        %v4270 = vld [vmem:[%s13 + $0x20] sm:$0xff]
        %v4271 = vld [vmem:[%s13 + $0x28] sm:$0xff]
        %v4272 = vld [vmem:[%s13 + $0x30] sm:$0xff]
        %v4273 = vld [vmem:[%s13 + $0x38] sm:$0xff]
        %v4274 = vld [vmem:[%s13 + $0x40] sm:$0xff]
        %v4275 = vld [vmem:[%s13 + $0x48] sm:$0xff]
        %v4276 = vld [vmem:[%s13 + $0x50] sm:$0xff]
        %v4277 = vld [vmem:[%s13 + $0x58] sm:$0xff]
        %v4278 = vld [vmem:[%s13 + $0x60] sm:$0xff]
        %v4279 = vld [vmem:[%s13 + $0x68] sm:$0xff]
        %v4280 = vld [vmem:[%s13 + $0x70] sm:$0xff]
        %v4281 = vld [vmem:[%s13 + $0x78] sm:$0xff]
        %v4282 = vld [vmem:[%s14] sm:$0x3]
        %v4284 = vlaneseq
        %v4285 = vshrl.u32 %v4284, 7
        %v4286 = vsub.s32 0, %v4285
        %v4287 = vrot.slane %v4282, %v4286
        %v4288 = vlaneseq
        %v4289 = vshrl.u32 %v4288, 7
        %v4290 = vsub.s32 1, %v4289
        %v4291 = vrot.slane %v4282, %v4290
        %v4310 = vunpack.c.l.b16 %v4266
        %v4311 = vunpack.c.h.b16 %v4266
        %v4312 = vunpack.c.l.b16 %v4267
        %v4313 = vunpack.c.h.b16 %v4267
        %v4314 = vunpack.c.l.b16 %v4268
        %v4315 = vunpack.c.h.b16 %v4268
        %v4316 = vunpack.c.l.b16 %v4269
        %v4317 = vunpack.c.h.b16 %v4269
        %v4318 = vunpack.c.l.b16 %v4270
        %v4319 = vunpack.c.h.b16 %v4270
        %v4320 = vunpack.c.l.b16 %v4271
        %v4321 = vunpack.c.h.b16 %v4271
        %v4322 = vunpack.c.l.b16 %v4272
        %v4323 = vunpack.c.h.b16 %v4272
        %v4324 = vunpack.c.l.b16 %v4273
        %v4325 = vunpack.c.h.b16 %v4273
        %v4326 = vunpack.c.l.b16 %v4274
        %v4327 = vunpack.c.h.b16 %v4274
        %v4328 = vunpack.c.l.b16 %v4275
        %v4329 = vunpack.c.h.b16 %v4275
        %v4330 = vunpack.c.l.b16 %v4276
        %v4331 = vunpack.c.h.b16 %v4276
        %v4332 = vunpack.c.l.b16 %v4277
        %v4333 = vunpack.c.h.b16 %v4277
        %v4334 = vunpack.c.l.b16 %v4278
        %v4335 = vunpack.c.h.b16 %v4278
        %v4336 = vunpack.c.l.b16 %v4279
        %v4337 = vunpack.c.h.b16 %v4279
        %v4338 = vunpack.c.l.b16 %v4280
        %v4339 = vunpack.c.h.b16 %v4280
        %v4340 = vunpack.c.l.b16 %v4281
        %v4341 = vunpack.c.h.b16 %v4281
        %v4342 = vpack.c.b16 %v4312, %v4310
        %v4343 = vpack.c.b16 %v4313, %v4311
        %v4344 = vpack.c.b16 %v4316, %v4314
        %v4345 = vpack.c.b16 %v4317, %v4315
        %v4346 = vpack.c.b16 %v4320, %v4318
        %v4347 = vpack.c.b16 %v4321, %v4319
        %v4348 = vpack.c.b16 %v4324, %v4322
        %v4349 = vpack.c.b16 %v4325, %v4323
        %v4350 = vpack.c.b16 %v4328, %v4326
        %v4351 = vpack.c.b16 %v4329, %v4327
        %v4352 = vpack.c.b16 %v4332, %v4330
        %v4353 = vpack.c.b16 %v4333, %v4331
        %v4354 = vpack.c.b16 %v4336, %v4334
        %v4355 = vpack.c.b16 %v4337, %v4335
        %v4356 = vpack.c.b16 %v4340, %v4338
        %v4357 = vpack.c.b16 %v4341, %v4339
        %4374 = vmatprep.subr.bf16.mxu0 %v4343
        %4375 = vmatpush1.bf16.msra.mxu0 %v4342
        %4376 = vmatprep.subr.bf16.mxu0 %v4345
        %4377 = vmatpush1.bf16.msra.mxu0 %v4344
        %4378 = vmatprep.subr.bf16.mxu0 %v4347
        %4379 = vmatpush1.bf16.msra.mxu0 %v4346
        %4380 = vmatprep.subr.bf16.mxu0 %v4349
        %4381 = vmatpush1.bf16.msra.mxu0 %v4348
        %4382 = vmatprep.subr.bf16.mxu0 %v4351
        %4383 = vmatpush1.bf16.msra.mxu0 %v4350
        %4384 = vmatprep.subr.bf16.mxu0 %v4353
        %4385 = vmatpush1.bf16.msra.mxu0 %v4352
        %4386 = vmatprep.subr.bf16.mxu0 %v4355
        %4387 = vmatpush1.bf16.msra.mxu0 %v4354
        %4388 = vmatprep.subr.bf16.mxu0 %v4357
        %4389 = vmatpush1.bf16.msra.mxu0 %v4356
        %4390 = vmatprep.subr.bf16.mxu0 0
        %4391 = vmatpush1.bf16.msra.mxu0 0
        %4392 = vmatprep.subr.bf16.mxu0 0
        %4393 = vmatpush1.bf16.msra.mxu0 0
        %4394 = vmatprep.subr.bf16.mxu0 0
        %4395 = vmatpush1.bf16.msra.mxu0 0
        %4396 = vmatprep.subr.bf16.mxu0 0
        %4397 = vmatpush1.bf16.msra.mxu0 0
        %4398 = vmatprep.subr.bf16.mxu0 0
        %4399 = vmatpush1.bf16.msra.mxu0 0
        %4400 = vmatprep.subr.bf16.mxu0 0
        %4401 = vmatpush1.bf16.msra.mxu0 0
        %4402 = vmatprep.subr.bf16.mxu0 0
        %4403 = vmatpush1.bf16.msra.mxu0 0
        %4404 = vmatprep.subr.bf16.mxu0 0
        %4405 = vmatpush1.bf16.msra.mxu0 0
        %4406 = vmatprep.mubr.bf16.mxu0 0
        %4407 = vmatmul.mubr.bf16.gmra.mrb[0].mxu0 %v4262
        %v4408 = vpop.f32.mrb[0].mxu0
        %v4409 = vadd.f32 %v4287, %v4408
        %v4410 = vpop.f32.mrb[0].mxu0
        %v4411 = vadd.f32 %v4291, %v4410
        %v4412 = vpop.f32.mrb[0].mxu0
        %v4413 = vadd.f32 %v4287, %v4412
        %v4414 = vpop.f32.mrb[0].mxu0
        %v4415 = vadd.f32 %v4291, %v4414
        %4416 = vmatprep.mubr.bf16.mxu0 0
        %4417 = vmatmul.mubr.bf16.gmra.mrb[0].mxu0 %v4263
        %v4418 = vpop.f32.mrb[0].mxu0
        %v4419 = vadd.f32 %v4287, %v4418
        %v4420 = vpop.f32.mrb[0].mxu0
        %v4421 = vadd.f32 %v4291, %v4420
        %v4422 = vpop.f32.mrb[0].mxu0
        %v4423 = vadd.f32 %v4287, %v4422
        %v4424 = vpop.f32.mrb[0].mxu0
        %v4425 = vadd.f32 %v4291, %v4424
        %4426 = vmatprep.mubr.bf16.mxu0 0
        %4427 = vmatmul.mubr.bf16.gmra.mrb[0].mxu0 %v4264
        %v4428 = vpop.f32.mrb[0].mxu0
        %v4429 = vadd.f32 %v4287, %v4428
        %v4430 = vpop.f32.mrb[0].mxu0
        %v4431 = vadd.f32 %v4291, %v4430
        %v4432 = vpop.f32.mrb[0].mxu0
        %v4433 = vadd.f32 %v4287, %v4432
        %v4434 = vpop.f32.mrb[0].mxu0
        %v4435 = vadd.f32 %v4291, %v4434
        %4436 = vmatprep.mubr.bf16.mxu0 0
        %4437 = vmatmul.mubr.bf16.gmra.mrb[0].mxu0 %v4265
        %v4438 = vpop.f32.mrb[0].mxu0
        %v4439 = vadd.f32 %v4287, %v4438
        %v4440 = vpop.f32.mrb[0].mxu0
        %v4441 = vadd.f32 %v4291, %v4440
        %v4442 = vpop.f32.mrb[0].mxu0
        %v4443 = vadd.f32 %v4287, %v4442
        %v4444 = vpop.f32.mrb[0].mxu0
        %v4445 = vadd.f32 %v4291, %v4444
        %4446 = vdwg.mxu0
        %v4447 = vmax.f32 %v4409, 0.0
        %v4448 = vmax.f32 %v4411, 0.0
        %v4449 = vmax.f32 %v4413, 0.0
        %v4450 = vmax.f32 %v4415, 0.0
        %v4451 = vmax.f32 %v4419, 0.0
        %v4452 = vmax.f32 %v4421, 0.0
        %v4453 = vmax.f32 %v4423, 0.0
        %v4454 = vmax.f32 %v4425, 0.0
        %v4455 = vmax.f32 %v4429, 0.0
        %v4456 = vmax.f32 %v4431, 0.0
        %v4457 = vmax.f32 %v4433, 0.0
        %v4458 = vmax.f32 %v4435, 0.0
        %v4459 = vmax.f32 %v4439, 0.0
        %v4460 = vmax.f32 %v4441, 0.0
        %v4461 = vmax.f32 %v4443, 0.0
        %v4462 = vmax.f32 %v4445, 0.0
        %v4463 = vpack.c.bf16 %v4449, %v4447
        %v4464 = vpack.c.bf16 %v4450, %v4448
        %v4465 = vpack.c.bf16 %v4453, %v4451
        %v4466 = vpack.c.bf16 %v4454, %v4452
        %v4467 = vpack.c.bf16 %v4457, %v4455
        %v4468 = vpack.c.bf16 %v4458, %v4456
        %v4469 = vpack.c.bf16 %v4461, %v4459
        %v4470 = vpack.c.bf16 %v4462, %v4460
        %v4471 = vld [vmem:[%s15] sm:$0xf]
        %v4472 = vld [vmem:[%s15 + $0x4] sm:$0xf]
        %v4473 = vld [vmem:[%s15 + $0x8] sm:$0xf]
        %v4474 = vld [vmem:[%s15 + $0xc] sm:$0xf]
        %v4475 = vld [vmem:[%s15 + $0x10] sm:$0xf]
        %v4476 = vld [vmem:[%s15 + $0x14] sm:$0xf]
        %v4477 = vld [vmem:[%s15 + $0x18] sm:$0xf]
        %v4478 = vld [vmem:[%s15 + $0x1c] sm:$0xf]
        %v4479 = vld [vmem:[%s15 + $0x20] sm:$0xf]
        %v4480 = vld [vmem:[%s15 + $0x24] sm:$0xf]
        %v4481 = vld [vmem:[%s15 + $0x28] sm:$0xf]
        %v4482 = vld [vmem:[%s15 + $0x2c] sm:$0xf]
        %v4483 = vld [vmem:[%s15 + $0x30] sm:$0xf]
        %v4484 = vld [vmem:[%s15 + $0x34] sm:$0xf]
        %v4485 = vld [vmem:[%s15 + $0x38] sm:$0xf]
        %v4486 = vld [vmem:[%s15 + $0x3c] sm:$0xf]
        %v4487 = vld [vmem:[%s15 + $0x40] sm:$0xf]
        %v4488 = vld [vmem:[%s15 + $0x44] sm:$0xf]
        %v4489 = vld [vmem:[%s15 + $0x48] sm:$0xf]
        %v4490 = vld [vmem:[%s15 + $0x4c] sm:$0xf]
        %v4491 = vld [vmem:[%s15 + $0x50] sm:$0xf]
        %v4492 = vld [vmem:[%s15 + $0x54] sm:$0xf]
        %v4493 = vld [vmem:[%s15 + $0x58] sm:$0xf]
        %v4494 = vld [vmem:[%s15 + $0x5c] sm:$0xf]
        %v4495 = vld [vmem:[%s15 + $0x60] sm:$0xf]
        %v4496 = vld [vmem:[%s15 + $0x64] sm:$0xf]
        %v4497 = vld [vmem:[%s15 + $0x68] sm:$0xf]
        %v4498 = vld [vmem:[%s15 + $0x6c] sm:$0xf]
        %v4499 = vld [vmem:[%s15 + $0x70] sm:$0xf]
        %v4500 = vld [vmem:[%s15 + $0x74] sm:$0xf]
        %v4501 = vld [vmem:[%s15 + $0x78] sm:$0xf]
        %v4502 = vld [vmem:[%s15 + $0x7c] sm:$0xf]
        %v4503 = vld [vmem:[%s16] sm:$0x1]
        %v4505 = vlaneseq
        %v4506 = vshrl.u32 %v4505, 7
        %v4507 = vsub.s32 0, %v4506
        %v4508 = vrot.slane %v4503, %v4507
        %v4542 = vunpack.c.l.b16 %v4471
        %v4543 = vunpack.c.l.b16 %v4472
        %v4544 = vunpack.c.l.b16 %v4473
        %v4545 = vunpack.c.l.b16 %v4474
        %v4546 = vunpack.c.l.b16 %v4475
        %v4547 = vunpack.c.l.b16 %v4476
        %v4548 = vunpack.c.l.b16 %v4477
        %v4549 = vunpack.c.l.b16 %v4478
        %v4550 = vunpack.c.l.b16 %v4479
        %v4551 = vunpack.c.l.b16 %v4480
        %v4552 = vunpack.c.l.b16 %v4481
        %v4553 = vunpack.c.l.b16 %v4482
        %v4554 = vunpack.c.l.b16 %v4483
        %v4555 = vunpack.c.l.b16 %v4484
        %v4556 = vunpack.c.l.b16 %v4485
        %v4557 = vunpack.c.l.b16 %v4486
        %v4558 = vunpack.c.l.b16 %v4487
        %v4559 = vunpack.c.l.b16 %v4488
        %v4560 = vunpack.c.l.b16 %v4489
        %v4561 = vunpack.c.l.b16 %v4490
        %v4562 = vunpack.c.l.b16 %v4491
        %v4563 = vunpack.c.l.b16 %v4492
        %v4564 = vunpack.c.l.b16 %v4493
        %v4565 = vunpack.c.l.b16 %v4494
        %v4566 = vunpack.c.l.b16 %v4495
        %v4567 = vunpack.c.l.b16 %v4496
        %v4568 = vunpack.c.l.b16 %v4497
        %v4569 = vunpack.c.l.b16 %v4498
        %v4570 = vunpack.c.l.b16 %v4499
        %v4571 = vunpack.c.l.b16 %v4500
        %v4572 = vunpack.c.l.b16 %v4501
        %v4573 = vunpack.c.l.b16 %v4502
        %v4574 = vpack.c.b16 %v4543, %v4542
        %v4575 = vpack.c.b16 %v4545, %v4544
        %v4576 = vpack.c.b16 %v4547, %v4546
        %v4577 = vpack.c.b16 %v4549, %v4548
        %v4578 = vpack.c.b16 %v4551, %v4550
        %v4579 = vpack.c.b16 %v4553, %v4552
        %v4580 = vpack.c.b16 %v4555, %v4554
        %v4581 = vpack.c.b16 %v4557, %v4556
        %v4582 = vpack.c.b16 %v4559, %v4558
        %v4583 = vpack.c.b16 %v4561, %v4560
        %v4584 = vpack.c.b16 %v4563, %v4562
        %v4585 = vpack.c.b16 %v4565, %v4564
        %v4586 = vpack.c.b16 %v4567, %v4566
        %v4587 = vpack.c.b16 %v4569, %v4568
        %v4588 = vpack.c.b16 %v4571, %v4570
        %v4589 = vpack.c.b16 %v4573, %v4572
        %4606 = vmatprep.subr.bf16.mxu0 0
        %4607 = vmatpush1.bf16.msra.mxu0 %v4574
        %4608 = vmatprep.subr.bf16.mxu0 0
        %4609 = vmatpush1.bf16.msra.mxu0 %v4575
        %4610 = vmatprep.subr.bf16.mxu0 0
        %4611 = vmatpush1.bf16.msra.mxu0 %v4576
        %4612 = vmatprep.subr.bf16.mxu0 0
        %4613 = vmatpush1.bf16.msra.mxu0 %v4577
        %4614 = vmatprep.subr.bf16.mxu0 0
        %4615 = vmatpush1.bf16.msra.mxu0 %v4578
        %4616 = vmatprep.subr.bf16.mxu0 0
        %4617 = vmatpush1.bf16.msra.mxu0 %v4579
        %4618 = vmatprep.subr.bf16.mxu0 0
        %4619 = vmatpush1.bf16.msra.mxu0 %v4580
        %4620 = vmatprep.subr.bf16.mxu0 0
        %4621 = vmatpush1.bf16.msra.mxu0 %v4581
        %4622 = vmatprep.subr.bf16.mxu0 0
        %4623 = vmatpush1.bf16.msra.mxu0 %v4582
        %4624 = vmatprep.subr.bf16.mxu0 0
        %4625 = vmatpush1.bf16.msra.mxu0 %v4583
        %4626 = vmatprep.subr.bf16.mxu0 0
        %4627 = vmatpush1.bf16.msra.mxu0 %v4584
        %4628 = vmatprep.subr.bf16.mxu0 0
        %4629 = vmatpush1.bf16.msra.mxu0 %v4585
        %4630 = vmatprep.subr.bf16.mxu0 0
        %4631 = vmatpush1.bf16.msra.mxu0 %v4586
        %4632 = vmatprep.subr.bf16.mxu0 0
        %4633 = vmatpush1.bf16.msra.mxu0 %v4587
        %4634 = vmatprep.subr.bf16.mxu0 0
        %4635 = vmatpush1.bf16.msra.mxu0 %v4588
        %4636 = vmatprep.subr.bf16.mxu0 0
        %4637 = vmatpush1.bf16.msra.mxu0 %v4589
        %4638 = vmatprep.mubr.bf16.mxu0 %v4464
        %4639 = vmatmul.mubr.bf16.gmra.mrb[0].mxu0 %v4463
        %v4640 = vpop.f32.mrb[0].mxu0
        %v4641 = vadd.f32 %v4508, %v4640
        %v4642 = vpop.f32.mrb[0].mxu0
        %v4643 = vpop.f32.mrb[0].mxu0
        %v4644 = vadd.f32 %v4508, %v4643
        %v4645 = vpop.f32.mrb[0].mxu0
        %4646 = vmatprep.mubr.bf16.mxu0 %v4466
        %4647 = vmatmul.mubr.bf16.gmra.mrb[0].mxu0 %v4465
        %v4648 = vpop.f32.mrb[0].mxu0
        %v4649 = vadd.f32 %v4508, %v4648
        %v4650 = vpop.f32.mrb[0].mxu0
        %v4651 = vpop.f32.mrb[0].mxu0
        %v4652 = vadd.f32 %v4508, %v4651
        %v4653 = vpop.f32.mrb[0].mxu0
        %4654 = vmatprep.mubr.bf16.mxu0 %v4468
        %4655 = vmatmul.mubr.bf16.gmra.mrb[0].mxu0 %v4467
        %v4656 = vpop.f32.mrb[0].mxu0
        %v4657 = vadd.f32 %v4508, %v4656
        %v4658 = vpop.f32.mrb[0].mxu0
        %v4659 = vpop.f32.mrb[0].mxu0
        %v4660 = vadd.f32 %v4508, %v4659
        %v4661 = vpop.f32.mrb[0].mxu0
        %4662 = vmatprep.mubr.bf16.mxu0 %v4470
        %4663 = vmatmul.mubr.bf16.gmra.mrb[0].mxu0 %v4469
        %v4664 = vpop.f32.mrb[0].mxu0
        %v4665 = vadd.f32 %v4508, %v4664
        %v4666 = vpop.f32.mrb[0].mxu0
        %v4667 = vpop.f32.mrb[0].mxu0
        %v4668 = vadd.f32 %v4508, %v4667
        %v4669 = vpop.f32.mrb[0].mxu0
        %4670 = vdwg.mxu0
        %v4671 = vadd.f32 %v4136, %v4641
        %v4672 = vadd.f32 %v4137, %v4644
        %v4673 = vadd.f32 %v4138, %v4649
        %v4674 = vadd.f32 %v4139, %v4652
        %v4675 = vadd.f32 %v4140, %v4657
        %v4676 = vadd.f32 %v4141, %v4660
        %v4677 = vadd.f32 %v4142, %v4665
        %v4678 = vadd.f32 %v4143, %v4668
        %4679 = vst [vmem:[%s555] sm:$0xff] %v4671
        %4680 = vst [vmem:[%s555 + $0x8] sm:$0xff] %v4672
        %4681 = vst [vmem:[%s555 + $0x10] sm:$0xff] %v4673
        %4682 = vst [vmem:[%s555 + $0x18] sm:$0xff] %v4674
        %4683 = vst [vmem:[%s555 + $0x20] sm:$0xff] %v4675
        %4684 = vst [vmem:[%s555 + $0x28] sm:$0xff] %v4676
        %4685 = vst [vmem:[%s555 + $0x30] sm:$0xff] %v4677
        %4686 = vst [vmem:[%s555 + $0x38] sm:$0xff] %v4678
        %s4687 = sand.u32 %s415, 1
        %s4688 = scalar_lea.sflag [#allocation5], %s4687
        %s4689 = sand.u32 %s415, 1
        %s4690 = smul.addr %s4689, 64
        %s4691 = scalar_lea.vmem [#allocation4], %s4690
        // Predicated region
        $region93: #{tpu_custom_call.1} parent=87 // pred_check
          %p4692 = pneg %p425
        $region94: #{tpu_custom_call.1} parent=87 // pred_check_branch
          %4694 = sbr.rel (%p4692) target = $region96
        $region95: #{tpu_custom_call.1} parent=87 // pred_region
          %s4695 = smul.u32 8, %s36
          %s4697 = ssub.s32 1024, 1024
          %4698 = vsyncadd %s4688, %s4697
          %s4699 = smul.addr %s35, 8
          %s4700 = sadd.s32 %s4695, %s4699
          %s4701 = smul.addr %s4700, 128
          %s4702 = scalar_lea.hbm %s17, %s4701
          %s4703 = sshll.u32 %s4691, 4
          %s4704 = int_to_ptr.vmem [resolvable:$true] %s4703
          %4709 = dma.vmem_to_hbm [thread:$0]  %s4704, 1024, %s4702, %s4688, 128, 128, 8
        $region96: #{tpu_custom_call.1} parent=87 // pred_fallthru
          _
      $region88: #{tpu_custom_call.1} parent=5 // pred_fallthru
        _
      %p4710 = scmp.le.s32.totalorder 2, %s26
      // Predicated region
      $region97: #{tpu_custom_call.1} parent=5 // pred_check
        %p4711 = pneg %p4710
      $region98: #{tpu_custom_call.1} parent=5 // pred_check_branch
        %4713 = sbr.rel (%p4711) target = $region100
      $region99: #{tpu_custom_call.1} parent=5 // pred_region
        %s4714 = ssub.s32 %s26, 2
        // Predicated region
        $region101: #{tpu_custom_call.1} parent=99 // pred_check
          %p4715 = pneg %p431
        $region102: #{tpu_custom_call.1} parent=99 // pred_check_branch
          %4717 = sbr.rel (%p4715) target = $region104
        $region103: #{tpu_custom_call.1} parent=99 // pred_region
          %s4718 = sand.u32 %s416, 1
          %s4719 = scalar_lea.sflag [#allocation5], %s4718
          %s4720 = sand.u32 %s416, 1
          %s4721 = smul.addr %s4720, 64
          %s4722 = scalar_lea.vmem [#allocation4], %s4721
          %4723 = dma.done %s4719, 1024
        $region104: #{tpu_custom_call.1} parent=99 // pred_fallthru
          _
      $region100: #{tpu_custom_call.1} parent=5 // pred_fallthru
        _
    $region6: #{tpu_custom_call.1} parent=1 // loop_footer
      %s30 = sadd.s32 1, %s26
    $region7: #{tpu_custom_call.1} parent=1 // loop_footer_branch
      %25 = sbr.rel target = $region3
    $region8: #{tpu_custom_call.1} parent=1 // loop_exit
      _
    %4724 = vsyncpa [#allocation5], 1
    %s4725 = scalar_lea.sflag [#allocation5], 1
    %4726 = vsyncpa %s4725, 1

// kernel: tpu_custom_call.1
$region0: #{tpu_custom_call.1}
  #allocation0 [shape = 'u32[]', space=smem, size = 0x4, offset = 0x4, fixed_abs, tag = 'smem constant byte address 0x4 - core index']
  #allocation1 [shape = 'u32[144,128]{1,0:T(1,128)}', space=vmem, size = 0x12000, scoped, tag = 'internal scratch']
  #allocation2 [shape = 'bf16[4,64,32]{2,1,0:T(16,128)(2,1)}', space=vmem, size = 0x10000, scoped, tag = 'scratch operand']
  #allocation3 [shape = 'bf16[4,64,32]{2,1,0:T(16,128)(2,1)}', space=vmem, size = 0x10000, scoped, tag = 'scratch operand']
  %s0 = inlined_call_operand.vmem [shape: f32[2,64,128], index: 0, kind: input, shape index: {}]
  %s1 = inlined_call_operand.vmem [shape: f32[1,128], index: 1, kind: input, shape index: {}]
  %s2 = inlined_call_operand.vmem [shape: f32[1,128], index: 2, kind: input, shape index: {}]
  %s3 = inlined_call_operand.vmem [shape: bf16[4,128,32], index: 3, kind: input, shape index: {}]
  %s4 = inlined_call_operand.vmem [shape: f32[4,1,32], index: 4, kind: input, shape index: {}]
  %s5 = inlined_call_operand.vmem [shape: bf16[4,128,32], index: 5, kind: input, shape index: {}]
  %s6 = inlined_call_operand.vmem [shape: f32[4,1,32], index: 6, kind: input, shape index: {}]
  %s7 = inlined_call_operand.vmem [shape: bf16[4,128,32], index: 7, kind: input, shape index: {}]
  %s8 = inlined_call_operand.vmem [shape: f32[4,1,32], index: 8, kind: input, shape index: {}]
  %s9 = inlined_call_operand.vmem [shape: bf16[4,32,128], index: 9, kind: input, shape index: {}]
  %s10 = inlined_call_operand.vmem [shape: f32[1,128], index: 10, kind: input, shape index: {}]
  %s11 = inlined_call_operand.vmem [shape: f32[1,128], index: 11, kind: input, shape index: {}]
  %s12 = inlined_call_operand.vmem [shape: f32[1,128], index: 12, kind: input, shape index: {}]
  %s13 = inlined_call_operand.vmem [shape: bf16[128,256], index: 13, kind: input, shape index: {}]
  %s14 = inlined_call_operand.vmem [shape: f32[1,256], index: 14, kind: input, shape index: {}]
  %s15 = inlined_call_operand.vmem [shape: bf16[256,128], index: 15, kind: input, shape index: {}]
  %s16 = inlined_call_operand.vmem [shape: f32[1,128], index: 16, kind: input, shape index: {}]
  %s17 = inlined_call_operand.hbm [shape: f32[2,64,128], index: 17, kind: output, shape index: {}]
  %s18 = sld [smem:[#allocation0]]
  $region105: #{tpu_custom_call.1} parent=0
    _
  %s20 = ssub.s32 1, %s18
  %s21 = scalar_select 0, %s20, %s18
  $region1: #{tpu_custom_call.1} parent=0
    #allocation4 [shape = 'u8[65536]{0}', space=vmem, size = 0x10000, scoped, tag = 'output window, operand 0']
    #allocation5 [shape = 's32[2]{0}', space=sflag, size = 0x8, scoped, tag = 'scoped memory for tpu_custom_call.1']
    %22 = vsyncpa [#allocation5], 0
    %s23 = scalar_lea.sflag [#allocation5], 1
    %24 = vsyncpa %s23, 0
    loop: start=0, step=1, limit=4
    $region2: #{tpu_custom_call.1} parent=1 // loop_pre_header
      _
    $region3: #{tpu_custom_call.1} parent=1 // loop_header
      %s26 = sphi 0, %s30
      %p27 = scmp.ge.s32.totalorder %s26, 4
      %s33 = sphi 0, %s45
      %s34 = sphi 0, %s41
      %s35 = sphi 0, %s33
      %s36 = sphi 0, %s34
      %s37 = sphi 0, %s35
      %s38 = sphi 0, %s36
      %s48 = sphi 0, %s50
      %s51 = sphi 0, %s48
      %s52 = sphi 0, %s51
      %s68 = sphi 0, %s52
      %s72 = sphi 0, %s72
      %s74 = sphi 0, %s72
      %s75 = sphi 0, %s74
      %s89 = sphi 0, %s75
      %s93 = sphi 0, %s93
      %s95 = sphi 0, %s93
      %s96 = sphi 0, %s95
      %s110 = sphi 0, %s96
      %s114 = sphi 0, %s114
      %s116 = sphi 0, %s114
      %s117 = sphi 0, %s116
      %s131 = sphi 0, %s117
      %s135 = sphi 0, %s135
      %s137 = sphi 0, %s135
      %s138 = sphi 0, %s137
      %s152 = sphi 0, %s138
      %s156 = sphi 0, %s156
      %s158 = sphi 0, %s156
      %s159 = sphi 0, %s158
      %s173 = sphi 0, %s159
      %s177 = sphi 0, %s177
      %s179 = sphi 0, %s177
      %s180 = sphi 0, %s179
      %s194 = sphi 0, %s180
      %s198 = sphi 0, %s198
      %s200 = sphi 0, %s198
      %s201 = sphi 0, %s200
      %s215 = sphi 0, %s201
      %s219 = sphi 0, %s219
      %s221 = sphi 0, %s219
      %s222 = sphi 0, %s221
      %s236 = sphi 0, %s222
      %s240 = sphi 0, %s240
      %s242 = sphi 0, %s240
      %s243 = sphi 0, %s242
      %s257 = sphi 0, %s243
      %s261 = sphi 0, %s261
      %s263 = sphi 0, %s261
      %s264 = sphi 0, %s263
      %s278 = sphi 0, %s264
      %s282 = sphi 0, %s282
      %s284 = sphi 0, %s282
      %s285 = sphi 0, %s284
      %s299 = sphi 0, %s285
      %s303 = sphi 0, %s303
      %s305 = sphi 0, %s303
      %s306 = sphi 0, %s305
      %s320 = sphi 0, %s306
      %s324 = sphi 0, %s324
      %s326 = sphi 0, %s324
      %s327 = sphi 0, %s326
      %s341 = sphi 0, %s327
      %s345 = sphi 0, %s345
      %s347 = sphi 0, %s345
      %s348 = sphi 0, %s347
      %s362 = sphi 0, %s348
      %s366 = sphi 0, %s366
      %s368 = sphi 0, %s366
      %s369 = sphi 0, %s368
      %s383 = sphi 0, %s369
      %s387 = sphi 0, %s387
      %s389 = sphi 0, %s387
      %s390 = sphi 0, %s389
      %s404 = sphi 0, %s390
      %s412 = sphi 0, %s414
      %s415 = sphi 0, %s412
      %s416 = sphi 0, %s415
      %s432 = sphi 0, %s416
    $region4: #{tpu_custom_call.1} parent=1 // loop_header_branch
      %29 = sbr.rel (%p27) target = $region8
    $region5: #{tpu_custom_call.1} parent=1 // loop_body
      %s31 = ssub.s32 %s26, 1
      %s32 = ssub.s32 %s26, 2
      %s39 = sadd.s32 1, %s34
      %p40 = scmp.ge.s32.totalorder %s39, 1
      %s41 = scalar_select %p40, 0, %s39
      %s42 = sadd.s32 1, %s33
      %s43 = scalar_select %p40, %s42, %s33
      %p44 = scmp.ge.s32.totalorder %s43, 2
      %s45 = scalar_select %p44, 0, %s43
      %s46 = ssub.s32 %s33, %s45
      %p47 = scmp.eq.s32.totalorder %s46, 0
      %s49 = sadd.s32 %s48, 1
      %s50 = scalar_select %p47, %s48, %s49
      %p53 = pneg %p47
      %p54 = scmp.eq.s32.totalorder %s26, 1
      %p55 = por %p53, %p54
      %p56 = scmp.ne.s32.totalorder %s48, %s51
      %p57 = scmp.eq.s32.totalorder %s26, 0
      %p58 = por %p56, %p57
      %p59 = scmp.ne.s32.totalorder %s48, %s51
      %p60 = scmp.eq.s32.totalorder %s31, 1
      %p61 = por %p59, %p60
      %p62 = scmp.ne.s32.totalorder %s51, %s52
      %p63 = scmp.eq.s32.totalorder %s31, 0
      %p64 = por %p62, %p63
      %p65 = scmp.ne.s32.totalorder %s51, %s52
      %p66 = scmp.eq.s32.totalorder %s32, 1
      %p67 = por %p65, %p66
      %p69 = scmp.ne.s32.totalorder %s52, %s68
      %p70 = scmp.eq.s32.totalorder %s32, 0
      %p71 = por %p69, %p70
      %s73 = sadd.s32 %s72, 1
      %p76 = scmp.eq.s32.totalorder %s26, 1
      %p77 = scmp.ne.s32.totalorder %s72, %s74
      %p78 = scmp.eq.s32.totalorder %s26, 0
      %p79 = por %p77, %p78
      %p80 = scmp.ne.s32.totalorder %s72, %s74
      %p81 = scmp.eq.s32.totalorder %s31, 1
      %p82 = por %p80, %p81
      %p83 = scmp.ne.s32.totalorder %s74, %s75
      %p84 = scmp.eq.s32.totalorder %s31, 0
      %p85 = por %p83, %p84
      %p86 = scmp.ne.s32.totalorder %s74, %s75
      %p87 = scmp.eq.s32.totalorder %s32, 1
      %p88 = por %p86, %p87
      %p90 = scmp.ne.s32.totalorder %s75, %s89
      %p91 = scmp.eq.s32.totalorder %s32, 0
      %p92 = por %p90, %p91
      %s94 = sadd.s32 %s93, 1
      %p97 = scmp.eq.s32.totalorder %s26, 1
      %p98 = scmp.ne.s32.totalorder %s93, %s95
      %p99 = scmp.eq.s32.totalorder %s26, 0
      %p100 = por %p98, %p99
      %p101 = scmp.ne.s32.totalorder %s93, %s95
      %p102 = scmp.eq.s32.totalorder %s31, 1
      %p103 = por %p101, %p102
      %p104 = scmp.ne.s32.totalorder %s95, %s96
      %p105 = scmp.eq.s32.totalorder %s31, 0
      %p106 = por %p104, %p105
      %p107 = scmp.ne.s32.totalorder %s95, %s96
      %p108 = scmp.eq.s32.totalorder %s32, 1
      %p109 = por %p107, %p108
      %p111 = scmp.ne.s32.totalorder %s96, %s110
      %p112 = scmp.eq.s32.totalorder %s32, 0
      %p113 = por %p111, %p112
      %s115 = sadd.s32 %s114, 1
      %p118 = scmp.eq.s32.totalorder %s26, 1
      %p119 = scmp.ne.s32.totalorder %s114, %s116
      %p120 = scmp.eq.s32.totalorder %s26, 0
      %p121 = por %p119, %p120
      %p122 = scmp.ne.s32.totalorder %s114, %s116
      %p123 = scmp.eq.s32.totalorder %s31, 1
      %p124 = por %p122, %p123
      %p125 = scmp.ne.s32.totalorder %s116, %s117
      %p126 = scmp.eq.s32.totalorder %s31, 0
      %p127 = por %p125, %p126
      %p128 = scmp.ne.s32.totalorder %s116, %s117
      %p129 = scmp.eq.s32.totalorder %s32, 1
      %p130 = por %p128, %p129
      %p132 = scmp.ne.s32.totalorder %s117, %s131
      %p133 = scmp.eq.s32.totalorder %s32, 0
      %p134 = por %p132, %p133
      %s136 = sadd.s32 %s135, 1
      %p139 = scmp.eq.s32.totalorder %s26, 1
      %p140 = scmp.ne.s32.totalorder %s135, %s137
      %p141 = scmp.eq.s32.totalorder %s26, 0
      %p142 = por %p140, %p141
      %p143 = scmp.ne.s32.totalorder %s135, %s137
      %p144 = scmp.eq.s32.totalorder %s31, 1
      %p145 = por %p143, %p144
      %p146 = scmp.ne.s32.totalorder %s137, %s138
      %p147 = scmp.eq.s32.totalorder %s31, 0
      %p148 = por %p146, %p147
      %p149 = scmp.ne.s32.totalorder %s137, %s138
      %p150 = scmp.eq.s32.totalorder %s32, 1
      %p151 = por %p149, %p150
      %p153 = scmp.ne.s32.totalorder %s138, %s152
      %p154 = scmp.eq.s32.totalorder %s32, 0
      %p155 = por %p153, %p154
      %s157 = sadd.s32 %s156, 1
      %p160 = scmp.eq.s32.totalorder %s26, 1
      %p161 = scmp.ne.s32.totalorder %s156, %s158
      %p162 = scmp.eq.s32.totalorder %s26, 0
      %p163 = por %p161, %p162
      %p164 = scmp.ne.s32.totalorder %s156, %s158
      %p165 = scmp.eq.s32.totalorder %s31, 1
      %p166 = por %p164, %p165
      %p167 = scmp.ne.s32.totalorder %s158, %s159
      %p168 = scmp.eq.s32.totalorder %s31, 0
      %p169 = por %p167, %p168
      %p170 = scmp.ne.s32.totalorder %s158, %s159
      %p171 = scmp.eq.s32.totalorder %s32, 1
      %p172 = por %p170, %p171
      %p174 = scmp.ne.s32.totalorder %s159, %s173
      %p175 = scmp.eq.s32.totalorder %s32, 0
      %p176 = por %p174, %p175
      %s178 = sadd.s32 %s177, 1
      %p181 = scmp.eq.s32.totalorder %s26, 1
      %p182 = scmp.ne.s32.totalorder %s177, %s179
      %p183 = scmp.eq.s32.totalorder %s26, 0
      %p184 = por %p182, %p183
      %p185 = scmp.ne.s32.totalorder %s177, %s179
      %p186 = scmp.eq.s32.totalorder %s31, 1
      %p187 = por %p185, %p186
      %p188 = scmp.ne.s32.totalorder %s179, %s180
      %p189 = scmp.eq.s32.totalorder %s31, 0
      %p190 = por %p188, %p189
      %p191 = scmp.ne.s32.totalorder %s179, %s180
      %p192 = scmp.eq.s32.totalorder %s32, 1
      %p193 = por %p191, %p192
      %p195 = scmp.ne.s32.totalorder %s180, %s194
      %p196 = scmp.eq.s32.totalorder %s32, 0
      %p197 = por %p195, %p196
      %s199 = sadd.s32 %s198, 1
      %p202 = scmp.eq.s32.totalorder %s26, 1
      %p203 = scmp.ne.s32.totalorder %s198, %s200
      %p204 = scmp.eq.s32.totalorder %s26, 0
      %p205 = por %p203, %p204
      %p206 = scmp.ne.s32.totalorder %s198, %s200
      %p207 = scmp.eq.s32.totalorder %s31, 1
      %p208 = por %p206, %p207
      %p209 = scmp.ne.s32.totalorder %s200, %s201
      %p210 = scmp.eq.s32.totalorder %s31, 0
      %p211 = por %p209, %p210
      %p212 = scmp.ne.s32.totalorder %s200, %s201
      %p213 = scmp.eq.s32.totalorder %s32, 1
      %p214 = por %p212, %p213
      %p216 = scmp.ne.s32.totalorder %s201, %s215
      %p217 = scmp.eq.s32.totalorder %s32, 0
      %p218 = por %p216, %p217
      %s220 = sadd.s32 %s219, 1
      %p223 = scmp.eq.s32.totalorder %s26, 1
      %p224 = scmp.ne.s32.totalorder %s219, %s221
      %p225 = scmp.eq.s32.totalorder %s26, 0
      %p226 = por %p224, %p225
      %p227 = scmp.ne.s32.totalorder %s219, %s221
      %p228 = scmp.eq.s32.totalorder %s31, 1
      %p229 = por %p227, %p228
      %p230 = scmp.ne.s32.totalorder %s221, %s222
      %p231 = scmp.eq.s32.totalorder %s31, 0
      %p232 = por %p230, %p231
      %p233 = scmp.ne.s32.totalorder %s221, %s222
      %p234 = scmp.eq.s32.totalorder %s32, 1
      %p235 = por %p233, %p234
      %p237 = scmp.ne.s32.totalorder %s222, %s236
      %p238 = scmp.eq.s32.totalorder %s32, 0
      %p239 = por %p237, %p238
      %s241 = sadd.s32 %s240, 1
      %p244 = scmp.eq.s32.totalorder %s26, 1
      %p245 = scmp.ne.s32.totalorder %s240, %s242
      %p246 = scmp.eq.s32.totalorder %s26, 0
      %p247 = por %p245, %p246
      %p248 = scmp.ne.s32.totalorder %s240, %s242
      %p249 = scmp.eq.s32.totalorder %s31, 1
      %p250 = por %p248, %p249
      %p251 = scmp.ne.s32.totalorder %s242, %s243
      %p252 = scmp.eq.s32.totalorder %s31, 0
      %p253 = por %p251, %p252
      %p254 = scmp.ne.s32.totalorder %s242, %s243
      %p255 = scmp.eq.s32.totalorder %s32, 1
      %p256 = por %p254, %p255
      %p258 = scmp.ne.s32.totalorder %s243, %s257
      %p259 = scmp.eq.s32.totalorder %s32, 0
      %p260 = por %p258, %p259
      %s262 = sadd.s32 %s261, 1
      %p265 = scmp.eq.s32.totalorder %s26, 1
      %p266 = scmp.ne.s32.totalorder %s261, %s263
      %p267 = scmp.eq.s32.totalorder %s26, 0
      %p268 = por %p266, %p267
      %p269 = scmp.ne.s32.totalorder %s261, %s263
      %p270 = scmp.eq.s32.totalorder %s31, 1
      %p271 = por %p269, %p270
      %p272 = scmp.ne.s32.totalorder %s263, %s264
      %p273 = scmp.eq.s32.totalorder %s31, 0
      %p274 = por %p272, %p273
      %p275 = scmp.ne.s32.totalorder %s263, %s264
      %p276 = scmp.eq.s32.totalorder %s32, 1
      %p277 = por %p275, %p276
      %p279 = scmp.ne.s32.totalorder %s264, %s278
      %p280 = scmp.eq.s32.totalorder %s32, 0
      %p281 = por %p279, %p280
      %s283 = sadd.s32 %s282, 1
      %p286 = scmp.eq.s32.totalorder %s26, 1
      %p287 = scmp.ne.s32.totalorder %s282, %s284
      %p288 = scmp.eq.s32.totalorder %s26, 0
      %p289 = por %p287, %p288
      %p290 = scmp.ne.s32.totalorder %s282, %s284
      %p291 = scmp.eq.s32.totalorder %s31, 1
      %p292 = por %p290, %p291
      %p293 = scmp.ne.s32.totalorder %s284, %s285
      %p294 = scmp.eq.s32.totalorder %s31, 0
      %p295 = por %p293, %p294
      %p296 = scmp.ne.s32.totalorder %s284, %s285
      %p297 = scmp.eq.s32.totalorder %s32, 1
      %p298 = por %p296, %p297
      %p300 = scmp.ne.s32.totalorder %s285, %s299
      %p301 = scmp.eq.s32.totalorder %s32, 0
      %p302 = por %p300, %p301
      %s304 = sadd.s32 %s303, 1
      %p307 = scmp.eq.s32.totalorder %s26, 1
      %p308 = scmp.ne.s32.totalorder %s303, %s305
      %p309 = scmp.eq.s32.totalorder %s26, 0
      %p310 = por %p308, %p309
      %p311 = scmp.ne.s32.totalorder %s303, %s305
      %p312 = scmp.eq.s32.totalorder %s31, 1
      %p313 = por %p311, %p312
      %p314 = scmp.ne.s32.totalorder %s305, %s306
      %p315 = scmp.eq.s32.totalorder %s31, 0
      %p316 = por %p314, %p315
      %p317 = scmp.ne.s32.totalorder %s305, %s306
      %p318 = scmp.eq.s32.totalorder %s32, 1
      %p319 = por %p317, %p318
      %p321 = scmp.ne.s32.totalorder %s306, %s320
      %p322 = scmp.eq.s32.totalorder %s32, 0
      %p323 = por %p321, %p322
      %s325 = sadd.s32 %s324, 1
      %p328 = scmp.eq.s32.totalorder %s26, 1
      %p329 = scmp.ne.s32.totalorder %s324, %s326
      %p330 = scmp.eq.s32.totalorder %s26, 0
      %p331 = por %p329, %p330
      %p332 = scmp.ne.s32.totalorder %s324, %s326
      %p333 = scmp.eq.s32.totalorder %s31, 1
      %p334 = por %p332, %p333
      %p335 = scmp.ne.s32.totalorder %s326, %s327
      %p336 = scmp.eq.s32.totalorder %s31, 0
      %p337 = por %p335, %p336
      %p338 = scmp.ne.s32.totalorder %s326, %s327
      %p339 = scmp.eq.s32.totalorder %s32, 1
      %p340 = por %p338, %p339
      %p342 = scmp.ne.s32.totalorder %s327, %s341
      %p343 = scmp.eq.s32.totalorder %s32, 0
      %p344 = por %p342, %p343
      %s346 = sadd.s32 %s345, 1
      %p349 = scmp.eq.s32.totalorder %s26, 1
      %p350 = scmp.ne.s32.totalorder %s345, %s347
      %p351 = scmp.eq.s32.totalorder %s26, 0
      %p352 = por %p350, %p351
      %p353 = scmp.ne.s32.totalorder %s345, %s347
      %p354 = scmp.eq.s32.totalorder %s31, 1
      %p355 = por %p353, %p354
      %p356 = scmp.ne.s32.totalorder %s347, %s348
      %p357 = scmp.eq.s32.totalorder %s31, 0
      %p358 = por %p356, %p357
      %p359 = scmp.ne.s32.totalorder %s347, %s348
      %p360 = scmp.eq.s32.totalorder %s32, 1
      %p361 = por %p359, %p360
      %p363 = scmp.ne.s32.totalorder %s348, %s362
      %p364 = scmp.eq.s32.totalorder %s32, 0
      %p365 = por %p363, %p364
      %s367 = sadd.s32 %s366, 1
      %p370 = scmp.eq.s32.totalorder %s26, 1
      %p371 = scmp.ne.s32.totalorder %s366, %s368
      %p372 = scmp.eq.s32.totalorder %s26, 0
      %p373 = por %p371, %p372
      %p374 = scmp.ne.s32.totalorder %s366, %s368
      %p375 = scmp.eq.s32.totalorder %s31, 1
      %p376 = por %p374, %p375
      %p377 = scmp.ne.s32.totalorder %s368, %s369
      %p378 = scmp.eq.s32.totalorder %s31, 0
      %p379 = por %p377, %p378
      %p380 = scmp.ne.s32.totalorder %s368, %s369
      %p381 = scmp.eq.s32.totalorder %s32, 1
      %p382 = por %p380, %p381
      %p384 = scmp.ne.s32.totalorder %s369, %s383
      %p385 = scmp.eq.s32.totalorder %s32, 0
      %p386 = por %p384, %p385
      %s388 = sadd.s32 %s387, 1
      %p391 = scmp.eq.s32.totalorder %s26, 1
      %p392 = scmp.ne.s32.totalorder %s387, %s389
      %p393 = scmp.eq.s32.totalorder %s26, 0
      %p394 = por %p392, %p393
      %p395 = scmp.ne.s32.totalorder %s387, %s389
      %p396 = scmp.eq.s32.totalorder %s31, 1
      %p397 = por %p395, %p396
      %p398 = scmp.ne.s32.totalorder %s389, %s390
      %p399 = scmp.eq.s32.totalorder %s31, 0
      %p400 = por %p398, %p399
      %p401 = scmp.ne.s32.totalorder %s389, %s390
      %p402 = scmp.eq.s32.totalorder %s32, 1
      %p403 = por %p401, %p402
      %p405 = scmp.ne.s32.totalorder %s390, %s404
      %p406 = scmp.eq.s32.totalorder %s32, 0
      %p407 = por %p405, %p406
      %s408 = ssub.s32 %s33, %s45
      %s409 = ssub.s32 %s34, %s41
      %s410 = sor.u32 %s408, %s409
      %p411 = scmp.eq.s32.totalorder %s410, 0
      %s413 = sadd.s32 %s412, 1
      %s414 = scalar_select %p411, %s412, %s413
      %p417 = pneg %p411
      %p418 = scmp.eq.s32.totalorder %s26, 1
      %p419 = por %p417, %p418
      %p420 = scmp.ne.s32.totalorder %s412, %s415
      %p421 = scmp.eq.s32.totalorder %s26, 0
      %p422 = por %p420, %p421
      %p423 = scmp.ne.s32.totalorder %s412, %s415
      %p424 = scmp.eq.s32.totalorder %s31, 1
      %p425 = por %p423, %p424
      %p426 = scmp.ne.s32.totalorder %s415, %s416
      %p427 = scmp.eq.s32.totalorder %s31, 0
      %p428 = por %p426, %p427
      %p429 = scmp.ne.s32.totalorder %s415, %s416
      %p430 = scmp.eq.s32.totalorder %s32, 1
      %p431 = por %p429, %p430
      %p433 = scmp.ne.s32.totalorder %s416, %s432
      %p434 = scmp.eq.s32.totalorder %s32, 0
      %p435 = por %p433, %p434
      %p436 = scmp.le.s32.totalorder 1, %s26
      %p437 = scmp.lt.s32.totalorder %s26, 3
      %p438 = pnand %p436, %p437
      %p439 = pneg %p438
      // Predicated region
      $region9: #{tpu_custom_call.1} parent=5 // pred_check
        _
      $region10: #{tpu_custom_call.1} parent=5 // pred_check_branch
        %441 = sbr.rel (%p438) target = $region12
      $region11: #{tpu_custom_call.1} parent=5 // pred_region
        %s442 = ssub.s32 %s26, 1
        // Predicated region
        $region13: #{tpu_custom_call.1} parent=11 // pred_check
          %p443 = pneg %p85
        $region14: #{tpu_custom_call.1} parent=11 // pred_check_branch
          %445 = sbr.rel (%p443) target = $region16
        $region15: #{tpu_custom_call.1} parent=11 // pred_region
          _
        $region16: #{tpu_custom_call.1} parent=11 // pred_fallthru
          _
        // Predicated region
        $region17: #{tpu_custom_call.1} parent=11 // pred_check
          %p446 = pneg %p106
        $region18: #{tpu_custom_call.1} parent=11 // pred_check_branch
          %448 = sbr.rel (%p446) target = $region20
        $region19: #{tpu_custom_call.1} parent=11 // pred_region
          _
        $region20: #{tpu_custom_call.1} parent=11 // pred_fallthru
          _
        // Predicated region
        $region21: #{tpu_custom_call.1} parent=11 // pred_check
          %p449 = pneg %p127
        $region22: #{tpu_custom_call.1} parent=11 // pred_check_branch
          %451 = sbr.rel (%p449) target = $region24
        $region23: #{tpu_custom_call.1} parent=11 // pred_region
          _
        $region24: #{tpu_custom_call.1} parent=11 // pred_fallthru
          _
        // Predicated region
        $region25: #{tpu_custom_call.1} parent=11 // pred_check
          %p452 = pneg %p148
        $region26: #{tpu_custom_call.1} parent=11 // pred_check_branch
          %454 = sbr.rel (%p452) target = $region28
        $region27: #{tpu_custom_call.1} parent=11 // pred_region
          _
        $region28: #{tpu_custom_call.1} parent=11 // pred_fallthru
          _
        // Predicated region
        $region29: #{tpu_custom_call.1} parent=11 // pred_check
          %p455 = pneg %p169
        $region30: #{tpu_custom_call.1} parent=11 // pred_check_branch
          %457 = sbr.rel (%p455) target = $region32
        $region31: #{tpu_custom_call.1} parent=11 // pred_region
          _
        $region32: #{tpu_custom_call.1} parent=11 // pred_fallthru
          _
        // Predicated region
        $region33: #{tpu_custom_call.1} parent=11 // pred_check
          %p458 = pneg %p190
        $region34: #{tpu_custom_call.1} parent=11 // pred_check_branch
          %460 = sbr.rel (%p458) target = $region36
        $region35: #{tpu_custom_call.1} parent=11 // pred_region
          _
        $region36: #{tpu_custom_call.1} parent=11 // pred_fallthru
          _
        // Predicated region
        $region37: #{tpu_custom_call.1} parent=11 // pred_check
          %p461 = pneg %p211
        $region38: #{tpu_custom_call.1} parent=11 // pred_check_branch
          %463 = sbr.rel (%p461) target = $region40
        $region39: #{tpu_custom_call.1} parent=11 // pred_region
          _
        $region40: #{tpu_custom_call.1} parent=11 // pred_fallthru
          _
        // Predicated region
        $region41: #{tpu_custom_call.1} parent=11 // pred_check
          %p464 = pneg %p232
        $region42: #{tpu_custom_call.1} parent=11 // pred_check_branch
          %466 = sbr.rel (%p464) target = $region44
        $region43: #{tpu_custom_call.1} parent=11 // pred_region
          _
        $region44: #{tpu_custom_call.1} parent=11 // pred_fallthru
          _
        // Predicated region
        $region45: #{tpu_custom_call.1} parent=11 // pred_check
          %p467 = pneg %p253
        $region46: #{tpu_custom_call.1} parent=11 // pred_check_branch
          %469 = sbr.rel (%p467) target = $region48
        $region47: #{tpu_custom_call.1} parent=11 // pred_region
          _
        $region48: #{tpu_custom_call.1} parent=11 // pred_fallthru
          _
        // Predicated region
        $region49: #{tpu_custom_call.1} parent=11 // pred_check
          %p470 = pneg %p274
        $region50: #{tpu_custom_call.1} parent=11 // pred_check_branch
          %472 = sbr.rel (%p470) target = $region52
        $region51: #{tpu_custom_call.1} parent=11 // pred_region
          _
        $region52: #{tpu_custom_call.1} parent=11 // pred_fallthru
          _
        // Predicated region
        $region53: #{tpu_custom_call.1} parent=11 // pred_check
          %p473 = pneg %p295
        $region54: #{tpu_custom_call.1} parent=11 // pred_check_branch
          %475 = sbr.rel (%p473) target = $region56
        $region55: #{tpu_custom_call.1} parent=11 // pred_region
          _
        $region56: #{tpu_custom_call.1} parent=11 // pred_fallthru
          _
        // Predicated region
        $region57: #{tpu_custom_call.1} parent=11 // pred_check
          %p476 = pneg %p316
        $region58: #{tpu_custom_call.1} parent=11 // pred_check_branch
          %478 = sbr.rel (%p476) target = $region60
        $region59: #{tpu_custom_call.1} parent=11 // pred_region
          _
        $region60: #{tpu_custom_call.1} parent=11 // pred_fallthru
          _
        // Predicated region
        $region61: #{tpu_custom_call.1} parent=11 // pred_check
          %p479 = pneg %p337
        $region62: #{tpu_custom_call.1} parent=11 // pred_check_branch
          %481 = sbr.rel (%p479) target = $region64
        $region63: #{tpu_custom_call.1} parent=11 // pred_region
          _
        $region64: #{tpu_custom_call.1} parent=11 // pred_fallthru
          _
        // Predicated region
        $region65: #{tpu_custom_call.1} parent=11 // pred_check
          %p482 = pneg %p358
        $region66: #{tpu_custom_call.1} parent=11 // pred_check_branch
          %484 = sbr.rel (%p482) target = $region68
        $region67: #{tpu_custom_call.1} parent=11 // pred_region
          _
        $region68: #{tpu_custom_call.1} parent=11 // pred_fallthru
          _
        // Predicated region
        $region69: #{tpu_custom_call.1} parent=11 // pred_check
          %p485 = pneg %p379
        $region70: #{tpu_custom_call.1} parent=11 // pred_check_branch
          %487 = sbr.rel (%p485) target = $region72
        $region71: #{tpu_custom_call.1} parent=11 // pred_region
          _
        $region72: #{tpu_custom_call.1} parent=11 // pred_fallthru
          _
        // Predicated region
        $region73: #{tpu_custom_call.1} parent=11 // pred_check
          %p488 = pneg %p400
        $region74: #{tpu_custom_call.1} parent=11 // pred_check_branch
          %490 = sbr.rel (%p488) target = $region76
        $region75: #{tpu_custom_call.1} parent=11 // pred_region
          _
        $region76: #{tpu_custom_call.1} parent=11 // pred_fallthru
          _
      $region12: #{tpu_custom_call.1} parent=5 // pred_fallthru
        _
      %p491 = scmp.lt.s32.totalorder %s26, 2
      // Predicated region
      $region77: #{tpu_custom_call.1} parent=5 // pred_check
        %p492 = pneg %p491
      $region78: #{tpu_custom_call.1} parent=5 // pred_check_branch
        %494 = sbr.rel (%p492) target = $region80
      $region79: #{tpu_custom_call.1} parent=5 // pred_region
        // Predicated region
        $region81: #{tpu_custom_call.1} parent=79 // pred_check
          %p495 = pneg %p58
        $region82: #{tpu_custom_call.1} parent=79 // pred_check_branch
          %497 = sbr.rel (%p495) target = $region84
        $region83: #{tpu_custom_call.1} parent=79 // pred_region
          %p498 = scmp.lt.s32.totalorder %s33, 1
          %s499 = scalar_select %p498, %s33, 1
          %s500 = smul.addr %s499, 8
          %s501 = smul.addr %s500, 8
          %s502 = scalar_lea.vmem %s0, %s501
        $region84: #{tpu_custom_call.1} parent=79 // pred_fallthru
          _
      $region80: #{tpu_custom_call.1} parent=5 // pred_fallthru
        _
      %p503 = scmp.le.s32.totalorder 1, %s26
      %p504 = scmp.lt.s32.totalorder %s26, 3
      %p505 = pnand %p503, %p504
      %p506 = pneg %p505
      // Predicated region
      $region85: #{tpu_custom_call.1} parent=5 // pred_check
        _
      $region86: #{tpu_custom_call.1} parent=5 // pred_check_branch
        %508 = sbr.rel (%p505) target = $region88
      $region87: #{tpu_custom_call.1} parent=5 // pred_region
        %s509 = ssub.s32 %s26, 1
        %p510 = scmp.lt.s32.totalorder %s35, 1
        %s511 = scalar_select %p510, %s35, 1
        %s512 = smul.addr %s511, 8
        %s513 = smul.addr %s512, 8
        %s514 = scalar_lea.vmem %s0, %s513
        %p515 = pneg %p64
        %p516 = pneg %p61
        %p517 = pneg %p85
        %p518 = pneg %p82
        %p519 = pneg %p106
        %p520 = pneg %p103
        %p521 = pneg %p127
        %p522 = pneg %p124
        %p523 = pneg %p148
        %p524 = pneg %p145
        %p525 = pneg %p169
        %p526 = pneg %p166
        %p527 = pneg %p190
        %p528 = pneg %p187
        %p529 = pneg %p211
        %p530 = pneg %p208
        %p531 = pneg %p232
        %p532 = pneg %p229
        %p533 = pneg %p253
        %p534 = pneg %p250
        %p535 = pneg %p274
        %p536 = pneg %p271
        %p537 = pneg %p295
        %p538 = pneg %p292
        %p539 = pneg %p316
        %p540 = pneg %p313
        %p541 = pneg %p337
        %p542 = pneg %p334
        %p543 = pneg %p358
        %p544 = pneg %p355
        %p545 = pneg %p379
        %p546 = pneg %p376
        %p547 = pneg %p400
        %p548 = pneg %p397
        %p549 = pneg %p428
        %p550 = pneg %p425
        %s551 = sand.u32 %s415, 1
        %s552 = scalar_lea.sflag [#allocation5], %s551
        %s553 = sand.u32 %s415, 1
        %s554 = smul.addr %s553, 64
        %s555 = scalar_lea.vmem [#allocation4], %s554
        %p556 = scmp.lt.s32.totalorder %s35, 1
        %s557 = scalar_select %p556, %s35, 1
        %s558 = smul.addr %s557, 8
        %s559 = smul.addr %s558, 8
        %s560 = scalar_lea.vmem %s0, %s559
        %s561 = smul.u32 8, %s36
        %p563 = scmp.eq.s32.totalorder %s36, 0
        // Predicated region
        $region89: #{tpu_custom_call.1} parent=87 // pred_check
          %p564 = pneg %p563
        $region90: #{tpu_custom_call.1} parent=87 // pred_check_branch
          %566 = sbr.rel (%p564) target = $region92
        $region91: #{tpu_custom_call.1} parent=87 // pred_region
          %v567 = vld [vmem:[%s560] sm:$0xff]
          %v568 = vld [vmem:[%s560 + $0x8] sm:$0xff]
          %v569 = vld [vmem:[%s560 + $0x10] sm:$0xff]
          %v570 = vld [vmem:[%s560 + $0x18] sm:$0xff]
          %v571 = vld [vmem:[%s560 + $0x20] sm:$0xff]
          %v572 = vld [vmem:[%s560 + $0x28] sm:$0xff]
          %v573 = vld [vmem:[%s560 + $0x30] sm:$0xff]
          %v574 = vld [vmem:[%s560 + $0x38] sm:$0xff]
          %v575 = vld [vmem:[%s1] sm:$0x1]
          %v576 = vld [vmem:[%s2] sm:$0x1]
          %577 = vadd.xlane.f32.xlu0 %v567
          %v578 = vpop.xlane.xlu0 %577
          %579 = vadd.xlane.f32.xlu0 %v568
          %v580 = vpop.xlane.xlu0 %579
          %581 = vadd.xlane.f32.xlu0 %v569
          %v582 = vpop.xlane.xlu0 %581
          %583 = vadd.xlane.f32.xlu0 %v570
          %v584 = vpop.xlane.xlu0 %583
          %585 = vadd.xlane.f32.xlu0 %v571
          %v586 = vpop.xlane.xlu0 %585
          %587 = vadd.xlane.f32.xlu0 %v572
          %v588 = vpop.xlane.xlu0 %587
          %589 = vadd.xlane.f32.xlu0 %v573
          %v590 = vpop.xlane.xlu0 %589
          %591 = vadd.xlane.f32.xlu0 %v574
          %v592 = vpop.xlane.xlu0 %591
          %v593 = vrcp.pop 128.0
          %v594 = vmul.f32 %v578, %v593
          %v595 = vmul.f32 %v580, %v593
          %v596 = vmul.f32 %v582, %v593
          %v597 = vmul.f32 %v584, %v593
          %v598 = vmul.f32 %v586, %v593
          %v599 = vmul.f32 %v588, %v593
          %v600 = vmul.f32 %v590, %v593
          %v601 = vmul.f32 %v592, %v593
          %v602 = vsub.f32 %v567, %v594
          %v603 = vsub.f32 %v568, %v595
          %v604 = vsub.f32 %v569, %v596
          %v605 = vsub.f32 %v570, %v597
          %v606 = vsub.f32 %v571, %v598
          %v607 = vsub.f32 %v572, %v599
          %v608 = vsub.f32 %v573, %v600
          %v609 = vsub.f32 %v574, %v601
          %v610 = vmul.f32 %v602, %v602
          %v611 = vmul.f32 %v603, %v603
          %v612 = vmul.f32 %v604, %v604
          %v613 = vmul.f32 %v605, %v605
          %v614 = vmul.f32 %v606, %v606
          %v615 = vmul.f32 %v607, %v607
          %v616 = vmul.f32 %v608, %v608
          %v617 = vmul.f32 %v609, %v609
          %618 = vadd.xlane.f32.xlu0 %v610
          %v619 = vpop.xlane.xlu0 %618
          %620 = vadd.xlane.f32.xlu0 %v611
          %v621 = vpop.xlane.xlu0 %620
          %622 = vadd.xlane.f32.xlu0 %v612
          %v623 = vpop.xlane.xlu0 %622
          %624 = vadd.xlane.f32.xlu0 %v613
          %v625 = vpop.xlane.xlu0 %624
          %626 = vadd.xlane.f32.xlu0 %v614
          %v627 = vpop.xlane.xlu0 %626
          %628 = vadd.xlane.f32.xlu0 %v615
          %v629 = vpop.xlane.xlu0 %628
          %630 = vadd.xlane.f32.xlu0 %v616
          %v631 = vpop.xlane.xlu0 %630
          %632 = vadd.xlane.f32.xlu0 %v617
          %v633 = vpop.xlane.xlu0 %632
          %v634 = vmul.f32 %v619, %v593
          %v635 = vmul.f32 %v621, %v593
          %v636 = vmul.f32 %v623, %v593
          %v637 = vmul.f32 %v625, %v593
          %v638 = vmul.f32 %v627, %v593
          %v639 = vmul.f32 %v629, %v593
          %v640 = vmul.f32 %v631, %v593
          %v641 = vmul.f32 %v633, %v593
          %v642 = vadd.f32 %v634, 1e-05
          %v643 = vadd.f32 %v635, 1e-05
          %v644 = vadd.f32 %v636, 1e-05
          %v645 = vadd.f32 %v637, 1e-05
          %v646 = vadd.f32 %v638, 1e-05
          %v647 = vadd.f32 %v639, 1e-05
          %v648 = vadd.f32 %v640, 1e-05
          %v649 = vadd.f32 %v641, 1e-05
          %v650 = vrsqrt.pop %v642
          %v651 = vrsqrt.pop %v643
          %v652 = vrsqrt.pop %v644
          %v653 = vrsqrt.pop %v645
          %v654 = vrsqrt.pop %v646
          %v655 = vrsqrt.pop %v647
          %v656 = vrsqrt.pop %v648
          %v657 = vrsqrt.pop %v649
          %v658 = vmul.f32 %v602, %v650
          %v659 = vmul.f32 %v603, %v651
          %v660 = vmul.f32 %v604, %v652
          %v661 = vmul.f32 %v605, %v653
          %v662 = vmul.f32 %v606, %v654
          %v663 = vmul.f32 %v607, %v655
          %v664 = vmul.f32 %v608, %v656
          %v665 = vmul.f32 %v609, %v657
          %v667 = vlaneseq
          %v668 = vshrl.u32 %v667, 7
          %v669 = vsub.s32 0, %v668
          %v670 = vrot.slane %v575, %v669
          %v672 = vmul.f32 %v658, %v670
          %v673 = vmul.f32 %v659, %v670
          %v674 = vmul.f32 %v660, %v670
          %v675 = vmul.f32 %v661, %v670
          %v676 = vmul.f32 %v662, %v670
          %v677 = vmul.f32 %v663, %v670
          %v678 = vmul.f32 %v664, %v670
          %v679 = vmul.f32 %v665, %v670
          %v681 = vlaneseq
          %v682 = vshrl.u32 %v681, 7
          %v683 = vsub.s32 0, %v682
          %v684 = vrot.slane %v576, %v683
          %v686 = vadd.f32 %v672, %v684
          %v687 = vadd.f32 %v673, %v684
          %v688 = vadd.f32 %v674, %v684
          %v689 = vadd.f32 %v675, %v684
          %v690 = vadd.f32 %v676, %v684
          %v691 = vadd.f32 %v677, %v684
          %v692 = vadd.f32 %v678, %v684
          %v693 = vadd.f32 %v679, %v684
          %v694 = vpack.c.bf16 %v687, %v686
          %v695 = vpack.c.bf16 %v689, %v688
          %v696 = vpack.c.bf16 %v691, %v690
          %v697 = vpack.c.bf16 %v693, %v692
          %v698 = vld [vmem:[%s5] sm:$0xf]
          %v699 = vld [vmem:[%s5 + $0x4] sm:$0xf]
          %v700 = vld [vmem:[%s5 + $0x8] sm:$0xf]
          %v701 = vld [vmem:[%s5 + $0xc] sm:$0xf]
          %v702 = vld [vmem:[%s5 + $0x10] sm:$0xf]
          %v703 = vld [vmem:[%s5 + $0x14] sm:$0xf]
          %v704 = vld [vmem:[%s5 + $0x18] sm:$0xf]
          %v705 = vld [vmem:[%s5 + $0x1c] sm:$0xf]
          %v706 = vld [vmem:[%s5 + $0x20] sm:$0xf]
          %v707 = vld [vmem:[%s5 + $0x24] sm:$0xf]
          %v708 = vld [vmem:[%s5 + $0x28] sm:$0xf]
          %v709 = vld [vmem:[%s5 + $0x2c] sm:$0xf]
          %v710 = vld [vmem:[%s5 + $0x30] sm:$0xf]
          %v711 = vld [vmem:[%s5 + $0x34] sm:$0xf]
          %v712 = vld [vmem:[%s5 + $0x38] sm:$0xf]
          %v713 = vld [vmem:[%s5 + $0x3c] sm:$0xf]
          %v714 = vld [vmem:[%s6] sm:$0x1]
          %v716 = vlaneseq
          %v717 = vshrl.u32 %v716, 7
          %v718 = vsub.s32 0, %v717
          %v719 = vrot.slane %v714, %v718
          %v737 = vunpack.c.l.b16 %v698
          %v738 = vunpack.c.l.b16 %v699
          %v739 = vunpack.c.l.b16 %v700
          %v740 = vunpack.c.l.b16 %v701
          %v741 = vunpack.c.l.b16 %v702
          %v742 = vunpack.c.l.b16 %v703
          %v743 = vunpack.c.l.b16 %v704
          %v744 = vunpack.c.l.b16 %v705
          %v745 = vunpack.c.l.b16 %v706
          %v746 = vunpack.c.l.b16 %v707
          %v747 = vunpack.c.l.b16 %v708
          %v748 = vunpack.c.l.b16 %v709
          %v749 = vunpack.c.l.b16 %v710
          %v750 = vunpack.c.l.b16 %v711
          %v751 = vunpack.c.l.b16 %v712
          %v752 = vunpack.c.l.b16 %v713
          %v753 = vpack.c.b16 %v738, %v737
          %v754 = vpack.c.b16 %v740, %v739
          %v755 = vpack.c.b16 %v742, %v741
          %v756 = vpack.c.b16 %v744, %v743
          %v757 = vpack.c.b16 %v746, %v745
          %v758 = vpack.c.b16 %v748, %v747
          %v759 = vpack.c.b16 %v750, %v749
          %v760 = vpack.c.b16 %v752, %v751
          %769 = vmatprep.subr.bf16.mxu0 0
          %770 = vmatpush1.bf16.msra.mxu0 %v753
          %771 = vmatprep.subr.bf16.mxu0 0
          %772 = vmatpush1.bf16.msra.mxu0 %v754
          %773 = vmatprep.subr.bf16.mxu0 0
          %774 = vmatpush1.bf16.msra.mxu0 %v755
          %775 = vmatprep.subr.bf16.mxu0 0
          %776 = vmatpush1.bf16.msra.mxu0 %v756
          %777 = vmatprep.subr.bf16.mxu0 0
          %778 = vmatpush1.bf16.msra.mxu0 %v757
          %779 = vmatprep.subr.bf16.mxu0 0
          %780 = vmatpush1.bf16.msra.mxu0 %v758
          %781 = vmatprep.subr.bf16.mxu0 0
          %782 = vmatpush1.bf16.msra.mxu0 %v759
          %783 = vmatprep.subr.bf16.mxu0 0
          %784 = vmatpush1.bf16.msra.mxu0 %v760
          %785 = vmatprep.subr.bf16.mxu0 0
          %786 = vmatpush1.bf16.msra.mxu0 0
          %787 = vmatprep.subr.bf16.mxu0 0
          %788 = vmatpush1.bf16.msra.mxu0 0
          %789 = vmatprep.subr.bf16.mxu0 0
          %790 = vmatpush1.bf16.msra.mxu0 0
          %791 = vmatprep.subr.bf16.mxu0 0
          %792 = vmatpush1.bf16.msra.mxu0 0
          %793 = vmatprep.subr.bf16.mxu0 0
          %794 = vmatpush1.bf16.msra.mxu0 0
          %795 = vmatprep.subr.bf16.mxu0 0
          %796 = vmatpush1.bf16.msra.mxu0 0
          %797 = vmatprep.subr.bf16.mxu0 0
          %798 = vmatpush1.bf16.msra.mxu0 0
          %799 = vmatprep.subr.bf16.mxu0 0
          %800 = vmatpush1.bf16.msra.mxu0 0
          %801 = vmatprep.mubr.bf16.mxu0 0
          %802 = vmatmul.mubr.bf16.gmra.mrb[0].mxu0 %v694
          %v803 = vpop.f32.mrb[0].mxu0
          %v804 = vadd.f32 %v719, %v803
          %v805 = vpop.f32.mrb[0].mxu0
          %v806 = vpop.f32.mrb[0].mxu0
          %v807 = vadd.f32 %v719, %v806
          %v808 = vpop.f32.mrb[0].mxu0
          %809 = vmatprep.mubr.bf16.mxu0 0
          %810 = vmatmul.mubr.bf16.gmra.mrb[0].mxu0 %v695
          %v811 = vpop.f32.mrb[0].mxu0
          %v812 = vadd.f32 %v719, %v811
          %v813 = vpop.f32.mrb[0].mxu0
          %v814 = vpop.f32.mrb[0].mxu0
          %v815 = vadd.f32 %v719, %v814
          %v816 = vpop.f32.mrb[0].mxu0
          %817 = vmatprep.mubr.bf16.mxu0 0
          %818 = vmatmul.mubr.bf16.gmra.mrb[0].mxu0 %v696
          %v819 = vpop.f32.mrb[0].mxu0
          %v820 = vadd.f32 %v719, %v819
          %v821 = vpop.f32.mrb[0].mxu0
          %v822 = vpop.f32.mrb[0].mxu0
          %v823 = vadd.f32 %v719, %v822
          %v824 = vpop.f32.mrb[0].mxu0
          %825 = vmatprep.mubr.bf16.mxu0 0
          %826 = vmatmul.mubr.bf16.gmra.mrb[0].mxu0 %v697
          %v827 = vpop.f32.mrb[0].mxu0
          %v828 = vadd.f32 %v719, %v827
          %v829 = vpop.f32.mrb[0].mxu0
          %v830 = vpop.f32.mrb[0].mxu0
          %v831 = vadd.f32 %v719, %v830
          %v832 = vpop.f32.mrb[0].mxu0
          %833 = vdwg.mxu0
          %v834 = vld [vmem:[%s7] sm:$0xf]
          %v835 = vld [vmem:[%s7 + $0x4] sm:$0xf]
          %v836 = vld [vmem:[%s7 + $0x8] sm:$0xf]
          %v837 = vld [vmem:[%s7 + $0xc] sm:$0xf]
          %v838 = vld [vmem:[%s7 + $0x10] sm:$0xf]
          %v839 = vld [vmem:[%s7 + $0x14] sm:$0xf]
          %v840 = vld [vmem:[%s7 + $0x18] sm:$0xf]
          %v841 = vld [vmem:[%s7 + $0x1c] sm:$0xf]
          %v842 = vld [vmem:[%s7 + $0x20] sm:$0xf]
          %v843 = vld [vmem:[%s7 + $0x24] sm:$0xf]
          %v844 = vld [vmem:[%s7 + $0x28] sm:$0xf]
          %v845 = vld [vmem:[%s7 + $0x2c] sm:$0xf]
          %v846 = vld [vmem:[%s7 + $0x30] sm:$0xf]
          %v847 = vld [vmem:[%s7 + $0x34] sm:$0xf]
          %v848 = vld [vmem:[%s7 + $0x38] sm:$0xf]
          %v849 = vld [vmem:[%s7 + $0x3c] sm:$0xf]
          %v850 = vld [vmem:[%s8] sm:$0x1]
          %v852 = vlaneseq
          %v853 = vshrl.u32 %v852, 7
          %v854 = vsub.s32 0, %v853
          %v855 = vrot.slane %v850, %v854
          %v873 = vunpack.c.l.b16 %v834
          %v874 = vunpack.c.l.b16 %v835
          %v875 = vunpack.c.l.b16 %v836
          %v876 = vunpack.c.l.b16 %v837
          %v877 = vunpack.c.l.b16 %v838
          %v878 = vunpack.c.l.b16 %v839
          %v879 = vunpack.c.l.b16 %v840
          %v880 = vunpack.c.l.b16 %v841
          %v881 = vunpack.c.l.b16 %v842
          %v882 = vunpack.c.l.b16 %v843
          %v883 = vunpack.c.l.b16 %v844
          %v884 = vunpack.c.l.b16 %v845
          %v885 = vunpack.c.l.b16 %v846
          %v886 = vunpack.c.l.b16 %v847
          %v887 = vunpack.c.l.b16 %v848
          %v888 = vunpack.c.l.b16 %v849
          %v889 = vpack.c.b16 %v874, %v873
          %v890 = vpack.c.b16 %v876, %v875
          %v891 = vpack.c.b16 %v878, %v877
          %v892 = vpack.c.b16 %v880, %v879
          %v893 = vpack.c.b16 %v882, %v881
          %v894 = vpack.c.b16 %v884, %v883
          %v895 = vpack.c.b16 %v886, %v885
          %v896 = vpack.c.b16 %v888, %v887
          %905 = vmatprep.subr.bf16.mxu0 0
          %906 = vmatpush1.bf16.msra.mxu0 %v889
          %907 = vmatprep.subr.bf16.mxu0 0
          %908 = vmatpush1.bf16.msra.mxu0 %v890
          %909 = vmatprep.subr.bf16.mxu0 0
          %910 = vmatpush1.bf16.msra.mxu0 %v891
          %911 = vmatprep.subr.bf16.mxu0 0
          %912 = vmatpush1.bf16.msra.mxu0 %v892
          %913 = vmatprep.subr.bf16.mxu0 0
          %914 = vmatpush1.bf16.msra.mxu0 %v893
          %915 = vmatprep.subr.bf16.mxu0 0
          %916 = vmatpush1.bf16.msra.mxu0 %v894
          %917 = vmatprep.subr.bf16.mxu0 0
          %918 = vmatpush1.bf16.msra.mxu0 %v895
          %919 = vmatprep.subr.bf16.mxu0 0
          %920 = vmatpush1.bf16.msra.mxu0 %v896
          %921 = vmatprep.subr.bf16.mxu0 0
          %922 = vmatpush1.bf16.msra.mxu0 0
          %923 = vmatprep.subr.bf16.mxu0 0
          %924 = vmatpush1.bf16.msra.mxu0 0
          %925 = vmatprep.subr.bf16.mxu0 0
          %926 = vmatpush1.bf16.msra.mxu0 0
          %927 = vmatprep.subr.bf16.mxu0 0
          %928 = vmatpush1.bf16.msra.mxu0 0
          %929 = vmatprep.subr.bf16.mxu0 0
          %930 = vmatpush1.bf16.msra.mxu0 0
          %931 = vmatprep.subr.bf16.mxu0 0
          %932 = vmatpush1.bf16.msra.mxu0 0
          %933 = vmatprep.subr.bf16.mxu0 0
          %934 = vmatpush1.bf16.msra.mxu0 0
          %935 = vmatprep.subr.bf16.mxu0 0
          %936 = vmatpush1.bf16.msra.mxu0 0
          %937 = vmatprep.mubr.bf16.mxu0 0
          %938 = vmatmul.mubr.bf16.gmra.mrb[0].mxu0 %v694
          %v939 = vpop.f32.mrb[0].mxu0
          %v940 = vadd.f32 %v855, %v939
          %v941 = vpop.f32.mrb[0].mxu0
          %v942 = vpop.f32.mrb[0].mxu0
          %v943 = vadd.f32 %v855, %v942
          %v944 = vpop.f32.mrb[0].mxu0
          %945 = vmatprep.mubr.bf16.mxu0 0
          %946 = vmatmul.mubr.bf16.gmra.mrb[0].mxu0 %v695
          %v947 = vpop.f32.mrb[0].mxu0
          %v948 = vadd.f32 %v855, %v947
          %v949 = vpop.f32.mrb[0].mxu0
          %v950 = vpop.f32.mrb[0].mxu0
          %v951 = vadd.f32 %v855, %v950
          %v952 = vpop.f32.mrb[0].mxu0
          %953 = vmatprep.mubr.bf16.mxu0 0
          %954 = vmatmul.mubr.bf16.gmra.mrb[0].mxu0 %v696
          %v955 = vpop.f32.mrb[0].mxu0
          %v956 = vadd.f32 %v855, %v955
          %v957 = vpop.f32.mrb[0].mxu0
          %v958 = vpop.f32.mrb[0].mxu0
          %v959 = vadd.f32 %v855, %v958
          %v960 = vpop.f32.mrb[0].mxu0
          %961 = vmatprep.mubr.bf16.mxu0 0
          %962 = vmatmul.mubr.bf16.gmra.mrb[0].mxu0 %v697
          %v963 = vpop.f32.mrb[0].mxu0
          %v964 = vadd.f32 %v855, %v963
          %v965 = vpop.f32.mrb[0].mxu0
          %v966 = vpop.f32.mrb[0].mxu0
          %v967 = vadd.f32 %v855, %v966
          %v968 = vpop.f32.mrb[0].mxu0
          %969 = vdwg.mxu0
          %v970 = vpack.c.bf16 %v807, %v804
          %v971 = vpack.c.bf16 %v815, %v812
          %v972 = vpack.c.bf16 %v823, %v820
          %v973 = vpack.c.bf16 %v831, %v828
          %vm974 = vcmask 261120
          %975 = vst.msk [vmem:[#allocation2] sm:$0xff] %vm974, %v970
          %976 = vst.msk [vmem:[#allocation2 + $0x8] sm:$0xff] %vm974, %v971
          %977 = vst.msk [vmem:[#allocation2 + $0x10] sm:$0xff] %vm974, %v972
          %978 = vst.msk [vmem:[#allocation2 + $0x18] sm:$0xff] %vm974, %v973
          %v979 = vpack.c.bf16 %v943, %v940
          %v980 = vpack.c.bf16 %v951, %v948
          %v981 = vpack.c.bf16 %v959, %v956
          %v982 = vpack.c.bf16 %v967, %v964
          %983 = vst.msk [vmem:[#allocation3] sm:$0xff] %vm974, %v979
          %984 = vst.msk [vmem:[#allocation3 + $0x8] sm:$0xff] %vm974, %v980
          %985 = vst.msk [vmem:[#allocation3 + $0x10] sm:$0xff] %vm974, %v981
          %986 = vst.msk [vmem:[#allocation3 + $0x18] sm:$0xff] %vm974, %v982
          %s987 = scalar_lea.vmem %s5, 64
          %v988 = vld [vmem:[%s987] sm:$0xf]
          %v989 = vld [vmem:[%s987 + $0x4] sm:$0xf]
          %v990 = vld [vmem:[%s987 + $0x8] sm:$0xf]
          %v991 = vld [vmem:[%s987 + $0xc] sm:$0xf]
          %v992 = vld [vmem:[%s987 + $0x10] sm:$0xf]
          %v993 = vld [vmem:[%s987 + $0x14] sm:$0xf]
          %v994 = vld [vmem:[%s987 + $0x18] sm:$0xf]
          %v995 = vld [vmem:[%s987 + $0x1c] sm:$0xf]
          %v996 = vld [vmem:[%s987 + $0x20] sm:$0xf]
          %v997 = vld [vmem:[%s987 + $0x24] sm:$0xf]
          %v998 = vld [vmem:[%s987 + $0x28] sm:$0xf]
          %v999 = vld [vmem:[%s987 + $0x2c] sm:$0xf]
          %v1000 = vld [vmem:[%s987 + $0x30] sm:$0xf]
          %v1001 = vld [vmem:[%s987 + $0x34] sm:$0xf]
          %v1002 = vld [vmem:[%s987 + $0x38] sm:$0xf]
          %v1003 = vld [vmem:[%s987 + $0x3c] sm:$0xf]
          %s1004 = scalar_lea.vmem %s6, 1
          %v1005 = vld [vmem:[%s1004] sm:$0x1]
          %v1007 = vlaneseq
          %v1008 = vshrl.u32 %v1007, 7
          %v1009 = vsub.s32 0, %v1008
          %v1010 = vrot.slane %v1005, %v1009
          %v1028 = vunpack.c.l.b16 %v988
          %v1029 = vunpack.c.l.b16 %v989
          %v1030 = vunpack.c.l.b16 %v990
          %v1031 = vunpack.c.l.b16 %v991
          %v1032 = vunpack.c.l.b16 %v992
          %v1033 = vunpack.c.l.b16 %v993
          %v1034 = vunpack.c.l.b16 %v994
          %v1035 = vunpack.c.l.b16 %v995
          %v1036 = vunpack.c.l.b16 %v996
          %v1037 = vunpack.c.l.b16 %v997
          %v1038 = vunpack.c.l.b16 %v998
          %v1039 = vunpack.c.l.b16 %v999
          %v1040 = vunpack.c.l.b16 %v1000
          %v1041 = vunpack.c.l.b16 %v1001
          %v1042 = vunpack.c.l.b16 %v1002
          %v1043 = vunpack.c.l.b16 %v1003
          %v1044 = vpack.c.b16 %v1029, %v1028
          %v1045 = vpack.c.b16 %v1031, %v1030
          %v1046 = vpack.c.b16 %v1033, %v1032
          %v1047 = vpack.c.b16 %v1035, %v1034
          %v1048 = vpack.c.b16 %v1037, %v1036
          %v1049 = vpack.c.b16 %v1039, %v1038
          %v1050 = vpack.c.b16 %v1041, %v1040
          %v1051 = vpack.c.b16 %v1043, %v1042
          %1060 = vmatprep.subr.bf16.mxu0 0
          %1061 = vmatpush1.bf16.msra.mxu0 %v1044
          %1062 = vmatprep.subr.bf16.mxu0 0
          %1063 = vmatpush1.bf16.msra.mxu0 %v1045
          %1064 = vmatprep.subr.bf16.mxu0 0
          %1065 = vmatpush1.bf16.msra.mxu0 %v1046
          %1066 = vmatprep.subr.bf16.mxu0 0
          %1067 = vmatpush1.bf16.msra.mxu0 %v1047
          %1068 = vmatprep.subr.bf16.mxu0 0
          %1069 = vmatpush1.bf16.msra.mxu0 %v1048
          %1070 = vmatprep.subr.bf16.mxu0 0
          %1071 = vmatpush1.bf16.msra.mxu0 %v1049
          %1072 = vmatprep.subr.bf16.mxu0 0
          %1073 = vmatpush1.bf16.msra.mxu0 %v1050
          %1074 = vmatprep.subr.bf16.mxu0 0
          %1075 = vmatpush1.bf16.msra.mxu0 %v1051
          %1076 = vmatprep.subr.bf16.mxu0 0
          %1077 = vmatpush1.bf16.msra.mxu0 0
          %1078 = vmatprep.subr.bf16.mxu0 0
          %1079 = vmatpush1.bf16.msra.mxu0 0
          %1080 = vmatprep.subr.bf16.mxu0 0
          %1081 = vmatpush1.bf16.msra.mxu0 0
          %1082 = vmatprep.subr.bf16.mxu0 0
          %1083 = vmatpush1.bf16.msra.mxu0 0
          %1084 = vmatprep.subr.bf16.mxu0 0
          %1085 = vmatpush1.bf16.msra.mxu0 0
          %1086 = vmatprep.subr.bf16.mxu0 0
          %1087 = vmatpush1.bf16.msra.mxu0 0
          %1088 = vmatprep.subr.bf16.mxu0 0
          %1089 = vmatpush1.bf16.msra.mxu0 0
          %1090 = vmatprep.subr.bf16.mxu0 0
          %1091 = vmatpush1.bf16.msra.mxu0 0
          %1092 = vmatprep.mubr.bf16.mxu0 0
          %1093 = vmatmul.mubr.bf16.gmra.mrb[0].mxu0 %v694
          %v1094 = vpop.f32.mrb[0].mxu0
          %v1095 = vadd.f32 %v1010, %v1094
          %v1096 = vpop.f32.mrb[0].mxu0
          %v1097 = vpop.f32.mrb[0].mxu0
          %v1098 = vadd.f32 %v1010, %v1097
          %v1099 = vpop.f32.mrb[0].mxu0
          %1100 = vmatprep.mubr.bf16.mxu0 0
          %1101 = vmatmul.mubr.bf16.gmra.mrb[0].mxu0 %v695
          %v1102 = vpop.f32.mrb[0].mxu0
          %v1103 = vadd.f32 %v1010, %v1102
          %v1104 = vpop.f32.mrb[0].mxu0
          %v1105 = vpop.f32.mrb[0].mxu0
          %v1106 = vadd.f32 %v1010, %v1105
          %v1107 = vpop.f32.mrb[0].mxu0
          %1108 = vmatprep.mubr.bf16.mxu0 0
          %1109 = vmatmul.mubr.bf16.gmra.mrb[0].mxu0 %v696
          %v1110 = vpop.f32.mrb[0].mxu0
          %v1111 = vadd.f32 %v1010, %v1110
          %v1112 = vpop.f32.mrb[0].mxu0
          %v1113 = vpop.f32.mrb[0].mxu0
          %v1114 = vadd.f32 %v1010, %v1113
          %v1115 = vpop.f32.mrb[0].mxu0
          %1116 = vmatprep.mubr.bf16.mxu0 0
          %1117 = vmatmul.mubr.bf16.gmra.mrb[0].mxu0 %v697
          %v1118 = vpop.f32.mrb[0].mxu0
          %v1119 = vadd.f32 %v1010, %v1118
          %v1120 = vpop.f32.mrb[0].mxu0
          %v1121 = vpop.f32.mrb[0].mxu0
          %v1122 = vadd.f32 %v1010, %v1121
          %v1123 = vpop.f32.mrb[0].mxu0
          %1124 = vdwg.mxu0
          %s1125 = scalar_lea.vmem %s7, 64
          %v1126 = vld [vmem:[%s1125] sm:$0xf]
          %v1127 = vld [vmem:[%s1125 + $0x4] sm:$0xf]
          %v1128 = vld [vmem:[%s1125 + $0x8] sm:$0xf]
          %v1129 = vld [vmem:[%s1125 + $0xc] sm:$0xf]
          %v1130 = vld [vmem:[%s1125 + $0x10] sm:$0xf]
          %v1131 = vld [vmem:[%s1125 + $0x14] sm:$0xf]
          %v1132 = vld [vmem:[%s1125 + $0x18] sm:$0xf]
          %v1133 = vld [vmem:[%s1125 + $0x1c] sm:$0xf]
          %v1134 = vld [vmem:[%s1125 + $0x20] sm:$0xf]
          %v1135 = vld [vmem:[%s1125 + $0x24] sm:$0xf]
          %v1136 = vld [vmem:[%s1125 + $0x28] sm:$0xf]
          %v1137 = vld [vmem:[%s1125 + $0x2c] sm:$0xf]
          %v1138 = vld [vmem:[%s1125 + $0x30] sm:$0xf]
          %v1139 = vld [vmem:[%s1125 + $0x34] sm:$0xf]
          %v1140 = vld [vmem:[%s1125 + $0x38] sm:$0xf]
          %v1141 = vld [vmem:[%s1125 + $0x3c] sm:$0xf]
          %s1142 = scalar_lea.vmem %s8, 1
          %v1143 = vld [vmem:[%s1142] sm:$0x1]
          %v1145 = vlaneseq
          %v1146 = vshrl.u32 %v1145, 7
          %v1147 = vsub.s32 0, %v1146
          %v1148 = vrot.slane %v1143, %v1147
          %v1166 = vunpack.c.l.b16 %v1126
          %v1167 = vunpack.c.l.b16 %v1127
          %v1168 = vunpack.c.l.b16 %v1128
          %v1169 = vunpack.c.l.b16 %v1129
          %v1170 = vunpack.c.l.b16 %v1130
          %v1171 = vunpack.c.l.b16 %v1131
          %v1172 = vunpack.c.l.b16 %v1132
          %v1173 = vunpack.c.l.b16 %v1133
          %v1174 = vunpack.c.l.b16 %v1134
          %v1175 = vunpack.c.l.b16 %v1135
          %v1176 = vunpack.c.l.b16 %v1136
          %v1177 = vunpack.c.l.b16 %v1137
          %v1178 = vunpack.c.l.b16 %v1138
          %v1179 = vunpack.c.l.b16 %v1139
          %v1180 = vunpack.c.l.b16 %v1140
          %v1181 = vunpack.c.l.b16 %v1141
          %v1182 = vpack.c.b16 %v1167, %v1166
          %v1183 = vpack.c.b16 %v1169, %v1168
          %v1184 = vpack.c.b16 %v1171, %v1170
          %v1185 = vpack.c.b16 %v1173, %v1172
          %v1186 = vpack.c.b16 %v1175, %v1174
          %v1187 = vpack.c.b16 %v1177, %v1176
          %v1188 = vpack.c.b16 %v1179, %v1178
          %v1189 = vpack.c.b16 %v1181, %v1180
          %1198 = vmatprep.subr.bf16.mxu0 0
          %1199 = vmatpush1.bf16.msra.mxu0 %v1182
          %1200 = vmatprep.subr.bf16.mxu0 0
          %1201 = vmatpush1.bf16.msra.mxu0 %v1183
          %1202 = vmatprep.subr.bf16.mxu0 0
          %1203 = vmatpush1.bf16.msra.mxu0 %v1184
          %1204 = vmatprep.subr.bf16.mxu0 0
          %1205 = vmatpush1.bf16.msra.mxu0 %v1185
          %1206 = vmatprep.subr.bf16.mxu0 0
          %1207 = vmatpush1.bf16.msra.mxu0 %v1186
          %1208 = vmatprep.subr.bf16.mxu0 0
          %1209 = vmatpush1.bf16.msra.mxu0 %v1187
          %1210 = vmatprep.subr.bf16.mxu0 0
          %1211 = vmatpush1.bf16.msra.mxu0 %v1188
          %1212 = vmatprep.subr.bf16.mxu0 0
          %1213 = vmatpush1.bf16.msra.mxu0 %v1189
          %1214 = vmatprep.subr.bf16.mxu0 0
          %1215 = vmatpush1.bf16.msra.mxu0 0
          %1216 = vmatprep.subr.bf16.mxu0 0
          %1217 = vmatpush1.bf16.msra.mxu0 0
          %1218 = vmatprep.subr.bf16.mxu0 0
          %1219 = vmatpush1.bf16.msra.mxu0 0
          %1220 = vmatprep.subr.bf16.mxu0 0
          %1221 = vmatpush1.bf16.msra.mxu0 0
          %1222 = vmatprep.subr.bf16.mxu0 0
          %1223 = vmatpush1.bf16.msra.mxu0 0
          %1224 = vmatprep.subr.bf16.mxu0 0
          %1225 = vmatpush1.bf16.msra.mxu0 0
          %1226 = vmatprep.subr.bf16.mxu0 0
          %1227 = vmatpush1.bf16.msra.mxu0 0
          %1228 = vmatprep.subr.bf16.mxu0 0
          %1229 = vmatpush1.bf16.msra.mxu0 0
          %1230 = vmatprep.mubr.bf16.mxu0 0
          %1231 = vmatmul.mubr.bf16.gmra.mrb[0].mxu0 %v694
          %v1232 = vpop.f32.mrb[0].mxu0
          %v1233 = vadd.f32 %v1148, %v1232
          %v1234 = vpop.f32.mrb[0].mxu0
          %v1235 = vpop.f32.mrb[0].mxu0
          %v1236 = vadd.f32 %v1148, %v1235
          %v1237 = vpop.f32.mrb[0].mxu0
          %1238 = vmatprep.mubr.bf16.mxu0 0
          %1239 = vmatmul.mubr.bf16.gmra.mrb[0].mxu0 %v695
          %v1240 = vpop.f32.mrb[0].mxu0
          %v1241 = vadd.f32 %v1148, %v1240
          %v1242 = vpop.f32.mrb[0].mxu0
          %v1243 = vpop.f32.mrb[0].mxu0
          %v1244 = vadd.f32 %v1148, %v1243
          %v1245 = vpop.f32.mrb[0].mxu0
          %1246 = vmatprep.mubr.bf16.mxu0 0
          %1247 = vmatmul.mubr.bf16.gmra.mrb[0].mxu0 %v696
          %v1248 = vpop.f32.mrb[0].mxu0
          %v1249 = vadd.f32 %v1148, %v1248
          %v1250 = vpop.f32.mrb[0].mxu0
          %v1251 = vpop.f32.mrb[0].mxu0
          %v1252 = vadd.f32 %v1148, %v1251
          %v1253 = vpop.f32.mrb[0].mxu0
          %1254 = vmatprep.mubr.bf16.mxu0 0
          %1255 = vmatmul.mubr.bf16.gmra.mrb[0].mxu0 %v697
          %v1256 = vpop.f32.mrb[0].mxu0
          %v1257 = vadd.f32 %v1148, %v1256
          %v1258 = vpop.f32.mrb[0].mxu0
          %v1259 = vpop.f32.mrb[0].mxu0
          %v1260 = vadd.f32 %v1148, %v1259
          %v1261 = vpop.f32.mrb[0].mxu0
          %1262 = vdwg.mxu0
          %v1263 = vpack.c.bf16 %v1098, %v1095
          %v1264 = vpack.c.bf16 %v1106, %v1103
          %v1265 = vpack.c.bf16 %v1114, %v1111
          %v1266 = vpack.c.bf16 %v1122, %v1119
          %s1267 = sadd.s32 0, 4
          %s1268 = smul.addr %s1267, 8
          %s1269 = scalar_lea.vmem [#allocation2], %s1268
          %1270 = vst.msk [vmem:[%s1269] sm:$0xff] %vm974, %v1263
          %1271 = vst.msk [vmem:[%s1269 + $0x8] sm:$0xff] %vm974, %v1264
          %1272 = vst.msk [vmem:[%s1269 + $0x10] sm:$0xff] %vm974, %v1265
          %1273 = vst.msk [vmem:[%s1269 + $0x18] sm:$0xff] %vm974, %v1266
          %v1274 = vpack.c.bf16 %v1236, %v1233
          %v1275 = vpack.c.bf16 %v1244, %v1241
          %v1276 = vpack.c.bf16 %v1252, %v1249
          %v1277 = vpack.c.bf16 %v1260, %v1257
          %s1278 = smul.addr %s1267, 8
          %s1279 = scalar_lea.vmem [#allocation3], %s1278
          %1280 = vst.msk [vmem:[%s1279] sm:$0xff] %vm974, %v1274
          %1281 = vst.msk [vmem:[%s1279 + $0x8] sm:$0xff] %vm974, %v1275
          %1282 = vst.msk [vmem:[%s1279 + $0x10] sm:$0xff] %vm974, %v1276
          %1283 = vst.msk [vmem:[%s1279 + $0x18] sm:$0xff] %vm974, %v1277
          %s1284 = scalar_lea.vmem %s5, 128
          %v1285 = vld [vmem:[%s1284] sm:$0xf]
          %v1286 = vld [vmem:[%s1284 + $0x4] sm:$0xf]
          %v1287 = vld [vmem:[%s1284 + $0x8] sm:$0xf]
          %v1288 = vld [vmem:[%s1284 + $0xc] sm:$0xf]
          %v1289 = vld [vmem:[%s1284 + $0x10] sm:$0xf]
          %v1290 = vld [vmem:[%s1284 + $0x14] sm:$0xf]
          %v1291 = vld [vmem:[%s1284 + $0x18] sm:$0xf]
          %v1292 = vld [vmem:[%s1284 + $0x1c] sm:$0xf]
          %v1293 = vld [vmem:[%s1284 + $0x20] sm:$0xf]
          %v1294 = vld [vmem:[%s1284 + $0x24] sm:$0xf]
          %v1295 = vld [vmem:[%s1284 + $0x28] sm:$0xf]
          %v1296 = vld [vmem:[%s1284 + $0x2c] sm:$0xf]
          %v1297 = vld [vmem:[%s1284 + $0x30] sm:$0xf]
          %v1298 = vld [vmem:[%s1284 + $0x34] sm:$0xf]
          %v1299 = vld [vmem:[%s1284 + $0x38] sm:$0xf]
          %v1300 = vld [vmem:[%s1284 + $0x3c] sm:$0xf]
          %s1301 = scalar_lea.vmem %s6, 2
          %v1302 = vld [vmem:[%s1301] sm:$0x1]
          %v1304 = vlaneseq
          %v1305 = vshrl.u32 %v1304, 7
          %v1306 = vsub.s32 0, %v1305
          %v1307 = vrot.slane %v1302, %v1306
          %v1325 = vunpack.c.l.b16 %v1285
          %v1326 = vunpack.c.l.b16 %v1286
          %v1327 = vunpack.c.l.b16 %v1287
          %v1328 = vunpack.c.l.b16 %v1288
          %v1329 = vunpack.c.l.b16 %v1289
          %v1330 = vunpack.c.l.b16 %v1290
          %v1331 = vunpack.c.l.b16 %v1291
          %v1332 = vunpack.c.l.b16 %v1292
          %v1333 = vunpack.c.l.b16 %v1293
          %v1334 = vunpack.c.l.b16 %v1294
          %v1335 = vunpack.c.l.b16 %v1295
          %v1336 = vunpack.c.l.b16 %v1296
          %v1337 = vunpack.c.l.b16 %v1297
          %v1338 = vunpack.c.l.b16 %v1298
          %v1339 = vunpack.c.l.b16 %v1299
          %v1340 = vunpack.c.l.b16 %v1300
          %v1341 = vpack.c.b16 %v1326, %v1325
          %v1342 = vpack.c.b16 %v1328, %v1327
          %v1343 = vpack.c.b16 %v1330, %v1329
          %v1344 = vpack.c.b16 %v1332, %v1331
          %v1345 = vpack.c.b16 %v1334, %v1333
          %v1346 = vpack.c.b16 %v1336, %v1335
          %v1347 = vpack.c.b16 %v1338, %v1337
          %v1348 = vpack.c.b16 %v1340, %v1339
          %1357 = vmatprep.subr.bf16.mxu0 0
          %1358 = vmatpush1.bf16.msra.mxu0 %v1341
          %1359 = vmatprep.subr.bf16.mxu0 0
          %1360 = vmatpush1.bf16.msra.mxu0 %v1342
          %1361 = vmatprep.subr.bf16.mxu0 0
          %1362 = vmatpush1.bf16.msra.mxu0 %v1343
          %1363 = vmatprep.subr.bf16.mxu0 0
          %1364 = vmatpush1.bf16.msra.mxu0 %v1344
          %1365 = vmatprep.subr.bf16.mxu0 0
          %1366 = vmatpush1.bf16.msra.mxu0 %v1345
          %1367 = vmatprep.subr.bf16.mxu0 0
          %1368 = vmatpush1.bf16.msra.mxu0 %v1346
          %1369 = vmatprep.subr.bf16.mxu0 0
          %1370 = vmatpush1.bf16.msra.mxu0 %v1347
          %1371 = vmatprep.subr.bf16.mxu0 0
          %1372 = vmatpush1.bf16.msra.mxu0 %v1348
          %1373 = vmatprep.subr.bf16.mxu0 0
          %1374 = vmatpush1.bf16.msra.mxu0 0
          %1375 = vmatprep.subr.bf16.mxu0 0
          %1376 = vmatpush1.bf16.msra.mxu0 0
          %1377 = vmatprep.subr.bf16.mxu0 0
          %1378 = vmatpush1.bf16.msra.mxu0 0
          %1379 = vmatprep.subr.bf16.mxu0 0
          %1380 = vmatpush1.bf16.msra.mxu0 0
          %1381 = vmatprep.subr.bf16.mxu0 0
          %1382 = vmatpush1.bf16.msra.mxu0 0
          %1383 = vmatprep.subr.bf16.mxu0 0
          %1384 = vmatpush1.bf16.msra.mxu0 0
          %1385 = vmatprep.subr.bf16.mxu0 0
          %1386 = vmatpush1.bf16.msra.mxu0 0
          %1387 = vmatprep.subr.bf16.mxu0 0
          %1388 = vmatpush1.bf16.msra.mxu0 0
          %1389 = vmatprep.mubr.bf16.mxu0 0
          %1390 = vmatmul.mubr.bf16.gmra.mrb[0].mxu0 %v694
          %v1391 = vpop.f32.mrb[0].mxu0
          %v1392 = vadd.f32 %v1307, %v1391
          %v1393 = vpop.f32.mrb[0].mxu0
          %v1394 = vpop.f32.mrb[0].mxu0
          %v1395 = vadd.f32 %v1307, %v1394
          %v1396 = vpop.f32.mrb[0].mxu0
          %1397 = vmatprep.mubr.bf16.mxu0 0
          %1398 = vmatmul.mubr.bf16.gmra.mrb[0].mxu0 %v695
          %v1399 = vpop.f32.mrb[0].mxu0
          %v1400 = vadd.f32 %v1307, %v1399
          %v1401 = vpop.f32.mrb[0].mxu0
          %v1402 = vpop.f32.mrb[0].mxu0
          %v1403 = vadd.f32 %v1307, %v1402
          %v1404 = vpop.f32.mrb[0].mxu0
          %1405 = vmatprep.mubr.bf16.mxu0 0
          %1406 = vmatmul.mubr.bf16.gmra.mrb[0].mxu0 %v696
          %v1407 = vpop.f32.mrb[0].mxu0
          %v1408 = vadd.f32 %v1307, %v1407
          %v1409 = vpop.f32.mrb[0].mxu0
          %v1410 = vpop.f32.mrb[0].mxu0
          %v1411 = vadd.f32 %v1307, %v1410
          %v1412 = vpop.f32.mrb[0].mxu0
          %1413 = vmatprep.mubr.bf16.mxu0 0
          %1414 = vmatmul.mubr.bf16.gmra.mrb[0].mxu0 %v697
          %v1415 = vpop.f32.mrb[0].mxu0
          %v1416 = vadd.f32 %v1307, %v1415
          %v1417 = vpop.f32.mrb[0].mxu0
          %v1418 = vpop.f32.mrb[0].mxu0
          %v1419 = vadd.f32 %v1307, %v1418
          %v1420 = vpop.f32.mrb[0].mxu0
          %1421 = vdwg.mxu0
          %s1422 = scalar_lea.vmem %s7, 128
          %v1423 = vld [vmem:[%s1422] sm:$0xf]
          %v1424 = vld [vmem:[%s1422 + $0x4] sm:$0xf]
          %v1425 = vld [vmem:[%s1422 + $0x8] sm:$0xf]
          %v1426 = vld [vmem:[%s1422 + $0xc] sm:$0xf]
          %v1427 = vld [vmem:[%s1422 + $0x10] sm:$0xf]
          %v1428 = vld [vmem:[%s1422 + $0x14] sm:$0xf]
          %v1429 = vld [vmem:[%s1422 + $0x18] sm:$0xf]
          %v1430 = vld [vmem:[%s1422 + $0x1c] sm:$0xf]
          %v1431 = vld [vmem:[%s1422 + $0x20] sm:$0xf]
          %v1432 = vld [vmem:[%s1422 + $0x24] sm:$0xf]
          %v1433 = vld [vmem:[%s1422 + $0x28] sm:$0xf]
          %v1434 = vld [vmem:[%s1422 + $0x2c] sm:$0xf]
          %v1435 = vld [vmem:[%s1422 + $0x30] sm:$0xf]
          %v1436 = vld [vmem:[%s1422 + $0x34] sm:$0xf]
          %v1437 = vld [vmem:[%s1422 + $0x38] sm:$0xf]
          %v1438 = vld [vmem:[%s1422 + $0x3c] sm:$0xf]
          %s1439 = scalar_lea.vmem %s8, 2
          %v1440 = vld [vmem:[%s1439] sm:$0x1]
          %v1442 = vlaneseq
          %v1443 = vshrl.u32 %v1442, 7
          %v1444 = vsub.s32 0, %v1443
          %v1445 = vrot.slane %v1440, %v1444
          %v1463 = vunpack.c.l.b16 %v1423
          %v1464 = vunpack.c.l.b16 %v1424
          %v1465 = vunpack.c.l.b16 %v1425
          %v1466 = vunpack.c.l.b16 %v1426
          %v1467 = vunpack.c.l.b16 %v1427
          %v1468 = vunpack.c.l.b16 %v1428
          %v1469 = vunpack.c.l.b16 %v1429
          %v1470 = vunpack.c.l.b16 %v1430
          %v1471 = vunpack.c.l.b16 %v1431
          %v1472 = vunpack.c.l.b16 %v1432
          %v1473 = vunpack.c.l.b16 %v1433
          %v1474 = vunpack.c.l.b16 %v1434
          %v1475 = vunpack.c.l.b16 %v1435
          %v1476 = vunpack.c.l.b16 %v1436
          %v1477 = vunpack.c.l.b16 %v1437
          %v1478 = vunpack.c.l.b16 %v1438
          %v1479 = vpack.c.b16 %v1464, %v1463
          %v1480 = vpack.c.b16 %v1466, %v1465
          %v1481 = vpack.c.b16 %v1468, %v1467
          %v1482 = vpack.c.b16 %v1470, %v1469
          %v1483 = vpack.c.b16 %v1472, %v1471
          %v1484 = vpack.c.b16 %v1474, %v1473
          %v1485 = vpack.c.b16 %v1476, %v1475
          %v1486 = vpack.c.b16 %v1478, %v1477
          %1495 = vmatprep.subr.bf16.mxu0 0
          %1496 = vmatpush1.bf16.msra.mxu0 %v1479
          %1497 = vmatprep.subr.bf16.mxu0 0
          %1498 = vmatpush1.bf16.msra.mxu0 %v1480
          %1499 = vmatprep.subr.bf16.mxu0 0
          %1500 = vmatpush1.bf16.msra.mxu0 %v1481
          %1501 = vmatprep.subr.bf16.mxu0 0
          %1502 = vmatpush1.bf16.msra.mxu0 %v1482
          %1503 = vmatprep.subr.bf16.mxu0 0
          %1504 = vmatpush1.bf16.msra.mxu0 %v1483
          %1505 = vmatprep.subr.bf16.mxu0 0
          %1506 = vmatpush1.bf16.msra.mxu0 %v1484
          %1507 = vmatprep.subr.bf16.mxu0 0
          %1508 = vmatpush1.bf16.msra.mxu0 %v1485
          %1509 = vmatprep.subr.bf16.mxu0 0
          %1510 = vmatpush1.bf16.msra.mxu0 %v1486
          %1511 = vmatprep.subr.bf16.mxu0 0
          %1512 = vmatpush1.bf16.msra.mxu0 0
          %1513 = vmatprep.subr.bf16.mxu0 0
          %1514 = vmatpush1.bf16.msra.mxu0 0
          %1515 = vmatprep.subr.bf16.mxu0 0
          %1516 = vmatpush1.bf16.msra.mxu0 0
          %1517 = vmatprep.subr.bf16.mxu0 0
          %1518 = vmatpush1.bf16.msra.mxu0 0
          %1519 = vmatprep.subr.bf16.mxu0 0
          %1520 = vmatpush1.bf16.msra.mxu0 0
          %1521 = vmatprep.subr.bf16.mxu0 0
          %1522 = vmatpush1.bf16.msra.mxu0 0
          %1523 = vmatprep.subr.bf16.mxu0 0
          %1524 = vmatpush1.bf16.msra.mxu0 0
          %1525 = vmatprep.subr.bf16.mxu0 0
          %1526 = vmatpush1.bf16.msra.mxu0 0
          %1527 = vmatprep.mubr.bf16.mxu0 0
          %1528 = vmatmul.mubr.bf16.gmra.mrb[0].mxu0 %v694
          %v1529 = vpop.f32.mrb[0].mxu0
          %v1530 = vadd.f32 %v1445, %v1529
          %v1531 = vpop.f32.mrb[0].mxu0
          %v1532 = vpop.f32.mrb[0].mxu0
          %v1533 = vadd.f32 %v1445, %v1532
          %v1534 = vpop.f32.mrb[0].mxu0
          %1535 = vmatprep.mubr.bf16.mxu0 0
          %1536 = vmatmul.mubr.bf16.gmra.mrb[0].mxu0 %v695
          %v1537 = vpop.f32.mrb[0].mxu0
          %v1538 = vadd.f32 %v1445, %v1537
          %v1539 = vpop.f32.mrb[0].mxu0
          %v1540 = vpop.f32.mrb[0].mxu0
          %v1541 = vadd.f32 %v1445, %v1540
          %v1542 = vpop.f32.mrb[0].mxu0
          %1543 = vmatprep.mubr.bf16.mxu0 0
          %1544 = vmatmul.mubr.bf16.gmra.mrb[0].mxu0 %v696
          %v1545 = vpop.f32.mrb[0].mxu0
          %v1546 = vadd.f32 %v1445, %v1545
          %v1547 = vpop.f32.mrb[0].mxu0
          %v1548 = vpop.f32.mrb[0].mxu0
          %v1549 = vadd.f32 %v1445, %v1548
          %v1550 = vpop.f32.mrb[0].mxu0
          %1551 = vmatprep.mubr.bf16.mxu0 0
          %1552 = vmatmul.mubr.bf16.gmra.mrb[0].mxu0 %v697
          %v1553 = vpop.f32.mrb[0].mxu0
          %v1554 = vadd.f32 %v1445, %v1553
          %v1555 = vpop.f32.mrb[0].mxu0
          %v1556 = vpop.f32.mrb[0].mxu0
          %v1557 = vadd.f32 %v1445, %v1556
          %v1558 = vpop.f32.mrb[0].mxu0
          %1559 = vdwg.mxu0
          %v1560 = vpack.c.bf16 %v1395, %v1392
          %v1561 = vpack.c.bf16 %v1403, %v1400
          %v1562 = vpack.c.bf16 %v1411, %v1408
          %v1563 = vpack.c.bf16 %v1419, %v1416
          %s1564 = sadd.s32 0, 8
          %s1565 = smul.addr %s1564, 8
          %s1566 = scalar_lea.vmem [#allocation2], %s1565
          %1567 = vst.msk [vmem:[%s1566] sm:$0xff] %vm974, %v1560
          %1568 = vst.msk [vmem:[%s1566 + $0x8] sm:$0xff] %vm974, %v1561
          %1569 = vst.msk [vmem:[%s1566 + $0x10] sm:$0xff] %vm974, %v1562
          %1570 = vst.msk [vmem:[%s1566 + $0x18] sm:$0xff] %vm974, %v1563
          %v1571 = vpack.c.bf16 %v1533, %v1530
          %v1572 = vpack.c.bf16 %v1541, %v1538
          %v1573 = vpack.c.bf16 %v1549, %v1546
          %v1574 = vpack.c.bf16 %v1557, %v1554
          %s1575 = smul.addr %s1564, 8
          %s1576 = scalar_lea.vmem [#allocation3], %s1575
          %1577 = vst.msk [vmem:[%s1576] sm:$0xff] %vm974, %v1571
          %1578 = vst.msk [vmem:[%s1576 + $0x8] sm:$0xff] %vm974, %v1572
          %1579 = vst.msk [vmem:[%s1576 + $0x10] sm:$0xff] %vm974, %v1573
          %1580 = vst.msk [vmem:[%s1576 + $0x18] sm:$0xff] %vm974, %v1574
          %s1581 = scalar_lea.vmem %s5, 192
          %v1582 = vld [vmem:[%s1581] sm:$0xf]
          %v1583 = vld [vmem:[%s1581 + $0x4] sm:$0xf]
          %v1584 = vld [vmem:[%s1581 + $0x8] sm:$0xf]
          %v1585 = vld [vmem:[%s1581 + $0xc] sm:$0xf]
          %v1586 = vld [vmem:[%s1581 + $0x10] sm:$0xf]
          %v1587 = vld [vmem:[%s1581 + $0x14] sm:$0xf]
          %v1588 = vld [vmem:[%s1581 + $0x18] sm:$0xf]
          %v1589 = vld [vmem:[%s1581 + $0x1c] sm:$0xf]
          %v1590 = vld [vmem:[%s1581 + $0x20] sm:$0xf]
          %v1591 = vld [vmem:[%s1581 + $0x24] sm:$0xf]
          %v1592 = vld [vmem:[%s1581 + $0x28] sm:$0xf]
          %v1593 = vld [vmem:[%s1581 + $0x2c] sm:$0xf]
          %v1594 = vld [vmem:[%s1581 + $0x30] sm:$0xf]
          %v1595 = vld [vmem:[%s1581 + $0x34] sm:$0xf]
          %v1596 = vld [vmem:[%s1581 + $0x38] sm:$0xf]
          %v1597 = vld [vmem:[%s1581 + $0x3c] sm:$0xf]
          %s1598 = scalar_lea.vmem %s6, 3
          %v1599 = vld [vmem:[%s1598] sm:$0x1]
          %v1601 = vlaneseq
          %v1602 = vshrl.u32 %v1601, 7
          %v1603 = vsub.s32 0, %v1602
          %v1604 = vrot.slane %v1599, %v1603
          %v1622 = vunpack.c.l.b16 %v1582
          %v1623 = vunpack.c.l.b16 %v1583
          %v1624 = vunpack.c.l.b16 %v1584
          %v1625 = vunpack.c.l.b16 %v1585
          %v1626 = vunpack.c.l.b16 %v1586
          %v1627 = vunpack.c.l.b16 %v1587
          %v1628 = vunpack.c.l.b16 %v1588
          %v1629 = vunpack.c.l.b16 %v1589
          %v1630 = vunpack.c.l.b16 %v1590
          %v1631 = vunpack.c.l.b16 %v1591
          %v1632 = vunpack.c.l.b16 %v1592
          %v1633 = vunpack.c.l.b16 %v1593
          %v1634 = vunpack.c.l.b16 %v1594
          %v1635 = vunpack.c.l.b16 %v1595
          %v1636 = vunpack.c.l.b16 %v1596
          %v1637 = vunpack.c.l.b16 %v1597
          %v1638 = vpack.c.b16 %v1623, %v1622
          %v1639 = vpack.c.b16 %v1625, %v1624
          %v1640 = vpack.c.b16 %v1627, %v1626
          %v1641 = vpack.c.b16 %v1629, %v1628
          %v1642 = vpack.c.b16 %v1631, %v1630
          %v1643 = vpack.c.b16 %v1633, %v1632
          %v1644 = vpack.c.b16 %v1635, %v1634
          %v1645 = vpack.c.b16 %v1637, %v1636
          %1654 = vmatprep.subr.bf16.mxu0 0
          %1655 = vmatpush1.bf16.msra.mxu0 %v1638
          %1656 = vmatprep.subr.bf16.mxu0 0
          %1657 = vmatpush1.bf16.msra.mxu0 %v1639
          %1658 = vmatprep.subr.bf16.mxu0 0
          %1659 = vmatpush1.bf16.msra.mxu0 %v1640
          %1660 = vmatprep.subr.bf16.mxu0 0
          %1661 = vmatpush1.bf16.msra.mxu0 %v1641
          %1662 = vmatprep.subr.bf16.mxu0 0
          %1663 = vmatpush1.bf16.msra.mxu0 %v1642
          %1664 = vmatprep.subr.bf16.mxu0 0
          %1665 = vmatpush1.bf16.msra.mxu0 %v1643
          %1666 = vmatprep.subr.bf16.mxu0 0
          %1667 = vmatpush1.bf16.msra.mxu0 %v1644
          %1668 = vmatprep.subr.bf16.mxu0 0
          %1669 = vmatpush1.bf16.msra.mxu0 %v1645
          %1670 = vmatprep.subr.bf16.mxu0 0
          %1671 = vmatpush1.bf16.msra.mxu0 0
          %1672 = vmatprep.subr.bf16.mxu0 0
          %1673 = vmatpush1.bf16.msra.mxu0 0
          %1674 = vmatprep.subr.bf16.mxu0 0
          %1675 = vmatpush1.bf16.msra.mxu0 0
          %1676 = vmatprep.subr.bf16.mxu0 0
          %1677 = vmatpush1.bf16.msra.mxu0 0
          %1678 = vmatprep.subr.bf16.mxu0 0
          %1679 = vmatpush1.bf16.msra.mxu0 0
          %1680 = vmatprep.subr.bf16.mxu0 0
          %1681 = vmatpush1.bf16.msra.mxu0 0
          %1682 = vmatprep.subr.bf16.mxu0 0
          %1683 = vmatpush1.bf16.msra.mxu0 0
          %1684 = vmatprep.subr.bf16.mxu0 0
          %1685 = vmatpush1.bf16.msra.mxu0 0
          %1686 = vmatprep.mubr.bf16.mxu0 0
          %1687 = vmatmul.mubr.bf16.gmra.mrb[0].mxu0 %v694
          %v1688 = vpop.f32.mrb[0].mxu0
          %v1689 = vadd.f32 %v1604, %v1688
          %v1690 = vpop.f32.mrb[0].mxu0
          %v1691 = vpop.f32.mrb[0].mxu0
          %v1692 = vadd.f32 %v1604, %v1691
          %v1693 = vpop.f32.mrb[0].mxu0
          %1694 = vmatprep.mubr.bf16.mxu0 0
          %1695 = vmatmul.mubr.bf16.gmra.mrb[0].mxu0 %v695
          %v1696 = vpop.f32.mrb[0].mxu0
          %v1697 = vadd.f32 %v1604, %v1696
          %v1698 = vpop.f32.mrb[0].mxu0
          %v1699 = vpop.f32.mrb[0].mxu0
          %v1700 = vadd.f32 %v1604, %v1699
          %v1701 = vpop.f32.mrb[0].mxu0
          %1702 = vmatprep.mubr.bf16.mxu0 0
          %1703 = vmatmul.mubr.bf16.gmra.mrb[0].mxu0 %v696
          %v1704 = vpop.f32.mrb[0].mxu0
          %v1705 = vadd.f32 %v1604, %v1704
          %v1706 = vpop.f32.mrb[0].mxu0
          %v1707 = vpop.f32.mrb[0].mxu0
          %v1708 = vadd.f32 %v1604, %v1707
          %v1709 = vpop.f32.mrb[0].mxu0
          %1710 = vmatprep.mubr.bf16.mxu0 0
          %1711 = vmatmul.mubr.bf16.gmra.mrb[0].mxu0 %v697
          %v1712 = vpop.f32.mrb[0].mxu0
          %v1713 = vadd.f32 %v1604, %v1712
          %v1714 = vpop.f32.mrb[0].mxu0
          %v1715 = vpop.f32.mrb[0].mxu0
          %v1716 = vadd.f32 %v1604, %v1715
          %v1717 = vpop.f32.mrb[0].mxu0
          %1718 = vdwg.mxu0
          %s1719 = scalar_lea.vmem %s7, 192
          %v1720 = vld [vmem:[%s1719] sm:$0xf]
          %v1721 = vld [vmem:[%s1719 + $0x4] sm:$0xf]
          %v1722 = vld [vmem:[%s1719 + $0x8] sm:$0xf]
          %v1723 = vld [vmem:[%s1719 + $0xc] sm:$0xf]
          %v1724 = vld [vmem:[%s1719 + $0x10] sm:$0xf]
          %v1725 = vld [vmem:[%s1719 + $0x14] sm:$0xf]
          %v1726 = vld [vmem:[%s1719 + $0x18] sm:$0xf]
          %v1727 = vld [vmem:[%s1719 + $0x1c] sm:$0xf]
          %v1728 = vld [vmem:[%s1719 + $0x20] sm:$0xf]
          %v1729 = vld [vmem:[%s1719 + $0x24] sm:$0xf]
          %v1730 = vld [vmem:[%s1719 + $0x28] sm:$0xf]
          %v1731 = vld [vmem:[%s1719 + $0x2c] sm:$0xf]
          %v1732 = vld [vmem:[%s1719 + $0x30] sm:$0xf]
          %v1733 = vld [vmem:[%s1719 + $0x34] sm:$0xf]
          %v1734 = vld [vmem:[%s1719 + $0x38] sm:$0xf]
          %v1735 = vld [vmem:[%s1719 + $0x3c] sm:$0xf]
          %s1736 = scalar_lea.vmem %s8, 3
          %v1737 = vld [vmem:[%s1736] sm:$0x1]
          %v1739 = vlaneseq
          %v1740 = vshrl.u32 %v1739, 7
          %v1741 = vsub.s32 0, %v1740
          %v1742 = vrot.slane %v1737, %v1741
          %v1760 = vunpack.c.l.b16 %v1720
          %v1761 = vunpack.c.l.b16 %v1721
          %v1762 = vunpack.c.l.b16 %v1722
          %v1763 = vunpack.c.l.b16 %v1723
          %v1764 = vunpack.c.l.b16 %v1724
          %v1765 = vunpack.c.l.b16 %v1725
          %v1766 = vunpack.c.l.b16 %v1726
          %v1767 = vunpack.c.l.b16 %v1727
          %v1768 = vunpack.c.l.b16 %v1728
          %v1769 = vunpack.c.l.b16 %v1729
          %v1770 = vunpack.c.l.b16 %v1730
          %v1771 = vunpack.c.l.b16 %v1731
          %v1772 = vunpack.c.l.b16 %v1732
          %v1773 = vunpack.c.l.b16 %v1733
          %v1774 = vunpack.c.l.b16 %v1734
          %v1775 = vunpack.c.l.b16 %v1735
          %v1776 = vpack.c.b16 %v1761, %v1760
          %v1777 = vpack.c.b16 %v1763, %v1762
          %v1778 = vpack.c.b16 %v1765, %v1764
          %v1779 = vpack.c.b16 %v1767, %v1766
          %v1780 = vpack.c.b16 %v1769, %v1768
          %v1781 = vpack.c.b16 %v1771, %v1770
          %v1782 = vpack.c.b16 %v1773, %v1772
          %v1783 = vpack.c.b16 %v1775, %v1774
          %1792 = vmatprep.subr.bf16.mxu0 0
          %1793 = vmatpush1.bf16.msra.mxu0 %v1776
          %1794 = vmatprep.subr.bf16.mxu0 0
          %1795 = vmatpush1.bf16.msra.mxu0 %v1777
          %1796 = vmatprep.subr.bf16.mxu0 0
          %1797 = vmatpush1.bf16.msra.mxu0 %v1778
          %1798 = vmatprep.subr.bf16.mxu0 0
          %1799 = vmatpush1.bf16.msra.mxu0 %v1779
          %1800 = vmatprep.subr.bf16.mxu0 0
          %1801 = vmatpush1.bf16.msra.mxu0 %v1780
          %1802 = vmatprep.subr.bf16.mxu0 0
          %1803 = vmatpush1.bf16.msra.mxu0 %v1781
          %1804 = vmatprep.subr.bf16.mxu0 0
          %1805 = vmatpush1.bf16.msra.mxu0 %v1782
          %1806 = vmatprep.subr.bf16.mxu0 0
          %1807 = vmatpush1.bf16.msra.mxu0 %v1783
          %1808 = vmatprep.subr.bf16.mxu0 0
          %1809 = vmatpush1.bf16.msra.mxu0 0
          %1810 = vmatprep.subr.bf16.mxu0 0
          %1811 = vmatpush1.bf16.msra.mxu0 0
          %1812 = vmatprep.subr.bf16.mxu0 0
          %1813 = vmatpush1.bf16.msra.mxu0 0
          %1814 = vmatprep.subr.bf16.mxu0 0
          %1815 = vmatpush1.bf16.msra.mxu0 0
          %1816 = vmatprep.subr.bf16.mxu0 0
          %1817 = vmatpush1.bf16.msra.mxu0 0
          %1818 = vmatprep.subr.bf16.mxu0 0
          %1819 = vmatpush1.bf16.msra.mxu0 0
          %1820 = vmatprep.subr.bf16.mxu0 0
          %1821 = vmatpush1.bf16.msra.mxu0 0
          %1822 = vmatprep.subr.bf16.mxu0 0
          %1823 = vmatpush1.bf16.msra.mxu0 0
          %1824 = vmatprep.mubr.bf16.mxu0 0
          %1825 = vmatmul.mubr.bf16.gmra.mrb[0].mxu0 %v694
          %v1826 = vpop.f32.mrb[0].mxu0
          %v1827 = vadd.f32 %v1742, %v1826
          %v1828 = vpop.f32.mrb[0].mxu0
          %v1829 = vpop.f32.mrb[0].mxu0
          %v1830 = vadd.f32 %v1742, %v1829
          %v1831 = vpop.f32.mrb[0].mxu0
          %1832 = vmatprep.mubr.bf16.mxu0 0
          %1833 = vmatmul.mubr.bf16.gmra.mrb[0].mxu0 %v695
          %v1834 = vpop.f32.mrb[0].mxu0
          %v1835 = vadd.f32 %v1742, %v1834
          %v1836 = vpop.f32.mrb[0].mxu0
          %v1837 = vpop.f32.mrb[0].mxu0
          %v1838 = vadd.f32 %v1742, %v1837
          %v1839 = vpop.f32.mrb[0].mxu0
          %1840 = vmatprep.mubr.bf16.mxu0 0
          %1841 = vmatmul.mubr.bf16.gmra.mrb[0].mxu0 %v696
          %v1842 = vpop.f32.mrb[0].mxu0
          %v1843 = vadd.f32 %v1742, %v1842
          %v1844 = vpop.f32.mrb[0].mxu0
          %v1845 = vpop.f32.mrb[0].mxu0
          %v1846 = vadd.f32 %v1742, %v1845
          %v1847 = vpop.f32.mrb[0].mxu0
          %1848 = vmatprep.mubr.bf16.mxu0 0
          %1849 = vmatmul.mubr.bf16.gmra.mrb[0].mxu0 %v697
          %v1850 = vpop.f32.mrb[0].mxu0
          %v1851 = vadd.f32 %v1742, %v1850
          %v1852 = vpop.f32.mrb[0].mxu0
          %v1853 = vpop.f32.mrb[0].mxu0
          %v1854 = vadd.f32 %v1742, %v1853
          %v1855 = vpop.f32.mrb[0].mxu0
          %1856 = vdwg.mxu0
          %v1857 = vpack.c.bf16 %v1692, %v1689
          %v1858 = vpack.c.bf16 %v1700, %v1697
          %v1859 = vpack.c.bf16 %v1708, %v1705
          %v1860 = vpack.c.bf16 %v1716, %v1713
          %s1861 = sadd.s32 0, 12
          %s1862 = smul.addr %s1861, 8
          %s1863 = scalar_lea.vmem [#allocation2], %s1862
          %1864 = vst.msk [vmem:[%s1863] sm:$0xff] %vm974, %v1857
          %1865 = vst.msk [vmem:[%s1863 + $0x8] sm:$0xff] %vm974, %v1858
          %1866 = vst.msk [vmem:[%s1863 + $0x10] sm:$0xff] %vm974, %v1859
          %1867 = vst.msk [vmem:[%s1863 + $0x18] sm:$0xff] %vm974, %v1860
          %v1868 = vpack.c.bf16 %v1830, %v1827
          %v1869 = vpack.c.bf16 %v1838, %v1835
          %v1870 = vpack.c.bf16 %v1846, %v1843
          %v1871 = vpack.c.bf16 %v1854, %v1851
          %s1872 = smul.addr %s1861, 8
          %s1873 = scalar_lea.vmem [#allocation3], %s1872
          %1874 = vst.msk [vmem:[%s1873] sm:$0xff] %vm974, %v1868
          %1875 = vst.msk [vmem:[%s1873 + $0x8] sm:$0xff] %vm974, %v1869
          %1876 = vst.msk [vmem:[%s1873 + $0x10] sm:$0xff] %vm974, %v1870
          %1877 = vst.msk [vmem:[%s1873 + $0x18] sm:$0xff] %vm974, %v1871
        $region92: #{tpu_custom_call.1} parent=87 // pred_fallthru
          _
        %s1878 = smul.u32 %s36, 64
        %s1879 = scalar_lea.vmem %s560, %s1878
        %v1880 = vld [vmem:[%s1879] sm:$0xff]
        %v1881 = vld [vmem:[%s1879 + $0x8] sm:$0xff]
        %v1882 = vld [vmem:[%s1879 + $0x10] sm:$0xff]
        %v1883 = vld [vmem:[%s1879 + $0x18] sm:$0xff]
        %v1884 = vld [vmem:[%s1879 + $0x20] sm:$0xff]
        %v1885 = vld [vmem:[%s1879 + $0x28] sm:$0xff]
        %v1886 = vld [vmem:[%s1879 + $0x30] sm:$0xff]
        %v1887 = vld [vmem:[%s1879 + $0x38] sm:$0xff]
        %v1888 = vld [vmem:[%s1] sm:$0x1]
        %v1889 = vld [vmem:[%s2] sm:$0x1]
        %1890 = vadd.xlane.f32.xlu0 %v1880
        %v1891 = vpop.xlane.xlu0 %1890
        %1892 = vadd.xlane.f32.xlu0 %v1881
        %v1893 = vpop.xlane.xlu0 %1892
        %1894 = vadd.xlane.f32.xlu0 %v1882
        %v1895 = vpop.xlane.xlu0 %1894
        %1896 = vadd.xlane.f32.xlu0 %v1883
        %v1897 = vpop.xlane.xlu0 %1896
        %1898 = vadd.xlane.f32.xlu0 %v1884
        %v1899 = vpop.xlane.xlu0 %1898
        %1900 = vadd.xlane.f32.xlu0 %v1885
        %v1901 = vpop.xlane.xlu0 %1900
        %1902 = vadd.xlane.f32.xlu0 %v1886
        %v1903 = vpop.xlane.xlu0 %1902
        %1904 = vadd.xlane.f32.xlu0 %v1887
        %v1905 = vpop.xlane.xlu0 %1904
        %v1906 = vrcp.pop 128.0
        %v1907 = vmul.f32 %v1891, %v1906
        %v1908 = vmul.f32 %v1893, %v1906
        %v1909 = vmul.f32 %v1895, %v1906
        %v1910 = vmul.f32 %v1897, %v1906
        %v1911 = vmul.f32 %v1899, %v1906
        %v1912 = vmul.f32 %v1901, %v1906
        %v1913 = vmul.f32 %v1903, %v1906
        %v1914 = vmul.f32 %v1905, %v1906
        %v1915 = vsub.f32 %v1880, %v1907
        %v1916 = vsub.f32 %v1881, %v1908
        %v1917 = vsub.f32 %v1882, %v1909
        %v1918 = vsub.f32 %v1883, %v1910
        %v1919 = vsub.f32 %v1884, %v1911
        %v1920 = vsub.f32 %v1885, %v1912
        %v1921 = vsub.f32 %v1886, %v1913
        %v1922 = vsub.f32 %v1887, %v1914
        %v1923 = vmul.f32 %v1915, %v1915
        %v1924 = vmul.f32 %v1916, %v1916
        %v1925 = vmul.f32 %v1917, %v1917
        %v1926 = vmul.f32 %v1918, %v1918
        %v1927 = vmul.f32 %v1919, %v1919
        %v1928 = vmul.f32 %v1920, %v1920
        %v1929 = vmul.f32 %v1921, %v1921
        %v1930 = vmul.f32 %v1922, %v1922
        %1931 = vadd.xlane.f32.xlu0 %v1923
        %v1932 = vpop.xlane.xlu0 %1931
        %1933 = vadd.xlane.f32.xlu0 %v1924
        %v1934 = vpop.xlane.xlu0 %1933
        %1935 = vadd.xlane.f32.xlu0 %v1925
        %v1936 = vpop.xlane.xlu0 %1935
        %1937 = vadd.xlane.f32.xlu0 %v1926
        %v1938 = vpop.xlane.xlu0 %1937
        %1939 = vadd.xlane.f32.xlu0 %v1927
        %v1940 = vpop.xlane.xlu0 %1939
        %1941 = vadd.xlane.f32.xlu0 %v1928
        %v1942 = vpop.xlane.xlu0 %1941
        %1943 = vadd.xlane.f32.xlu0 %v1929
        %v1944 = vpop.xlane.xlu0 %1943
        %1945 = vadd.xlane.f32.xlu0 %v1930
        %v1946 = vpop.xlane.xlu0 %1945
        %v1947 = vmul.f32 %v1932, %v1906
        %v1948 = vmul.f32 %v1934, %v1906
        %v1949 = vmul.f32 %v1936, %v1906
        %v1950 = vmul.f32 %v1938, %v1906
        %v1951 = vmul.f32 %v1940, %v1906
        %v1952 = vmul.f32 %v1942, %v1906
        %v1953 = vmul.f32 %v1944, %v1906
        %v1954 = vmul.f32 %v1946, %v1906
        %v1955 = vadd.f32 %v1947, 1e-05
        %v1956 = vadd.f32 %v1948, 1e-05
        %v1957 = vadd.f32 %v1949, 1e-05
        %v1958 = vadd.f32 %v1950, 1e-05
        %v1959 = vadd.f32 %v1951, 1e-05
        %v1960 = vadd.f32 %v1952, 1e-05
        %v1961 = vadd.f32 %v1953, 1e-05
        %v1962 = vadd.f32 %v1954, 1e-05
        %v1963 = vrsqrt.pop %v1955
        %v1964 = vrsqrt.pop %v1956
        %v1965 = vrsqrt.pop %v1957
        %v1966 = vrsqrt.pop %v1958
        %v1967 = vrsqrt.pop %v1959
        %v1968 = vrsqrt.pop %v1960
        %v1969 = vrsqrt.pop %v1961
        %v1970 = vrsqrt.pop %v1962
        %v1971 = vmul.f32 %v1915, %v1963
        %v1972 = vmul.f32 %v1916, %v1964
        %v1973 = vmul.f32 %v1917, %v1965
        %v1974 = vmul.f32 %v1918, %v1966
        %v1975 = vmul.f32 %v1919, %v1967
        %v1976 = vmul.f32 %v1920, %v1968
        %v1977 = vmul.f32 %v1921, %v1969
        %v1978 = vmul.f32 %v1922, %v1970
        %v1980 = vlaneseq
        %v1981 = vshrl.u32 %v1980, 7
        %v1982 = vsub.s32 0, %v1981
        %v1983 = vrot.slane %v1888, %v1982
        %v1985 = vmul.f32 %v1971, %v1983
        %v1986 = vmul.f32 %v1972, %v1983
        %v1987 = vmul.f32 %v1973, %v1983
        %v1988 = vmul.f32 %v1974, %v1983
        %v1989 = vmul.f32 %v1975, %v1983
        %v1990 = vmul.f32 %v1976, %v1983
        %v1991 = vmul.f32 %v1977, %v1983
        %v1992 = vmul.f32 %v1978, %v1983
        %v1994 = vlaneseq
        %v1995 = vshrl.u32 %v1994, 7
        %v1996 = vsub.s32 0, %v1995
        %v1997 = vrot.slane %v1889, %v1996
        %v1999 = vadd.f32 %v1985, %v1997
        %v2000 = vadd.f32 %v1986, %v1997
        %v2001 = vadd.f32 %v1987, %v1997
        %v2002 = vadd.f32 %v1988, %v1997
        %v2003 = vadd.f32 %v1989, %v1997
        %v2004 = vadd.f32 %v1990, %v1997
        %v2005 = vadd.f32 %v1991, %v1997
        %v2006 = vadd.f32 %v1992, %v1997
        %v2007 = vpack.c.bf16 %v2000, %v1999
        %v2008 = vpack.c.bf16 %v2002, %v2001
        %v2009 = vpack.c.bf16 %v2004, %v2003
        %v2010 = vpack.c.bf16 %v2006, %v2005
        %v2011 = vld [vmem:[%s3] sm:$0xf]
        %v2012 = vld [vmem:[%s3 + $0x4] sm:$0xf]
        %v2013 = vld [vmem:[%s3 + $0x8] sm:$0xf]
        %v2014 = vld [vmem:[%s3 + $0xc] sm:$0xf]
        %v2015 = vld [vmem:[%s3 + $0x10] sm:$0xf]
        %v2016 = vld [vmem:[%s3 + $0x14] sm:$0xf]
        %v2017 = vld [vmem:[%s3 + $0x18] sm:$0xf]
        %v2018 = vld [vmem:[%s3 + $0x1c] sm:$0xf]
        %v2019 = vld [vmem:[%s3 + $0x20] sm:$0xf]
        %v2020 = vld [vmem:[%s3 + $0x24] sm:$0xf]
        %v2021 = vld [vmem:[%s3 + $0x28] sm:$0xf]
        %v2022 = vld [vmem:[%s3 + $0x2c] sm:$0xf]
        %v2023 = vld [vmem:[%s3 + $0x30] sm:$0xf]
        %v2024 = vld [vmem:[%s3 + $0x34] sm:$0xf]
        %v2025 = vld [vmem:[%s3 + $0x38] sm:$0xf]
        %v2026 = vld [vmem:[%s3 + $0x3c] sm:$0xf]
        %v2027 = vld [vmem:[%s4] sm:$0x1]
        %v2029 = vlaneseq
        %v2030 = vshrl.u32 %v2029, 7
        %v2031 = vsub.s32 0, %v2030
        %v2032 = vrot.slane %v2027, %v2031
        %v2050 = vunpack.c.l.b16 %v2011
        %v2051 = vunpack.c.l.b16 %v2012
        %v2052 = vunpack.c.l.b16 %v2013
        %v2053 = vunpack.c.l.b16 %v2014
        %v2054 = vunpack.c.l.b16 %v2015
        %v2055 = vunpack.c.l.b16 %v2016
        %v2056 = vunpack.c.l.b16 %v2017
        %v2057 = vunpack.c.l.b16 %v2018
        %v2058 = vunpack.c.l.b16 %v2019
        %v2059 = vunpack.c.l.b16 %v2020
        %v2060 = vunpack.c.l.b16 %v2021
        %v2061 = vunpack.c.l.b16 %v2022
        %v2062 = vunpack.c.l.b16 %v2023
        %v2063 = vunpack.c.l.b16 %v2024
        %v2064 = vunpack.c.l.b16 %v2025
        %v2065 = vunpack.c.l.b16 %v2026
        %v2066 = vpack.c.b16 %v2051, %v2050
        %v2067 = vpack.c.b16 %v2053, %v2052
        %v2068 = vpack.c.b16 %v2055, %v2054
        %v2069 = vpack.c.b16 %v2057, %v2056
        %v2070 = vpack.c.b16 %v2059, %v2058
        %v2071 = vpack.c.b16 %v2061, %v2060
        %v2072 = vpack.c.b16 %v2063, %v2062
        %v2073 = vpack.c.b16 %v2065, %v2064
        %2082 = vmatprep.subr.bf16.mxu0 0
        %2083 = vmatpush1.bf16.msra.mxu0 %v2066
        %2084 = vmatprep.subr.bf16.mxu0 0
        %2085 = vmatpush1.bf16.msra.mxu0 %v2067
        %2086 = vmatprep.subr.bf16.mxu0 0
        %2087 = vmatpush1.bf16.msra.mxu0 %v2068
        %2088 = vmatprep.subr.bf16.mxu0 0
        %2089 = vmatpush1.bf16.msra.mxu0 %v2069
        %2090 = vmatprep.subr.bf16.mxu0 0
        %2091 = vmatpush1.bf16.msra.mxu0 %v2070
        %2092 = vmatprep.subr.bf16.mxu0 0
        %2093 = vmatpush1.bf16.msra.mxu0 %v2071
        %2094 = vmatprep.subr.bf16.mxu0 0
        %2095 = vmatpush1.bf16.msra.mxu0 %v2072
        %2096 = vmatprep.subr.bf16.mxu0 0
        %2097 = vmatpush1.bf16.msra.mxu0 %v2073
        %2098 = vmatprep.subr.bf16.mxu0 0
        %2099 = vmatpush1.bf16.msra.mxu0 0
        %2100 = vmatprep.subr.bf16.mxu0 0
        %2101 = vmatpush1.bf16.msra.mxu0 0
        %2102 = vmatprep.subr.bf16.mxu0 0
        %2103 = vmatpush1.bf16.msra.mxu0 0
        %2104 = vmatprep.subr.bf16.mxu0 0
        %2105 = vmatpush1.bf16.msra.mxu0 0
        %2106 = vmatprep.subr.bf16.mxu0 0
        %2107 = vmatpush1.bf16.msra.mxu0 0
        %2108 = vmatprep.subr.bf16.mxu0 0
        %2109 = vmatpush1.bf16.msra.mxu0 0
        %2110 = vmatprep.subr.bf16.mxu0 0
        %2111 = vmatpush1.bf16.msra.mxu0 0
        %2112 = vmatprep.subr.bf16.mxu0 0
        %2113 = vmatpush1.bf16.msra.mxu0 0
        %2114 = vmatprep.mubr.bf16.mxu0 0
        %2115 = vmatmul.mubr.bf16.gmra.mrb[0].mxu0 %v2007
        %v2116 = vpop.f32.mrb[0].mxu0
        %v2117 = vadd.f32 %v2032, %v2116
        %v2118 = vpop.f32.mrb[0].mxu0
        %v2119 = vpop.f32.mrb[0].mxu0
        %v2120 = vadd.f32 %v2032, %v2119
        %v2121 = vpop.f32.mrb[0].mxu0
        %2122 = vmatprep.mubr.bf16.mxu0 0
        %2123 = vmatmul.mubr.bf16.gmra.mrb[0].mxu0 %v2008
        %v2124 = vpop.f32.mrb[0].mxu0
        %v2125 = vadd.f32 %v2032, %v2124
        %v2126 = vpop.f32.mrb[0].mxu0
        %v2127 = vpop.f32.mrb[0].mxu0
        %v2128 = vadd.f32 %v2032, %v2127
        %v2129 = vpop.f32.mrb[0].mxu0
        %2130 = vmatprep.mubr.bf16.mxu0 0
        %2131 = vmatmul.mubr.bf16.gmra.mrb[0].mxu0 %v2009
        %v2132 = vpop.f32.mrb[0].mxu0
        %v2133 = vadd.f32 %v2032, %v2132
        %v2134 = vpop.f32.mrb[0].mxu0
        %v2135 = vpop.f32.mrb[0].mxu0
        %v2136 = vadd.f32 %v2032, %v2135
        %v2137 = vpop.f32.mrb[0].mxu0
        %2138 = vmatprep.mubr.bf16.mxu0 0
        %2139 = vmatmul.mubr.bf16.gmra.mrb[0].mxu0 %v2010
        %v2140 = vpop.f32.mrb[0].mxu0
        %v2141 = vadd.f32 %v2032, %v2140
        %v2142 = vpop.f32.mrb[0].mxu0
        %v2143 = vpop.f32.mrb[0].mxu0
        %v2144 = vadd.f32 %v2032, %v2143
        %v2145 = vpop.f32.mrb[0].mxu0
        %2146 = vdwg.mxu0
        %v2147 = vpack.c.bf16 %v2120, %v2117
        %v2148 = vpack.c.bf16 %v2128, %v2125
        %v2149 = vpack.c.bf16 %v2136, %v2133
        %v2150 = vpack.c.bf16 %v2144, %v2141
        %v2151 = vld [vmem:[#allocation2] sm:$0xff]
        %v2152 = vld [vmem:[#allocation2 + $0x8] sm:$0xff]
        %v2153 = vld [vmem:[#allocation2 + $0x10] sm:$0xff]
        %v2154 = vld [vmem:[#allocation2 + $0x18] sm:$0xff]
        %vm2155 = vcmask 261120
        %v2157 = vsel %vm2155, %v2147, 0
        %v2160 = vsel %vm2155, %v2148, 0
        %v2163 = vsel %vm2155, %v2149, 0
        %v2166 = vsel %vm2155, %v2150, 0
        %v2169 = vsel %vm2155, %v2151, 0
        %v2172 = vsel %vm2155, %v2152, 0
        %v2175 = vsel %vm2155, %v2153, 0
        %v2178 = vsel %vm2155, %v2154, 0
        %2180 = vmatprep.subr.bf16.mxu0 0
        %2181 = vmatpush1.bf16.xpose.msra.mxu0 %v2169
        %2182 = vmatprep.subr.bf16.mxu0 0
        %2183 = vmatpush1.bf16.xpose.msra.mxu0 %v2172
        %2184 = vmatprep.subr.bf16.mxu0 0
        %2185 = vmatpush1.bf16.xpose.msra.mxu0 %v2175
        %2186 = vmatprep.subr.bf16.mxu0 0
        %2187 = vmatpush1.bf16.xpose.msra.mxu0 %v2178
        %2188 = vmatprep.subr.bf16.mxu0 0
        %2189 = vmatpush1.bf16.xpose.msra.mxu0 0
        %2190 = vmatprep.subr.bf16.mxu0 0
        %2191 = vmatpush1.bf16.xpose.msra.mxu0 0
        %2192 = vmatprep.subr.bf16.mxu0 0
        %2193 = vmatpush1.bf16.xpose.msra.mxu0 0
        %2194 = vmatprep.subr.bf16.mxu0 0
        %2195 = vmatpush1.bf16.xpose.msra.mxu0 0
        %2196 = vmatprep.subr.bf16.mxu0 0
        %2197 = vmatpush1.bf16.xpose.msra.mxu0 0
        %2198 = vmatprep.subr.bf16.mxu0 0
        %2199 = vmatpush1.bf16.xpose.msra.mxu0 0
        %2200 = vmatprep.subr.bf16.mxu0 0
        %2201 = vmatpush1.bf16.xpose.msra.mxu0 0
        %2202 = vmatprep.subr.bf16.mxu0 0
        %2203 = vmatpush1.bf16.xpose.msra.mxu0 0
        %2204 = vmatprep.subr.bf16.mxu0 0
        %2205 = vmatpush1.bf16.xpose.msra.mxu0 0
        %2206 = vmatprep.subr.bf16.mxu0 0
        %2207 = vmatpush1.bf16.xpose.msra.mxu0 0
        %2208 = vmatprep.subr.bf16.mxu0 0
        %2209 = vmatpush1.bf16.xpose.msra.mxu0 0
        %2210 = vmatprep.subr.bf16.mxu0 0
        %2211 = vmatpush1.bf16.xpose.msra.mxu0 0
        %2212 = vmatprep.mubr.bf16.mxu0 0
        %2213 = vmatmul.mubr.bf16.gmra.mrb[0].mxu0 %v2157
        %v2214 = vpop.f32.mrb[0].mxu0
        %v2215 = vadd.f32 0.0, %v2214
        %v2216 = vpop.f32.mrb[0].mxu0
        %v2217 = vpop.f32.mrb[0].mxu0
        %v2218 = vadd.f32 0.0, %v2217
        %v2219 = vpop.f32.mrb[0].mxu0
        %2220 = vmatprep.mubr.bf16.mxu0 0
        %2221 = vmatmul.mubr.bf16.gmra.mrb[0].mxu0 %v2160
        %v2222 = vpop.f32.mrb[0].mxu0
        %v2223 = vadd.f32 0.0, %v2222
        %v2224 = vpop.f32.mrb[0].mxu0
        %v2225 = vpop.f32.mrb[0].mxu0
        %v2226 = vadd.f32 0.0, %v2225
        %v2227 = vpop.f32.mrb[0].mxu0
        %2228 = vmatprep.mubr.bf16.mxu0 0
        %2229 = vmatmul.mubr.bf16.gmra.mrb[0].mxu0 %v2163
        %v2230 = vpop.f32.mrb[0].mxu0
        %v2231 = vadd.f32 0.0, %v2230
        %v2232 = vpop.f32.mrb[0].mxu0
        %v2233 = vpop.f32.mrb[0].mxu0
        %v2234 = vadd.f32 0.0, %v2233
        %v2235 = vpop.f32.mrb[0].mxu0
        %2236 = vmatprep.mubr.bf16.mxu0 0
        %2237 = vmatmul.mubr.bf16.gmra.mrb[0].mxu0 %v2166
        %v2238 = vpop.f32.mrb[0].mxu0
        %v2239 = vadd.f32 0.0, %v2238
        %v2240 = vpop.f32.mrb[0].mxu0
        %v2241 = vpop.f32.mrb[0].mxu0
        %v2242 = vadd.f32 0.0, %v2241
        %v2243 = vpop.f32.mrb[0].mxu0
        %2244 = vdwg.mxu0
        %v2245 = vrcp.pop 5.656854
        %v2246 = vmul.f32 %v2215, %v2245
        %v2247 = vmul.f32 %v2218, %v2245
        %v2248 = vmul.f32 %v2223, %v2245
        %v2249 = vmul.f32 %v2226, %v2245
        %v2250 = vmul.f32 %v2231, %v2245
        %v2251 = vmul.f32 %v2234, %v2245
        %v2252 = vmul.f32 %v2239, %v2245
        %v2253 = vmul.f32 %v2242, %v2245
        %v2254 = vfloor.f32 %v2246
        %v2255 = vfloor.f32 %v2247
        %v2256 = vfloor.f32 %v2248
        %v2257 = vfloor.f32 %v2249
        %v2258 = vfloor.f32 %v2250
        %v2259 = vfloor.f32 %v2251
        %v2260 = vfloor.f32 %v2252
        %v2261 = vfloor.f32 %v2253
        %vm2262 = vcmask 523264
        %v2263 = vsel %vm2262, %v2254, -inf
        %2264 = vmax.xlane.f32.xlu0 %v2263
        %v2265 = vpop.xlane.xlu0 %2264
        %v2266 = vsel %vm2262, %v2255, -inf
        %2267 = vmax.xlane.f32.xlu0 %v2266
        %v2268 = vpop.xlane.xlu0 %2267
        %v2269 = vsel %vm2262, %v2256, -inf
        %2270 = vmax.xlane.f32.xlu0 %v2269
        %v2271 = vpop.xlane.xlu0 %2270
        %v2272 = vsel %vm2262, %v2257, -inf
        %2273 = vmax.xlane.f32.xlu0 %v2272
        %v2274 = vpop.xlane.xlu0 %2273
        %v2275 = vsel %vm2262, %v2258, -inf
        %2276 = vmax.xlane.f32.xlu0 %v2275
        %v2277 = vpop.xlane.xlu0 %2276
        %v2278 = vsel %vm2262, %v2259, -inf
        %2279 = vmax.xlane.f32.xlu0 %v2278
        %v2280 = vpop.xlane.xlu0 %2279
        %v2281 = vsel %vm2262, %v2260, -inf
        %2282 = vmax.xlane.f32.xlu0 %v2281
        %v2283 = vpop.xlane.xlu0 %2282
        %v2284 = vsel %vm2262, %v2261, -inf
        %2285 = vmax.xlane.f32.xlu0 %v2284
        %v2286 = vpop.xlane.xlu0 %2285
        %v2287 = vsub.f32 %v2254, %v2265
        %v2288 = vsub.f32 %v2255, %v2268
        %v2289 = vsub.f32 %v2256, %v2271
        %v2290 = vsub.f32 %v2257, %v2274
        %v2291 = vsub.f32 %v2258, %v2277
        %v2292 = vsub.f32 %v2259, %v2280
        %v2293 = vsub.f32 %v2260, %v2283
        %v2294 = vsub.f32 %v2261, %v2286
        %v2295 = vmul.f32 %v2287, 1.442695
        %v2296 = vpow.pop %v2295
        %v2297 = vmul.f32 %v2288, 1.442695
        %v2298 = vpow.pop %v2297
        %v2299 = vmul.f32 %v2289, 1.442695
        %v2300 = vpow.pop %v2299
        %v2301 = vmul.f32 %v2290, 1.442695
        %v2302 = vpow.pop %v2301
        %v2303 = vmul.f32 %v2291, 1.442695
        %v2304 = vpow.pop %v2303
        %v2305 = vmul.f32 %v2292, 1.442695
        %v2306 = vpow.pop %v2305
        %v2307 = vmul.f32 %v2293, 1.442695
        %v2308 = vpow.pop %v2307
        %v2309 = vmul.f32 %v2294, 1.442695
        %v2310 = vpow.pop %v2309
        %v2311 = vsel %vm2262, %v2296, 0.0
        %2312 = vadd.xlane.f32.xlu0 %v2311
        %v2313 = vpop.xlane.xlu0 %2312
        %v2314 = vsel %vm2262, %v2298, 0.0
        %2315 = vadd.xlane.f32.xlu0 %v2314
        %v2316 = vpop.xlane.xlu0 %2315
        %v2317 = vsel %vm2262, %v2300, 0.0
        %2318 = vadd.xlane.f32.xlu0 %v2317
        %v2319 = vpop.xlane.xlu0 %2318
        %v2320 = vsel %vm2262, %v2302, 0.0
        %2321 = vadd.xlane.f32.xlu0 %v2320
        %v2322 = vpop.xlane.xlu0 %2321
        %v2323 = vsel %vm2262, %v2304, 0.0
        %2324 = vadd.xlane.f32.xlu0 %v2323
        %v2325 = vpop.xlane.xlu0 %2324
        %v2326 = vsel %vm2262, %v2306, 0.0
        %2327 = vadd.xlane.f32.xlu0 %v2326
        %v2328 = vpop.xlane.xlu0 %2327
        %v2329 = vsel %vm2262, %v2308, 0.0
        %2330 = vadd.xlane.f32.xlu0 %v2329
        %v2331 = vpop.xlane.xlu0 %2330
        %v2332 = vsel %vm2262, %v2310, 0.0
        %2333 = vadd.xlane.f32.xlu0 %v2332
        %v2334 = vpop.xlane.xlu0 %2333
        %v2335 = vrcp.pop %v2313
        %v2336 = vrcp.pop %v2316
        %v2337 = vrcp.pop %v2319
        %v2338 = vrcp.pop %v2322
        %v2339 = vrcp.pop %v2325
        %v2340 = vrcp.pop %v2328
        %v2341 = vrcp.pop %v2331
        %v2342 = vrcp.pop %v2334
        %v2343 = vmul.f32 %v2296, %v2335
        %v2344 = vmul.f32 %v2298, %v2336
        %v2345 = vmul.f32 %v2300, %v2337
        %v2346 = vmul.f32 %v2302, %v2338
        %v2347 = vmul.f32 %v2304, %v2339
        %v2348 = vmul.f32 %v2306, %v2340
        %v2349 = vmul.f32 %v2308, %v2341
        %v2350 = vmul.f32 %v2310, %v2342
        %v2351 = vpack.c.bf16 %v2344, %v2343
        %v2352 = vpack.c.bf16 %v2346, %v2345
        %v2353 = vpack.c.bf16 %v2348, %v2347
        %v2354 = vpack.c.bf16 %v2350, %v2349
        %v2355 = vld [vmem:[#allocation3] sm:$0xff]
        %v2356 = vld [vmem:[#allocation3 + $0x8] sm:$0xff]
        %v2357 = vld [vmem:[#allocation3 + $0x10] sm:$0xff]
        %v2358 = vld [vmem:[#allocation3 + $0x18] sm:$0xff]
        %v2360 = vsel %vm2262, %v2351, 0
        %v2363 = vsel %vm2262, %v2352, 0
        %v2366 = vsel %vm2262, %v2353, 0
        %v2369 = vsel %vm2262, %v2354, 0
        %2371 = vmatprep.subr.bf16.mxu0 0
        %2372 = vmatpush1.bf16.msra.mxu0 %v2355
        %2373 = vmatprep.subr.bf16.mxu0 0
        %2374 = vmatpush1.bf16.msra.mxu0 %v2356
        %2375 = vmatprep.subr.bf16.mxu0 0
        %2376 = vmatpush1.bf16.msra.mxu0 %v2357
        %2377 = vmatprep.subr.bf16.mxu0 0
        %2378 = vmatpush1.bf16.msra.mxu0 %v2358
        %2379 = vmatprep.subr.bf16.mxu0 0
        %2380 = vmatpush1.bf16.msra.mxu0 0
        %2381 = vmatprep.subr.bf16.mxu0 0
        %2382 = vmatpush1.bf16.msra.mxu0 0
        %2383 = vmatprep.subr.bf16.mxu0 0
        %2384 = vmatpush1.bf16.msra.mxu0 0
        %2385 = vmatprep.subr.bf16.mxu0 0
        %2386 = vmatpush1.bf16.msra.mxu0 0
        %2387 = vmatprep.subr.bf16.mxu0 0
        %2388 = vmatpush1.bf16.msra.mxu0 0
        %2389 = vmatprep.subr.bf16.mxu0 0
        %2390 = vmatpush1.bf16.msra.mxu0 0
        %2391 = vmatprep.subr.bf16.mxu0 0
        %2392 = vmatpush1.bf16.msra.mxu0 0
        %2393 = vmatprep.subr.bf16.mxu0 0
        %2394 = vmatpush1.bf16.msra.mxu0 0
        %2395 = vmatprep.subr.bf16.mxu0 0
        %2396 = vmatpush1.bf16.msra.mxu0 0
        %2397 = vmatprep.subr.bf16.mxu0 0
        %2398 = vmatpush1.bf16.msra.mxu0 0
        %2399 = vmatprep.subr.bf16.mxu0 0
        %2400 = vmatpush1.bf16.msra.mxu0 0
        %2401 = vmatprep.subr.bf16.mxu0 0
        %2402 = vmatpush1.bf16.msra.mxu0 0
        %2403 = vmatprep.mubr.bf16.mxu0 0
        %2404 = vmatmul.mubr.bf16.gmra.mrb[0].mxu0 %v2360
        %v2405 = vpop.f32.mrb[0].mxu0
        %v2406 = vadd.f32 0.0, %v2405
        %v2407 = vpop.f32.mrb[0].mxu0
        %v2408 = vpop.f32.mrb[0].mxu0
        %v2409 = vadd.f32 0.0, %v2408
        %v2410 = vpop.f32.mrb[0].mxu0
        %2411 = vmatprep.mubr.bf16.mxu0 0
        %2412 = vmatmul.mubr.bf16.gmra.mrb[0].mxu0 %v2363
        %v2413 = vpop.f32.mrb[0].mxu0
        %v2414 = vadd.f32 0.0, %v2413
        %v2415 = vpop.f32.mrb[0].mxu0
        %v2416 = vpop.f32.mrb[0].mxu0
        %v2417 = vadd.f32 0.0, %v2416
        %v2418 = vpop.f32.mrb[0].mxu0
        %2419 = vmatprep.mubr.bf16.mxu0 0
        %2420 = vmatmul.mubr.bf16.gmra.mrb[0].mxu0 %v2366
        %v2421 = vpop.f32.mrb[0].mxu0
        %v2422 = vadd.f32 0.0, %v2421
        %v2423 = vpop.f32.mrb[0].mxu0
        %v2424 = vpop.f32.mrb[0].mxu0
        %v2425 = vadd.f32 0.0, %v2424
        %v2426 = vpop.f32.mrb[0].mxu0
        %2427 = vmatprep.mubr.bf16.mxu0 0
        %2428 = vmatmul.mubr.bf16.gmra.mrb[0].mxu0 %v2369
        %v2429 = vpop.f32.mrb[0].mxu0
        %v2430 = vadd.f32 0.0, %v2429
        %v2431 = vpop.f32.mrb[0].mxu0
        %v2432 = vpop.f32.mrb[0].mxu0
        %v2433 = vadd.f32 0.0, %v2432
        %v2434 = vpop.f32.mrb[0].mxu0
        %2435 = vdwg.mxu0
        %v2436 = vpack.c.bf16 %v2409, %v2406
        %v2437 = vpack.c.bf16 %v2417, %v2414
        %v2438 = vpack.c.bf16 %v2425, %v2422
        %v2439 = vpack.c.bf16 %v2433, %v2430
        %v2440 = vld [vmem:[%s9] sm:$0xf]
        %v2441 = vld [vmem:[%s9 + $0x4] sm:$0xf]
        %v2442 = vld [vmem:[%s9 + $0x8] sm:$0xf]
        %v2443 = vld [vmem:[%s9 + $0xc] sm:$0xf]
        %s2444 = scalar_lea.vmem %s3, 64
        %v2445 = vld [vmem:[%s2444] sm:$0xf]
        %v2446 = vld [vmem:[%s2444 + $0x4] sm:$0xf]
        %v2447 = vld [vmem:[%s2444 + $0x8] sm:$0xf]
        %v2448 = vld [vmem:[%s2444 + $0xc] sm:$0xf]
        %v2449 = vld [vmem:[%s2444 + $0x10] sm:$0xf]
        %v2450 = vld [vmem:[%s2444 + $0x14] sm:$0xf]
        %v2451 = vld [vmem:[%s2444 + $0x18] sm:$0xf]
        %v2452 = vld [vmem:[%s2444 + $0x1c] sm:$0xf]
        %v2453 = vld [vmem:[%s2444 + $0x20] sm:$0xf]
        %v2454 = vld [vmem:[%s2444 + $0x24] sm:$0xf]
        %v2455 = vld [vmem:[%s2444 + $0x28] sm:$0xf]
        %v2456 = vld [vmem:[%s2444 + $0x2c] sm:$0xf]
        %v2457 = vld [vmem:[%s2444 + $0x30] sm:$0xf]
        %v2458 = vld [vmem:[%s2444 + $0x34] sm:$0xf]
        %v2459 = vld [vmem:[%s2444 + $0x38] sm:$0xf]
        %v2460 = vld [vmem:[%s2444 + $0x3c] sm:$0xf]
        %s2461 = scalar_lea.vmem %s4, 1
        %v2462 = vld [vmem:[%s2461] sm:$0x1]
        %v2464 = vlaneseq
        %v2465 = vshrl.u32 %v2464, 7
        %v2466 = vsub.s32 0, %v2465
        %v2467 = vrot.slane %v2462, %v2466
        %v2485 = vunpack.c.l.b16 %v2445
        %v2486 = vunpack.c.l.b16 %v2446
        %v2487 = vunpack.c.l.b16 %v2447
        %v2488 = vunpack.c.l.b16 %v2448
        %v2489 = vunpack.c.l.b16 %v2449
        %v2490 = vunpack.c.l.b16 %v2450
        %v2491 = vunpack.c.l.b16 %v2451
        %v2492 = vunpack.c.l.b16 %v2452
        %v2493 = vunpack.c.l.b16 %v2453
        %v2494 = vunpack.c.l.b16 %v2454
        %v2495 = vunpack.c.l.b16 %v2455
        %v2496 = vunpack.c.l.b16 %v2456
        %v2497 = vunpack.c.l.b16 %v2457
        %v2498 = vunpack.c.l.b16 %v2458
        %v2499 = vunpack.c.l.b16 %v2459
        %v2500 = vunpack.c.l.b16 %v2460
        %v2501 = vpack.c.b16 %v2486, %v2485
        %v2502 = vpack.c.b16 %v2488, %v2487
        %v2503 = vpack.c.b16 %v2490, %v2489
        %v2504 = vpack.c.b16 %v2492, %v2491
        %v2505 = vpack.c.b16 %v2494, %v2493
        %v2506 = vpack.c.b16 %v2496, %v2495
        %v2507 = vpack.c.b16 %v2498, %v2497
        %v2508 = vpack.c.b16 %v2500, %v2499
        %2517 = vmatprep.subr.bf16.mxu0 0
        %2518 = vmatpush1.bf16.msra.mxu0 %v2501
        %2519 = vmatprep.subr.bf16.mxu0 0
        %2520 = vmatpush1.bf16.msra.mxu0 %v2502
        %2521 = vmatprep.subr.bf16.mxu0 0
        %2522 = vmatpush1.bf16.msra.mxu0 %v2503
        %2523 = vmatprep.subr.bf16.mxu0 0
        %2524 = vmatpush1.bf16.msra.mxu0 %v2504
        %2525 = vmatprep.subr.bf16.mxu0 0
        %2526 = vmatpush1.bf16.msra.mxu0 %v2505
        %2527 = vmatprep.subr.bf16.mxu0 0
        %2528 = vmatpush1.bf16.msra.mxu0 %v2506
        %2529 = vmatprep.subr.bf16.mxu0 0
        %2530 = vmatpush1.bf16.msra.mxu0 %v2507
        %2531 = vmatprep.subr.bf16.mxu0 0
        %2532 = vmatpush1.bf16.msra.mxu0 %v2508
        %2533 = vmatprep.subr.bf16.mxu0 0
        %2534 = vmatpush1.bf16.msra.mxu0 0
        %2535 = vmatprep.subr.bf16.mxu0 0
        %2536 = vmatpush1.bf16.msra.mxu0 0
        %2537 = vmatprep.subr.bf16.mxu0 0
        %2538 = vmatpush1.bf16.msra.mxu0 0
        %2539 = vmatprep.subr.bf16.mxu0 0
        %2540 = vmatpush1.bf16.msra.mxu0 0
        %2541 = vmatprep.subr.bf16.mxu0 0
        %2542 = vmatpush1.bf16.msra.mxu0 0
        %2543 = vmatprep.subr.bf16.mxu0 0
        %2544 = vmatpush1.bf16.msra.mxu0 0
        %2545 = vmatprep.subr.bf16.mxu0 0
        %2546 = vmatpush1.bf16.msra.mxu0 0
        %2547 = vmatprep.subr.bf16.mxu0 0
        %2548 = vmatpush1.bf16.msra.mxu0 0
        %2549 = vmatprep.mubr.bf16.mxu0 0
        %2550 = vmatmul.mubr.bf16.gmra.mrb[0].mxu0 %v2007
        %v2551 = vpop.f32.mrb[0].mxu0
        %v2552 = vadd.f32 %v2467, %v2551
        %v2553 = vpop.f32.mrb[0].mxu0
        %v2554 = vpop.f32.mrb[0].mxu0
        %v2555 = vadd.f32 %v2467, %v2554
        %v2556 = vpop.f32.mrb[0].mxu0
        %2557 = vmatprep.mubr.bf16.mxu0 0
        %2558 = vmatmul.mubr.bf16.gmra.mrb[0].mxu0 %v2008
        %v2559 = vpop.f32.mrb[0].mxu0
        %v2560 = vadd.f32 %v2467, %v2559
        %v2561 = vpop.f32.mrb[0].mxu0
        %v2562 = vpop.f32.mrb[0].mxu0
        %v2563 = vadd.f32 %v2467, %v2562
        %v2564 = vpop.f32.mrb[0].mxu0
        %2565 = vmatprep.mubr.bf16.mxu0 0
        %2566 = vmatmul.mubr.bf16.gmra.mrb[0].mxu0 %v2009
        %v2567 = vpop.f32.mrb[0].mxu0
        %v2568 = vadd.f32 %v2467, %v2567
        %v2569 = vpop.f32.mrb[0].mxu0
        %v2570 = vpop.f32.mrb[0].mxu0
        %v2571 = vadd.f32 %v2467, %v2570
        %v2572 = vpop.f32.mrb[0].mxu0
        %2573 = vmatprep.mubr.bf16.mxu0 0
        %2574 = vmatmul.mubr.bf16.gmra.mrb[0].mxu0 %v2010
        %v2575 = vpop.f32.mrb[0].mxu0
        %v2576 = vadd.f32 %v2467, %v2575
        %v2577 = vpop.f32.mrb[0].mxu0
        %v2578 = vpop.f32.mrb[0].mxu0
        %v2579 = vadd.f32 %v2467, %v2578
        %v2580 = vpop.f32.mrb[0].mxu0
        %2581 = vdwg.mxu0
        %v2582 = vpack.c.bf16 %v2555, %v2552
        %v2583 = vpack.c.bf16 %v2563, %v2560
        %v2584 = vpack.c.bf16 %v2571, %v2568
        %v2585 = vpack.c.bf16 %v2579, %v2576
        %s2586 = scalar_lea.vmem [#allocation2], 32
        %v2587 = vld [vmem:[%s2586] sm:$0xff]
        %v2588 = vld [vmem:[%s2586 + $0x8] sm:$0xff]
        %v2589 = vld [vmem:[%s2586 + $0x10] sm:$0xff]
        %v2590 = vld [vmem:[%s2586 + $0x18] sm:$0xff]
        %v2592 = vsel %vm2155, %v2582, 0
        %v2595 = vsel %vm2155, %v2583, 0
        %v2598 = vsel %vm2155, %v2584, 0
        %v2601 = vsel %vm2155, %v2585, 0
        %v2604 = vsel %vm2155, %v2587, 0
        %v2607 = vsel %vm2155, %v2588, 0
        %v2610 = vsel %vm2155, %v2589, 0
        %v2613 = vsel %vm2155, %v2590, 0
        %2615 = vmatprep.subr.bf16.mxu0 0
        %2616 = vmatpush1.bf16.xpose.msra.mxu0 %v2604
        %2617 = vmatprep.subr.bf16.mxu0 0
        %2618 = vmatpush1.bf16.xpose.msra.mxu0 %v2607
        %2619 = vmatprep.subr.bf16.mxu0 0
        %2620 = vmatpush1.bf16.xpose.msra.mxu0 %v2610
        %2621 = vmatprep.subr.bf16.mxu0 0
        %2622 = vmatpush1.bf16.xpose.msra.mxu0 %v2613
        %2623 = vmatprep.subr.bf16.mxu0 0
        %2624 = vmatpush1.bf16.xpose.msra.mxu0 0
        %2625 = vmatprep.subr.bf16.mxu0 0
        %2626 = vmatpush1.bf16.xpose.msra.mxu0 0
        %2627 = vmatprep.subr.bf16.mxu0 0
        %2628 = vmatpush1.bf16.xpose.msra.mxu0 0
        %2629 = vmatprep.subr.bf16.mxu0 0
        %2630 = vmatpush1.bf16.xpose.msra.mxu0 0
        %2631 = vmatprep.subr.bf16.mxu0 0
        %2632 = vmatpush1.bf16.xpose.msra.mxu0 0
        %2633 = vmatprep.subr.bf16.mxu0 0
        %2634 = vmatpush1.bf16.xpose.msra.mxu0 0
        %2635 = vmatprep.subr.bf16.mxu0 0
        %2636 = vmatpush1.bf16.xpose.msra.mxu0 0
        %2637 = vmatprep.subr.bf16.mxu0 0
        %2638 = vmatpush1.bf16.xpose.msra.mxu0 0
        %2639 = vmatprep.subr.bf16.mxu0 0
        %2640 = vmatpush1.bf16.xpose.msra.mxu0 0
        %2641 = vmatprep.subr.bf16.mxu0 0
        %2642 = vmatpush1.bf16.xpose.msra.mxu0 0
        %2643 = vmatprep.subr.bf16.mxu0 0
        %2644 = vmatpush1.bf16.xpose.msra.mxu0 0
        %2645 = vmatprep.subr.bf16.mxu0 0
        %2646 = vmatpush1.bf16.xpose.msra.mxu0 0
        %2647 = vmatprep.mubr.bf16.mxu0 0
        %2648 = vmatmul.mubr.bf16.gmra.mrb[0].mxu0 %v2592
        %v2649 = vpop.f32.mrb[0].mxu0
        %v2650 = vadd.f32 0.0, %v2649
        %v2651 = vpop.f32.mrb[0].mxu0
        %v2652 = vpop.f32.mrb[0].mxu0
        %v2653 = vadd.f32 0.0, %v2652
        %v2654 = vpop.f32.mrb[0].mxu0
        %2655 = vmatprep.mubr.bf16.mxu0 0
        %2656 = vmatmul.mubr.bf16.gmra.mrb[0].mxu0 %v2595
        %v2657 = vpop.f32.mrb[0].mxu0
        %v2658 = vadd.f32 0.0, %v2657
        %v2659 = vpop.f32.mrb[0].mxu0
        %v2660 = vpop.f32.mrb[0].mxu0
        %v2661 = vadd.f32 0.0, %v2660
        %v2662 = vpop.f32.mrb[0].mxu0
        %2663 = vmatprep.mubr.bf16.mxu0 0
        %2664 = vmatmul.mubr.bf16.gmra.mrb[0].mxu0 %v2598
        %v2665 = vpop.f32.mrb[0].mxu0
        %v2666 = vadd.f32 0.0, %v2665
        %v2667 = vpop.f32.mrb[0].mxu0
        %v2668 = vpop.f32.mrb[0].mxu0
        %v2669 = vadd.f32 0.0, %v2668
        %v2670 = vpop.f32.mrb[0].mxu0
        %2671 = vmatprep.mubr.bf16.mxu0 0
        %2672 = vmatmul.mubr.bf16.gmra.mrb[0].mxu0 %v2601
        %v2673 = vpop.f32.mrb[0].mxu0
        %v2674 = vadd.f32 0.0, %v2673
        %v2675 = vpop.f32.mrb[0].mxu0
        %v2676 = vpop.f32.mrb[0].mxu0
        %v2677 = vadd.f32 0.0, %v2676
        %v2678 = vpop.f32.mrb[0].mxu0
        %2679 = vdwg.mxu0
        %v2680 = vmul.f32 %v2650, %v2245
        %v2681 = vmul.f32 %v2653, %v2245
        %v2682 = vmul.f32 %v2658, %v2245
        %v2683 = vmul.f32 %v2661, %v2245
        %v2684 = vmul.f32 %v2666, %v2245
        %v2685 = vmul.f32 %v2669, %v2245
        %v2686 = vmul.f32 %v2674, %v2245
        %v2687 = vmul.f32 %v2677, %v2245
        %v2688 = vfloor.f32 %v2680
        %v2689 = vfloor.f32 %v2681
        %v2690 = vfloor.f32 %v2682
        %v2691 = vfloor.f32 %v2683
        %v2692 = vfloor.f32 %v2684
        %v2693 = vfloor.f32 %v2685
        %v2694 = vfloor.f32 %v2686
        %v2695 = vfloor.f32 %v2687
        %v2696 = vsel %vm2262, %v2688, -inf
        %2697 = vmax.xlane.f32.xlu0 %v2696
        %v2698 = vpop.xlane.xlu0 %2697
        %v2699 = vsel %vm2262, %v2689, -inf
        %2700 = vmax.xlane.f32.xlu0 %v2699
        %v2701 = vpop.xlane.xlu0 %2700
        %v2702 = vsel %vm2262, %v2690, -inf
        %2703 = vmax.xlane.f32.xlu0 %v2702
        %v2704 = vpop.xlane.xlu0 %2703
        %v2705 = vsel %vm2262, %v2691, -inf
        %2706 = vmax.xlane.f32.xlu0 %v2705
        %v2707 = vpop.xlane.xlu0 %2706
        %v2708 = vsel %vm2262, %v2692, -inf
        %2709 = vmax.xlane.f32.xlu0 %v2708
        %v2710 = vpop.xlane.xlu0 %2709
        %v2711 = vsel %vm2262, %v2693, -inf
        %2712 = vmax.xlane.f32.xlu0 %v2711
        %v2713 = vpop.xlane.xlu0 %2712
        %v2714 = vsel %vm2262, %v2694, -inf
        %2715 = vmax.xlane.f32.xlu0 %v2714
        %v2716 = vpop.xlane.xlu0 %2715
        %v2717 = vsel %vm2262, %v2695, -inf
        %2718 = vmax.xlane.f32.xlu0 %v2717
        %v2719 = vpop.xlane.xlu0 %2718
        %v2720 = vsub.f32 %v2688, %v2698
        %v2721 = vsub.f32 %v2689, %v2701
        %v2722 = vsub.f32 %v2690, %v2704
        %v2723 = vsub.f32 %v2691, %v2707
        %v2724 = vsub.f32 %v2692, %v2710
        %v2725 = vsub.f32 %v2693, %v2713
        %v2726 = vsub.f32 %v2694, %v2716
        %v2727 = vsub.f32 %v2695, %v2719
        %v2728 = vmul.f32 %v2720, 1.442695
        %v2729 = vpow.pop %v2728
        %v2730 = vmul.f32 %v2721, 1.442695
        %v2731 = vpow.pop %v2730
        %v2732 = vmul.f32 %v2722, 1.442695
        %v2733 = vpow.pop %v2732
        %v2734 = vmul.f32 %v2723, 1.442695
        %v2735 = vpow.pop %v2734
        %v2736 = vmul.f32 %v2724, 1.442695
        %v2737 = vpow.pop %v2736
        %v2738 = vmul.f32 %v2725, 1.442695
        %v2739 = vpow.pop %v2738
        %v2740 = vmul.f32 %v2726, 1.442695
        %v2741 = vpow.pop %v2740
        %v2742 = vmul.f32 %v2727, 1.442695
        %v2743 = vpow.pop %v2742
        %v2744 = vsel %vm2262, %v2729, 0.0
        %2745 = vadd.xlane.f32.xlu0 %v2744
        %v2746 = vpop.xlane.xlu0 %2745
        %v2747 = vsel %vm2262, %v2731, 0.0
        %2748 = vadd.xlane.f32.xlu0 %v2747
        %v2749 = vpop.xlane.xlu0 %2748
        %v2750 = vsel %vm2262, %v2733, 0.0
        %2751 = vadd.xlane.f32.xlu0 %v2750
        %v2752 = vpop.xlane.xlu0 %2751
        %v2753 = vsel %vm2262, %v2735, 0.0
        %2754 = vadd.xlane.f32.xlu0 %v2753
        %v2755 = vpop.xlane.xlu0 %2754
        %v2756 = vsel %vm2262, %v2737, 0.0
        %2757 = vadd.xlane.f32.xlu0 %v2756
        %v2758 = vpop.xlane.xlu0 %2757
        %v2759 = vsel %vm2262, %v2739, 0.0
        %2760 = vadd.xlane.f32.xlu0 %v2759
        %v2761 = vpop.xlane.xlu0 %2760
        %v2762 = vsel %vm2262, %v2741, 0.0
        %2763 = vadd.xlane.f32.xlu0 %v2762
        %v2764 = vpop.xlane.xlu0 %2763
        %v2765 = vsel %vm2262, %v2743, 0.0
        %2766 = vadd.xlane.f32.xlu0 %v2765
        %v2767 = vpop.xlane.xlu0 %2766
        %v2768 = vrcp.pop %v2746
        %v2769 = vrcp.pop %v2749
        %v2770 = vrcp.pop %v2752
        %v2771 = vrcp.pop %v2755
        %v2772 = vrcp.pop %v2758
        %v2773 = vrcp.pop %v2761
        %v2774 = vrcp.pop %v2764
        %v2775 = vrcp.pop %v2767
        %v2776 = vmul.f32 %v2729, %v2768
        %v2777 = vmul.f32 %v2731, %v2769
        %v2778 = vmul.f32 %v2733, %v2770
        %v2779 = vmul.f32 %v2735, %v2771
        %v2780 = vmul.f32 %v2737, %v2772
        %v2781 = vmul.f32 %v2739, %v2773
        %v2782 = vmul.f32 %v2741, %v2774
        %v2783 = vmul.f32 %v2743, %v2775
        %v2784 = vpack.c.bf16 %v2777, %v2776
        %v2785 = vpack.c.bf16 %v2779, %v2778
        %v2786 = vpack.c.bf16 %v2781, %v2780
        %v2787 = vpack.c.bf16 %v2783, %v2782
        %s2788 = scalar_lea.vmem [#allocation3], 32
        %v2789 = vld [vmem:[%s2788] sm:$0xff]
        %v2790 = vld [vmem:[%s2788 + $0x8] sm:$0xff]
        %v2791 = vld [vmem:[%s2788 + $0x10] sm:$0xff]
        %v2792 = vld [vmem:[%s2788 + $0x18] sm:$0xff]
        %v2794 = vsel %vm2262, %v2784, 0
        %v2797 = vsel %vm2262, %v2785, 0
        %v2800 = vsel %vm2262, %v2786, 0
        %v2803 = vsel %vm2262, %v2787, 0
        %2805 = vmatprep.subr.bf16.mxu0 0
        %2806 = vmatpush1.bf16.msra.mxu0 %v2789
        %2807 = vmatprep.subr.bf16.mxu0 0
        %2808 = vmatpush1.bf16.msra.mxu0 %v2790
        %2809 = vmatprep.subr.bf16.mxu0 0
        %2810 = vmatpush1.bf16.msra.mxu0 %v2791
        %2811 = vmatprep.subr.bf16.mxu0 0
        %2812 = vmatpush1.bf16.msra.mxu0 %v2792
        %2813 = vmatprep.subr.bf16.mxu0 0
        %2814 = vmatpush1.bf16.msra.mxu0 0
        %2815 = vmatprep.subr.bf16.mxu0 0
        %2816 = vmatpush1.bf16.msra.mxu0 0
        %2817 = vmatprep.subr.bf16.mxu0 0
        %2818 = vmatpush1.bf16.msra.mxu0 0
        %2819 = vmatprep.subr.bf16.mxu0 0
        %2820 = vmatpush1.bf16.msra.mxu0 0
        %2821 = vmatprep.subr.bf16.mxu0 0
        %2822 = vmatpush1.bf16.msra.mxu0 0
        %2823 = vmatprep.subr.bf16.mxu0 0
        %2824 = vmatpush1.bf16.msra.mxu0 0
        %2825 = vmatprep.subr.bf16.mxu0 0
        %2826 = vmatpush1.bf16.msra.mxu0 0
        %2827 = vmatprep.subr.bf16.mxu0 0
        %2828 = vmatpush1.bf16.msra.mxu0 0
        %2829 = vmatprep.subr.bf16.mxu0 0
        %2830 = vmatpush1.bf16.msra.mxu0 0
        %2831 = vmatprep.subr.bf16.mxu0 0
        %2832 = vmatpush1.bf16.msra.mxu0 0
        %2833 = vmatprep.subr.bf16.mxu0 0
        %2834 = vmatpush1.bf16.msra.mxu0 0
        %2835 = vmatprep.subr.bf16.mxu0 0
        %2836 = vmatpush1.bf16.msra.mxu0 0
        %2837 = vmatprep.mubr.bf16.mxu0 0
        %2838 = vmatmul.mubr.bf16.gmra.mrb[0].mxu0 %v2794
        %v2839 = vpop.f32.mrb[0].mxu0
        %v2840 = vadd.f32 0.0, %v2839
        %v2841 = vpop.f32.mrb[0].mxu0
        %v2842 = vpop.f32.mrb[0].mxu0
        %v2843 = vadd.f32 0.0, %v2842
        %v2844 = vpop.f32.mrb[0].mxu0
        %2845 = vmatprep.mubr.bf16.mxu0 0
        %2846 = vmatmul.mubr.bf16.gmra.mrb[0].mxu0 %v2797
        %v2847 = vpop.f32.mrb[0].mxu0
        %v2848 = vadd.f32 0.0, %v2847
        %v2849 = vpop.f32.mrb[0].mxu0
        %v2850 = vpop.f32.mrb[0].mxu0
        %v2851 = vadd.f32 0.0, %v2850
        %v2852 = vpop.f32.mrb[0].mxu0
        %2853 = vmatprep.mubr.bf16.mxu0 0
        %2854 = vmatmul.mubr.bf16.gmra.mrb[0].mxu0 %v2800
        %v2855 = vpop.f32.mrb[0].mxu0
        %v2856 = vadd.f32 0.0, %v2855
        %v2857 = vpop.f32.mrb[0].mxu0
        %v2858 = vpop.f32.mrb[0].mxu0
        %v2859 = vadd.f32 0.0, %v2858
        %v2860 = vpop.f32.mrb[0].mxu0
        %2861 = vmatprep.mubr.bf16.mxu0 0
        %2862 = vmatmul.mubr.bf16.gmra.mrb[0].mxu0 %v2803
        %v2863 = vpop.f32.mrb[0].mxu0
        %v2864 = vadd.f32 0.0, %v2863
        %v2865 = vpop.f32.mrb[0].mxu0
        %v2866 = vpop.f32.mrb[0].mxu0
        %v2867 = vadd.f32 0.0, %v2866
        %v2868 = vpop.f32.mrb[0].mxu0
        %2869 = vdwg.mxu0
        %v2870 = vpack.c.bf16 %v2843, %v2840
        %v2871 = vpack.c.bf16 %v2851, %v2848
        %v2872 = vpack.c.bf16 %v2859, %v2856
        %v2873 = vpack.c.bf16 %v2867, %v2864
        %s2874 = scalar_lea.vmem %s9, 16
        %v2875 = vld [vmem:[%s2874] sm:$0xf]
        %v2876 = vld [vmem:[%s2874 + $0x4] sm:$0xf]
        %v2877 = vld [vmem:[%s2874 + $0x8] sm:$0xf]
        %v2878 = vld [vmem:[%s2874 + $0xc] sm:$0xf]
        %v2883 = vunpack.c.l.b16 %v2875
        %v2884 = vunpack.c.l.b16 %v2876
        %v2885 = vunpack.c.l.b16 %v2877
        %v2886 = vunpack.c.l.b16 %v2878
        %v2887 = vpack.c.b16 %v2884, %v2883
        %v2888 = vpack.c.b16 %v2886, %v2885
        %v2892 = vsel %vm2155, %v2870, 0
        %v2895 = vsel %vm2155, %v2871, 0
        %v2898 = vsel %vm2155, %v2872, 0
        %v2901 = vsel %vm2155, %v2873, 0
        %2903 = vmatprep.subr.bf16.mxu0 0
        %2904 = vmatpush1.bf16.msra.mxu0 %v2887
        %2905 = vmatprep.subr.bf16.mxu0 0
        %2906 = vmatpush1.bf16.msra.mxu0 %v2888
        %2907 = vmatprep.subr.bf16.mxu0 0
        %2908 = vmatpush1.bf16.msra.mxu0 0
        %2909 = vmatprep.subr.bf16.mxu0 0
        %2910 = vmatpush1.bf16.msra.mxu0 0
        %2911 = vmatprep.subr.bf16.mxu0 0
        %2912 = vmatpush1.bf16.msra.mxu0 0
        %2913 = vmatprep.subr.bf16.mxu0 0
        %2914 = vmatpush1.bf16.msra.mxu0 0
        %2915 = vmatprep.subr.bf16.mxu0 0
        %2916 = vmatpush1.bf16.msra.mxu0 0
        %2917 = vmatprep.subr.bf16.mxu0 0
        %2918 = vmatpush1.bf16.msra.mxu0 0
        %2919 = vmatprep.subr.bf16.mxu0 0
        %2920 = vmatpush1.bf16.msra.mxu0 0
        %2921 = vmatprep.subr.bf16.mxu0 0
        %2922 = vmatpush1.bf16.msra.mxu0 0
        %2923 = vmatprep.subr.bf16.mxu0 0
        %2924 = vmatpush1.bf16.msra.mxu0 0
        %2925 = vmatprep.subr.bf16.mxu0 0
        %2926 = vmatpush1.bf16.msra.mxu0 0
        %2927 = vmatprep.subr.bf16.mxu0 0
        %2928 = vmatpush1.bf16.msra.mxu0 0
        %2929 = vmatprep.subr.bf16.mxu0 0
        %2930 = vmatpush1.bf16.msra.mxu0 0
        %2931 = vmatprep.subr.bf16.mxu0 0
        %2932 = vmatpush1.bf16.msra.mxu0 0
        %2933 = vmatprep.subr.bf16.mxu0 0
        %2934 = vmatpush1.bf16.msra.mxu0 0
        %2935 = vmatprep.mubr.bf16.mxu0 0
        %2936 = vmatmul.mubr.bf16.gmra.mrb[0].mxu0 %v2892
        %v2937 = vpop.f32.mrb[0].mxu0
        %v2938 = vadd.f32 0.0, %v2937
        %v2939 = vpop.f32.mrb[0].mxu0
        %v2940 = vpop.f32.mrb[0].mxu0
        %v2941 = vadd.f32 0.0, %v2940
        %v2942 = vpop.f32.mrb[0].mxu0
        %2943 = vmatprep.mubr.bf16.mxu0 0
        %2944 = vmatmul.mubr.bf16.gmra.mrb[0].mxu0 %v2895
        %v2945 = vpop.f32.mrb[0].mxu0
        %v2946 = vadd.f32 0.0, %v2945
        %v2947 = vpop.f32.mrb[0].mxu0
        %v2948 = vpop.f32.mrb[0].mxu0
        %v2949 = vadd.f32 0.0, %v2948
        %v2950 = vpop.f32.mrb[0].mxu0
        %2951 = vmatprep.mubr.bf16.mxu0 0
        %2952 = vmatmul.mubr.bf16.gmra.mrb[0].mxu0 %v2898
        %v2953 = vpop.f32.mrb[0].mxu0
        %v2954 = vadd.f32 0.0, %v2953
        %v2955 = vpop.f32.mrb[0].mxu0
        %v2956 = vpop.f32.mrb[0].mxu0
        %v2957 = vadd.f32 0.0, %v2956
        %v2958 = vpop.f32.mrb[0].mxu0
        %2959 = vmatprep.mubr.bf16.mxu0 0
        %2960 = vmatmul.mubr.bf16.gmra.mrb[0].mxu0 %v2901
        %v2961 = vpop.f32.mrb[0].mxu0
        %v2962 = vadd.f32 0.0, %v2961
        %v2963 = vpop.f32.mrb[0].mxu0
        %v2964 = vpop.f32.mrb[0].mxu0
        %v2965 = vadd.f32 0.0, %v2964
        %v2966 = vpop.f32.mrb[0].mxu0
        %2967 = vdwg.mxu0
        %v2972 = vunpack.c.l.b16 %v2440
        %v2973 = vunpack.c.l.b16 %v2441
        %v2974 = vunpack.c.l.b16 %v2442
        %v2975 = vunpack.c.l.b16 %v2443
        %v2976 = vpack.c.b16 %v2973, %v2972
        %v2977 = vpack.c.b16 %v2975, %v2974
        %v2981 = vsel %vm2155, %v2436, 0
        %v2984 = vsel %vm2155, %v2437, 0
        %v2987 = vsel %vm2155, %v2438, 0
        %v2990 = vsel %vm2155, %v2439, 0
        %2992 = vmatprep.subr.bf16.mxu0 0
        %2993 = vmatpush1.bf16.msra.mxu0 %v2976
        %2994 = vmatprep.subr.bf16.mxu0 0
        %2995 = vmatpush1.bf16.msra.mxu0 %v2977
        %2996 = vmatprep.subr.bf16.mxu0 0
        %2997 = vmatpush1.bf16.msra.mxu0 0
        %2998 = vmatprep.subr.bf16.mxu0 0
        %2999 = vmatpush1.bf16.msra.mxu0 0
        %3000 = vmatprep.subr.bf16.mxu0 0
        %3001 = vmatpush1.bf16.msra.mxu0 0
        %3002 = vmatprep.subr.bf16.mxu0 0
        %3003 = vmatpush1.bf16.msra.mxu0 0
        %3004 = vmatprep.subr.bf16.mxu0 0
        %3005 = vmatpush1.bf16.msra.mxu0 0
        %3006 = vmatprep.subr.bf16.mxu0 0
        %3007 = vmatpush1.bf16.msra.mxu0 0
        %3008 = vmatprep.subr.bf16.mxu0 0
        %3009 = vmatpush1.bf16.msra.mxu0 0
        %3010 = vmatprep.subr.bf16.mxu0 0
        %3011 = vmatpush1.bf16.msra.mxu0 0
        %3012 = vmatprep.subr.bf16.mxu0 0
        %3013 = vmatpush1.bf16.msra.mxu0 0
        %3014 = vmatprep.subr.bf16.mxu0 0
        %3015 = vmatpush1.bf16.msra.mxu0 0
        %3016 = vmatprep.subr.bf16.mxu0 0
        %3017 = vmatpush1.bf16.msra.mxu0 0
        %3018 = vmatprep.subr.bf16.mxu0 0
        %3019 = vmatpush1.bf16.msra.mxu0 0
        %3020 = vmatprep.subr.bf16.mxu0 0
        %3021 = vmatpush1.bf16.msra.mxu0 0
        %3022 = vmatprep.subr.bf16.mxu0 0
        %3023 = vmatpush1.bf16.msra.mxu0 0
        %3024 = vmatprep.mubr.bf16.mxu0 0
        %3025 = vmatmul.mubr.bf16.gmra.mrb[0].mxu0 %v2981
        %v3026 = vpop.f32.mrb[0].mxu0
        %v3027 = vadd.f32 %v2938, %v3026
        %v3028 = vpop.f32.mrb[0].mxu0
        %v3029 = vpop.f32.mrb[0].mxu0
        %v3030 = vadd.f32 %v2941, %v3029
        %v3031 = vpop.f32.mrb[0].mxu0
        %3032 = vmatprep.mubr.bf16.mxu0 0
        %3033 = vmatmul.mubr.bf16.gmra.mrb[0].mxu0 %v2984
        %v3034 = vpop.f32.mrb[0].mxu0
        %v3035 = vadd.f32 %v2946, %v3034
        %v3036 = vpop.f32.mrb[0].mxu0
        %v3037 = vpop.f32.mrb[0].mxu0
        %v3038 = vadd.f32 %v2949, %v3037
        %v3039 = vpop.f32.mrb[0].mxu0
        %3040 = vmatprep.mubr.bf16.mxu0 0
        %3041 = vmatmul.mubr.bf16.gmra.mrb[0].mxu0 %v2987
        %v3042 = vpop.f32.mrb[0].mxu0
        %v3043 = vadd.f32 %v2954, %v3042
        %v3044 = vpop.f32.mrb[0].mxu0
        %v3045 = vpop.f32.mrb[0].mxu0
        %v3046 = vadd.f32 %v2957, %v3045
        %v3047 = vpop.f32.mrb[0].mxu0
        %3048 = vmatprep.mubr.bf16.mxu0 0
        %3049 = vmatmul.mubr.bf16.gmra.mrb[0].mxu0 %v2990
        %v3050 = vpop.f32.mrb[0].mxu0
        %v3051 = vadd.f32 %v2962, %v3050
        %v3052 = vpop.f32.mrb[0].mxu0
        %v3053 = vpop.f32.mrb[0].mxu0
        %v3054 = vadd.f32 %v2965, %v3053
        %v3055 = vpop.f32.mrb[0].mxu0
        %3056 = vdwg.mxu0
        %s3057 = scalar_lea.vmem %s3, 128
        %v3058 = vld [vmem:[%s3057] sm:$0xf]
        %v3059 = vld [vmem:[%s3057 + $0x4] sm:$0xf]
        %v3060 = vld [vmem:[%s3057 + $0x8] sm:$0xf]
        %v3061 = vld [vmem:[%s3057 + $0xc] sm:$0xf]
        %v3062 = vld [vmem:[%s3057 + $0x10] sm:$0xf]
        %v3063 = vld [vmem:[%s3057 + $0x14] sm:$0xf]
        %v3064 = vld [vmem:[%s3057 + $0x18] sm:$0xf]
        %v3065 = vld [vmem:[%s3057 + $0x1c] sm:$0xf]
        %v3066 = vld [vmem:[%s3057 + $0x20] sm:$0xf]
        %v3067 = vld [vmem:[%s3057 + $0x24] sm:$0xf]
        %v3068 = vld [vmem:[%s3057 + $0x28] sm:$0xf]
        %v3069 = vld [vmem:[%s3057 + $0x2c] sm:$0xf]
        %v3070 = vld [vmem:[%s3057 + $0x30] sm:$0xf]
        %v3071 = vld [vmem:[%s3057 + $0x34] sm:$0xf]
        %v3072 = vld [vmem:[%s3057 + $0x38] sm:$0xf]
        %v3073 = vld [vmem:[%s3057 + $0x3c] sm:$0xf]
        %s3074 = scalar_lea.vmem %s4, 2
        %v3075 = vld [vmem:[%s3074] sm:$0x1]
        %v3077 = vlaneseq
        %v3078 = vshrl.u32 %v3077, 7
        %v3079 = vsub.s32 0, %v3078
        %v3080 = vrot.slane %v3075, %v3079
        %v3098 = vunpack.c.l.b16 %v3058
        %v3099 = vunpack.c.l.b16 %v3059
        %v3100 = vunpack.c.l.b16 %v3060
        %v3101 = vunpack.c.l.b16 %v3061
        %v3102 = vunpack.c.l.b16 %v3062
        %v3103 = vunpack.c.l.b16 %v3063
        %v3104 = vunpack.c.l.b16 %v3064
        %v3105 = vunpack.c.l.b16 %v3065
        %v3106 = vunpack.c.l.b16 %v3066
        %v3107 = vunpack.c.l.b16 %v3067
        %v3108 = vunpack.c.l.b16 %v3068
        %v3109 = vunpack.c.l.b16 %v3069
        %v3110 = vunpack.c.l.b16 %v3070
        %v3111 = vunpack.c.l.b16 %v3071
        %v3112 = vunpack.c.l.b16 %v3072
        %v3113 = vunpack.c.l.b16 %v3073
        %v3114 = vpack.c.b16 %v3099, %v3098
        %v3115 = vpack.c.b16 %v3101, %v3100
        %v3116 = vpack.c.b16 %v3103, %v3102
        %v3117 = vpack.c.b16 %v3105, %v3104
        %v3118 = vpack.c.b16 %v3107, %v3106
        %v3119 = vpack.c.b16 %v3109, %v3108
        %v3120 = vpack.c.b16 %v3111, %v3110
        %v3121 = vpack.c.b16 %v3113, %v3112
        %3130 = vmatprep.subr.bf16.mxu0 0
        %3131 = vmatpush1.bf16.msra.mxu0 %v3114
        %3132 = vmatprep.subr.bf16.mxu0 0
        %3133 = vmatpush1.bf16.msra.mxu0 %v3115
        %3134 = vmatprep.subr.bf16.mxu0 0
        %3135 = vmatpush1.bf16.msra.mxu0 %v3116
        %3136 = vmatprep.subr.bf16.mxu0 0
        %3137 = vmatpush1.bf16.msra.mxu0 %v3117
        %3138 = vmatprep.subr.bf16.mxu0 0
        %3139 = vmatpush1.bf16.msra.mxu0 %v3118
        %3140 = vmatprep.subr.bf16.mxu0 0
        %3141 = vmatpush1.bf16.msra.mxu0 %v3119
        %3142 = vmatprep.subr.bf16.mxu0 0
        %3143 = vmatpush1.bf16.msra.mxu0 %v3120
        %3144 = vmatprep.subr.bf16.mxu0 0
        %3145 = vmatpush1.bf16.msra.mxu0 %v3121
        %3146 = vmatprep.subr.bf16.mxu0 0
        %3147 = vmatpush1.bf16.msra.mxu0 0
        %3148 = vmatprep.subr.bf16.mxu0 0
        %3149 = vmatpush1.bf16.msra.mxu0 0
        %3150 = vmatprep.subr.bf16.mxu0 0
        %3151 = vmatpush1.bf16.msra.mxu0 0
        %3152 = vmatprep.subr.bf16.mxu0 0
        %3153 = vmatpush1.bf16.msra.mxu0 0
        %3154 = vmatprep.subr.bf16.mxu0 0
        %3155 = vmatpush1.bf16.msra.mxu0 0
        %3156 = vmatprep.subr.bf16.mxu0 0
        %3157 = vmatpush1.bf16.msra.mxu0 0
        %3158 = vmatprep.subr.bf16.mxu0 0
        %3159 = vmatpush1.bf16.msra.mxu0 0
        %3160 = vmatprep.subr.bf16.mxu0 0
        %3161 = vmatpush1.bf16.msra.mxu0 0
        %3162 = vmatprep.mubr.bf16.mxu0 0
        %3163 = vmatmul.mubr.bf16.gmra.mrb[0].mxu0 %v2007
        %v3164 = vpop.f32.mrb[0].mxu0
        %v3165 = vadd.f32 %v3080, %v3164
        %v3166 = vpop.f32.mrb[0].mxu0
        %v3167 = vpop.f32.mrb[0].mxu0
        %v3168 = vadd.f32 %v3080, %v3167
        %v3169 = vpop.f32.mrb[0].mxu0
        %3170 = vmatprep.mubr.bf16.mxu0 0
        %3171 = vmatmul.mubr.bf16.gmra.mrb[0].mxu0 %v2008
        %v3172 = vpop.f32.mrb[0].mxu0
        %v3173 = vadd.f32 %v3080, %v3172
        %v3174 = vpop.f32.mrb[0].mxu0
        %v3175 = vpop.f32.mrb[0].mxu0
        %v3176 = vadd.f32 %v3080, %v3175
        %v3177 = vpop.f32.mrb[0].mxu0
        %3178 = vmatprep.mubr.bf16.mxu0 0
        %3179 = vmatmul.mubr.bf16.gmra.mrb[0].mxu0 %v2009
        %v3180 = vpop.f32.mrb[0].mxu0
        %v3181 = vadd.f32 %v3080, %v3180
        %v3182 = vpop.f32.mrb[0].mxu0
        %v3183 = vpop.f32.mrb[0].mxu0
        %v3184 = vadd.f32 %v3080, %v3183
        %v3185 = vpop.f32.mrb[0].mxu0
        %3186 = vmatprep.mubr.bf16.mxu0 0
        %3187 = vmatmul.mubr.bf16.gmra.mrb[0].mxu0 %v2010
        %v3188 = vpop.f32.mrb[0].mxu0
        %v3189 = vadd.f32 %v3080, %v3188
        %v3190 = vpop.f32.mrb[0].mxu0
        %v3191 = vpop.f32.mrb[0].mxu0
        %v3192 = vadd.f32 %v3080, %v3191
        %v3193 = vpop.f32.mrb[0].mxu0
        %3194 = vdwg.mxu0
        %v3195 = vpack.c.bf16 %v3168, %v3165
        %v3196 = vpack.c.bf16 %v3176, %v3173
        %v3197 = vpack.c.bf16 %v3184, %v3181
        %v3198 = vpack.c.bf16 %v3192, %v3189
        %s3199 = scalar_lea.vmem [#allocation2], 64
        %v3200 = vld [vmem:[%s3199] sm:$0xff]
        %v3201 = vld [vmem:[%s3199 + $0x8] sm:$0xff]
        %v3202 = vld [vmem:[%s3199 + $0x10] sm:$0xff]
        %v3203 = vld [vmem:[%s3199 + $0x18] sm:$0xff]
        %v3205 = vsel %vm2155, %v3195, 0
        %v3208 = vsel %vm2155, %v3196, 0
        %v3211 = vsel %vm2155, %v3197, 0
        %v3214 = vsel %vm2155, %v3198, 0
        %v3217 = vsel %vm2155, %v3200, 0
        %v3220 = vsel %vm2155, %v3201, 0
        %v3223 = vsel %vm2155, %v3202, 0
        %v3226 = vsel %vm2155, %v3203, 0
        %3228 = vmatprep.subr.bf16.mxu0 0
        %3229 = vmatpush1.bf16.xpose.msra.mxu0 %v3217
        %3230 = vmatprep.subr.bf16.mxu0 0
        %3231 = vmatpush1.bf16.xpose.msra.mxu0 %v3220
        %3232 = vmatprep.subr.bf16.mxu0 0
        %3233 = vmatpush1.bf16.xpose.msra.mxu0 %v3223
        %3234 = vmatprep.subr.bf16.mxu0 0
        %3235 = vmatpush1.bf16.xpose.msra.mxu0 %v3226
        %3236 = vmatprep.subr.bf16.mxu0 0
        %3237 = vmatpush1.bf16.xpose.msra.mxu0 0
        %3238 = vmatprep.subr.bf16.mxu0 0
        %3239 = vmatpush1.bf16.xpose.msra.mxu0 0
        %3240 = vmatprep.subr.bf16.mxu0 0
        %3241 = vmatpush1.bf16.xpose.msra.mxu0 0
        %3242 = vmatprep.subr.bf16.mxu0 0
        %3243 = vmatpush1.bf16.xpose.msra.mxu0 0
        %3244 = vmatprep.subr.bf16.mxu0 0
        %3245 = vmatpush1.bf16.xpose.msra.mxu0 0
        %3246 = vmatprep.subr.bf16.mxu0 0
        %3247 = vmatpush1.bf16.xpose.msra.mxu0 0
        %3248 = vmatprep.subr.bf16.mxu0 0
        %3249 = vmatpush1.bf16.xpose.msra.mxu0 0
        %3250 = vmatprep.subr.bf16.mxu0 0
        %3251 = vmatpush1.bf16.xpose.msra.mxu0 0
        %3252 = vmatprep.subr.bf16.mxu0 0
        %3253 = vmatpush1.bf16.xpose.msra.mxu0 0
        %3254 = vmatprep.subr.bf16.mxu0 0
        %3255 = vmatpush1.bf16.xpose.msra.mxu0 0
        %3256 = vmatprep.subr.bf16.mxu0 0
        %3257 = vmatpush1.bf16.xpose.msra.mxu0 0
        %3258 = vmatprep.subr.bf16.mxu0 0
        %3259 = vmatpush1.bf16.xpose.msra.mxu0 0
        %3260 = vmatprep.mubr.bf16.mxu0 0
        %3261 = vmatmul.mubr.bf16.gmra.mrb[0].mxu0 %v3205
        %v3262 = vpop.f32.mrb[0].mxu0
        %v3263 = vadd.f32 0.0, %v3262
        %v3264 = vpop.f32.mrb[0].mxu0
        %v3265 = vpop.f32.mrb[0].mxu0
        %v3266 = vadd.f32 0.0, %v3265
        %v3267 = vpop.f32.mrb[0].mxu0
        %3268 = vmatprep.mubr.bf16.mxu0 0
        %3269 = vmatmul.mubr.bf16.gmra.mrb[0].mxu0 %v3208
        %v3270 = vpop.f32.mrb[0].mxu0
        %v3271 = vadd.f32 0.0, %v3270
        %v3272 = vpop.f32.mrb[0].mxu0
        %v3273 = vpop.f32.mrb[0].mxu0
        %v3274 = vadd.f32 0.0, %v3273
        %v3275 = vpop.f32.mrb[0].mxu0
        %3276 = vmatprep.mubr.bf16.mxu0 0
        %3277 = vmatmul.mubr.bf16.gmra.mrb[0].mxu0 %v3211
        %v3278 = vpop.f32.mrb[0].mxu0
        %v3279 = vadd.f32 0.0, %v3278
        %v3280 = vpop.f32.mrb[0].mxu0
        %v3281 = vpop.f32.mrb[0].mxu0
        %v3282 = vadd.f32 0.0, %v3281
        %v3283 = vpop.f32.mrb[0].mxu0
        %3284 = vmatprep.mubr.bf16.mxu0 0
        %3285 = vmatmul.mubr.bf16.gmra.mrb[0].mxu0 %v3214
        %v3286 = vpop.f32.mrb[0].mxu0
        %v3287 = vadd.f32 0.0, %v3286
        %v3288 = vpop.f32.mrb[0].mxu0
        %v3289 = vpop.f32.mrb[0].mxu0
        %v3290 = vadd.f32 0.0, %v3289
        %v3291 = vpop.f32.mrb[0].mxu0
        %3292 = vdwg.mxu0
        %v3293 = vmul.f32 %v3263, %v2245
        %v3294 = vmul.f32 %v3266, %v2245
        %v3295 = vmul.f32 %v3271, %v2245
        %v3296 = vmul.f32 %v3274, %v2245
        %v3297 = vmul.f32 %v3279, %v2245
        %v3298 = vmul.f32 %v3282, %v2245
        %v3299 = vmul.f32 %v3287, %v2245
        %v3300 = vmul.f32 %v3290, %v2245
        %v3301 = vfloor.f32 %v3293
        %v3302 = vfloor.f32 %v3294
        %v3303 = vfloor.f32 %v3295
        %v3304 = vfloor.f32 %v3296
        %v3305 = vfloor.f32 %v3297
        %v3306 = vfloor.f32 %v3298
        %v3307 = vfloor.f32 %v3299
        %v3308 = vfloor.f32 %v3300
        %v3309 = vsel %vm2262, %v3301, -inf
        %3310 = vmax.xlane.f32.xlu0 %v3309
        %v3311 = vpop.xlane.xlu0 %3310
        %v3312 = vsel %vm2262, %v3302, -inf
        %3313 = vmax.xlane.f32.xlu0 %v3312
        %v3314 = vpop.xlane.xlu0 %3313
        %v3315 = vsel %vm2262, %v3303, -inf
        %3316 = vmax.xlane.f32.xlu0 %v3315
        %v3317 = vpop.xlane.xlu0 %3316
        %v3318 = vsel %vm2262, %v3304, -inf
        %3319 = vmax.xlane.f32.xlu0 %v3318
        %v3320 = vpop.xlane.xlu0 %3319
        %v3321 = vsel %vm2262, %v3305, -inf
        %3322 = vmax.xlane.f32.xlu0 %v3321
        %v3323 = vpop.xlane.xlu0 %3322
        %v3324 = vsel %vm2262, %v3306, -inf
        %3325 = vmax.xlane.f32.xlu0 %v3324
        %v3326 = vpop.xlane.xlu0 %3325
        %v3327 = vsel %vm2262, %v3307, -inf
        %3328 = vmax.xlane.f32.xlu0 %v3327
        %v3329 = vpop.xlane.xlu0 %3328
        %v3330 = vsel %vm2262, %v3308, -inf
        %3331 = vmax.xlane.f32.xlu0 %v3330
        %v3332 = vpop.xlane.xlu0 %3331
        %v3333 = vsub.f32 %v3301, %v3311
        %v3334 = vsub.f32 %v3302, %v3314
        %v3335 = vsub.f32 %v3303, %v3317
        %v3336 = vsub.f32 %v3304, %v3320
        %v3337 = vsub.f32 %v3305, %v3323
        %v3338 = vsub.f32 %v3306, %v3326
        %v3339 = vsub.f32 %v3307, %v3329
        %v3340 = vsub.f32 %v3308, %v3332
        %v3341 = vmul.f32 %v3333, 1.442695
        %v3342 = vpow.pop %v3341
        %v3343 = vmul.f32 %v3334, 1.442695
        %v3344 = vpow.pop %v3343
        %v3345 = vmul.f32 %v3335, 1.442695
        %v3346 = vpow.pop %v3345
        %v3347 = vmul.f32 %v3336, 1.442695
        %v3348 = vpow.pop %v3347
        %v3349 = vmul.f32 %v3337, 1.442695
        %v3350 = vpow.pop %v3349
        %v3351 = vmul.f32 %v3338, 1.442695
        %v3352 = vpow.pop %v3351
        %v3353 = vmul.f32 %v3339, 1.442695
        %v3354 = vpow.pop %v3353
        %v3355 = vmul.f32 %v3340, 1.442695
        %v3356 = vpow.pop %v3355
        %v3357 = vsel %vm2262, %v3342, 0.0
        %3358 = vadd.xlane.f32.xlu0 %v3357
        %v3359 = vpop.xlane.xlu0 %3358
        %v3360 = vsel %vm2262, %v3344, 0.0
        %3361 = vadd.xlane.f32.xlu0 %v3360
        %v3362 = vpop.xlane.xlu0 %3361
        %v3363 = vsel %vm2262, %v3346, 0.0
        %3364 = vadd.xlane.f32.xlu0 %v3363
        %v3365 = vpop.xlane.xlu0 %3364
        %v3366 = vsel %vm2262, %v3348, 0.0
        %3367 = vadd.xlane.f32.xlu0 %v3366
        %v3368 = vpop.xlane.xlu0 %3367
        %v3369 = vsel %vm2262, %v3350, 0.0
        %3370 = vadd.xlane.f32.xlu0 %v3369
        %v3371 = vpop.xlane.xlu0 %3370
        %v3372 = vsel %vm2262, %v3352, 0.0
        %3373 = vadd.xlane.f32.xlu0 %v3372
        %v3374 = vpop.xlane.xlu0 %3373
        %v3375 = vsel %vm2262, %v3354, 0.0
        %3376 = vadd.xlane.f32.xlu0 %v3375
        %v3377 = vpop.xlane.xlu0 %3376
        %v3378 = vsel %vm2262, %v3356, 0.0
        %3379 = vadd.xlane.f32.xlu0 %v3378
        %v3380 = vpop.xlane.xlu0 %3379
        %v3381 = vrcp.pop %v3359
        %v3382 = vrcp.pop %v3362
        %v3383 = vrcp.pop %v3365
        %v3384 = vrcp.pop %v3368
        %v3385 = vrcp.pop %v3371
        %v3386 = vrcp.pop %v3374
        %v3387 = vrcp.pop %v3377
        %v3388 = vrcp.pop %v3380
        %v3389 = vmul.f32 %v3342, %v3381
        %v3390 = vmul.f32 %v3344, %v3382
        %v3391 = vmul.f32 %v3346, %v3383
        %v3392 = vmul.f32 %v3348, %v3384
        %v3393 = vmul.f32 %v3350, %v3385
        %v3394 = vmul.f32 %v3352, %v3386
        %v3395 = vmul.f32 %v3354, %v3387
        %v3396 = vmul.f32 %v3356, %v3388
        %v3397 = vpack.c.bf16 %v3390, %v3389
        %v3398 = vpack.c.bf16 %v3392, %v3391
        %v3399 = vpack.c.bf16 %v3394, %v3393
        %v3400 = vpack.c.bf16 %v3396, %v3395
        %s3401 = scalar_lea.vmem [#allocation3], 64
        %v3402 = vld [vmem:[%s3401] sm:$0xff]
        %v3403 = vld [vmem:[%s3401 + $0x8] sm:$0xff]
        %v3404 = vld [vmem:[%s3401 + $0x10] sm:$0xff]
        %v3405 = vld [vmem:[%s3401 + $0x18] sm:$0xff]
        %v3407 = vsel %vm2262, %v3397, 0
        %v3410 = vsel %vm2262, %v3398, 0
        %v3413 = vsel %vm2262, %v3399, 0
        %v3416 = vsel %vm2262, %v3400, 0
        %3418 = vmatprep.subr.bf16.mxu0 0
        %3419 = vmatpush1.bf16.msra.mxu0 %v3402
        %3420 = vmatprep.subr.bf16.mxu0 0
        %3421 = vmatpush1.bf16.msra.mxu0 %v3403
        %3422 = vmatprep.subr.bf16.mxu0 0
        %3423 = vmatpush1.bf16.msra.mxu0 %v3404
        %3424 = vmatprep.subr.bf16.mxu0 0
        %3425 = vmatpush1.bf16.msra.mxu0 %v3405
        %3426 = vmatprep.subr.bf16.mxu0 0
        %3427 = vmatpush1.bf16.msra.mxu0 0
        %3428 = vmatprep.subr.bf16.mxu0 0
        %3429 = vmatpush1.bf16.msra.mxu0 0
        %3430 = vmatprep.subr.bf16.mxu0 0
        %3431 = vmatpush1.bf16.msra.mxu0 0
        %3432 = vmatprep.subr.bf16.mxu0 0
        %3433 = vmatpush1.bf16.msra.mxu0 0
        %3434 = vmatprep.subr.bf16.mxu0 0
        %3435 = vmatpush1.bf16.msra.mxu0 0
        %3436 = vmatprep.subr.bf16.mxu0 0
        %3437 = vmatpush1.bf16.msra.mxu0 0
        %3438 = vmatprep.subr.bf16.mxu0 0
        %3439 = vmatpush1.bf16.msra.mxu0 0
        %3440 = vmatprep.subr.bf16.mxu0 0
        %3441 = vmatpush1.bf16.msra.mxu0 0
        %3442 = vmatprep.subr.bf16.mxu0 0
        %3443 = vmatpush1.bf16.msra.mxu0 0
        %3444 = vmatprep.subr.bf16.mxu0 0
        %3445 = vmatpush1.bf16.msra.mxu0 0
        %3446 = vmatprep.subr.bf16.mxu0 0
        %3447 = vmatpush1.bf16.msra.mxu0 0
        %3448 = vmatprep.subr.bf16.mxu0 0
        %3449 = vmatpush1.bf16.msra.mxu0 0
        %3450 = vmatprep.mubr.bf16.mxu0 0
        %3451 = vmatmul.mubr.bf16.gmra.mrb[0].mxu0 %v3407
        %v3452 = vpop.f32.mrb[0].mxu0
        %v3453 = vadd.f32 0.0, %v3452
        %v3454 = vpop.f32.mrb[0].mxu0
        %v3455 = vpop.f32.mrb[0].mxu0
        %v3456 = vadd.f32 0.0, %v3455
        %v3457 = vpop.f32.mrb[0].mxu0
        %3458 = vmatprep.mubr.bf16.mxu0 0
        %3459 = vmatmul.mubr.bf16.gmra.mrb[0].mxu0 %v3410
        %v3460 = vpop.f32.mrb[0].mxu0
        %v3461 = vadd.f32 0.0, %v3460
        %v3462 = vpop.f32.mrb[0].mxu0
        %v3463 = vpop.f32.mrb[0].mxu0
        %v3464 = vadd.f32 0.0, %v3463
        %v3465 = vpop.f32.mrb[0].mxu0
        %3466 = vmatprep.mubr.bf16.mxu0 0
        %3467 = vmatmul.mubr.bf16.gmra.mrb[0].mxu0 %v3413
        %v3468 = vpop.f32.mrb[0].mxu0
        %v3469 = vadd.f32 0.0, %v3468
        %v3470 = vpop.f32.mrb[0].mxu0
        %v3471 = vpop.f32.mrb[0].mxu0
        %v3472 = vadd.f32 0.0, %v3471
        %v3473 = vpop.f32.mrb[0].mxu0
        %3474 = vmatprep.mubr.bf16.mxu0 0
        %3475 = vmatmul.mubr.bf16.gmra.mrb[0].mxu0 %v3416
        %v3476 = vpop.f32.mrb[0].mxu0
        %v3477 = vadd.f32 0.0, %v3476
        %v3478 = vpop.f32.mrb[0].mxu0
        %v3479 = vpop.f32.mrb[0].mxu0
        %v3480 = vadd.f32 0.0, %v3479
        %v3481 = vpop.f32.mrb[0].mxu0
        %3482 = vdwg.mxu0
        %v3483 = vpack.c.bf16 %v3456, %v3453
        %v3484 = vpack.c.bf16 %v3464, %v3461
        %v3485 = vpack.c.bf16 %v3472, %v3469
        %v3486 = vpack.c.bf16 %v3480, %v3477
        %s3487 = scalar_lea.vmem %s9, 32
        %v3488 = vld [vmem:[%s3487] sm:$0xf]
        %v3489 = vld [vmem:[%s3487 + $0x4] sm:$0xf]
        %v3490 = vld [vmem:[%s3487 + $0x8] sm:$0xf]
        %v3491 = vld [vmem:[%s3487 + $0xc] sm:$0xf]
        %v3496 = vunpack.c.l.b16 %v3488
        %v3497 = vunpack.c.l.b16 %v3489
        %v3498 = vunpack.c.l.b16 %v3490
        %v3499 = vunpack.c.l.b16 %v3491
        %v3500 = vpack.c.b16 %v3497, %v3496
        %v3501 = vpack.c.b16 %v3499, %v3498
        %v3505 = vsel %vm2155, %v3483, 0
        %v3508 = vsel %vm2155, %v3484, 0
        %v3511 = vsel %vm2155, %v3485, 0
        %v3514 = vsel %vm2155, %v3486, 0
        %3516 = vmatprep.subr.bf16.mxu0 0
        %3517 = vmatpush1.bf16.msra.mxu0 %v3500
        %3518 = vmatprep.subr.bf16.mxu0 0
        %3519 = vmatpush1.bf16.msra.mxu0 %v3501
        %3520 = vmatprep.subr.bf16.mxu0 0
        %3521 = vmatpush1.bf16.msra.mxu0 0
        %3522 = vmatprep.subr.bf16.mxu0 0
        %3523 = vmatpush1.bf16.msra.mxu0 0
        %3524 = vmatprep.subr.bf16.mxu0 0
        %3525 = vmatpush1.bf16.msra.mxu0 0
        %3526 = vmatprep.subr.bf16.mxu0 0
        %3527 = vmatpush1.bf16.msra.mxu0 0
        %3528 = vmatprep.subr.bf16.mxu0 0
        %3529 = vmatpush1.bf16.msra.mxu0 0
        %3530 = vmatprep.subr.bf16.mxu0 0
        %3531 = vmatpush1.bf16.msra.mxu0 0
        %3532 = vmatprep.subr.bf16.mxu0 0
        %3533 = vmatpush1.bf16.msra.mxu0 0
        %3534 = vmatprep.subr.bf16.mxu0 0
        %3535 = vmatpush1.bf16.msra.mxu0 0
        %3536 = vmatprep.subr.bf16.mxu0 0
        %3537 = vmatpush1.bf16.msra.mxu0 0
        %3538 = vmatprep.subr.bf16.mxu0 0
        %3539 = vmatpush1.bf16.msra.mxu0 0
        %3540 = vmatprep.subr.bf16.mxu0 0
        %3541 = vmatpush1.bf16.msra.mxu0 0
        %3542 = vmatprep.subr.bf16.mxu0 0
        %3543 = vmatpush1.bf16.msra.mxu0 0
        %3544 = vmatprep.subr.bf16.mxu0 0
        %3545 = vmatpush1.bf16.msra.mxu0 0
        %3546 = vmatprep.subr.bf16.mxu0 0
        %3547 = vmatpush1.bf16.msra.mxu0 0
        %3548 = vmatprep.mubr.bf16.mxu0 0
        %3549 = vmatmul.mubr.bf16.gmra.mrb[0].mxu0 %v3505
        %v3550 = vpop.f32.mrb[0].mxu0
        %v3551 = vadd.f32 0.0, %v3550
        %v3552 = vpop.f32.mrb[0].mxu0
        %v3553 = vpop.f32.mrb[0].mxu0
        %v3554 = vadd.f32 0.0, %v3553
        %v3555 = vpop.f32.mrb[0].mxu0
        %3556 = vmatprep.mubr.bf16.mxu0 0
        %3557 = vmatmul.mubr.bf16.gmra.mrb[0].mxu0 %v3508
        %v3558 = vpop.f32.mrb[0].mxu0
        %v3559 = vadd.f32 0.0, %v3558
        %v3560 = vpop.f32.mrb[0].mxu0
        %v3561 = vpop.f32.mrb[0].mxu0
        %v3562 = vadd.f32 0.0, %v3561
        %v3563 = vpop.f32.mrb[0].mxu0
        %3564 = vmatprep.mubr.bf16.mxu0 0
        %3565 = vmatmul.mubr.bf16.gmra.mrb[0].mxu0 %v3511
        %v3566 = vpop.f32.mrb[0].mxu0
        %v3567 = vadd.f32 0.0, %v3566
        %v3568 = vpop.f32.mrb[0].mxu0
        %v3569 = vpop.f32.mrb[0].mxu0
        %v3570 = vadd.f32 0.0, %v3569
        %v3571 = vpop.f32.mrb[0].mxu0
        %3572 = vmatprep.mubr.bf16.mxu0 0
        %3573 = vmatmul.mubr.bf16.gmra.mrb[0].mxu0 %v3514
        %v3574 = vpop.f32.mrb[0].mxu0
        %v3575 = vadd.f32 0.0, %v3574
        %v3576 = vpop.f32.mrb[0].mxu0
        %v3577 = vpop.f32.mrb[0].mxu0
        %v3578 = vadd.f32 0.0, %v3577
        %v3579 = vpop.f32.mrb[0].mxu0
        %3580 = vdwg.mxu0
        %v3581 = vadd.f32 %v3027, %v3551
        %v3582 = vadd.f32 %v3030, %v3554
        %v3583 = vadd.f32 %v3035, %v3559
        %v3584 = vadd.f32 %v3038, %v3562
        %v3585 = vadd.f32 %v3043, %v3567
        %v3586 = vadd.f32 %v3046, %v3570
        %v3587 = vadd.f32 %v3051, %v3575
        %v3588 = vadd.f32 %v3054, %v3578
        %s3589 = scalar_lea.vmem %s3, 192
        %v3590 = vld [vmem:[%s3589] sm:$0xf]
        %v3591 = vld [vmem:[%s3589 + $0x4] sm:$0xf]
        %v3592 = vld [vmem:[%s3589 + $0x8] sm:$0xf]
        %v3593 = vld [vmem:[%s3589 + $0xc] sm:$0xf]
        %v3594 = vld [vmem:[%s3589 + $0x10] sm:$0xf]
        %v3595 = vld [vmem:[%s3589 + $0x14] sm:$0xf]
        %v3596 = vld [vmem:[%s3589 + $0x18] sm:$0xf]
        %v3597 = vld [vmem:[%s3589 + $0x1c] sm:$0xf]
        %v3598 = vld [vmem:[%s3589 + $0x20] sm:$0xf]
        %v3599 = vld [vmem:[%s3589 + $0x24] sm:$0xf]
        %v3600 = vld [vmem:[%s3589 + $0x28] sm:$0xf]
        %v3601 = vld [vmem:[%s3589 + $0x2c] sm:$0xf]
        %v3602 = vld [vmem:[%s3589 + $0x30] sm:$0xf]
        %v3603 = vld [vmem:[%s3589 + $0x34] sm:$0xf]
        %v3604 = vld [vmem:[%s3589 + $0x38] sm:$0xf]
        %v3605 = vld [vmem:[%s3589 + $0x3c] sm:$0xf]
        %s3606 = scalar_lea.vmem %s4, 3
        %v3607 = vld [vmem:[%s3606] sm:$0x1]
        %v3609 = vlaneseq
        %v3610 = vshrl.u32 %v3609, 7
        %v3611 = vsub.s32 0, %v3610
        %v3612 = vrot.slane %v3607, %v3611
        %v3630 = vunpack.c.l.b16 %v3590
        %v3631 = vunpack.c.l.b16 %v3591
        %v3632 = vunpack.c.l.b16 %v3592
        %v3633 = vunpack.c.l.b16 %v3593
        %v3634 = vunpack.c.l.b16 %v3594
        %v3635 = vunpack.c.l.b16 %v3595
        %v3636 = vunpack.c.l.b16 %v3596
        %v3637 = vunpack.c.l.b16 %v3597
        %v3638 = vunpack.c.l.b16 %v3598
        %v3639 = vunpack.c.l.b16 %v3599
        %v3640 = vunpack.c.l.b16 %v3600
        %v3641 = vunpack.c.l.b16 %v3601
        %v3642 = vunpack.c.l.b16 %v3602
        %v3643 = vunpack.c.l.b16 %v3603
        %v3644 = vunpack.c.l.b16 %v3604
        %v3645 = vunpack.c.l.b16 %v3605
        %v3646 = vpack.c.b16 %v3631, %v3630
        %v3647 = vpack.c.b16 %v3633, %v3632
        %v3648 = vpack.c.b16 %v3635, %v3634
        %v3649 = vpack.c.b16 %v3637, %v3636
        %v3650 = vpack.c.b16 %v3639, %v3638
        %v3651 = vpack.c.b16 %v3641, %v3640
        %v3652 = vpack.c.b16 %v3643, %v3642
        %v3653 = vpack.c.b16 %v3645, %v3644
        %3662 = vmatprep.subr.bf16.mxu0 0
        %3663 = vmatpush1.bf16.msra.mxu0 %v3646
        %3664 = vmatprep.subr.bf16.mxu0 0
        %3665 = vmatpush1.bf16.msra.mxu0 %v3647
        %3666 = vmatprep.subr.bf16.mxu0 0
        %3667 = vmatpush1.bf16.msra.mxu0 %v3648
        %3668 = vmatprep.subr.bf16.mxu0 0
        %3669 = vmatpush1.bf16.msra.mxu0 %v3649
        %3670 = vmatprep.subr.bf16.mxu0 0
        %3671 = vmatpush1.bf16.msra.mxu0 %v3650
        %3672 = vmatprep.subr.bf16.mxu0 0
        %3673 = vmatpush1.bf16.msra.mxu0 %v3651
        %3674 = vmatprep.subr.bf16.mxu0 0
        %3675 = vmatpush1.bf16.msra.mxu0 %v3652
        %3676 = vmatprep.subr.bf16.mxu0 0
        %3677 = vmatpush1.bf16.msra.mxu0 %v3653
        %3678 = vmatprep.subr.bf16.mxu0 0
        %3679 = vmatpush1.bf16.msra.mxu0 0
        %3680 = vmatprep.subr.bf16.mxu0 0
        %3681 = vmatpush1.bf16.msra.mxu0 0
        %3682 = vmatprep.subr.bf16.mxu0 0
        %3683 = vmatpush1.bf16.msra.mxu0 0
        %3684 = vmatprep.subr.bf16.mxu0 0
        %3685 = vmatpush1.bf16.msra.mxu0 0
        %3686 = vmatprep.subr.bf16.mxu0 0
        %3687 = vmatpush1.bf16.msra.mxu0 0
        %3688 = vmatprep.subr.bf16.mxu0 0
        %3689 = vmatpush1.bf16.msra.mxu0 0
        %3690 = vmatprep.subr.bf16.mxu0 0
        %3691 = vmatpush1.bf16.msra.mxu0 0
        %3692 = vmatprep.subr.bf16.mxu0 0
        %3693 = vmatpush1.bf16.msra.mxu0 0
        %3694 = vmatprep.mubr.bf16.mxu0 0
        %3695 = vmatmul.mubr.bf16.gmra.mrb[0].mxu0 %v2007
        %v3696 = vpop.f32.mrb[0].mxu0
        %v3697 = vadd.f32 %v3612, %v3696
        %v3698 = vpop.f32.mrb[0].mxu0
        %v3699 = vpop.f32.mrb[0].mxu0
        %v3700 = vadd.f32 %v3612, %v3699
        %v3701 = vpop.f32.mrb[0].mxu0
        %3702 = vmatprep.mubr.bf16.mxu0 0
        %3703 = vmatmul.mubr.bf16.gmra.mrb[0].mxu0 %v2008
        %v3704 = vpop.f32.mrb[0].mxu0
        %v3705 = vadd.f32 %v3612, %v3704
        %v3706 = vpop.f32.mrb[0].mxu0
        %v3707 = vpop.f32.mrb[0].mxu0
        %v3708 = vadd.f32 %v3612, %v3707
        %v3709 = vpop.f32.mrb[0].mxu0
        %3710 = vmatprep.mubr.bf16.mxu0 0
        %3711 = vmatmul.mubr.bf16.gmra.mrb[0].mxu0 %v2009
        %v3712 = vpop.f32.mrb[0].mxu0
        %v3713 = vadd.f32 %v3612, %v3712
        %v3714 = vpop.f32.mrb[0].mxu0
        %v3715 = vpop.f32.mrb[0].mxu0
        %v3716 = vadd.f32 %v3612, %v3715
        %v3717 = vpop.f32.mrb[0].mxu0
        %3718 = vmatprep.mubr.bf16.mxu0 0
        %3719 = vmatmul.mubr.bf16.gmra.mrb[0].mxu0 %v2010
        %v3720 = vpop.f32.mrb[0].mxu0
        %v3721 = vadd.f32 %v3612, %v3720
        %v3722 = vpop.f32.mrb[0].mxu0
        %v3723 = vpop.f32.mrb[0].mxu0
        %v3724 = vadd.f32 %v3612, %v3723
        %v3725 = vpop.f32.mrb[0].mxu0
        %3726 = vdwg.mxu0
        %v3727 = vpack.c.bf16 %v3700, %v3697
        %v3728 = vpack.c.bf16 %v3708, %v3705
        %v3729 = vpack.c.bf16 %v3716, %v3713
        %v3730 = vpack.c.bf16 %v3724, %v3721
        %s3731 = scalar_lea.vmem [#allocation2], 96
        %v3732 = vld [vmem:[%s3731] sm:$0xff]
        %v3733 = vld [vmem:[%s3731 + $0x8] sm:$0xff]
        %v3734 = vld [vmem:[%s3731 + $0x10] sm:$0xff]
        %v3735 = vld [vmem:[%s3731 + $0x18] sm:$0xff]
        %v3737 = vsel %vm2155, %v3727, 0
        %v3740 = vsel %vm2155, %v3728, 0
        %v3743 = vsel %vm2155, %v3729, 0
        %v3746 = vsel %vm2155, %v3730, 0
        %v3749 = vsel %vm2155, %v3732, 0
        %v3752 = vsel %vm2155, %v3733, 0
        %v3755 = vsel %vm2155, %v3734, 0
        %v3758 = vsel %vm2155, %v3735, 0
        %3760 = vmatprep.subr.bf16.mxu0 0
        %3761 = vmatpush1.bf16.xpose.msra.mxu0 %v3749
        %3762 = vmatprep.subr.bf16.mxu0 0
        %3763 = vmatpush1.bf16.xpose.msra.mxu0 %v3752
        %3764 = vmatprep.subr.bf16.mxu0 0
        %3765 = vmatpush1.bf16.xpose.msra.mxu0 %v3755
        %3766 = vmatprep.subr.bf16.mxu0 0
        %3767 = vmatpush1.bf16.xpose.msra.mxu0 %v3758
        %3768 = vmatprep.subr.bf16.mxu0 0
        %3769 = vmatpush1.bf16.xpose.msra.mxu0 0
        %3770 = vmatprep.subr.bf16.mxu0 0
        %3771 = vmatpush1.bf16.xpose.msra.mxu0 0
        %3772 = vmatprep.subr.bf16.mxu0 0
        %3773 = vmatpush1.bf16.xpose.msra.mxu0 0
        %3774 = vmatprep.subr.bf16.mxu0 0
        %3775 = vmatpush1.bf16.xpose.msra.mxu0 0
        %3776 = vmatprep.subr.bf16.mxu0 0
        %3777 = vmatpush1.bf16.xpose.msra.mxu0 0
        %3778 = vmatprep.subr.bf16.mxu0 0
        %3779 = vmatpush1.bf16.xpose.msra.mxu0 0
        %3780 = vmatprep.subr.bf16.mxu0 0
        %3781 = vmatpush1.bf16.xpose.msra.mxu0 0
        %3782 = vmatprep.subr.bf16.mxu0 0
        %3783 = vmatpush1.bf16.xpose.msra.mxu0 0
        %3784 = vmatprep.subr.bf16.mxu0 0
        %3785 = vmatpush1.bf16.xpose.msra.mxu0 0
        %3786 = vmatprep.subr.bf16.mxu0 0
        %3787 = vmatpush1.bf16.xpose.msra.mxu0 0
        %3788 = vmatprep.subr.bf16.mxu0 0
        %3789 = vmatpush1.bf16.xpose.msra.mxu0 0
        %3790 = vmatprep.subr.bf16.mxu0 0
        %3791 = vmatpush1.bf16.xpose.msra.mxu0 0
        %3792 = vmatprep.mubr.bf16.mxu0 0
        %3793 = vmatmul.mubr.bf16.gmra.mrb[0].mxu0 %v3737
        %v3794 = vpop.f32.mrb[0].mxu0
        %v3795 = vadd.f32 0.0, %v3794
        %v3796 = vpop.f32.mrb[0].mxu0
        %v3797 = vpop.f32.mrb[0].mxu0
        %v3798 = vadd.f32 0.0, %v3797
        %v3799 = vpop.f32.mrb[0].mxu0
        %3800 = vmatprep.mubr.bf16.mxu0 0
        %3801 = vmatmul.mubr.bf16.gmra.mrb[0].mxu0 %v3740
        %v3802 = vpop.f32.mrb[0].mxu0
        %v3803 = vadd.f32 0.0, %v3802
        %v3804 = vpop.f32.mrb[0].mxu0
        %v3805 = vpop.f32.mrb[0].mxu0
        %v3806 = vadd.f32 0.0, %v3805
        %v3807 = vpop.f32.mrb[0].mxu0
        %3808 = vmatprep.mubr.bf16.mxu0 0
        %3809 = vmatmul.mubr.bf16.gmra.mrb[0].mxu0 %v3743
        %v3810 = vpop.f32.mrb[0].mxu0
        %v3811 = vadd.f32 0.0, %v3810
        %v3812 = vpop.f32.mrb[0].mxu0
        %v3813 = vpop.f32.mrb[0].mxu0
        %v3814 = vadd.f32 0.0, %v3813
        %v3815 = vpop.f32.mrb[0].mxu0
        %3816 = vmatprep.mubr.bf16.mxu0 0
        %3817 = vmatmul.mubr.bf16.gmra.mrb[0].mxu0 %v3746
        %v3818 = vpop.f32.mrb[0].mxu0
        %v3819 = vadd.f32 0.0, %v3818
        %v3820 = vpop.f32.mrb[0].mxu0
        %v3821 = vpop.f32.mrb[0].mxu0
        %v3822 = vadd.f32 0.0, %v3821
        %v3823 = vpop.f32.mrb[0].mxu0
        %3824 = vdwg.mxu0
        %v3825 = vmul.f32 %v3795, %v2245
        %v3826 = vmul.f32 %v3798, %v2245
        %v3827 = vmul.f32 %v3803, %v2245
        %v3828 = vmul.f32 %v3806, %v2245
        %v3829 = vmul.f32 %v3811, %v2245
        %v3830 = vmul.f32 %v3814, %v2245
        %v3831 = vmul.f32 %v3819, %v2245
        %v3832 = vmul.f32 %v3822, %v2245
        %v3833 = vfloor.f32 %v3825
        %v3834 = vfloor.f32 %v3826
        %v3835 = vfloor.f32 %v3827
        %v3836 = vfloor.f32 %v3828
        %v3837 = vfloor.f32 %v3829
        %v3838 = vfloor.f32 %v3830
        %v3839 = vfloor.f32 %v3831
        %v3840 = vfloor.f32 %v3832
        %v3841 = vsel %vm2262, %v3833, -inf
        %3842 = vmax.xlane.f32.xlu0 %v3841
        %v3843 = vpop.xlane.xlu0 %3842
        %v3844 = vsel %vm2262, %v3834, -inf
        %3845 = vmax.xlane.f32.xlu0 %v3844
        %v3846 = vpop.xlane.xlu0 %3845
        %v3847 = vsel %vm2262, %v3835, -inf
        %3848 = vmax.xlane.f32.xlu0 %v3847
        %v3849 = vpop.xlane.xlu0 %3848
        %v3850 = vsel %vm2262, %v3836, -inf
        %3851 = vmax.xlane.f32.xlu0 %v3850
        %v3852 = vpop.xlane.xlu0 %3851
        %v3853 = vsel %vm2262, %v3837, -inf
        %3854 = vmax.xlane.f32.xlu0 %v3853
        %v3855 = vpop.xlane.xlu0 %3854
        %v3856 = vsel %vm2262, %v3838, -inf
        %3857 = vmax.xlane.f32.xlu0 %v3856
        %v3858 = vpop.xlane.xlu0 %3857
        %v3859 = vsel %vm2262, %v3839, -inf
        %3860 = vmax.xlane.f32.xlu0 %v3859
        %v3861 = vpop.xlane.xlu0 %3860
        %v3862 = vsel %vm2262, %v3840, -inf
        %3863 = vmax.xlane.f32.xlu0 %v3862
        %v3864 = vpop.xlane.xlu0 %3863
        %v3865 = vsub.f32 %v3833, %v3843
        %v3866 = vsub.f32 %v3834, %v3846
        %v3867 = vsub.f32 %v3835, %v3849
        %v3868 = vsub.f32 %v3836, %v3852
        %v3869 = vsub.f32 %v3837, %v3855
        %v3870 = vsub.f32 %v3838, %v3858
        %v3871 = vsub.f32 %v3839, %v3861
        %v3872 = vsub.f32 %v3840, %v3864
        %v3873 = vmul.f32 %v3865, 1.442695
        %v3874 = vpow.pop %v3873
        %v3875 = vmul.f32 %v3866, 1.442695
        %v3876 = vpow.pop %v3875
        %v3877 = vmul.f32 %v3867, 1.442695
        %v3878 = vpow.pop %v3877
        %v3879 = vmul.f32 %v3868, 1.442695
        %v3880 = vpow.pop %v3879
        %v3881 = vmul.f32 %v3869, 1.442695
        %v3882 = vpow.pop %v3881
        %v3883 = vmul.f32 %v3870, 1.442695
        %v3884 = vpow.pop %v3883
        %v3885 = vmul.f32 %v3871, 1.442695
        %v3886 = vpow.pop %v3885
        %v3887 = vmul.f32 %v3872, 1.442695
        %v3888 = vpow.pop %v3887
        %v3889 = vsel %vm2262, %v3874, 0.0
        %3890 = vadd.xlane.f32.xlu0 %v3889
        %v3891 = vpop.xlane.xlu0 %3890
        %v3892 = vsel %vm2262, %v3876, 0.0
        %3893 = vadd.xlane.f32.xlu0 %v3892
        %v3894 = vpop.xlane.xlu0 %3893
        %v3895 = vsel %vm2262, %v3878, 0.0
        %3896 = vadd.xlane.f32.xlu0 %v3895
        %v3897 = vpop.xlane.xlu0 %3896
        %v3898 = vsel %vm2262, %v3880, 0.0
        %3899 = vadd.xlane.f32.xlu0 %v3898
        %v3900 = vpop.xlane.xlu0 %3899
        %v3901 = vsel %vm2262, %v3882, 0.0
        %3902 = vadd.xlane.f32.xlu0 %v3901
        %v3903 = vpop.xlane.xlu0 %3902
        %v3904 = vsel %vm2262, %v3884, 0.0
        %3905 = vadd.xlane.f32.xlu0 %v3904
        %v3906 = vpop.xlane.xlu0 %3905
        %v3907 = vsel %vm2262, %v3886, 0.0
        %3908 = vadd.xlane.f32.xlu0 %v3907
        %v3909 = vpop.xlane.xlu0 %3908
        %v3910 = vsel %vm2262, %v3888, 0.0
        %3911 = vadd.xlane.f32.xlu0 %v3910
        %v3912 = vpop.xlane.xlu0 %3911
        %v3913 = vrcp.pop %v3891
        %v3914 = vrcp.pop %v3894
        %v3915 = vrcp.pop %v3897
        %v3916 = vrcp.pop %v3900
        %v3917 = vrcp.pop %v3903
        %v3918 = vrcp.pop %v3906
        %v3919 = vrcp.pop %v3909
        %v3920 = vrcp.pop %v3912
        %v3921 = vmul.f32 %v3874, %v3913
        %v3922 = vmul.f32 %v3876, %v3914
        %v3923 = vmul.f32 %v3878, %v3915
        %v3924 = vmul.f32 %v3880, %v3916
        %v3925 = vmul.f32 %v3882, %v3917
        %v3926 = vmul.f32 %v3884, %v3918
        %v3927 = vmul.f32 %v3886, %v3919
        %v3928 = vmul.f32 %v3888, %v3920
        %v3929 = vpack.c.bf16 %v3922, %v3921
        %v3930 = vpack.c.bf16 %v3924, %v3923
        %v3931 = vpack.c.bf16 %v3926, %v3925
        %v3932 = vpack.c.bf16 %v3928, %v3927
        %s3933 = scalar_lea.vmem [#allocation3], 96
        %v3934 = vld [vmem:[%s3933] sm:$0xff]
        %v3935 = vld [vmem:[%s3933 + $0x8] sm:$0xff]
        %v3936 = vld [vmem:[%s3933 + $0x10] sm:$0xff]
        %v3937 = vld [vmem:[%s3933 + $0x18] sm:$0xff]
        %v3939 = vsel %vm2262, %v3929, 0
        %v3942 = vsel %vm2262, %v3930, 0
        %v3945 = vsel %vm2262, %v3931, 0
        %v3948 = vsel %vm2262, %v3932, 0
        %3950 = vmatprep.subr.bf16.mxu0 0
        %3951 = vmatpush1.bf16.msra.mxu0 %v3934
        %3952 = vmatprep.subr.bf16.mxu0 0
        %3953 = vmatpush1.bf16.msra.mxu0 %v3935
        %3954 = vmatprep.subr.bf16.mxu0 0
        %3955 = vmatpush1.bf16.msra.mxu0 %v3936
        %3956 = vmatprep.subr.bf16.mxu0 0
        %3957 = vmatpush1.bf16.msra.mxu0 %v3937
        %3958 = vmatprep.subr.bf16.mxu0 0
        %3959 = vmatpush1.bf16.msra.mxu0 0
        %3960 = vmatprep.subr.bf16.mxu0 0
        %3961 = vmatpush1.bf16.msra.mxu0 0
        %3962 = vmatprep.subr.bf16.mxu0 0
        %3963 = vmatpush1.bf16.msra.mxu0 0
        %3964 = vmatprep.subr.bf16.mxu0 0
        %3965 = vmatpush1.bf16.msra.mxu0 0
        %3966 = vmatprep.subr.bf16.mxu0 0
        %3967 = vmatpush1.bf16.msra.mxu0 0
        %3968 = vmatprep.subr.bf16.mxu0 0
        %3969 = vmatpush1.bf16.msra.mxu0 0
        %3970 = vmatprep.subr.bf16.mxu0 0
        %3971 = vmatpush1.bf16.msra.mxu0 0
        %3972 = vmatprep.subr.bf16.mxu0 0
        %3973 = vmatpush1.bf16.msra.mxu0 0
        %3974 = vmatprep.subr.bf16.mxu0 0
        %3975 = vmatpush1.bf16.msra.mxu0 0
        %3976 = vmatprep.subr.bf16.mxu0 0
        %3977 = vmatpush1.bf16.msra.mxu0 0
        %3978 = vmatprep.subr.bf16.mxu0 0
        %3979 = vmatpush1.bf16.msra.mxu0 0
        %3980 = vmatprep.subr.bf16.mxu0 0
        %3981 = vmatpush1.bf16.msra.mxu0 0
        %3982 = vmatprep.mubr.bf16.mxu0 0
        %3983 = vmatmul.mubr.bf16.gmra.mrb[0].mxu0 %v3939
        %v3984 = vpop.f32.mrb[0].mxu0
        %v3985 = vadd.f32 0.0, %v3984
        %v3986 = vpop.f32.mrb[0].mxu0
        %v3987 = vpop.f32.mrb[0].mxu0
        %v3988 = vadd.f32 0.0, %v3987
        %v3989 = vpop.f32.mrb[0].mxu0
        %3990 = vmatprep.mubr.bf16.mxu0 0
        %3991 = vmatmul.mubr.bf16.gmra.mrb[0].mxu0 %v3942
        %v3992 = vpop.f32.mrb[0].mxu0
        %v3993 = vadd.f32 0.0, %v3992
        %v3994 = vpop.f32.mrb[0].mxu0
        %v3995 = vpop.f32.mrb[0].mxu0
        %v3996 = vadd.f32 0.0, %v3995
        %v3997 = vpop.f32.mrb[0].mxu0
        %3998 = vmatprep.mubr.bf16.mxu0 0
        %3999 = vmatmul.mubr.bf16.gmra.mrb[0].mxu0 %v3945
        %v4000 = vpop.f32.mrb[0].mxu0
        %v4001 = vadd.f32 0.0, %v4000
        %v4002 = vpop.f32.mrb[0].mxu0
        %v4003 = vpop.f32.mrb[0].mxu0
        %v4004 = vadd.f32 0.0, %v4003
        %v4005 = vpop.f32.mrb[0].mxu0
        %4006 = vmatprep.mubr.bf16.mxu0 0
        %4007 = vmatmul.mubr.bf16.gmra.mrb[0].mxu0 %v3948
        %v4008 = vpop.f32.mrb[0].mxu0
        %v4009 = vadd.f32 0.0, %v4008
        %v4010 = vpop.f32.mrb[0].mxu0
        %v4011 = vpop.f32.mrb[0].mxu0
        %v4012 = vadd.f32 0.0, %v4011
        %v4013 = vpop.f32.mrb[0].mxu0
        %4014 = vdwg.mxu0
        %v4015 = vpack.c.bf16 %v3988, %v3985
        %v4016 = vpack.c.bf16 %v3996, %v3993
        %v4017 = vpack.c.bf16 %v4004, %v4001
        %v4018 = vpack.c.bf16 %v4012, %v4009
        %s4019 = scalar_lea.vmem %s9, 48
        %v4020 = vld [vmem:[%s4019] sm:$0xf]
        %v4021 = vld [vmem:[%s4019 + $0x4] sm:$0xf]
        %v4022 = vld [vmem:[%s4019 + $0x8] sm:$0xf]
        %v4023 = vld [vmem:[%s4019 + $0xc] sm:$0xf]
        %v4028 = vunpack.c.l.b16 %v4020
        %v4029 = vunpack.c.l.b16 %v4021
        %v4030 = vunpack.c.l.b16 %v4022
        %v4031 = vunpack.c.l.b16 %v4023
        %v4032 = vpack.c.b16 %v4029, %v4028
        %v4033 = vpack.c.b16 %v4031, %v4030
        %v4037 = vsel %vm2155, %v4015, 0
        %v4040 = vsel %vm2155, %v4016, 0
        %v4043 = vsel %vm2155, %v4017, 0
        %v4046 = vsel %vm2155, %v4018, 0
        %4048 = vmatprep.subr.bf16.mxu0 0
        %4049 = vmatpush1.bf16.msra.mxu0 %v4032
        %4050 = vmatprep.subr.bf16.mxu0 0
        %4051 = vmatpush1.bf16.msra.mxu0 %v4033
        %4052 = vmatprep.subr.bf16.mxu0 0
        %4053 = vmatpush1.bf16.msra.mxu0 0
        %4054 = vmatprep.subr.bf16.mxu0 0
        %4055 = vmatpush1.bf16.msra.mxu0 0
        %4056 = vmatprep.subr.bf16.mxu0 0
        %4057 = vmatpush1.bf16.msra.mxu0 0
        %4058 = vmatprep.subr.bf16.mxu0 0
        %4059 = vmatpush1.bf16.msra.mxu0 0
        %4060 = vmatprep.subr.bf16.mxu0 0
        %4061 = vmatpush1.bf16.msra.mxu0 0
        %4062 = vmatprep.subr.bf16.mxu0 0
        %4063 = vmatpush1.bf16.msra.mxu0 0
        %4064 = vmatprep.subr.bf16.mxu0 0
        %4065 = vmatpush1.bf16.msra.mxu0 0
        %4066 = vmatprep.subr.bf16.mxu0 0
        %4067 = vmatpush1.bf16.msra.mxu0 0
        %4068 = vmatprep.subr.bf16.mxu0 0
        %4069 = vmatpush1.bf16.msra.mxu0 0
        %4070 = vmatprep.subr.bf16.mxu0 0
        %4071 = vmatpush1.bf16.msra.mxu0 0
        %4072 = vmatprep.subr.bf16.mxu0 0
        %4073 = vmatpush1.bf16.msra.mxu0 0
        %4074 = vmatprep.subr.bf16.mxu0 0
        %4075 = vmatpush1.bf16.msra.mxu0 0
        %4076 = vmatprep.subr.bf16.mxu0 0
        %4077 = vmatpush1.bf16.msra.mxu0 0
        %4078 = vmatprep.subr.bf16.mxu0 0
        %4079 = vmatpush1.bf16.msra.mxu0 0
        %4080 = vmatprep.mubr.bf16.mxu0 0
        %4081 = vmatmul.mubr.bf16.gmra.mrb[0].mxu0 %v4037
        %v4082 = vpop.f32.mrb[0].mxu0
        %v4083 = vadd.f32 0.0, %v4082
        %v4084 = vpop.f32.mrb[0].mxu0
        %v4085 = vpop.f32.mrb[0].mxu0
        %v4086 = vadd.f32 0.0, %v4085
        %v4087 = vpop.f32.mrb[0].mxu0
        %4088 = vmatprep.mubr.bf16.mxu0 0
        %4089 = vmatmul.mubr.bf16.gmra.mrb[0].mxu0 %v4040
        %v4090 = vpop.f32.mrb[0].mxu0
        %v4091 = vadd.f32 0.0, %v4090
        %v4092 = vpop.f32.mrb[0].mxu0
        %v4093 = vpop.f32.mrb[0].mxu0
        %v4094 = vadd.f32 0.0, %v4093
        %v4095 = vpop.f32.mrb[0].mxu0
        %4096 = vmatprep.mubr.bf16.mxu0 0
        %4097 = vmatmul.mubr.bf16.gmra.mrb[0].mxu0 %v4043
        %v4098 = vpop.f32.mrb[0].mxu0
        %v4099 = vadd.f32 0.0, %v4098
        %v4100 = vpop.f32.mrb[0].mxu0
        %v4101 = vpop.f32.mrb[0].mxu0
        %v4102 = vadd.f32 0.0, %v4101
        %v4103 = vpop.f32.mrb[0].mxu0
        %4104 = vmatprep.mubr.bf16.mxu0 0
        %4105 = vmatmul.mubr.bf16.gmra.mrb[0].mxu0 %v4046
        %v4106 = vpop.f32.mrb[0].mxu0
        %v4107 = vadd.f32 0.0, %v4106
        %v4108 = vpop.f32.mrb[0].mxu0
        %v4109 = vpop.f32.mrb[0].mxu0
        %v4110 = vadd.f32 0.0, %v4109
        %v4111 = vpop.f32.mrb[0].mxu0
        %4112 = vdwg.mxu0
        %v4113 = vadd.f32 %v3581, %v4083
        %v4114 = vadd.f32 %v3582, %v4086
        %v4115 = vadd.f32 %v3583, %v4091
        %v4116 = vadd.f32 %v3584, %v4094
        %v4117 = vadd.f32 %v3585, %v4099
        %v4118 = vadd.f32 %v3586, %v4102
        %v4119 = vadd.f32 %v3587, %v4107
        %v4120 = vadd.f32 %v3588, %v4110
        %v4121 = vadd.f32 %v1880, %v4113
        %v4122 = vadd.f32 %v1881, %v4114
        %v4123 = vadd.f32 %v1882, %v4115
        %v4124 = vadd.f32 %v1883, %v4116
        %v4125 = vadd.f32 %v1884, %v4117
        %v4126 = vadd.f32 %v1885, %v4118
        %v4127 = vadd.f32 %v1886, %v4119
        %v4128 = vadd.f32 %v1887, %v4120
        %v4129 = vld [vmem:[%s10] sm:$0x1]
        %v4131 = vlaneseq
        %v4132 = vshrl.u32 %v4131, 7
        %v4133 = vsub.s32 0, %v4132
        %v4134 = vrot.slane %v4129, %v4133
        %v4136 = vadd.f32 %v4121, %v4134
        %v4137 = vadd.f32 %v4122, %v4134
        %v4138 = vadd.f32 %v4123, %v4134
        %v4139 = vadd.f32 %v4124, %v4134
        %v4140 = vadd.f32 %v4125, %v4134
        %v4141 = vadd.f32 %v4126, %v4134
        %v4142 = vadd.f32 %v4127, %v4134
        %v4143 = vadd.f32 %v4128, %v4134
        %v4144 = vld [vmem:[%s11] sm:$0x1]
        %v4145 = vld [vmem:[%s12] sm:$0x1]
        %4146 = vadd.xlane.f32.xlu0 %v4136
        %v4147 = vpop.xlane.xlu0 %4146
        %4148 = vadd.xlane.f32.xlu0 %v4137
        %v4149 = vpop.xlane.xlu0 %4148
        %4150 = vadd.xlane.f32.xlu0 %v4138
        %v4151 = vpop.xlane.xlu0 %4150
        %4152 = vadd.xlane.f32.xlu0 %v4139
        %v4153 = vpop.xlane.xlu0 %4152
        %4154 = vadd.xlane.f32.xlu0 %v4140
        %v4155 = vpop.xlane.xlu0 %4154
        %4156 = vadd.xlane.f32.xlu0 %v4141
        %v4157 = vpop.xlane.xlu0 %4156
        %4158 = vadd.xlane.f32.xlu0 %v4142
        %v4159 = vpop.xlane.xlu0 %4158
        %4160 = vadd.xlane.f32.xlu0 %v4143
        %v4161 = vpop.xlane.xlu0 %4160
        %v4162 = vmul.f32 %v4147, %v1906
        %v4163 = vmul.f32 %v4149, %v1906
        %v4164 = vmul.f32 %v4151, %v1906
        %v4165 = vmul.f32 %v4153, %v1906
        %v4166 = vmul.f32 %v4155, %v1906
        %v4167 = vmul.f32 %v4157, %v1906
        %v4168 = vmul.f32 %v4159, %v1906
        %v4169 = vmul.f32 %v4161, %v1906
        %v4170 = vsub.f32 %v4136, %v4162
        %v4171 = vsub.f32 %v4137, %v4163
        %v4172 = vsub.f32 %v4138, %v4164
        %v4173 = vsub.f32 %v4139, %v4165
        %v4174 = vsub.f32 %v4140, %v4166
        %v4175 = vsub.f32 %v4141, %v4167
        %v4176 = vsub.f32 %v4142, %v4168
        %v4177 = vsub.f32 %v4143, %v4169
        %v4178 = vmul.f32 %v4170, %v4170
        %v4179 = vmul.f32 %v4171, %v4171
        %v4180 = vmul.f32 %v4172, %v4172
        %v4181 = vmul.f32 %v4173, %v4173
        %v4182 = vmul.f32 %v4174, %v4174
        %v4183 = vmul.f32 %v4175, %v4175
        %v4184 = vmul.f32 %v4176, %v4176
        %v4185 = vmul.f32 %v4177, %v4177
        %4186 = vadd.xlane.f32.xlu0 %v4178
        %v4187 = vpop.xlane.xlu0 %4186
        %4188 = vadd.xlane.f32.xlu0 %v4179
        %v4189 = vpop.xlane.xlu0 %4188
        %4190 = vadd.xlane.f32.xlu0 %v4180
        %v4191 = vpop.xlane.xlu0 %4190
        %4192 = vadd.xlane.f32.xlu0 %v4181
        %v4193 = vpop.xlane.xlu0 %4192
        %4194 = vadd.xlane.f32.xlu0 %v4182
        %v4195 = vpop.xlane.xlu0 %4194
        %4196 = vadd.xlane.f32.xlu0 %v4183
        %v4197 = vpop.xlane.xlu0 %4196
        %4198 = vadd.xlane.f32.xlu0 %v4184
        %v4199 = vpop.xlane.xlu0 %4198
        %4200 = vadd.xlane.f32.xlu0 %v4185
        %v4201 = vpop.xlane.xlu0 %4200
        %v4202 = vmul.f32 %v4187, %v1906
        %v4203 = vmul.f32 %v4189, %v1906
        %v4204 = vmul.f32 %v4191, %v1906
        %v4205 = vmul.f32 %v4193, %v1906
        %v4206 = vmul.f32 %v4195, %v1906
        %v4207 = vmul.f32 %v4197, %v1906
        %v4208 = vmul.f32 %v4199, %v1906
        %v4209 = vmul.f32 %v4201, %v1906
        %v4210 = vadd.f32 %v4202, 1e-05
        %v4211 = vadd.f32 %v4203, 1e-05
        %v4212 = vadd.f32 %v4204, 1e-05
        %v4213 = vadd.f32 %v4205, 1e-05
        %v4214 = vadd.f32 %v4206, 1e-05
        %v4215 = vadd.f32 %v4207, 1e-05
        %v4216 = vadd.f32 %v4208, 1e-05
        %v4217 = vadd.f32 %v4209, 1e-05
        %v4218 = vrsqrt.pop %v4210
        %v4219 = vrsqrt.pop %v4211
        %v4220 = vrsqrt.pop %v4212
        %v4221 = vrsqrt.pop %v4213
        %v4222 = vrsqrt.pop %v4214
        %v4223 = vrsqrt.pop %v4215
        %v4224 = vrsqrt.pop %v4216
        %v4225 = vrsqrt.pop %v4217
        %v4226 = vmul.f32 %v4170, %v4218
        %v4227 = vmul.f32 %v4171, %v4219
        %v4228 = vmul.f32 %v4172, %v4220
        %v4229 = vmul.f32 %v4173, %v4221
        %v4230 = vmul.f32 %v4174, %v4222
        %v4231 = vmul.f32 %v4175, %v4223
        %v4232 = vmul.f32 %v4176, %v4224
        %v4233 = vmul.f32 %v4177, %v4225
        %v4235 = vlaneseq
        %v4236 = vshrl.u32 %v4235, 7
        %v4237 = vsub.s32 0, %v4236
        %v4238 = vrot.slane %v4144, %v4237
        %v4240 = vmul.f32 %v4226, %v4238
        %v4241 = vmul.f32 %v4227, %v4238
        %v4242 = vmul.f32 %v4228, %v4238
        %v4243 = vmul.f32 %v4229, %v4238
        %v4244 = vmul.f32 %v4230, %v4238
        %v4245 = vmul.f32 %v4231, %v4238
        %v4246 = vmul.f32 %v4232, %v4238
        %v4247 = vmul.f32 %v4233, %v4238
        %v4249 = vlaneseq
        %v4250 = vshrl.u32 %v4249, 7
        %v4251 = vsub.s32 0, %v4250
        %v4252 = vrot.slane %v4145, %v4251
        %v4254 = vadd.f32 %v4240, %v4252
        %v4255 = vadd.f32 %v4241, %v4252
        %v4256 = vadd.f32 %v4242, %v4252
        %v4257 = vadd.f32 %v4243, %v4252
        %v4258 = vadd.f32 %v4244, %v4252
        %v4259 = vadd.f32 %v4245, %v4252
        %v4260 = vadd.f32 %v4246, %v4252
        %v4261 = vadd.f32 %v4247, %v4252
        %v4262 = vpack.c.bf16 %v4255, %v4254
        %v4263 = vpack.c.bf16 %v4257, %v4256
        %v4264 = vpack.c.bf16 %v4259, %v4258
        %v4265 = vpack.c.bf16 %v4261, %v4260
        %v4266 = vld [vmem:[%s13] sm:$0xff]
        %v4267 = vld [vmem:[%s13 + $0x8] sm:$0xff]
        %v4268 = vld [vmem:[%s13 + $0x10] sm:$0xff]
        %v4269 = vld [vmem:[%s13 + $0x18] sm:$0xff]
        %v4270 = vld [vmem:[%s13 + $0x20] sm:$0xff]
        %v4271 = vld [vmem:[%s13 + $0x28] sm:$0xff]
        %v4272 = vld [vmem:[%s13 + $0x30] sm:$0xff]
        %v4273 = vld [vmem:[%s13 + $0x38] sm:$0xff]
        %v4274 = vld [vmem:[%s13 + $0x40] sm:$0xff]
        %v4275 = vld [vmem:[%s13 + $0x48] sm:$0xff]
        %v4276 = vld [vmem:[%s13 + $0x50] sm:$0xff]
        %v4277 = vld [vmem:[%s13 + $0x58] sm:$0xff]
        %v4278 = vld [vmem:[%s13 + $0x60] sm:$0xff]
        %v4279 = vld [vmem:[%s13 + $0x68] sm:$0xff]
        %v4280 = vld [vmem:[%s13 + $0x70] sm:$0xff]
        %v4281 = vld [vmem:[%s13 + $0x78] sm:$0xff]
        %v4282 = vld [vmem:[%s14] sm:$0x3]
        %v4284 = vlaneseq
        %v4285 = vshrl.u32 %v4284, 7
        %v4286 = vsub.s32 0, %v4285
        %v4287 = vrot.slane %v4282, %v4286
        %v4288 = vlaneseq
        %v4289 = vshrl.u32 %v4288, 7
        %v4290 = vsub.s32 1, %v4289
        %v4291 = vrot.slane %v4282, %v4290
        %v4310 = vunpack.c.l.b16 %v4266
        %v4311 = vunpack.c.h.b16 %v4266
        %v4312 = vunpack.c.l.b16 %v4267
        %v4313 = vunpack.c.h.b16 %v4267
        %v4314 = vunpack.c.l.b16 %v4268
        %v4315 = vunpack.c.h.b16 %v4268
        %v4316 = vunpack.c.l.b16 %v4269
        %v4317 = vunpack.c.h.b16 %v4269
        %v4318 = vunpack.c.l.b16 %v4270
        %v4319 = vunpack.c.h.b16 %v4270
        %v4320 = vunpack.c.l.b16 %v4271
        %v4321 = vunpack.c.h.b16 %v4271
        %v4322 = vunpack.c.l.b16 %v4272
        %v4323 = vunpack.c.h.b16 %v4272
        %v4324 = vunpack.c.l.b16 %v4273
        %v4325 = vunpack.c.h.b16 %v4273
        %v4326 = vunpack.c.l.b16 %v4274
        %v4327 = vunpack.c.h.b16 %v4274
        %v4328 = vunpack.c.l.b16 %v4275
        %v4329 = vunpack.c.h.b16 %v4275
        %v4330 = vunpack.c.l.b16 %v4276
        %v4331 = vunpack.c.h.b16 %v4276
        %v4332 = vunpack.c.l.b16 %v4277
        %v4333 = vunpack.c.h.b16 %v4277
        %v4334 = vunpack.c.l.b16 %v4278
        %v4335 = vunpack.c.h.b16 %v4278
        %v4336 = vunpack.c.l.b16 %v4279
        %v4337 = vunpack.c.h.b16 %v4279
        %v4338 = vunpack.c.l.b16 %v4280
        %v4339 = vunpack.c.h.b16 %v4280
        %v4340 = vunpack.c.l.b16 %v4281
        %v4341 = vunpack.c.h.b16 %v4281
        %v4342 = vpack.c.b16 %v4312, %v4310
        %v4343 = vpack.c.b16 %v4313, %v4311
        %v4344 = vpack.c.b16 %v4316, %v4314
        %v4345 = vpack.c.b16 %v4317, %v4315
        %v4346 = vpack.c.b16 %v4320, %v4318
        %v4347 = vpack.c.b16 %v4321, %v4319
        %v4348 = vpack.c.b16 %v4324, %v4322
        %v4349 = vpack.c.b16 %v4325, %v4323
        %v4350 = vpack.c.b16 %v4328, %v4326
        %v4351 = vpack.c.b16 %v4329, %v4327
        %v4352 = vpack.c.b16 %v4332, %v4330
        %v4353 = vpack.c.b16 %v4333, %v4331
        %v4354 = vpack.c.b16 %v4336, %v4334
        %v4355 = vpack.c.b16 %v4337, %v4335
        %v4356 = vpack.c.b16 %v4340, %v4338
        %v4357 = vpack.c.b16 %v4341, %v4339
        %4374 = vmatprep.subr.bf16.mxu0 %v4343
        %4375 = vmatpush1.bf16.msra.mxu0 %v4342
        %4376 = vmatprep.subr.bf16.mxu0 %v4345
        %4377 = vmatpush1.bf16.msra.mxu0 %v4344
        %4378 = vmatprep.subr.bf16.mxu0 %v4347
        %4379 = vmatpush1.bf16.msra.mxu0 %v4346
        %4380 = vmatprep.subr.bf16.mxu0 %v4349
        %4381 = vmatpush1.bf16.msra.mxu0 %v4348
        %4382 = vmatprep.subr.bf16.mxu0 %v4351
        %4383 = vmatpush1.bf16.msra.mxu0 %v4350
        %4384 = vmatprep.subr.bf16.mxu0 %v4353
        %4385 = vmatpush1.bf16.msra.mxu0 %v4352
        %4386 = vmatprep.subr.bf16.mxu0 %v4355
        %4387 = vmatpush1.bf16.msra.mxu0 %v4354
        %4388 = vmatprep.subr.bf16.mxu0 %v4357
        %4389 = vmatpush1.bf16.msra.mxu0 %v4356
        %4390 = vmatprep.subr.bf16.mxu0 0
        %4391 = vmatpush1.bf16.msra.mxu0 0
        %4392 = vmatprep.subr.bf16.mxu0 0
        %4393 = vmatpush1.bf16.msra.mxu0 0
        %4394 = vmatprep.subr.bf16.mxu0 0
        %4395 = vmatpush1.bf16.msra.mxu0 0
        %4396 = vmatprep.subr.bf16.mxu0 0
        %4397 = vmatpush1.bf16.msra.mxu0 0
        %4398 = vmatprep.subr.bf16.mxu0 0
        %4399 = vmatpush1.bf16.msra.mxu0 0
        %4400 = vmatprep.subr.bf16.mxu0 0
        %4401 = vmatpush1.bf16.msra.mxu0 0
        %4402 = vmatprep.subr.bf16.mxu0 0
        %4403 = vmatpush1.bf16.msra.mxu0 0
        %4404 = vmatprep.subr.bf16.mxu0 0
        %4405 = vmatpush1.bf16.msra.mxu0 0
        %4406 = vmatprep.mubr.bf16.mxu0 0
        %4407 = vmatmul.mubr.bf16.gmra.mrb[0].mxu0 %v4262
        %v4408 = vpop.f32.mrb[0].mxu0
        %v4409 = vadd.f32 %v4287, %v4408
        %v4410 = vpop.f32.mrb[0].mxu0
        %v4411 = vadd.f32 %v4291, %v4410
        %v4412 = vpop.f32.mrb[0].mxu0
        %v4413 = vadd.f32 %v4287, %v4412
        %v4414 = vpop.f32.mrb[0].mxu0
        %v4415 = vadd.f32 %v4291, %v4414
        %4416 = vmatprep.mubr.bf16.mxu0 0
        %4417 = vmatmul.mubr.bf16.gmra.mrb[0].mxu0 %v4263
        %v4418 = vpop.f32.mrb[0].mxu0
        %v4419 = vadd.f32 %v4287, %v4418
        %v4420 = vpop.f32.mrb[0].mxu0
        %v4421 = vadd.f32 %v4291, %v4420
        %v4422 = vpop.f32.mrb[0].mxu0
        %v4423 = vadd.f32 %v4287, %v4422
        %v4424 = vpop.f32.mrb[0].mxu0
        %v4425 = vadd.f32 %v4291, %v4424
        %4426 = vmatprep.mubr.bf16.mxu0 0
        %4427 = vmatmul.mubr.bf16.gmra.mrb[0].mxu0 %v4264
        %v4428 = vpop.f32.mrb[0].mxu0
        %v4429 = vadd.f32 %v4287, %v4428
        %v4430 = vpop.f32.mrb[0].mxu0
        %v4431 = vadd.f32 %v4291, %v4430
        %v4432 = vpop.f32.mrb[0].mxu0
        %v4433 = vadd.f32 %v4287, %v4432
        %v4434 = vpop.f32.mrb[0].mxu0
        %v4435 = vadd.f32 %v4291, %v4434
        %4436 = vmatprep.mubr.bf16.mxu0 0
        %4437 = vmatmul.mubr.bf16.gmra.mrb[0].mxu0 %v4265
        %v4438 = vpop.f32.mrb[0].mxu0
        %v4439 = vadd.f32 %v4287, %v4438
        %v4440 = vpop.f32.mrb[0].mxu0
        %v4441 = vadd.f32 %v4291, %v4440
        %v4442 = vpop.f32.mrb[0].mxu0
        %v4443 = vadd.f32 %v4287, %v4442
        %v4444 = vpop.f32.mrb[0].mxu0
        %v4445 = vadd.f32 %v4291, %v4444
        %4446 = vdwg.mxu0
        %v4447 = vmax.f32 %v4409, 0.0
        %v4448 = vmax.f32 %v4411, 0.0
        %v4449 = vmax.f32 %v4413, 0.0
        %v4450 = vmax.f32 %v4415, 0.0
        %v4451 = vmax.f32 %v4419, 0.0
        %v4452 = vmax.f32 %v4421, 0.0
        %v4453 = vmax.f32 %v4423, 0.0
        %v4454 = vmax.f32 %v4425, 0.0
        %v4455 = vmax.f32 %v4429, 0.0
        %v4456 = vmax.f32 %v4431, 0.0
        %v4457 = vmax.f32 %v4433, 0.0
        %v4458 = vmax.f32 %v4435, 0.0
        %v4459 = vmax.f32 %v4439, 0.0
        %v4460 = vmax.f32 %v4441, 0.0
        %v4461 = vmax.f32 %v4443, 0.0
        %v4462 = vmax.f32 %v4445, 0.0
        %v4463 = vpack.c.bf16 %v4449, %v4447
        %v4464 = vpack.c.bf16 %v4450, %v4448
        %v4465 = vpack.c.bf16 %v4453, %v4451
        %v4466 = vpack.c.bf16 %v4454, %v4452
        %v4467 = vpack.c.bf16 %v4457, %v4455
        %v4468 = vpack.c.bf16 %v4458, %v4456
        %v4469 = vpack.c.bf16 %v4461, %v4459
        %v4470 = vpack.c.bf16 %v4462, %v4460
        %v4471 = vld [vmem:[%s15] sm:$0xf]
        %v4472 = vld [vmem:[%s15 + $0x4] sm:$0xf]
        %v4473 = vld [vmem:[%s15 + $0x8] sm:$0xf]
        %v4474 = vld [vmem:[%s15 + $0xc] sm:$0xf]
        %v4475 = vld [vmem:[%s15 + $0x10] sm:$0xf]
        %v4476 = vld [vmem:[%s15 + $0x14] sm:$0xf]
        %v4477 = vld [vmem:[%s15 + $0x18] sm:$0xf]
        %v4478 = vld [vmem:[%s15 + $0x1c] sm:$0xf]
        %v4479 = vld [vmem:[%s15 + $0x20] sm:$0xf]
        %v4480 = vld [vmem:[%s15 + $0x24] sm:$0xf]
        %v4481 = vld [vmem:[%s15 + $0x28] sm:$0xf]
        %v4482 = vld [vmem:[%s15 + $0x2c] sm:$0xf]
        %v4483 = vld [vmem:[%s15 + $0x30] sm:$0xf]
        %v4484 = vld [vmem:[%s15 + $0x34] sm:$0xf]
        %v4485 = vld [vmem:[%s15 + $0x38] sm:$0xf]
        %v4486 = vld [vmem:[%s15 + $0x3c] sm:$0xf]
        %v4487 = vld [vmem:[%s15 + $0x40] sm:$0xf]
        %v4488 = vld [vmem:[%s15 + $0x44] sm:$0xf]
        %v4489 = vld [vmem:[%s15 + $0x48] sm:$0xf]
        %v4490 = vld [vmem:[%s15 + $0x4c] sm:$0xf]
        %v4491 = vld [vmem:[%s15 + $0x50] sm:$0xf]
        %v4492 = vld [vmem:[%s15 + $0x54] sm:$0xf]
        %v4493 = vld [vmem:[%s15 + $0x58] sm:$0xf]
        %v4494 = vld [vmem:[%s15 + $0x5c] sm:$0xf]
        %v4495 = vld [vmem:[%s15 + $0x60] sm:$0xf]
        %v4496 = vld [vmem:[%s15 + $0x64] sm:$0xf]
        %v4497 = vld [vmem:[%s15 + $0x68] sm:$0xf]
        %v4498 = vld [vmem:[%s15 + $0x6c] sm:$0xf]
        %v4499 = vld [vmem:[%s15 + $0x70] sm:$0xf]
        %v4500 = vld [vmem:[%s15 + $0x74] sm:$0xf]
        %v4501 = vld [vmem:[%s15 + $0x78] sm:$0xf]
        %v4502 = vld [vmem:[%s15 + $0x7c] sm:$0xf]
        %v4503 = vld [vmem:[%s16] sm:$0x1]
        %v4505 = vlaneseq
        %v4506 = vshrl.u32 %v4505, 7
        %v4507 = vsub.s32 0, %v4506
        %v4508 = vrot.slane %v4503, %v4507
        %v4542 = vunpack.c.l.b16 %v4471
        %v4543 = vunpack.c.l.b16 %v4472
        %v4544 = vunpack.c.l.b16 %v4473
        %v4545 = vunpack.c.l.b16 %v4474
        %v4546 = vunpack.c.l.b16 %v4475
        %v4547 = vunpack.c.l.b16 %v4476
        %v4548 = vunpack.c.l.b16 %v4477
        %v4549 = vunpack.c.l.b16 %v4478
        %v4550 = vunpack.c.l.b16 %v4479
        %v4551 = vunpack.c.l.b16 %v4480
        %v4552 = vunpack.c.l.b16 %v4481
        %v4553 = vunpack.c.l.b16 %v4482
        %v4554 = vunpack.c.l.b16 %v4483
        %v4555 = vunpack.c.l.b16 %v4484
        %v4556 = vunpack.c.l.b16 %v4485
        %v4557 = vunpack.c.l.b16 %v4486
        %v4558 = vunpack.c.l.b16 %v4487
        %v4559 = vunpack.c.l.b16 %v4488
        %v4560 = vunpack.c.l.b16 %v4489
        %v4561 = vunpack.c.l.b16 %v4490
        %v4562 = vunpack.c.l.b16 %v4491
        %v4563 = vunpack.c.l.b16 %v4492
        %v4564 = vunpack.c.l.b16 %v4493
        %v4565 = vunpack.c.l.b16 %v4494
        %v4566 = vunpack.c.l.b16 %v4495
        %v4567 = vunpack.c.l.b16 %v4496
        %v4568 = vunpack.c.l.b16 %v4497
        %v4569 = vunpack.c.l.b16 %v4498
        %v4570 = vunpack.c.l.b16 %v4499
        %v4571 = vunpack.c.l.b16 %v4500
        %v4572 = vunpack.c.l.b16 %v4501
        %v4573 = vunpack.c.l.b16 %v4502
        %v4574 = vpack.c.b16 %v4543, %v4542
        %v4575 = vpack.c.b16 %v4545, %v4544
        %v4576 = vpack.c.b16 %v4547, %v4546
        %v4577 = vpack.c.b16 %v4549, %v4548
        %v4578 = vpack.c.b16 %v4551, %v4550
        %v4579 = vpack.c.b16 %v4553, %v4552
        %v4580 = vpack.c.b16 %v4555, %v4554
        %v4581 = vpack.c.b16 %v4557, %v4556
        %v4582 = vpack.c.b16 %v4559, %v4558
        %v4583 = vpack.c.b16 %v4561, %v4560
        %v4584 = vpack.c.b16 %v4563, %v4562
        %v4585 = vpack.c.b16 %v4565, %v4564
        %v4586 = vpack.c.b16 %v4567, %v4566
        %v4587 = vpack.c.b16 %v4569, %v4568
        %v4588 = vpack.c.b16 %v4571, %v4570
        %v4589 = vpack.c.b16 %v4573, %v4572
        %4606 = vmatprep.subr.bf16.mxu0 0
        %4607 = vmatpush1.bf16.msra.mxu0 %v4574
        %4608 = vmatprep.subr.bf16.mxu0 0
        %4609 = vmatpush1.bf16.msra.mxu0 %v4575
        %4610 = vmatprep.subr.bf16.mxu0 0
        %4611 = vmatpush1.bf16.msra.mxu0 %v4576
        %4612 = vmatprep.subr.bf16.mxu0 0
        %4613 = vmatpush1.bf16.msra.mxu0 %v4577
        %4614 = vmatprep.subr.bf16.mxu0 0
        %4615 = vmatpush1.bf16.msra.mxu0 %v4578
        %4616 = vmatprep.subr.bf16.mxu0 0
        %4617 = vmatpush1.bf16.msra.mxu0 %v4579
        %4618 = vmatprep.subr.bf16.mxu0 0
        %4619 = vmatpush1.bf16.msra.mxu0 %v4580
        %4620 = vmatprep.subr.bf16.mxu0 0
        %4621 = vmatpush1.bf16.msra.mxu0 %v4581
        %4622 = vmatprep.subr.bf16.mxu0 0
        %4623 = vmatpush1.bf16.msra.mxu0 %v4582
        %4624 = vmatprep.subr.bf16.mxu0 0
        %4625 = vmatpush1.bf16.msra.mxu0 %v4583
        %4626 = vmatprep.subr.bf16.mxu0 0
        %4627 = vmatpush1.bf16.msra.mxu0 %v4584
        %4628 = vmatprep.subr.bf16.mxu0 0
        %4629 = vmatpush1.bf16.msra.mxu0 %v4585
        %4630 = vmatprep.subr.bf16.mxu0 0
        %4631 = vmatpush1.bf16.msra.mxu0 %v4586
        %4632 = vmatprep.subr.bf16.mxu0 0
        %4633 = vmatpush1.bf16.msra.mxu0 %v4587
        %4634 = vmatprep.subr.bf16.mxu0 0
        %4635 = vmatpush1.bf16.msra.mxu0 %v4588
        %4636 = vmatprep.subr.bf16.mxu0 0
        %4637 = vmatpush1.bf16.msra.mxu0 %v4589
        %4638 = vmatprep.mubr.bf16.mxu0 %v4464
        %4639 = vmatmul.mubr.bf16.gmra.mrb[0].mxu0 %v4463
        %v4640 = vpop.f32.mrb[0].mxu0
        %v4641 = vadd.f32 %v4508, %v4640
        %v4642 = vpop.f32.mrb[0].mxu0
        %v4643 = vpop.f32.mrb[0].mxu0
        %v4644 = vadd.f32 %v4508, %v4643
        %v4645 = vpop.f32.mrb[0].mxu0
        %4646 = vmatprep.mubr.bf16.mxu0 %v4466
        %4647 = vmatmul.mubr.bf16.gmra.mrb[0].mxu0 %v4465
        %v4648 = vpop.f32.mrb[0].mxu0
        %v4649 = vadd.f32 %v4508, %v4648
        %v4650 = vpop.f32.mrb[0].mxu0
        %v4651 = vpop.f32.mrb[0].mxu0
        %v4652 = vadd.f32 %v4508, %v4651
        %v4653 = vpop.f32.mrb[0].mxu0
        %4654 = vmatprep.mubr.bf16.mxu0 %v4468
        %4655 = vmatmul.mubr.bf16.gmra.mrb[0].mxu0 %v4467
        %v4656 = vpop.f32.mrb[0].mxu0
        %v4657 = vadd.f32 %v4508, %v4656
        %v4658 = vpop.f32.mrb[0].mxu0
        %v4659 = vpop.f32.mrb[0].mxu0
        %v4660 = vadd.f32 %v4508, %v4659
        %v4661 = vpop.f32.mrb[0].mxu0
        %4662 = vmatprep.mubr.bf16.mxu0 %v4470
        %4663 = vmatmul.mubr.bf16.gmra.mrb[0].mxu0 %v4469
        %v4664 = vpop.f32.mrb[0].mxu0
        %v4665 = vadd.f32 %v4508, %v4664
        %v4666 = vpop.f32.mrb[0].mxu0
        %v4667 = vpop.f32.mrb[0].mxu0
        %v4668 = vadd.f32 %v4508, %v4667
        %v4669 = vpop.f32.mrb[0].mxu0
        %4670 = vdwg.mxu0
        %v4671 = vadd.f32 %v4136, %v4641
        %v4672 = vadd.f32 %v4137, %v4644
        %v4673 = vadd.f32 %v4138, %v4649
        %v4674 = vadd.f32 %v4139, %v4652
        %v4675 = vadd.f32 %v4140, %v4657
        %v4676 = vadd.f32 %v4141, %v4660
        %v4677 = vadd.f32 %v4142, %v4665
        %v4678 = vadd.f32 %v4143, %v4668
        %4679 = vst [vmem:[%s555] sm:$0xff] %v4671
        %4680 = vst [vmem:[%s555 + $0x8] sm:$0xff] %v4672
        %4681 = vst [vmem:[%s555 + $0x10] sm:$0xff] %v4673
        %4682 = vst [vmem:[%s555 + $0x18] sm:$0xff] %v4674
        %4683 = vst [vmem:[%s555 + $0x20] sm:$0xff] %v4675
        %4684 = vst [vmem:[%s555 + $0x28] sm:$0xff] %v4676
        %4685 = vst [vmem:[%s555 + $0x30] sm:$0xff] %v4677
        %4686 = vst [vmem:[%s555 + $0x38] sm:$0xff] %v4678
        %s4687 = sand.u32 %s415, 1
        %s4688 = scalar_lea.sflag [#allocation5], %s4687
        %s4689 = sand.u32 %s415, 1
        %s4690 = smul.addr %s4689, 64
        %s4691 = scalar_lea.vmem [#allocation4], %s4690
        // Predicated region
        $region93: #{tpu_custom_call.1} parent=87 // pred_check
          %p4692 = pneg %p425
        $region94: #{tpu_custom_call.1} parent=87 // pred_check_branch
          %4694 = sbr.rel (%p4692) target = $region96
        $region95: #{tpu_custom_call.1} parent=87 // pred_region
          %s4695 = smul.u32 8, %s36
          %s4697 = ssub.s32 1024, 1024
          %4698 = vsyncadd %s4688, %s4697
          %s4699 = smul.addr %s35, 8
          %s4700 = sadd.s32 %s4695, %s4699
          %s4701 = smul.addr %s4700, 128
          %s4702 = scalar_lea.hbm %s17, %s4701
          %s4703 = sshll.u32 %s4691, 4
          %s4704 = int_to_ptr.vmem [resolvable:$true] %s4703
          %4709 = dma.vmem_to_hbm [thread:$0]  %s4704, 1024, %s4702, %s4688, 128, 128, 8
        $region96: #{tpu_custom_call.1} parent=87 // pred_fallthru
          _
      $region88: #{tpu_custom_call.1} parent=5 // pred_fallthru
        _
      %p4710 = scmp.le.s32.totalorder 2, %s26
      // Predicated region
      $region97: #{tpu_custom_call.1} parent=5 // pred_check
        %p4711 = pneg %p4710
      $region98: #{tpu_custom_call.1} parent=5 // pred_check_branch
        %4713 = sbr.rel (%p4711) target = $region100
      $region99: #{tpu_custom_call.1} parent=5 // pred_region
        %s4714 = ssub.s32 %s26, 2
        // Predicated region
        $region101: #{tpu_custom_call.1} parent=99 // pred_check
          %p4715 = pneg %p431
        $region102: #{tpu_custom_call.1} parent=99 // pred_check_branch
          %4717 = sbr.rel (%p4715) target = $region104
        $region103: #{tpu_custom_call.1} parent=99 // pred_region
          %s4718 = sand.u32 %s416, 1
          %s4719 = scalar_lea.sflag [#allocation5], %s4718
          %s4720 = sand.u32 %s416, 1
          %s4721 = smul.addr %s4720, 64
          %s4722 = scalar_lea.vmem [#allocation4], %s4721
          %4723 = dma.done %s4719, 1024
        $region104: #{tpu_custom_call.1} parent=99 // pred_fallthru
          _
      $region100: #{tpu_custom_call.1} parent=5 // pred_fallthru
        _
    $region6: #{tpu_custom_call.1} parent=1 // loop_footer
      %s30 = sadd.s32 1, %s26
    $region7: #{tpu_custom_call.1} parent=1 // loop_footer_branch
      %25 = sbr.rel target = $region3
    $region8: #{tpu_custom_call.1} parent=1 // loop_exit
      _
    %4724 = vsyncpa [#allocation5], 1
    %s4725 = scalar_lea.sflag [#allocation5], 1
    %4726 = vsyncpa %s4725, 1

</llo_original>
